<compile_context>
chip_gen: v5e
topology: v5e:2x2
jax: 0.10.0
libtpu: 0.0.40
codegen_flags: <defaults>
</compile_context>

<pallas_src>
import jax
import jax.numpy as jnp
import numpy as np
from jax.experimental import pallas as pl
from jax.experimental.pallas import tpu as pltpu


# ---------------------------------------------------------------------------
# Constant helper matrices (built once on the host, passed as kernel inputs)
# ---------------------------------------------------------------------------

def _interior_mask(H, W):
    """(1, (H+2)*(W+2)) f32: 1 at interior pixels, 0 on the 1-px border."""
    Hp, Wp = H + 2, W + 2
    m = np.zeros((Hp, Wp), np.float32)
    m[1:H + 1, 1:W + 1] = 1.0
    return m.reshape(1, Hp * Wp)


def _pool_select(H, W):
    """0/1 matrix mapping 2x2-max anchors at level (H,W) to the padded-flat
    layout of level (H/2, W/2).  Shape ((H+2)*(W+2), (H/2+2)*(W/2+2))."""
    Hp, Wp = H + 2, W + 2
    Ho, Wo = H // 2, W // 2
    Wop = Wo + 2
    S = np.zeros((Hp * Wp, (Ho + 2) * Wop), np.float32)
    for y2 in range(Ho):
        for x2 in range(Wo):
            S[(2 * y2 + 1) * Wp + (2 * x2 + 1), (y2 + 1) * Wop + (x2 + 1)] = 1.0
    return S


def _up_expand(H, W):
    """0/1 matrices scattering the 4 ConvTranspose(k=2,s=2) taps from level
    (H,W) into the padded-flat layout of level (2H,2W).
    Shape (4, (H+2)*(W+2), (2H+2)*(2W+2)); tap index k = dy*2+dx."""
    Hp, Wp = H + 2, W + 2
    Wop = 2 * W + 2
    E = np.zeros((4, Hp * Wp, (2 * H + 2) * Wop), np.float32)
    for k in range(4):
        dy, dx = k // 2, k % 2
        for y in range(H):
            for x in range(W):
                E[k, (y + 1) * Wp + (x + 1),
                  (2 * y + dy + 1) * Wop + (2 * x + dx + 1)] = 1.0
    return E


# ---------------------------------------------------------------------------
# Fused Pallas kernel
# ---------------------------------------------------------------------------

def _make_unet_kernel(H, W, n):
    Wp0, Wp1, Wp2 = W + 2, W // 2 + 2, W // 4 + 2
    L0 = (H + 2) * Wp0
    L1 = (H // 2 + 2) * Wp1
    L2 = (H // 4 + 2) * Wp2

    def kernel(x_ref,
               d1w1, d1b1, d1w2, d1b2,
               d2w1, d2b1, d2w2, d2b2,
               brw1, brb1, brw2, brb2,
               u1tw, u1tb, u1E, u1w1, u1b1, u1w2, u1b2,
               u2tw, u2tb, u2E, u2w1, u2b1, u2w2, u2b2,
               fcw, fcb, S01, S12, m0, m1, m2,
               o_ref,
               g0, g1, g2):

        # ----------------------------- helpers -----------------------------
        def zero_guards(buf, L, Wp):
            # Guard lanes (never written by activations) must be finite/zero.
            rows, guard = buf.shape[0], Wp + 1
            z = jnp.zeros((rows, guard), jnp.float32)
            buf[pl.ds(0, rows), pl.ds(0, guard)] = z
            buf[pl.ds(0, rows), pl.ds(guard + L, guard)] = z

        def write(buf, row0, val, Wp):
            # Store a padded-flat activation into the image region of a buffer.
            buf[pl.ds(row0, val.shape[0]), pl.ds(Wp + 1, val.shape[1])] = val

        def conv3x3(buf, row0, cin, w_ref, b_ref, mask_ref, L, Wp):
            # 9 accumulating (Cout,Cin)@(Cin,L) matmuls; taps are shifted
            # lane-slices of the zero-guarded buffer (no im2col materialised).
            acc = None
            for k in range(9):
                dy, dx = k // 3 - 1, k % 3 - 1
                tap = buf[pl.ds(row0, cin), pl.ds((Wp + 1) + dy * Wp + dx, L)]
                t = jnp.dot(w_ref[k], tap, preferred_element_type=jnp.float32)
                acc = t if acc is None else acc + t
            acc = jnp.maximum(acc + b_ref[...], 0.0)
            return acc * mask_ref[...]          # zero the padding ring

        def maxpool(buf, row0, cin, S_ref, L, Wp):
            base = Wp + 1
            m = jnp.maximum(
                jnp.maximum(buf[pl.ds(row0, cin), pl.ds(base, L)],
                            buf[pl.ds(row0, cin), pl.ds(base + 1, L)]),
                jnp.maximum(buf[pl.ds(row0, cin), pl.ds(base + Wp, L)],
                            buf[pl.ds(row0, cin), pl.ds(base + Wp + 1, L)]))
            # Selection matmul gathers the pool anchors and re-pads next level.
            return jnp.dot(m, S_ref[...], preferred_element_type=jnp.float32)

        def conv_transpose(val, cout, tw_ref, tb_ref, E_ref, mask_ref):
            # One fused matmul for all 4 taps, then 4 expansion matmuls that
            # scatter the taps into the interleaved (2H,2W) padded-flat layout.
            U = jnp.dot(tw_ref[...], val, preferred_element_type=jnp.float32)
            out = None
            for k in range(4):
                t = jnp.dot(U[k * cout:(k + 1) * cout, :], E_ref[k],
                            preferred_element_type=jnp.float32)
                out = t if out is None else out + t
            return (out + tb_ref[...]) * mask_ref[...]

        # Guard strips only; every grid step (NOT gated on program_id).
        zero_guards(g0, L0, Wp0)
        zero_guards(g1, L1, Wp1)
        zero_guards(g2, L2, Wp2)

        # ---------------- down1 (H x W) -------------------------------------
        write(g0, 0, x_ref[0], Wp0)
        a1 = conv3x3(g0, 0, n, d1w1, d1b1, m0, L0, Wp0)
        write(g0, 0, a1, Wp0)
        skip1 = conv3x3(g0, 0, n, d1w2, d1b2, m0, L0, Wp0)
        write(g0, n, skip1, Wp0)                  # keep skip1 in rows [n, 2n)
        p1 = maxpool(g0, n, n, S01, L0, Wp0)

        # ---------------- down2 (H/2 x W/2) ----------------------------------
        write(g1, 0, p1, Wp1)
        a2 = conv3x3(g1, 0, n, d2w1, d2b1, m1, L1, Wp1)
        write(g1, 0, a2, Wp1)
        skip2 = conv3x3(g1, 0, 2 * n, d2w2, d2b2, m1, L1, Wp1)
        write(g1, 2 * n, skip2, Wp1)              # keep skip2 in rows [2n, 4n)
        p2 = maxpool(g1, 2 * n, 2 * n, S12, L1, Wp1)

        # ---------------- bridge (H/4 x W/4, no pooling) ----------------------
        write(g2, 0, p2, Wp2)
        ab = conv3x3(g2, 0, 2 * n, brw1, brb1, m2, L2, Wp2)
        write(g2, 0, ab, Wp2)
        brg = conv3x3(g2, 0, 4 * n, brw2, brb2, m2, L2, Wp2)

        # ---------------- up1: H/4 -> H/2, concat skip2, 2x conv -------------
        up1 = conv_transpose(brg, 2 * n, u1tw, u1tb, u1E, m1)
        write(g1, 0, up1, Wp1)          # rows [0,2n)=up1, rows [2n,4n)=skip2
        a3 = conv3x3(g1, 0, 4 * n, u1w1, u1b1, m1, L1, Wp1)
        write(g1, 0, a3, Wp1)
        u1o = conv3x3(g1, 0, 2 * n, u1w2, u1b2, m1, L1, Wp1)

        # ---------------- up2: H/2 -> H, concat skip1, 2x conv ---------------
        up2 = conv_transpose(u1o, n, u2tw, u2tb, u2E, m0)
        write(g0, 0, up2, Wp0)          # rows [0,n)=up2, rows [n,2n)=skip1
        a4 = conv3x3(g0, 0, 2 * n, u2w1, u2b1, m0, L0, Wp0)
        write(g0, 0, a4, Wp0)
        u2o = conv3x3(g0, 0, n, u2w2, u2b2, m0, L0, Wp0)

        # ---------------- final 1x1 conv (MXU, lane-dense output) ------------
        y = jnp.dot(fcw[...], u2o, preferred_element_type=jnp.float32) + fcb[...]
        o_ref[0] = y.astype(o_ref.dtype)

    return kernel


# ---------------------------------------------------------------------------
# Wrapper: one pallas_call for the whole forward pass
# ---------------------------------------------------------------------------

def _const_spec(shape):
    zeros = (0,) * len(shape)
    return pl.BlockSpec(shape, lambda i: zeros)


@jax.jit
def unet1_forward(params, x_nchw):
    x = x_nchw.astype(jnp.float32)
    N, in_ch, H, W = x.shape
    n = params["d1_w1"].shape[-1]
    assert H % 4 == 0 and W % 4 == 0, "kernel assumes H, W divisible by 4"
    assert in_ch <= n

    Wp0, Wp1, Wp2 = W + 2, W // 2 + 2, W // 4 + 2
    L0 = (H + 2) * Wp0
    L1 = (H // 2 + 2) * Wp1
    L2 = (H // 4 + 2) * Wp2

    # Input -> padded-flat (C, (H+2)*(W+2)) layout; channels zero-padded to n.
    xp = jnp.pad(x, ((0, 0), (0, n - in_ch), (1, 1), (1, 1)))
    xf = xp.reshape(N, n, L0)

    def cw(w, ci_pad=None):           # (3,3,ci,co) -> (9, co, ci[_pad])
        kh, kw, ci, co = w.shape
        if ci_pad is not None and ci_pad > ci:
            w = jnp.pad(w, ((0, 0), (0, 0), (0, ci_pad - ci), (0, 0)))
            ci = ci_pad
        return jnp.transpose(w, (0, 1, 3, 2)).reshape(kh * kw, co, ci)

    def cb(b):                        # (co,) -> (co, 1)
        return b.reshape(-1, 1)

    def ctw(tw):                      # (4, ci, co) -> (4*co, ci), tap-major rows
        _, ci, co = tw.shape
        return jnp.transpose(tw, (0, 2, 1)).reshape(4 * co, ci)

    weights = [
        cw(params["d1_w1"], ci_pad=n), cb(params["d1_b1"]),
        cw(params["d1_w2"]), cb(params["d1_b2"]),
        cw(params["d2_w1"]), cb(params["d2_b1"]),
        cw(params["d2_w2"]), cb(params["d2_b2"]),
        cw(params["br_w1"]), cb(params["br_b1"]),
        cw(params["br_w2"]), cb(params["br_b2"]),
        ctw(params["u1_tw"]), cb(params["u1_tb"]),
        jnp.asarray(_up_expand(H // 4, W // 4)),
        cw(params["u1_w1"]), cb(params["u1_b1"]),
        cw(params["u1_w2"]), cb(params["u1_b2"]),
        ctw(params["u2_tw"]), cb(params["u2_tb"]),
        jnp.asarray(_up_expand(H // 2, W // 2)),
        cw(params["u2_w1"]), cb(params["u2_b1"]),
        cw(params["u2_w2"]), cb(params["u2_b2"]),
        params["fc_w"].reshape(n, 1).T, params["fc_b"].reshape(1, 1),
        jnp.asarray(_pool_select(H, W)),
        jnp.asarray(_pool_select(H // 2, W // 2)),
        jnp.asarray(_interior_mask(H, W)),
        jnp.asarray(_interior_mask(H // 2, W // 2)),
        jnp.asarray(_interior_mask(H // 4, W // 4)),
    ]

    in_specs = ([pl.BlockSpec((1, n, L0), lambda i: (i, 0, 0))]
                + [_const_spec(w.shape) for w in weights])

    scratch_shapes = [
        pltpu.VMEM((2 * n, L0 + 2 * Wp0 + 2), jnp.float32),   # level-0 buffer
        pltpu.VMEM((4 * n, L1 + 2 * Wp1 + 2), jnp.float32),   # level-1 buffer
        pltpu.VMEM((4 * n, L2 + 2 * Wp2 + 2), jnp.float32),   # level-2 buffer
    ]

    out = pl.pallas_call(
        _make_unet_kernel(H, W, n),
        out_shape=jax.ShapeDtypeStruct((N, 1, L0), jnp.float32),
        grid=(N,),
        in_specs=in_specs,
        out_specs=pl.BlockSpec((1, 1, L0), lambda i: (i, 0, 0)),
        scratch_shapes=scratch_shapes,
        compiler_params=pltpu.CompilerParams(
            dimension_semantics=("parallel",)),
    )(xf, *weights)

    # Strip the 1-pixel padding ring (tiny XLA-side slice) -> NCHW.
    return out.reshape(N, 1, H + 2, W + 2)[:, :, 1:H + 1, 1:W + 1]


# ---------------------------------------------------------------------------
# Parameter construction (deterministic, PyTorch-default-style uniform init)
# ---------------------------------------------------------------------------

def _uniform(key, shape, fan_in):
    bound = 1.0 / jnp.sqrt(jnp.float32(fan_in))
    return jax.random.uniform(key, shape, jnp.float32, -bound, bound)


def init_params(key, in_ch=3, n=8):
    keys = iter(jax.random.split(key, 64))

    def conv_p(cin, cout, k=3):
        fan = cin * k * k
        w = _uniform(next(keys), (k, k, cin, cout), fan)
        b = _uniform(next(keys), (cout,), fan)
        return w, b

    def convT_p(cin, cout):
        fan = cin * 4
        w = _uniform(next(keys), (4, cin, cout), fan)   # tap-major: k = dy*2+dx
        b = _uniform(next(keys), (cout,), fan)
        return w, b

    p = {}
    p["d1_w1"], p["d1_b1"] = conv_p(in_ch, n)
    p["d1_w2"], p["d1_b2"] = conv_p(n, n)
    p["d2_w1"], p["d2_b1"] = conv_p(n, 2 * n)
    p["d2_w2"], p["d2_b2"] = conv_p(2 * n, 2 * n)
    p["br_w1"], p["br_b1"] = conv_p(2 * n, 4 * n)
    p["br_w2"], p["br_b2"] = conv_p(4 * n, 4 * n)
    p["u1_tw"], p["u1_tb"] = convT_p(4 * n, 2 * n)
    p["u1_w1"], p["u1_b1"] = conv_p(4 * n, 2 * n)
    p["u1_w2"], p["u1_b2"] = conv_p(2 * n, 2 * n)
    p["u2_tw"], p["u2_tb"] = convT_p(2 * n, n)
    p["u2_w1"], p["u2_b1"] = conv_p(2 * n, n)
    p["u2_w2"], p["u2_b2"] = conv_p(n, n)
    fw, fb = conv_p(n, 1, k=1)
    p["fc_w"], p["fc_b"] = fw.reshape(n, 1), fb
    return p


# ---------------------------------------------------------------------------
# Pure-JAX reference (correctness self-check only)
# ---------------------------------------------------------------------------

def _ref_conv3x3(x, w, b, relu=True):
    y = jax.lax.conv_general_dilated(
        x, w, window_strides=(1, 1), padding=((1, 1), (1, 1)),
        dimension_numbers=("NHWC", "HWIO", "NHWC"),
        precision=jax.lax.Precision.HIGHEST) + b
    return jnp.maximum(y, 0.0) if relu else y


def _ref_maxpool(v):
    N, H, W, C = v.shape
    return jnp.max(v.reshape(N, H // 2, 2, W // 2, 2, C), axis=(2, 4))


def _ref_conv_transpose(v, w4, b):
    N, H, W, _ = v.shape
    Co = w4.shape[-1]
    taps = jnp.einsum("nhwc,kcd->knhwd", v, w4,
                      precision=jax.lax.Precision.HIGHEST) + b
    taps = taps.reshape(2, 2, N, H, W, Co)
    out = jnp.transpose(taps, (2, 3, 0, 4, 1, 5))
    return out.reshape(N, 2 * H, 2 * W, Co)


def unet1_reference(params, x_nchw):
    x = jnp.transpose(x_nchw, (0, 2, 3, 1)).astype(jnp.float32)
    h = _ref_conv3x3(x, params["d1_w1"], params["d1_b1"])
    skip1 = _ref_conv3x3(h, params["d1_w2"], params["d1_b2"])
    out = _ref_maxpool(skip1)
    h = _ref_conv3x3(out, params["d2_w1"], params["d2_b1"])
    skip2 = _ref_conv3x3(h, params["d2_w2"], params["d2_b2"])
    out = _ref_maxpool(skip2)
    h = _ref_conv3x3(out, params["br_w1"], params["br_b1"])
    out = _ref_conv3x3(h, params["br_w2"], params["br_b2"])
    up = _ref_conv_transpose(out, params["u1_tw"], params["u1_tb"])
    cat = jnp.concatenate([up, skip2], axis=-1)
    h = _ref_conv3x3(cat, params["u1_w1"], params["u1_b1"])
    out = _ref_conv3x3(h, params["u1_w2"], params["u1_b2"])
    up = _ref_conv_transpose(out, params["u2_tw"], params["u2_tb"])
    cat = jnp.concatenate([up, skip1], axis=-1)
    h = _ref_conv3x3(cat, params["u2_w1"], params["u2_b1"])
    out = _ref_conv3x3(h, params["u2_w2"], params["u2_b2"])
    y = jnp.einsum("nhwc,cd->nhwd", out, params["fc_w"],
                   precision=jax.lax.Precision.HIGHEST) + params["fc_b"]
    return jnp.transpose(y, (0, 3, 1, 2))


if __name__ == "__main__":
    key = jax.random.PRNGKey(0)
    pkey, xkey = jax.random.split(key)

    params = init_params(pkey, in_ch=3, n=8)
    x = jax.random.normal(xkey, (2, 3, 16, 16), jnp.float32)  # NCHW, like PyTorch

    y = unet1_forward(params, x)
    y = jax.block_until_ready(y)

    assert y.shape == (2, 1, 16, 16), y.shape
    assert bool(jnp.all(jnp.isfinite(y)))

    y_ref = unet1_reference(params, x)
    err = float(jnp.max(jnp.abs(y - y_ref)))
    assert err < 2e-2, f"max abs err vs reference: {err}"

    print("KERNEL_OK")
</pallas_src>

<mosaic_0001>
module attributes {stable_mosaic.version = 11 : i64} {
  func.func @kernel(%arg0: i32, %arg1: memref<1x8x324xf32, #tpu.memory_space<vmem>>, %arg2: memref<9x8x8xf32, #tpu.memory_space<vmem>>, %arg3: memref<8x1xf32, #tpu.memory_space<vmem>>, %arg4: memref<9x8x8xf32, #tpu.memory_space<vmem>>, %arg5: memref<8x1xf32, #tpu.memory_space<vmem>>, %arg6: memref<9x16x8xf32, #tpu.memory_space<vmem>>, %arg7: memref<16x1xf32, #tpu.memory_space<vmem>>, %arg8: memref<9x16x16xf32, #tpu.memory_space<vmem>>, %arg9: memref<16x1xf32, #tpu.memory_space<vmem>>, %arg10: memref<9x32x16xf32, #tpu.memory_space<vmem>>, %arg11: memref<32x1xf32, #tpu.memory_space<vmem>>, %arg12: memref<9x32x32xf32, #tpu.memory_space<vmem>>, %arg13: memref<32x1xf32, #tpu.memory_space<vmem>>, %arg14: memref<64x32xf32, #tpu.memory_space<vmem>>, %arg15: memref<16x1xf32, #tpu.memory_space<vmem>>, %arg16: memref<4x36x100xf32, #tpu.memory_space<vmem>>, %arg17: memref<9x16x32xf32, #tpu.memory_space<vmem>>, %arg18: memref<16x1xf32, #tpu.memory_space<vmem>>, %arg19: memref<9x16x16xf32, #tpu.memory_space<vmem>>, %arg20: memref<16x1xf32, #tpu.memory_space<vmem>>, %arg21: memref<32x16xf32, #tpu.memory_space<vmem>>, %arg22: memref<8x1xf32, #tpu.memory_space<vmem>>, %arg23: memref<4x100x324xf32, #tpu.memory_space<vmem>>, %arg24: memref<9x8x16xf32, #tpu.memory_space<vmem>>, %arg25: memref<8x1xf32, #tpu.memory_space<vmem>>, %arg26: memref<9x8x8xf32, #tpu.memory_space<vmem>>, %arg27: memref<8x1xf32, #tpu.memory_space<vmem>>, %arg28: memref<1x8xf32, #tpu.memory_space<vmem>>, %arg29: memref<1x1xf32, #tpu.memory_space<vmem>>, %arg30: memref<324x100xf32, #tpu.memory_space<vmem>>, %arg31: memref<100x36xf32, #tpu.memory_space<vmem>>, %arg32: memref<1x324xf32, #tpu.memory_space<vmem>>, %arg33: memref<1x100xf32, #tpu.memory_space<vmem>>, %arg34: memref<1x36xf32, #tpu.memory_space<vmem>>, %arg35: memref<1x1x324xf32, #tpu.memory_space<vmem>>, %arg36: memref<16x362xf32, #tpu.memory_space<vmem>>, %arg37: memref<32x122xf32, #tpu.memory_space<vmem>>, %arg38: memref<32x50xf32, #tpu.memory_space<vmem>>) attributes {dimension_semantics = [#tpu.dimension_semantics<parallel>], iteration_bounds = array<i64: 2>, scalar_prefetch = 0 : i64, scratch_operands = 3 : i64, tpu.core_type = #tpu.core_type<tc>, window_params = [{transform_indices = @transform_0, window_bounds = array<i64: 1, 8, 324>}, {pipeline_mode = #tpu.pipeline_mode<synchronous>, transform_indices = @transform_1, window_bounds = array<i64: 9, 8, 8>}, {pipeline_mode = #tpu.pipeline_mode<synchronous>, transform_indices = @transform_2, window_bounds = array<i64: 8, 1>}, {pipeline_mode = #tpu.pipeline_mode<synchronous>, transform_indices = @transform_3, window_bounds = array<i64: 9, 8, 8>}, {pipeline_mode = #tpu.pipeline_mode<synchronous>, transform_indices = @transform_4, window_bounds = array<i64: 8, 1>}, {pipeline_mode = #tpu.pipeline_mode<synchronous>, transform_indices = @transform_5, window_bounds = array<i64: 9, 16, 8>}, {pipeline_mode = #tpu.pipeline_mode<synchronous>, transform_indices = @transform_6, window_bounds = array<i64: 16, 1>}, {pipeline_mode = #tpu.pipeline_mode<synchronous>, transform_indices = @transform_7, window_bounds = array<i64: 9, 16, 16>}, {pipeline_mode = #tpu.pipeline_mode<synchronous>, transform_indices = @transform_8, window_bounds = array<i64: 16, 1>}, {pipeline_mode = #tpu.pipeline_mode<synchronous>, transform_indices = @transform_9, window_bounds = array<i64: 9, 32, 16>}, {pipeline_mode = #tpu.pipeline_mode<synchronous>, transform_indices = @transform_10, window_bounds = array<i64: 32, 1>}, {pipeline_mode = #tpu.pipeline_mode<synchronous>, transform_indices = @transform_11, window_bounds = array<i64: 9, 32, 32>}, {pipeline_mode = #tpu.pipeline_mode<synchronous>, transform_indices = @transform_12, window_bounds = array<i64: 32, 1>}, {pipeline_mode = #tpu.pipeline_mode<synchronous>, transform_indices = @transform_13, window_bounds = array<i64: 64, 32>}, {pipeline_mode = #tpu.pipeline_mode<synchronous>, transform_indices = @transform_14, window_bounds = array<i64: 16, 1>}, {pipeline_mode = #tpu.pipeline_mode<synchronous>, transform_indices = @transform_15, window_bounds = array<i64: 4, 36, 100>}, {pipeline_mode = #tpu.pipeline_mode<synchronous>, transform_indices = @transform_16, window_bounds = array<i64: 9, 16, 32>}, {pipeline_mode = #tpu.pipeline_mode<synchronous>, transform_indices = @transform_17, window_bounds = array<i64: 16, 1>}, {pipeline_mode = #tpu.pipeline_mode<synchronous>, transform_indices = @transform_18, window_bounds = array<i64: 9, 16, 16>}, {pipeline_mode = #tpu.pipeline_mode<synchronous>, transform_indices = @transform_19, window_bounds = array<i64: 16, 1>}, {pipeline_mode = #tpu.pipeline_mode<synchronous>, transform_indices = @transform_20, window_bounds = array<i64: 32, 16>}, {pipeline_mode = #tpu.pipeline_mode<synchronous>, transform_indices = @transform_21, window_bounds = array<i64: 8, 1>}, {pipeline_mode = #tpu.pipeline_mode<synchronous>, transform_indices = @transform_22, window_bounds = array<i64: 4, 100, 324>}, {pipeline_mode = #tpu.pipeline_mode<synchronous>, transform_indices = @transform_23, window_bounds = array<i64: 9, 8, 16>}, {pipeline_mode = #tpu.pipeline_mode<synchronous>, transform_indices = @transform_24, window_bounds = array<i64: 8, 1>}, {pipeline_mode = #tpu.pipeline_mode<synchronous>, transform_indices = @transform_25, window_bounds = array<i64: 9, 8, 8>}, {pipeline_mode = #tpu.pipeline_mode<synchronous>, transform_indices = @transform_26, window_bounds = array<i64: 8, 1>}, {pipeline_mode = #tpu.pipeline_mode<synchronous>, transform_indices = @transform_27, window_bounds = array<i64: 1, 8>}, {pipeline_mode = #tpu.pipeline_mode<synchronous>, transform_indices = @transform_28, window_bounds = array<i64: 1, 1>}, {pipeline_mode = #tpu.pipeline_mode<synchronous>, transform_indices = @transform_29, window_bounds = array<i64: 324, 100>}, {pipeline_mode = #tpu.pipeline_mode<synchronous>, transform_indices = @transform_30, window_bounds = array<i64: 100, 36>}, {pipeline_mode = #tpu.pipeline_mode<synchronous>, transform_indices = @transform_31, window_bounds = array<i64: 1, 324>}, {pipeline_mode = #tpu.pipeline_mode<synchronous>, transform_indices = @transform_32, window_bounds = array<i64: 1, 100>}, {pipeline_mode = #tpu.pipeline_mode<synchronous>, transform_indices = @transform_33, window_bounds = array<i64: 1, 36>}, {transform_indices = @transform_34, window_bounds = array<i64: 1, 1, 324>}]} {
    %cst = arith.constant 0.000000e+00 : f32
    %0 = vector.broadcast %cst : f32 to vector<16x19xf32>
    %c0 = arith.constant 0 : index
    %c0_0 = arith.constant 0 : index
    %1 = vector.load %arg36[%c0, %c0_0] : memref<16x362xf32, #tpu.memory_space<vmem>>, vector<16x19xf32>
    tpu.vector_store %arg36[%c0, %c0_0], %0 {strides = array<i32>} : memref<16x362xf32, #tpu.memory_space<vmem>>, vector<16x19xf32>,
    %c0_1 = arith.constant 0 : index
    %c343 = arith.constant 343 : index
    %2 = vector.load %arg36[%c0_1, %c343] : memref<16x362xf32, #tpu.memory_space<vmem>>, vector<16x19xf32>
    tpu.vector_store %arg36[%c0_1, %c343], %0 {strides = array<i32>} : memref<16x362xf32, #tpu.memory_space<vmem>>, vector<16x19xf32>,
    %cst_2 = arith.constant 0.000000e+00 : f32
    %3 = vector.broadcast %cst_2 : f32 to vector<32x11xf32>
    %c0_3 = arith.constant 0 : index
    %c0_4 = arith.constant 0 : index
    %4 = vector.load %arg37[%c0_3, %c0_4] : memref<32x122xf32, #tpu.memory_space<vmem>>, vector<32x11xf32>
    tpu.vector_store %arg37[%c0_3, %c0_4], %3 {strides = array<i32>} : memref<32x122xf32, #tpu.memory_space<vmem>>, vector<32x11xf32>,
    %c0_5 = arith.constant 0 : index
    %c111 = arith.constant 111 : index
    %5 = vector.load %arg37[%c0_5, %c111] : memref<32x122xf32, #tpu.memory_space<vmem>>, vector<32x11xf32>
    tpu.vector_store %arg37[%c0_5, %c111], %3 {strides = array<i32>} : memref<32x122xf32, #tpu.memory_space<vmem>>, vector<32x11xf32>,
    %cst_6 = arith.constant 0.000000e+00 : f32
    %6 = vector.broadcast %cst_6 : f32 to vector<32x7xf32>
    %c0_7 = arith.constant 0 : index
    %c0_8 = arith.constant 0 : index
    %7 = vector.load %arg38[%c0_7, %c0_8] : memref<32x50xf32, #tpu.memory_space<vmem>>, vector<32x7xf32>
    tpu.vector_store %arg38[%c0_7, %c0_8], %6 {strides = array<i32>} : memref<32x50xf32, #tpu.memory_space<vmem>>, vector<32x7xf32>,
    %c0_9 = arith.constant 0 : index
    %c43 = arith.constant 43 : index
    %8 = vector.load %arg38[%c0_9, %c43] : memref<32x50xf32, #tpu.memory_space<vmem>>, vector<32x7xf32>
    tpu.vector_store %arg38[%c0_9, %c43], %6 {strides = array<i32>} : memref<32x50xf32, #tpu.memory_space<vmem>>, vector<32x7xf32>,
    %c0_10 = arith.constant 0 : index
    %c0_11 = arith.constant 0 : index
    %c0_12 = arith.constant 0 : index
    %9 = vector.load %arg1[%c0_10, %c0_11, %c0_12] : memref<1x8x324xf32, #tpu.memory_space<vmem>>, vector<1x8x324xf32>
    %10 = vector.shape_cast %9 : vector<1x8x324xf32> to vector<8x324xf32>
    %c0_13 = arith.constant 0 : index
    %c19 = arith.constant 19 : index
    %11 = vector.load %arg36[%c0_13, %c19] : memref<16x362xf32, #tpu.memory_space<vmem>>, vector<8x324xf32>
    tpu.vector_store %arg36[%c0_13, %c19], %10 {strides = array<i32>} : memref<16x362xf32, #tpu.memory_space<vmem>>, vector<8x324xf32>,
    %c0_14 = arith.constant 0 : index
    %c0_15 = arith.constant 0 : index
    %12 = vector.load %arg36[%c0_14, %c0_15] : memref<16x362xf32, #tpu.memory_space<vmem>>, vector<8x324xf32>
    %c0_16 = arith.constant 0 : index
    %c0_17 = arith.constant 0 : index
    %c0_18 = arith.constant 0 : index
    %13 = vector.load %arg2[%c0_16, %c0_17, %c0_18] : memref<9x8x8xf32, #tpu.memory_space<vmem>>, vector<1x8x8xf32>
    %14 = vector.shape_cast %13 : vector<1x8x8xf32> to vector<8x8xf32>
    %cst_19 = arith.constant dense<0.000000e+00> : vector<8x324xf32>
    %15 = tpu.matmul %14, %12, %cst_19 {dimension_numbers = #tpu.dot_dimension_numbers<[1], [0], [0], [1], [0, 0, 1, 1], [], []>} : vector<8x8xf32>, vector<8x324xf32>, vector<8x324xf32> -> vector<8x324xf32>
    %c0_20 = arith.constant 0 : index
    %c1 = arith.constant 1 : index
    %16 = vector.load %arg36[%c0_20, %c1] : memref<16x362xf32, #tpu.memory_space<vmem>>, vector<8x324xf32>
    %c1_21 = arith.constant 1 : index
    %c0_22 = arith.constant 0 : index
    %c0_23 = arith.constant 0 : index
    %17 = vector.load %arg2[%c1_21, %c0_22, %c0_23] : memref<9x8x8xf32, #tpu.memory_space<vmem>>, vector<1x8x8xf32>
    %18 = vector.shape_cast %17 : vector<1x8x8xf32> to vector<8x8xf32>
    %cst_24 = arith.constant dense<0.000000e+00> : vector<8x324xf32>
    %19 = tpu.matmul %18, %16, %cst_24 {dimension_numbers = #tpu.dot_dimension_numbers<[1], [0], [0], [1], [0, 0, 1, 1], [], []>} : vector<8x8xf32>, vector<8x324xf32>, vector<8x324xf32> -> vector<8x324xf32>
    %20 = arith.addf %15, %19 : vector<8x324xf32>
    %c0_25 = arith.constant 0 : index
    %c2 = arith.constant 2 : index
    %21 = vector.load %arg36[%c0_25, %c2] : memref<16x362xf32, #tpu.memory_space<vmem>>, vector<8x324xf32>
    %c2_26 = arith.constant 2 : index
    %c0_27 = arith.constant 0 : index
    %c0_28 = arith.constant 0 : index
    %22 = vector.load %arg2[%c2_26, %c0_27, %c0_28] : memref<9x8x8xf32, #tpu.memory_space<vmem>>, vector<1x8x8xf32>
    %23 = vector.shape_cast %22 : vector<1x8x8xf32> to vector<8x8xf32>
    %cst_29 = arith.constant dense<0.000000e+00> : vector<8x324xf32>
    %24 = tpu.matmul %23, %21, %cst_29 {dimension_numbers = #tpu.dot_dimension_numbers<[1], [0], [0], [1], [0, 0, 1, 1], [], []>} : vector<8x8xf32>, vector<8x324xf32>, vector<8x324xf32> -> vector<8x324xf32>
    %25 = arith.addf %20, %24 : vector<8x324xf32>
    %c0_30 = arith.constant 0 : index
    %c18 = arith.constant 18 : index
    %26 = vector.load %arg36[%c0_30, %c18] : memref<16x362xf32, #tpu.memory_space<vmem>>, vector<8x324xf32>
    %c3 = arith.constant 3 : index
    %c0_31 = arith.constant 0 : index
    %c0_32 = arith.constant 0 : index
    %27 = vector.load %arg2[%c3, %c0_31, %c0_32] : memref<9x8x8xf32, #tpu.memory_space<vmem>>, vector<1x8x8xf32>
    %28 = vector.shape_cast %27 : vector<1x8x8xf32> to vector<8x8xf32>
    %cst_33 = arith.constant dense<0.000000e+00> : vector<8x324xf32>
    %29 = tpu.matmul %28, %26, %cst_33 {dimension_numbers = #tpu.dot_dimension_numbers<[1], [0], [0], [1], [0, 0, 1, 1], [], []>} : vector<8x8xf32>, vector<8x324xf32>, vector<8x324xf32> -> vector<8x324xf32>
    %30 = arith.addf %25, %29 : vector<8x324xf32>
    %c0_34 = arith.constant 0 : index
    %c19_35 = arith.constant 19 : index
    %31 = vector.load %arg36[%c0_34, %c19_35] : memref<16x362xf32, #tpu.memory_space<vmem>>, vector<8x324xf32>
    %c4 = arith.constant 4 : index
    %c0_36 = arith.constant 0 : index
    %c0_37 = arith.constant 0 : index
    %32 = vector.load %arg2[%c4, %c0_36, %c0_37] : memref<9x8x8xf32, #tpu.memory_space<vmem>>, vector<1x8x8xf32>
    %33 = vector.shape_cast %32 : vector<1x8x8xf32> to vector<8x8xf32>
    %cst_38 = arith.constant dense<0.000000e+00> : vector<8x324xf32>
    %34 = tpu.matmul %33, %31, %cst_38 {dimension_numbers = #tpu.dot_dimension_numbers<[1], [0], [0], [1], [0, 0, 1, 1], [], []>} : vector<8x8xf32>, vector<8x324xf32>, vector<8x324xf32> -> vector<8x324xf32>
    %35 = arith.addf %30, %34 : vector<8x324xf32>
    %c0_39 = arith.constant 0 : index
    %c20 = arith.constant 20 : index
    %36 = vector.load %arg36[%c0_39, %c20] : memref<16x362xf32, #tpu.memory_space<vmem>>, vector<8x324xf32>
    %c5 = arith.constant 5 : index
    %c0_40 = arith.constant 0 : index
    %c0_41 = arith.constant 0 : index
    %37 = vector.load %arg2[%c5, %c0_40, %c0_41] : memref<9x8x8xf32, #tpu.memory_space<vmem>>, vector<1x8x8xf32>
    %38 = vector.shape_cast %37 : vector<1x8x8xf32> to vector<8x8xf32>
    %cst_42 = arith.constant dense<0.000000e+00> : vector<8x324xf32>
    %39 = tpu.matmul %38, %36, %cst_42 {dimension_numbers = #tpu.dot_dimension_numbers<[1], [0], [0], [1], [0, 0, 1, 1], [], []>} : vector<8x8xf32>, vector<8x324xf32>, vector<8x324xf32> -> vector<8x324xf32>
    %40 = arith.addf %35, %39 : vector<8x324xf32>
    %c0_43 = arith.constant 0 : index
    %c36 = arith.constant 36 : index
    %41 = vector.load %arg36[%c0_43, %c36] : memref<16x362xf32, #tpu.memory_space<vmem>>, vector<8x324xf32>
    %c6 = arith.constant 6 : index
    %c0_44 = arith.constant 0 : index
    %c0_45 = arith.constant 0 : index
    %42 = vector.load %arg2[%c6, %c0_44, %c0_45] : memref<9x8x8xf32, #tpu.memory_space<vmem>>, vector<1x8x8xf32>
    %43 = vector.shape_cast %42 : vector<1x8x8xf32> to vector<8x8xf32>
    %cst_46 = arith.constant dense<0.000000e+00> : vector<8x324xf32>
    %44 = tpu.matmul %43, %41, %cst_46 {dimension_numbers = #tpu.dot_dimension_numbers<[1], [0], [0], [1], [0, 0, 1, 1], [], []>} : vector<8x8xf32>, vector<8x324xf32>, vector<8x324xf32> -> vector<8x324xf32>
    %45 = arith.addf %40, %44 : vector<8x324xf32>
    %c0_47 = arith.constant 0 : index
    %c37 = arith.constant 37 : index
    %46 = vector.load %arg36[%c0_47, %c37] : memref<16x362xf32, #tpu.memory_space<vmem>>, vector<8x324xf32>
    %c7 = arith.constant 7 : index
    %c0_48 = arith.constant 0 : index
    %c0_49 = arith.constant 0 : index
    %47 = vector.load %arg2[%c7, %c0_48, %c0_49] : memref<9x8x8xf32, #tpu.memory_space<vmem>>, vector<1x8x8xf32>
    %48 = vector.shape_cast %47 : vector<1x8x8xf32> to vector<8x8xf32>
    %cst_50 = arith.constant dense<0.000000e+00> : vector<8x324xf32>
    %49 = tpu.matmul %48, %46, %cst_50 {dimension_numbers = #tpu.dot_dimension_numbers<[1], [0], [0], [1], [0, 0, 1, 1], [], []>} : vector<8x8xf32>, vector<8x324xf32>, vector<8x324xf32> -> vector<8x324xf32>
    %50 = arith.addf %45, %49 : vector<8x324xf32>
    %c0_51 = arith.constant 0 : index
    %c38 = arith.constant 38 : index
    %51 = vector.load %arg36[%c0_51, %c38] : memref<16x362xf32, #tpu.memory_space<vmem>>, vector<8x324xf32>
    %c8 = arith.constant 8 : index
    %c0_52 = arith.constant 0 : index
    %c0_53 = arith.constant 0 : index
    %52 = vector.load %arg2[%c8, %c0_52, %c0_53] : memref<9x8x8xf32, #tpu.memory_space<vmem>>, vector<1x8x8xf32>
    %53 = vector.shape_cast %52 : vector<1x8x8xf32> to vector<8x8xf32>
    %cst_54 = arith.constant dense<0.000000e+00> : vector<8x324xf32>
    %54 = tpu.matmul %53, %51, %cst_54 {dimension_numbers = #tpu.dot_dimension_numbers<[1], [0], [0], [1], [0, 0, 1, 1], [], []>} : vector<8x8xf32>, vector<8x324xf32>, vector<8x324xf32> -> vector<8x324xf32>
    %55 = arith.addf %50, %54 : vector<8x324xf32>
    %c0_55 = arith.constant 0 : index
    %c0_56 = arith.constant 0 : index
    %56 = vector.load %arg3[%c0_55, %c0_56] : memref<8x1xf32, #tpu.memory_space<vmem>>, vector<8x1xf32>
    %57 = vector.broadcast %56 : vector<8x1xf32> to vector<8x324xf32>
    %58 = arith.addf %55, %57 : vector<8x324xf32>
    %cst_57 = arith.constant 0.000000e+00 : f32
    %59 = vector.broadcast %cst_57 : f32 to vector<8x324xf32>
    %60 = arith.maximumf %58, %59 : vector<8x324xf32>
    %c0_58 = arith.constant 0 : index
    %c0_59 = arith.constant 0 : index
    %61 = vector.load %arg32[%c0_58, %c0_59] : memref<1x324xf32, #tpu.memory_space<vmem>>, vector<1x324xf32>
    %62 = vector.broadcast %61 : vector<1x324xf32> to vector<8x324xf32>
    %63 = arith.mulf %60, %62 : vector<8x324xf32>
    %c0_60 = arith.constant 0 : index
    %c19_61 = arith.constant 19 : index
    %64 = vector.load %arg36[%c0_60, %c19_61] : memref<16x362xf32, #tpu.memory_space<vmem>>, vector<8x324xf32>
    tpu.vector_store %arg36[%c0_60, %c19_61], %63 {strides = array<i32>} : memref<16x362xf32, #tpu.memory_space<vmem>>, vector<8x324xf32>,
    %c0_62 = arith.constant 0 : index
    %c0_63 = arith.constant 0 : index
    %65 = vector.load %arg36[%c0_62, %c0_63] : memref<16x362xf32, #tpu.memory_space<vmem>>, vector<8x324xf32>
    %c0_64 = arith.constant 0 : index
    %c0_65 = arith.constant 0 : index
    %c0_66 = arith.constant 0 : index
    %66 = vector.load %arg4[%c0_64, %c0_65, %c0_66] : memref<9x8x8xf32, #tpu.memory_space<vmem>>, vector<1x8x8xf32>
    %67 = vector.shape_cast %66 : vector<1x8x8xf32> to vector<8x8xf32>
    %cst_67 = arith.constant dense<0.000000e+00> : vector<8x324xf32>
    %68 = tpu.matmul %67, %65, %cst_67 {dimension_numbers = #tpu.dot_dimension_numbers<[1], [0], [0], [1], [0, 0, 1, 1], [], []>} : vector<8x8xf32>, vector<8x324xf32>, vector<8x324xf32> -> vector<8x324xf32>
    %c0_68 = arith.constant 0 : index
    %c1_69 = arith.constant 1 : index
    %69 = vector.load %arg36[%c0_68, %c1_69] : memref<16x362xf32, #tpu.memory_space<vmem>>, vector<8x324xf32>
    %c1_70 = arith.constant 1 : index
    %c0_71 = arith.constant 0 : index
    %c0_72 = arith.constant 0 : index
    %70 = vector.load %arg4[%c1_70, %c0_71, %c0_72] : memref<9x8x8xf32, #tpu.memory_space<vmem>>, vector<1x8x8xf32>
    %71 = vector.shape_cast %70 : vector<1x8x8xf32> to vector<8x8xf32>
    %cst_73 = arith.constant dense<0.000000e+00> : vector<8x324xf32>
    %72 = tpu.matmul %71, %69, %cst_73 {dimension_numbers = #tpu.dot_dimension_numbers<[1], [0], [0], [1], [0, 0, 1, 1], [], []>} : vector<8x8xf32>, vector<8x324xf32>, vector<8x324xf32> -> vector<8x324xf32>
    %73 = arith.addf %68, %72 : vector<8x324xf32>
    %c0_74 = arith.constant 0 : index
    %c2_75 = arith.constant 2 : index
    %74 = vector.load %arg36[%c0_74, %c2_75] : memref<16x362xf32, #tpu.memory_space<vmem>>, vector<8x324xf32>
    %c2_76 = arith.constant 2 : index
    %c0_77 = arith.constant 0 : index
    %c0_78 = arith.constant 0 : index
    %75 = vector.load %arg4[%c2_76, %c0_77, %c0_78] : memref<9x8x8xf32, #tpu.memory_space<vmem>>, vector<1x8x8xf32>
    %76 = vector.shape_cast %75 : vector<1x8x8xf32> to vector<8x8xf32>
    %cst_79 = arith.constant dense<0.000000e+00> : vector<8x324xf32>
    %77 = tpu.matmul %76, %74, %cst_79 {dimension_numbers = #tpu.dot_dimension_numbers<[1], [0], [0], [1], [0, 0, 1, 1], [], []>} : vector<8x8xf32>, vector<8x324xf32>, vector<8x324xf32> -> vector<8x324xf32>
    %78 = arith.addf %73, %77 : vector<8x324xf32>
    %c0_80 = arith.constant 0 : index
    %c18_81 = arith.constant 18 : index
    %79 = vector.load %arg36[%c0_80, %c18_81] : memref<16x362xf32, #tpu.memory_space<vmem>>, vector<8x324xf32>
    %c3_82 = arith.constant 3 : index
    %c0_83 = arith.constant 0 : index
    %c0_84 = arith.constant 0 : index
    %80 = vector.load %arg4[%c3_82, %c0_83, %c0_84] : memref<9x8x8xf32, #tpu.memory_space<vmem>>, vector<1x8x8xf32>
    %81 = vector.shape_cast %80 : vector<1x8x8xf32> to vector<8x8xf32>
    %cst_85 = arith.constant dense<0.000000e+00> : vector<8x324xf32>
    %82 = tpu.matmul %81, %79, %cst_85 {dimension_numbers = #tpu.dot_dimension_numbers<[1], [0], [0], [1], [0, 0, 1, 1], [], []>} : vector<8x8xf32>, vector<8x324xf32>, vector<8x324xf32> -> vector<8x324xf32>
    %83 = arith.addf %78, %82 : vector<8x324xf32>
    %c0_86 = arith.constant 0 : index
    %c19_87 = arith.constant 19 : index
    %84 = vector.load %arg36[%c0_86, %c19_87] : memref<16x362xf32, #tpu.memory_space<vmem>>, vector<8x324xf32>
    %c4_88 = arith.constant 4 : index
    %c0_89 = arith.constant 0 : index
    %c0_90 = arith.constant 0 : index
    %85 = vector.load %arg4[%c4_88, %c0_89, %c0_90] : memref<9x8x8xf32, #tpu.memory_space<vmem>>, vector<1x8x8xf32>
    %86 = vector.shape_cast %85 : vector<1x8x8xf32> to vector<8x8xf32>
    %cst_91 = arith.constant dense<0.000000e+00> : vector<8x324xf32>
    %87 = tpu.matmul %86, %84, %cst_91 {dimension_numbers = #tpu.dot_dimension_numbers<[1], [0], [0], [1], [0, 0, 1, 1], [], []>} : vector<8x8xf32>, vector<8x324xf32>, vector<8x324xf32> -> vector<8x324xf32>
    %88 = arith.addf %83, %87 : vector<8x324xf32>
    %c0_92 = arith.constant 0 : index
    %c20_93 = arith.constant 20 : index
    %89 = vector.load %arg36[%c0_92, %c20_93] : memref<16x362xf32, #tpu.memory_space<vmem>>, vector<8x324xf32>
    %c5_94 = arith.constant 5 : index
    %c0_95 = arith.constant 0 : index
    %c0_96 = arith.constant 0 : index
    %90 = vector.load %arg4[%c5_94, %c0_95, %c0_96] : memref<9x8x8xf32, #tpu.memory_space<vmem>>, vector<1x8x8xf32>
    %91 = vector.shape_cast %90 : vector<1x8x8xf32> to vector<8x8xf32>
    %cst_97 = arith.constant dense<0.000000e+00> : vector<8x324xf32>
    %92 = tpu.matmul %91, %89, %cst_97 {dimension_numbers = #tpu.dot_dimension_numbers<[1], [0], [0], [1], [0, 0, 1, 1], [], []>} : vector<8x8xf32>, vector<8x324xf32>, vector<8x324xf32> -> vector<8x324xf32>
    %93 = arith.addf %88, %92 : vector<8x324xf32>
    %c0_98 = arith.constant 0 : index
    %c36_99 = arith.constant 36 : index
    %94 = vector.load %arg36[%c0_98, %c36_99] : memref<16x362xf32, #tpu.memory_space<vmem>>, vector<8x324xf32>
    %c6_100 = arith.constant 6 : index
    %c0_101 = arith.constant 0 : index
    %c0_102 = arith.constant 0 : index
    %95 = vector.load %arg4[%c6_100, %c0_101, %c0_102] : memref<9x8x8xf32, #tpu.memory_space<vmem>>, vector<1x8x8xf32>
    %96 = vector.shape_cast %95 : vector<1x8x8xf32> to vector<8x8xf32>
    %cst_103 = arith.constant dense<0.000000e+00> : vector<8x324xf32>
    %97 = tpu.matmul %96, %94, %cst_103 {dimension_numbers = #tpu.dot_dimension_numbers<[1], [0], [0], [1], [0, 0, 1, 1], [], []>} : vector<8x8xf32>, vector<8x324xf32>, vector<8x324xf32> -> vector<8x324xf32>
    %98 = arith.addf %93, %97 : vector<8x324xf32>
    %c0_104 = arith.constant 0 : index
    %c37_105 = arith.constant 37 : index
    %99 = vector.load %arg36[%c0_104, %c37_105] : memref<16x362xf32, #tpu.memory_space<vmem>>, vector<8x324xf32>
    %c7_106 = arith.constant 7 : index
    %c0_107 = arith.constant 0 : index
    %c0_108 = arith.constant 0 : index
    %100 = vector.load %arg4[%c7_106, %c0_107, %c0_108] : memref<9x8x8xf32, #tpu.memory_space<vmem>>, vector<1x8x8xf32>
    %101 = vector.shape_cast %100 : vector<1x8x8xf32> to vector<8x8xf32>
    %cst_109 = arith.constant dense<0.000000e+00> : vector<8x324xf32>
    %102 = tpu.matmul %101, %99, %cst_109 {dimension_numbers = #tpu.dot_dimension_numbers<[1], [0], [0], [1], [0, 0, 1, 1], [], []>} : vector<8x8xf32>, vector<8x324xf32>, vector<8x324xf32> -> vector<8x324xf32>
    %103 = arith.addf %98, %102 : vector<8x324xf32>
    %c0_110 = arith.constant 0 : index
    %c38_111 = arith.constant 38 : index
    %104 = vector.load %arg36[%c0_110, %c38_111] : memref<16x362xf32, #tpu.memory_space<vmem>>, vector<8x324xf32>
    %c8_112 = arith.constant 8 : index
    %c0_113 = arith.constant 0 : index
    %c0_114 = arith.constant 0 : index
    %105 = vector.load %arg4[%c8_112, %c0_113, %c0_114] : memref<9x8x8xf32, #tpu.memory_space<vmem>>, vector<1x8x8xf32>
    %106 = vector.shape_cast %105 : vector<1x8x8xf32> to vector<8x8xf32>
    %cst_115 = arith.constant dense<0.000000e+00> : vector<8x324xf32>
    %107 = tpu.matmul %106, %104, %cst_115 {dimension_numbers = #tpu.dot_dimension_numbers<[1], [0], [0], [1], [0, 0, 1, 1], [], []>} : vector<8x8xf32>, vector<8x324xf32>, vector<8x324xf32> -> vector<8x324xf32>
    %108 = arith.addf %103, %107 : vector<8x324xf32>
    %c0_116 = arith.constant 0 : index
    %c0_117 = arith.constant 0 : index
    %109 = vector.load %arg5[%c0_116, %c0_117] : memref<8x1xf32, #tpu.memory_space<vmem>>, vector<8x1xf32>
    %110 = vector.broadcast %109 : vector<8x1xf32> to vector<8x324xf32>
    %111 = arith.addf %108, %110 : vector<8x324xf32>
    %cst_118 = arith.constant 0.000000e+00 : f32
    %112 = vector.broadcast %cst_118 : f32 to vector<8x324xf32>
    %113 = arith.maximumf %111, %112 : vector<8x324xf32>
    %c0_119 = arith.constant 0 : index
    %c0_120 = arith.constant 0 : index
    %114 = vector.load %arg32[%c0_119, %c0_120] : memref<1x324xf32, #tpu.memory_space<vmem>>, vector<1x324xf32>
    %115 = vector.broadcast %114 : vector<1x324xf32> to vector<8x324xf32>
    %116 = arith.mulf %113, %115 : vector<8x324xf32>
    %c8_121 = arith.constant 8 : index
    %c19_122 = arith.constant 19 : index
    %117 = vector.load %arg36[%c8_121, %c19_122] : memref<16x362xf32, #tpu.memory_space<vmem>>, vector<8x324xf32>
    tpu.vector_store %arg36[%c8_121, %c19_122], %116 {strides = array<i32>} : memref<16x362xf32, #tpu.memory_space<vmem>>, vector<8x324xf32>,
    %c8_123 = arith.constant 8 : index
    %c19_124 = arith.constant 19 : index
    %118 = vector.load %arg36[%c8_123, %c19_124] : memref<16x362xf32, #tpu.memory_space<vmem>>, vector<8x324xf32>
    %c8_125 = arith.constant 8 : index
    %c20_126 = arith.constant 20 : index
    %119 = vector.load %arg36[%c8_125, %c20_126] : memref<16x362xf32, #tpu.memory_space<vmem>>, vector<8x324xf32>
    %120 = arith.maximumf %118, %119 : vector<8x324xf32>
    %c8_127 = arith.constant 8 : index
    %c37_128 = arith.constant 37 : index
    %121 = vector.load %arg36[%c8_127, %c37_128] : memref<16x362xf32, #tpu.memory_space<vmem>>, vector<8x324xf32>
    %c8_129 = arith.constant 8 : index
    %c38_130 = arith.constant 38 : index
    %122 = vector.load %arg36[%c8_129, %c38_130] : memref<16x362xf32, #tpu.memory_space<vmem>>, vector<8x324xf32>
    %123 = arith.maximumf %121, %122 : vector<8x324xf32>
    %124 = arith.maximumf %120, %123 : vector<8x324xf32>
    %c0_131 = arith.constant 0 : index
    %c0_132 = arith.constant 0 : index
    %125 = vector.load %arg30[%c0_131, %c0_132] : memref<324x100xf32, #tpu.memory_space<vmem>>, vector<324x100xf32>
    %cst_133 = arith.constant dense<0.000000e+00> : vector<8x100xf32>
    %126 = tpu.matmul %124, %125, %cst_133 {dimension_numbers = #tpu.dot_dimension_numbers<[1], [0], [0], [1], [0, 0, 1, 1], [], []>} : vector<8x324xf32>, vector<324x100xf32>, vector<8x100xf32> -> vector<8x100xf32>
    %c0_134 = arith.constant 0 : index
    %c11 = arith.constant 11 : index
    %127 = vector.load %arg37[%c0_134, %c11] : memref<32x122xf32, #tpu.memory_space<vmem>>, vector<8x100xf32>
    tpu.vector_store %arg37[%c0_134, %c11], %126 {strides = array<i32>} : memref<32x122xf32, #tpu.memory_space<vmem>>, vector<8x100xf32>,
    %c0_135 = arith.constant 0 : index
    %c0_136 = arith.constant 0 : index
    %128 = vector.load %arg37[%c0_135, %c0_136] : memref<32x122xf32, #tpu.memory_space<vmem>>, vector<8x100xf32>
    %c0_137 = arith.constant 0 : index
    %c0_138 = arith.constant 0 : index
    %c0_139 = arith.constant 0 : index
    %129 = vector.load %arg6[%c0_137, %c0_138, %c0_139] : memref<9x16x8xf32, #tpu.memory_space<vmem>>, vector<1x16x8xf32>
    %130 = vector.shape_cast %129 : vector<1x16x8xf32> to vector<16x8xf32>
    %cst_140 = arith.constant dense<0.000000e+00> : vector<16x100xf32>
    %131 = tpu.matmul %130, %128, %cst_140 {dimension_numbers = #tpu.dot_dimension_numbers<[1], [0], [0], [1], [0, 0, 1, 1], [], []>} : vector<16x8xf32>, vector<8x100xf32>, vector<16x100xf32> -> vector<16x100xf32>
    %c0_141 = arith.constant 0 : index
    %c1_142 = arith.constant 1 : index
    %132 = vector.load %arg37[%c0_141, %c1_142] : memref<32x122xf32, #tpu.memory_space<vmem>>, vector<8x100xf32>
    %c1_143 = arith.constant 1 : index
    %c0_144 = arith.constant 0 : index
    %c0_145 = arith.constant 0 : index
    %133 = vector.load %arg6[%c1_143, %c0_144, %c0_145] : memref<9x16x8xf32, #tpu.memory_space<vmem>>, vector<1x16x8xf32>
    %134 = vector.shape_cast %133 : vector<1x16x8xf32> to vector<16x8xf32>
    %cst_146 = arith.constant dense<0.000000e+00> : vector<16x100xf32>
    %135 = tpu.matmul %134, %132, %cst_146 {dimension_numbers = #tpu.dot_dimension_numbers<[1], [0], [0], [1], [0, 0, 1, 1], [], []>} : vector<16x8xf32>, vector<8x100xf32>, vector<16x100xf32> -> vector<16x100xf32>
    %136 = arith.addf %131, %135 : vector<16x100xf32>
    %c0_147 = arith.constant 0 : index
    %c2_148 = arith.constant 2 : index
    %137 = vector.load %arg37[%c0_147, %c2_148] : memref<32x122xf32, #tpu.memory_space<vmem>>, vector<8x100xf32>
    %c2_149 = arith.constant 2 : index
    %c0_150 = arith.constant 0 : index
    %c0_151 = arith.constant 0 : index
    %138 = vector.load %arg6[%c2_149, %c0_150, %c0_151] : memref<9x16x8xf32, #tpu.memory_space<vmem>>, vector<1x16x8xf32>
    %139 = vector.shape_cast %138 : vector<1x16x8xf32> to vector<16x8xf32>
    %cst_152 = arith.constant dense<0.000000e+00> : vector<16x100xf32>
    %140 = tpu.matmul %139, %137, %cst_152 {dimension_numbers = #tpu.dot_dimension_numbers<[1], [0], [0], [1], [0, 0, 1, 1], [], []>} : vector<16x8xf32>, vector<8x100xf32>, vector<16x100xf32> -> vector<16x100xf32>
    %141 = arith.addf %136, %140 : vector<16x100xf32>
    %c0_153 = arith.constant 0 : index
    %c10 = arith.constant 10 : index
    %142 = vector.load %arg37[%c0_153, %c10] : memref<32x122xf32, #tpu.memory_space<vmem>>, vector<8x100xf32>
    %c3_154 = arith.constant 3 : index
    %c0_155 = arith.constant 0 : index
    %c0_156 = arith.constant 0 : index
    %143 = vector.load %arg6[%c3_154, %c0_155, %c0_156] : memref<9x16x8xf32, #tpu.memory_space<vmem>>, vector<1x16x8xf32>
    %144 = vector.shape_cast %143 : vector<1x16x8xf32> to vector<16x8xf32>
    %cst_157 = arith.constant dense<0.000000e+00> : vector<16x100xf32>
    %145 = tpu.matmul %144, %142, %cst_157 {dimension_numbers = #tpu.dot_dimension_numbers<[1], [0], [0], [1], [0, 0, 1, 1], [], []>} : vector<16x8xf32>, vector<8x100xf32>, vector<16x100xf32> -> vector<16x100xf32>
    %146 = arith.addf %141, %145 : vector<16x100xf32>
    %c0_158 = arith.constant 0 : index
    %c11_159 = arith.constant 11 : index
    %147 = vector.load %arg37[%c0_158, %c11_159] : memref<32x122xf32, #tpu.memory_space<vmem>>, vector<8x100xf32>
    %c4_160 = arith.constant 4 : index
    %c0_161 = arith.constant 0 : index
    %c0_162 = arith.constant 0 : index
    %148 = vector.load %arg6[%c4_160, %c0_161, %c0_162] : memref<9x16x8xf32, #tpu.memory_space<vmem>>, vector<1x16x8xf32>
    %149 = vector.shape_cast %148 : vector<1x16x8xf32> to vector<16x8xf32>
    %cst_163 = arith.constant dense<0.000000e+00> : vector<16x100xf32>
    %150 = tpu.matmul %149, %147, %cst_163 {dimension_numbers = #tpu.dot_dimension_numbers<[1], [0], [0], [1], [0, 0, 1, 1], [], []>} : vector<16x8xf32>, vector<8x100xf32>, vector<16x100xf32> -> vector<16x100xf32>
    %151 = arith.addf %146, %150 : vector<16x100xf32>
    %c0_164 = arith.constant 0 : index
    %c12 = arith.constant 12 : index
    %152 = vector.load %arg37[%c0_164, %c12] : memref<32x122xf32, #tpu.memory_space<vmem>>, vector<8x100xf32>
    %c5_165 = arith.constant 5 : index
    %c0_166 = arith.constant 0 : index
    %c0_167 = arith.constant 0 : index
    %153 = vector.load %arg6[%c5_165, %c0_166, %c0_167] : memref<9x16x8xf32, #tpu.memory_space<vmem>>, vector<1x16x8xf32>
    %154 = vector.shape_cast %153 : vector<1x16x8xf32> to vector<16x8xf32>
    %cst_168 = arith.constant dense<0.000000e+00> : vector<16x100xf32>
    %155 = tpu.matmul %154, %152, %cst_168 {dimension_numbers = #tpu.dot_dimension_numbers<[1], [0], [0], [1], [0, 0, 1, 1], [], []>} : vector<16x8xf32>, vector<8x100xf32>, vector<16x100xf32> -> vector<16x100xf32>
    %156 = arith.addf %151, %155 : vector<16x100xf32>
    %c0_169 = arith.constant 0 : index
    %c20_170 = arith.constant 20 : index
    %157 = vector.load %arg37[%c0_169, %c20_170] : memref<32x122xf32, #tpu.memory_space<vmem>>, vector<8x100xf32>
    %c6_171 = arith.constant 6 : index
    %c0_172 = arith.constant 0 : index
    %c0_173 = arith.constant 0 : index
    %158 = vector.load %arg6[%c6_171, %c0_172, %c0_173] : memref<9x16x8xf32, #tpu.memory_space<vmem>>, vector<1x16x8xf32>
    %159 = vector.shape_cast %158 : vector<1x16x8xf32> to vector<16x8xf32>
    %cst_174 = arith.constant dense<0.000000e+00> : vector<16x100xf32>
    %160 = tpu.matmul %159, %157, %cst_174 {dimension_numbers = #tpu.dot_dimension_numbers<[1], [0], [0], [1], [0, 0, 1, 1], [], []>} : vector<16x8xf32>, vector<8x100xf32>, vector<16x100xf32> -> vector<16x100xf32>
    %161 = arith.addf %156, %160 : vector<16x100xf32>
    %c0_175 = arith.constant 0 : index
    %c21 = arith.constant 21 : index
    %162 = vector.load %arg37[%c0_175, %c21] : memref<32x122xf32, #tpu.memory_space<vmem>>, vector<8x100xf32>
    %c7_176 = arith.constant 7 : index
    %c0_177 = arith.constant 0 : index
    %c0_178 = arith.constant 0 : index
    %163 = vector.load %arg6[%c7_176, %c0_177, %c0_178] : memref<9x16x8xf32, #tpu.memory_space<vmem>>, vector<1x16x8xf32>
    %164 = vector.shape_cast %163 : vector<1x16x8xf32> to vector<16x8xf32>
    %cst_179 = arith.constant dense<0.000000e+00> : vector<16x100xf32>
    %165 = tpu.matmul %164, %162, %cst_179 {dimension_numbers = #tpu.dot_dimension_numbers<[1], [0], [0], [1], [0, 0, 1, 1], [], []>} : vector<16x8xf32>, vector<8x100xf32>, vector<16x100xf32> -> vector<16x100xf32>
    %166 = arith.addf %161, %165 : vector<16x100xf32>
    %c0_180 = arith.constant 0 : index
    %c22 = arith.constant 22 : index
    %167 = vector.load %arg37[%c0_180, %c22] : memref<32x122xf32, #tpu.memory_space<vmem>>, vector<8x100xf32>
    %c8_181 = arith.constant 8 : index
    %c0_182 = arith.constant 0 : index
    %c0_183 = arith.constant 0 : index
    %168 = vector.load %arg6[%c8_181, %c0_182, %c0_183] : memref<9x16x8xf32, #tpu.memory_space<vmem>>, vector<1x16x8xf32>
    %169 = vector.shape_cast %168 : vector<1x16x8xf32> to vector<16x8xf32>
    %cst_184 = arith.constant dense<0.000000e+00> : vector<16x100xf32>
    %170 = tpu.matmul %169, %167, %cst_184 {dimension_numbers = #tpu.dot_dimension_numbers<[1], [0], [0], [1], [0, 0, 1, 1], [], []>} : vector<16x8xf32>, vector<8x100xf32>, vector<16x100xf32> -> vector<16x100xf32>
    %171 = arith.addf %166, %170 : vector<16x100xf32>
    %c0_185 = arith.constant 0 : index
    %c0_186 = arith.constant 0 : index
    %172 = vector.load %arg7[%c0_185, %c0_186] : memref<16x1xf32, #tpu.memory_space<vmem>>, vector<16x1xf32>
    %173 = vector.broadcast %172 : vector<16x1xf32> to vector<16x100xf32>
    %174 = arith.addf %171, %173 : vector<16x100xf32>
    %cst_187 = arith.constant 0.000000e+00 : f32
    %175 = vector.broadcast %cst_187 : f32 to vector<16x100xf32>
    %176 = arith.maximumf %174, %175 : vector<16x100xf32>
    %c0_188 = arith.constant 0 : index
    %c0_189 = arith.constant 0 : index
    %177 = vector.load %arg33[%c0_188, %c0_189] : memref<1x100xf32, #tpu.memory_space<vmem>>, vector<1x100xf32>
    %178 = vector.broadcast %177 : vector<1x100xf32> to vector<16x100xf32>
    %179 = arith.mulf %176, %178 : vector<16x100xf32>
    %c0_190 = arith.constant 0 : index
    %c11_191 = arith.constant 11 : index
    %180 = vector.load %arg37[%c0_190, %c11_191] : memref<32x122xf32, #tpu.memory_space<vmem>>, vector<16x100xf32>
    tpu.vector_store %arg37[%c0_190, %c11_191], %179 {strides = array<i32>} : memref<32x122xf32, #tpu.memory_space<vmem>>, vector<16x100xf32>,
    %c0_192 = arith.constant 0 : index
    %c0_193 = arith.constant 0 : index
    %181 = vector.load %arg37[%c0_192, %c0_193] : memref<32x122xf32, #tpu.memory_space<vmem>>, vector<16x100xf32>
    %c0_194 = arith.constant 0 : index
    %c0_195 = arith.constant 0 : index
    %c0_196 = arith.constant 0 : index
    %182 = vector.load %arg8[%c0_194, %c0_195, %c0_196] : memref<9x16x16xf32, #tpu.memory_space<vmem>>, vector<1x16x16xf32>
    %183 = vector.shape_cast %182 : vector<1x16x16xf32> to vector<16x16xf32>
    %cst_197 = arith.constant dense<0.000000e+00> : vector<16x100xf32>
    %184 = tpu.matmul %183, %181, %cst_197 {dimension_numbers = #tpu.dot_dimension_numbers<[1], [0], [0], [1], [0, 0, 1, 1], [], []>} : vector<16x16xf32>, vector<16x100xf32>, vector<16x100xf32> -> vector<16x100xf32>
    %c0_198 = arith.constant 0 : index
    %c1_199 = arith.constant 1 : index
    %185 = vector.load %arg37[%c0_198, %c1_199] : memref<32x122xf32, #tpu.memory_space<vmem>>, vector<16x100xf32>
    %c1_200 = arith.constant 1 : index
    %c0_201 = arith.constant 0 : index
    %c0_202 = arith.constant 0 : index
    %186 = vector.load %arg8[%c1_200, %c0_201, %c0_202] : memref<9x16x16xf32, #tpu.memory_space<vmem>>, vector<1x16x16xf32>
    %187 = vector.shape_cast %186 : vector<1x16x16xf32> to vector<16x16xf32>
    %cst_203 = arith.constant dense<0.000000e+00> : vector<16x100xf32>
    %188 = tpu.matmul %187, %185, %cst_203 {dimension_numbers = #tpu.dot_dimension_numbers<[1], [0], [0], [1], [0, 0, 1, 1], [], []>} : vector<16x16xf32>, vector<16x100xf32>, vector<16x100xf32> -> vector<16x100xf32>
    %189 = arith.addf %184, %188 : vector<16x100xf32>
    %c0_204 = arith.constant 0 : index
    %c2_205 = arith.constant 2 : index
    %190 = vector.load %arg37[%c0_204, %c2_205] : memref<32x122xf32, #tpu.memory_space<vmem>>, vector<16x100xf32>
    %c2_206 = arith.constant 2 : index
    %c0_207 = arith.constant 0 : index
    %c0_208 = arith.constant 0 : index
    %191 = vector.load %arg8[%c2_206, %c0_207, %c0_208] : memref<9x16x16xf32, #tpu.memory_space<vmem>>, vector<1x16x16xf32>
    %192 = vector.shape_cast %191 : vector<1x16x16xf32> to vector<16x16xf32>
    %cst_209 = arith.constant dense<0.000000e+00> : vector<16x100xf32>
    %193 = tpu.matmul %192, %190, %cst_209 {dimension_numbers = #tpu.dot_dimension_numbers<[1], [0], [0], [1], [0, 0, 1, 1], [], []>} : vector<16x16xf32>, vector<16x100xf32>, vector<16x100xf32> -> vector<16x100xf32>
    %194 = arith.addf %189, %193 : vector<16x100xf32>
    %c0_210 = arith.constant 0 : index
    %c10_211 = arith.constant 10 : index
    %195 = vector.load %arg37[%c0_210, %c10_211] : memref<32x122xf32, #tpu.memory_space<vmem>>, vector<16x100xf32>
    %c3_212 = arith.constant 3 : index
    %c0_213 = arith.constant 0 : index
    %c0_214 = arith.constant 0 : index
    %196 = vector.load %arg8[%c3_212, %c0_213, %c0_214] : memref<9x16x16xf32, #tpu.memory_space<vmem>>, vector<1x16x16xf32>
    %197 = vector.shape_cast %196 : vector<1x16x16xf32> to vector<16x16xf32>
    %cst_215 = arith.constant dense<0.000000e+00> : vector<16x100xf32>
    %198 = tpu.matmul %197, %195, %cst_215 {dimension_numbers = #tpu.dot_dimension_numbers<[1], [0], [0], [1], [0, 0, 1, 1], [], []>} : vector<16x16xf32>, vector<16x100xf32>, vector<16x100xf32> -> vector<16x100xf32>
    %199 = arith.addf %194, %198 : vector<16x100xf32>
    %c0_216 = arith.constant 0 : index
    %c11_217 = arith.constant 11 : index
    %200 = vector.load %arg37[%c0_216, %c11_217] : memref<32x122xf32, #tpu.memory_space<vmem>>, vector<16x100xf32>
    %c4_218 = arith.constant 4 : index
    %c0_219 = arith.constant 0 : index
    %c0_220 = arith.constant 0 : index
    %201 = vector.load %arg8[%c4_218, %c0_219, %c0_220] : memref<9x16x16xf32, #tpu.memory_space<vmem>>, vector<1x16x16xf32>
    %202 = vector.shape_cast %201 : vector<1x16x16xf32> to vector<16x16xf32>
    %cst_221 = arith.constant dense<0.000000e+00> : vector<16x100xf32>
    %203 = tpu.matmul %202, %200, %cst_221 {dimension_numbers = #tpu.dot_dimension_numbers<[1], [0], [0], [1], [0, 0, 1, 1], [], []>} : vector<16x16xf32>, vector<16x100xf32>, vector<16x100xf32> -> vector<16x100xf32>
    %204 = arith.addf %199, %203 : vector<16x100xf32>
    %c0_222 = arith.constant 0 : index
    %c12_223 = arith.constant 12 : index
    %205 = vector.load %arg37[%c0_222, %c12_223] : memref<32x122xf32, #tpu.memory_space<vmem>>, vector<16x100xf32>
    %c5_224 = arith.constant 5 : index
    %c0_225 = arith.constant 0 : index
    %c0_226 = arith.constant 0 : index
    %206 = vector.load %arg8[%c5_224, %c0_225, %c0_226] : memref<9x16x16xf32, #tpu.memory_space<vmem>>, vector<1x16x16xf32>
    %207 = vector.shape_cast %206 : vector<1x16x16xf32> to vector<16x16xf32>
    %cst_227 = arith.constant dense<0.000000e+00> : vector<16x100xf32>
    %208 = tpu.matmul %207, %205, %cst_227 {dimension_numbers = #tpu.dot_dimension_numbers<[1], [0], [0], [1], [0, 0, 1, 1], [], []>} : vector<16x16xf32>, vector<16x100xf32>, vector<16x100xf32> -> vector<16x100xf32>
    %209 = arith.addf %204, %208 : vector<16x100xf32>
    %c0_228 = arith.constant 0 : index
    %c20_229 = arith.constant 20 : index
    %210 = vector.load %arg37[%c0_228, %c20_229] : memref<32x122xf32, #tpu.memory_space<vmem>>, vector<16x100xf32>
    %c6_230 = arith.constant 6 : index
    %c0_231 = arith.constant 0 : index
    %c0_232 = arith.constant 0 : index
    %211 = vector.load %arg8[%c6_230, %c0_231, %c0_232] : memref<9x16x16xf32, #tpu.memory_space<vmem>>, vector<1x16x16xf32>
    %212 = vector.shape_cast %211 : vector<1x16x16xf32> to vector<16x16xf32>
    %cst_233 = arith.constant dense<0.000000e+00> : vector<16x100xf32>
    %213 = tpu.matmul %212, %210, %cst_233 {dimension_numbers = #tpu.dot_dimension_numbers<[1], [0], [0], [1], [0, 0, 1, 1], [], []>} : vector<16x16xf32>, vector<16x100xf32>, vector<16x100xf32> -> vector<16x100xf32>
    %214 = arith.addf %209, %213 : vector<16x100xf32>
    %c0_234 = arith.constant 0 : index
    %c21_235 = arith.constant 21 : index
    %215 = vector.load %arg37[%c0_234, %c21_235] : memref<32x122xf32, #tpu.memory_space<vmem>>, vector<16x100xf32>
    %c7_236 = arith.constant 7 : index
    %c0_237 = arith.constant 0 : index
    %c0_238 = arith.constant 0 : index
    %216 = vector.load %arg8[%c7_236, %c0_237, %c0_238] : memref<9x16x16xf32, #tpu.memory_space<vmem>>, vector<1x16x16xf32>
    %217 = vector.shape_cast %216 : vector<1x16x16xf32> to vector<16x16xf32>
    %cst_239 = arith.constant dense<0.000000e+00> : vector<16x100xf32>
    %218 = tpu.matmul %217, %215, %cst_239 {dimension_numbers = #tpu.dot_dimension_numbers<[1], [0], [0], [1], [0, 0, 1, 1], [], []>} : vector<16x16xf32>, vector<16x100xf32>, vector<16x100xf32> -> vector<16x100xf32>
    %219 = arith.addf %214, %218 : vector<16x100xf32>
    %c0_240 = arith.constant 0 : index
    %c22_241 = arith.constant 22 : index
    %220 = vector.load %arg37[%c0_240, %c22_241] : memref<32x122xf32, #tpu.memory_space<vmem>>, vector<16x100xf32>
    %c8_242 = arith.constant 8 : index
    %c0_243 = arith.constant 0 : index
    %c0_244 = arith.constant 0 : index
    %221 = vector.load %arg8[%c8_242, %c0_243, %c0_244] : memref<9x16x16xf32, #tpu.memory_space<vmem>>, vector<1x16x16xf32>
    %222 = vector.shape_cast %221 : vector<1x16x16xf32> to vector<16x16xf32>
    %cst_245 = arith.constant dense<0.000000e+00> : vector<16x100xf32>
    %223 = tpu.matmul %222, %220, %cst_245 {dimension_numbers = #tpu.dot_dimension_numbers<[1], [0], [0], [1], [0, 0, 1, 1], [], []>} : vector<16x16xf32>, vector<16x100xf32>, vector<16x100xf32> -> vector<16x100xf32>
    %224 = arith.addf %219, %223 : vector<16x100xf32>
    %c0_246 = arith.constant 0 : index
    %c0_247 = arith.constant 0 : index
    %225 = vector.load %arg9[%c0_246, %c0_247] : memref<16x1xf32, #tpu.memory_space<vmem>>, vector<16x1xf32>
    %226 = vector.broadcast %225 : vector<16x1xf32> to vector<16x100xf32>
    %227 = arith.addf %224, %226 : vector<16x100xf32>
    %cst_248 = arith.constant 0.000000e+00 : f32
    %228 = vector.broadcast %cst_248 : f32 to vector<16x100xf32>
    %229 = arith.maximumf %227, %228 : vector<16x100xf32>
    %c0_249 = arith.constant 0 : index
    %c0_250 = arith.constant 0 : index
    %230 = vector.load %arg33[%c0_249, %c0_250] : memref<1x100xf32, #tpu.memory_space<vmem>>, vector<1x100xf32>
    %231 = vector.broadcast %230 : vector<1x100xf32> to vector<16x100xf32>
    %232 = arith.mulf %229, %231 : vector<16x100xf32>
    %c16 = arith.constant 16 : index
    %c11_251 = arith.constant 11 : index
    %233 = vector.load %arg37[%c16, %c11_251] : memref<32x122xf32, #tpu.memory_space<vmem>>, vector<16x100xf32>
    tpu.vector_store %arg37[%c16, %c11_251], %232 {strides = array<i32>} : memref<32x122xf32, #tpu.memory_space<vmem>>, vector<16x100xf32>,
    %c16_252 = arith.constant 16 : index
    %c11_253 = arith.constant 11 : index
    %234 = vector.load %arg37[%c16_252, %c11_253] : memref<32x122xf32, #tpu.memory_space<vmem>>, vector<16x100xf32>
    %c16_254 = arith.constant 16 : index
    %c12_255 = arith.constant 12 : index
    %235 = vector.load %arg37[%c16_254, %c12_255] : memref<32x122xf32, #tpu.memory_space<vmem>>, vector<16x100xf32>
    %236 = arith.maximumf %234, %235 : vector<16x100xf32>
    %c16_256 = arith.constant 16 : index
    %c21_257 = arith.constant 21 : index
    %237 = vector.load %arg37[%c16_256, %c21_257] : memref<32x122xf32, #tpu.memory_space<vmem>>, vector<16x100xf32>
    %c16_258 = arith.constant 16 : index
    %c22_259 = arith.constant 22 : index
    %238 = vector.load %arg37[%c16_258, %c22_259] : memref<32x122xf32, #tpu.memory_space<vmem>>, vector<16x100xf32>
    %239 = arith.maximumf %237, %238 : vector<16x100xf32>
    %240 = arith.maximumf %236, %239 : vector<16x100xf32>
    %c0_260 = arith.constant 0 : index
    %c0_261 = arith.constant 0 : index
    %241 = vector.load %arg31[%c0_260, %c0_261] : memref<100x36xf32, #tpu.memory_space<vmem>>, vector<100x36xf32>
    %cst_262 = arith.constant dense<0.000000e+00> : vector<16x36xf32>
    %242 = tpu.matmul %240, %241, %cst_262 {dimension_numbers = #tpu.dot_dimension_numbers<[1], [0], [0], [1], [0, 0, 1, 1], [], []>} : vector<16x100xf32>, vector<100x36xf32>, vector<16x36xf32> -> vector<16x36xf32>
    %c0_263 = arith.constant 0 : index
    %c7_264 = arith.constant 7 : index
    %243 = vector.load %arg38[%c0_263, %c7_264] : memref<32x50xf32, #tpu.memory_space<vmem>>, vector<16x36xf32>
    tpu.vector_store %arg38[%c0_263, %c7_264], %242 {strides = array<i32>} : memref<32x50xf32, #tpu.memory_space<vmem>>, vector<16x36xf32>,
    %c0_265 = arith.constant 0 : index
    %c0_266 = arith.constant 0 : index
    %244 = vector.load %arg38[%c0_265, %c0_266] : memref<32x50xf32, #tpu.memory_space<vmem>>, vector<16x36xf32>
    %c0_267 = arith.constant 0 : index
    %c0_268 = arith.constant 0 : index
    %c0_269 = arith.constant 0 : index
    %245 = vector.load %arg10[%c0_267, %c0_268, %c0_269] : memref<9x32x16xf32, #tpu.memory_space<vmem>>, vector<1x32x16xf32>
    %246 = vector.shape_cast %245 : vector<1x32x16xf32> to vector<32x16xf32>
    %cst_270 = arith.constant dense<0.000000e+00> : vector<32x36xf32>
    %247 = tpu.matmul %246, %244, %cst_270 {dimension_numbers = #tpu.dot_dimension_numbers<[1], [0], [0], [1], [0, 0, 1, 1], [], []>} : vector<32x16xf32>, vector<16x36xf32>, vector<32x36xf32> -> vector<32x36xf32>
    %c0_271 = arith.constant 0 : index
    %c1_272 = arith.constant 1 : index
    %248 = vector.load %arg38[%c0_271, %c1_272] : memref<32x50xf32, #tpu.memory_space<vmem>>, vector<16x36xf32>
    %c1_273 = arith.constant 1 : index
    %c0_274 = arith.constant 0 : index
    %c0_275 = arith.constant 0 : index
    %249 = vector.load %arg10[%c1_273, %c0_274, %c0_275] : memref<9x32x16xf32, #tpu.memory_space<vmem>>, vector<1x32x16xf32>
    %250 = vector.shape_cast %249 : vector<1x32x16xf32> to vector<32x16xf32>
    %cst_276 = arith.constant dense<0.000000e+00> : vector<32x36xf32>
    %251 = tpu.matmul %250, %248, %cst_276 {dimension_numbers = #tpu.dot_dimension_numbers<[1], [0], [0], [1], [0, 0, 1, 1], [], []>} : vector<32x16xf32>, vector<16x36xf32>, vector<32x36xf32> -> vector<32x36xf32>
    %252 = arith.addf %247, %251 : vector<32x36xf32>
    %c0_277 = arith.constant 0 : index
    %c2_278 = arith.constant 2 : index
    %253 = vector.load %arg38[%c0_277, %c2_278] : memref<32x50xf32, #tpu.memory_space<vmem>>, vector<16x36xf32>
    %c2_279 = arith.constant 2 : index
    %c0_280 = arith.constant 0 : index
    %c0_281 = arith.constant 0 : index
    %254 = vector.load %arg10[%c2_279, %c0_280, %c0_281] : memref<9x32x16xf32, #tpu.memory_space<vmem>>, vector<1x32x16xf32>
    %255 = vector.shape_cast %254 : vector<1x32x16xf32> to vector<32x16xf32>
    %cst_282 = arith.constant dense<0.000000e+00> : vector<32x36xf32>
    %256 = tpu.matmul %255, %253, %cst_282 {dimension_numbers = #tpu.dot_dimension_numbers<[1], [0], [0], [1], [0, 0, 1, 1], [], []>} : vector<32x16xf32>, vector<16x36xf32>, vector<32x36xf32> -> vector<32x36xf32>
    %257 = arith.addf %252, %256 : vector<32x36xf32>
    %c0_283 = arith.constant 0 : index
    %c6_284 = arith.constant 6 : index
    %258 = vector.load %arg38[%c0_283, %c6_284] : memref<32x50xf32, #tpu.memory_space<vmem>>, vector<16x36xf32>
    %c3_285 = arith.constant 3 : index
    %c0_286 = arith.constant 0 : index
    %c0_287 = arith.constant 0 : index
    %259 = vector.load %arg10[%c3_285, %c0_286, %c0_287] : memref<9x32x16xf32, #tpu.memory_space<vmem>>, vector<1x32x16xf32>
    %260 = vector.shape_cast %259 : vector<1x32x16xf32> to vector<32x16xf32>
    %cst_288 = arith.constant dense<0.000000e+00> : vector<32x36xf32>
    %261 = tpu.matmul %260, %258, %cst_288 {dimension_numbers = #tpu.dot_dimension_numbers<[1], [0], [0], [1], [0, 0, 1, 1], [], []>} : vector<32x16xf32>, vector<16x36xf32>, vector<32x36xf32> -> vector<32x36xf32>
    %262 = arith.addf %257, %261 : vector<32x36xf32>
    %c0_289 = arith.constant 0 : index
    %c7_290 = arith.constant 7 : index
    %263 = vector.load %arg38[%c0_289, %c7_290] : memref<32x50xf32, #tpu.memory_space<vmem>>, vector<16x36xf32>
    %c4_291 = arith.constant 4 : index
    %c0_292 = arith.constant 0 : index
    %c0_293 = arith.constant 0 : index
    %264 = vector.load %arg10[%c4_291, %c0_292, %c0_293] : memref<9x32x16xf32, #tpu.memory_space<vmem>>, vector<1x32x16xf32>
    %265 = vector.shape_cast %264 : vector<1x32x16xf32> to vector<32x16xf32>
    %cst_294 = arith.constant dense<0.000000e+00> : vector<32x36xf32>
    %266 = tpu.matmul %265, %263, %cst_294 {dimension_numbers = #tpu.dot_dimension_numbers<[1], [0], [0], [1], [0, 0, 1, 1], [], []>} : vector<32x16xf32>, vector<16x36xf32>, vector<32x36xf32> -> vector<32x36xf32>
    %267 = arith.addf %262, %266 : vector<32x36xf32>
    %c0_295 = arith.constant 0 : index
    %c8_296 = arith.constant 8 : index
    %268 = vector.load %arg38[%c0_295, %c8_296] : memref<32x50xf32, #tpu.memory_space<vmem>>, vector<16x36xf32>
    %c5_297 = arith.constant 5 : index
    %c0_298 = arith.constant 0 : index
    %c0_299 = arith.constant 0 : index
    %269 = vector.load %arg10[%c5_297, %c0_298, %c0_299] : memref<9x32x16xf32, #tpu.memory_space<vmem>>, vector<1x32x16xf32>
    %270 = vector.shape_cast %269 : vector<1x32x16xf32> to vector<32x16xf32>
    %cst_300 = arith.constant dense<0.000000e+00> : vector<32x36xf32>
    %271 = tpu.matmul %270, %268, %cst_300 {dimension_numbers = #tpu.dot_dimension_numbers<[1], [0], [0], [1], [0, 0, 1, 1], [], []>} : vector<32x16xf32>, vector<16x36xf32>, vector<32x36xf32> -> vector<32x36xf32>
    %272 = arith.addf %267, %271 : vector<32x36xf32>
    %c0_301 = arith.constant 0 : index
    %c12_302 = arith.constant 12 : index
    %273 = vector.load %arg38[%c0_301, %c12_302] : memref<32x50xf32, #tpu.memory_space<vmem>>, vector<16x36xf32>
    %c6_303 = arith.constant 6 : index
    %c0_304 = arith.constant 0 : index
    %c0_305 = arith.constant 0 : index
    %274 = vector.load %arg10[%c6_303, %c0_304, %c0_305] : memref<9x32x16xf32, #tpu.memory_space<vmem>>, vector<1x32x16xf32>
    %275 = vector.shape_cast %274 : vector<1x32x16xf32> to vector<32x16xf32>
    %cst_306 = arith.constant dense<0.000000e+00> : vector<32x36xf32>
    %276 = tpu.matmul %275, %273, %cst_306 {dimension_numbers = #tpu.dot_dimension_numbers<[1], [0], [0], [1], [0, 0, 1, 1], [], []>} : vector<32x16xf32>, vector<16x36xf32>, vector<32x36xf32> -> vector<32x36xf32>
    %277 = arith.addf %272, %276 : vector<32x36xf32>
    %c0_307 = arith.constant 0 : index
    %c13 = arith.constant 13 : index
    %278 = vector.load %arg38[%c0_307, %c13] : memref<32x50xf32, #tpu.memory_space<vmem>>, vector<16x36xf32>
    %c7_308 = arith.constant 7 : index
    %c0_309 = arith.constant 0 : index
    %c0_310 = arith.constant 0 : index
    %279 = vector.load %arg10[%c7_308, %c0_309, %c0_310] : memref<9x32x16xf32, #tpu.memory_space<vmem>>, vector<1x32x16xf32>
    %280 = vector.shape_cast %279 : vector<1x32x16xf32> to vector<32x16xf32>
    %cst_311 = arith.constant dense<0.000000e+00> : vector<32x36xf32>
    %281 = tpu.matmul %280, %278, %cst_311 {dimension_numbers = #tpu.dot_dimension_numbers<[1], [0], [0], [1], [0, 0, 1, 1], [], []>} : vector<32x16xf32>, vector<16x36xf32>, vector<32x36xf32> -> vector<32x36xf32>
    %282 = arith.addf %277, %281 : vector<32x36xf32>
    %c0_312 = arith.constant 0 : index
    %c14 = arith.constant 14 : index
    %283 = vector.load %arg38[%c0_312, %c14] : memref<32x50xf32, #tpu.memory_space<vmem>>, vector<16x36xf32>
    %c8_313 = arith.constant 8 : index
    %c0_314 = arith.constant 0 : index
    %c0_315 = arith.constant 0 : index
    %284 = vector.load %arg10[%c8_313, %c0_314, %c0_315] : memref<9x32x16xf32, #tpu.memory_space<vmem>>, vector<1x32x16xf32>
    %285 = vector.shape_cast %284 : vector<1x32x16xf32> to vector<32x16xf32>
    %cst_316 = arith.constant dense<0.000000e+00> : vector<32x36xf32>
    %286 = tpu.matmul %285, %283, %cst_316 {dimension_numbers = #tpu.dot_dimension_numbers<[1], [0], [0], [1], [0, 0, 1, 1], [], []>} : vector<32x16xf32>, vector<16x36xf32>, vector<32x36xf32> -> vector<32x36xf32>
    %287 = arith.addf %282, %286 : vector<32x36xf32>
    %c0_317 = arith.constant 0 : index
    %c0_318 = arith.constant 0 : index
    %288 = vector.load %arg11[%c0_317, %c0_318] : memref<32x1xf32, #tpu.memory_space<vmem>>, vector<32x1xf32>
    %289 = vector.broadcast %288 : vector<32x1xf32> to vector<32x36xf32>
    %290 = arith.addf %287, %289 : vector<32x36xf32>
    %cst_319 = arith.constant 0.000000e+00 : f32
    %291 = vector.broadcast %cst_319 : f32 to vector<32x36xf32>
    %292 = arith.maximumf %290, %291 : vector<32x36xf32>
    %c0_320 = arith.constant 0 : index
    %c0_321 = arith.constant 0 : index
    %293 = vector.load %arg34[%c0_320, %c0_321] : memref<1x36xf32, #tpu.memory_space<vmem>>, vector<1x36xf32>
    %294 = vector.broadcast %293 : vector<1x36xf32> to vector<32x36xf32>
    %295 = arith.mulf %292, %294 : vector<32x36xf32>
    %c0_322 = arith.constant 0 : index
    %c7_323 = arith.constant 7 : index
    %296 = vector.load %arg38[%c0_322, %c7_323] : memref<32x50xf32, #tpu.memory_space<vmem>>, vector<32x36xf32>
    tpu.vector_store %arg38[%c0_322, %c7_323], %295 {strides = array<i32>} : memref<32x50xf32, #tpu.memory_space<vmem>>, vector<32x36xf32>,
    %c0_324 = arith.constant 0 : index
    %c0_325 = arith.constant 0 : index
    %297 = vector.load %arg38[%c0_324, %c0_325] : memref<32x50xf32, #tpu.memory_space<vmem>>, vector<32x36xf32>
    %c0_326 = arith.constant 0 : index
    %c0_327 = arith.constant 0 : index
    %c0_328 = arith.constant 0 : index
    %298 = vector.load %arg12[%c0_326, %c0_327, %c0_328] : memref<9x32x32xf32, #tpu.memory_space<vmem>>, vector<1x32x32xf32>
    %299 = vector.shape_cast %298 : vector<1x32x32xf32> to vector<32x32xf32>
    %cst_329 = arith.constant dense<0.000000e+00> : vector<32x36xf32>
    %300 = tpu.matmul %299, %297, %cst_329 {dimension_numbers = #tpu.dot_dimension_numbers<[1], [0], [0], [1], [0, 0, 1, 1], [], []>} : vector<32x32xf32>, vector<32x36xf32>, vector<32x36xf32> -> vector<32x36xf32>
    %c0_330 = arith.constant 0 : index
    %c1_331 = arith.constant 1 : index
    %301 = vector.load %arg38[%c0_330, %c1_331] : memref<32x50xf32, #tpu.memory_space<vmem>>, vector<32x36xf32>
    %c1_332 = arith.constant 1 : index
    %c0_333 = arith.constant 0 : index
    %c0_334 = arith.constant 0 : index
    %302 = vector.load %arg12[%c1_332, %c0_333, %c0_334] : memref<9x32x32xf32, #tpu.memory_space<vmem>>, vector<1x32x32xf32>
    %303 = vector.shape_cast %302 : vector<1x32x32xf32> to vector<32x32xf32>
    %cst_335 = arith.constant dense<0.000000e+00> : vector<32x36xf32>
    %304 = tpu.matmul %303, %301, %cst_335 {dimension_numbers = #tpu.dot_dimension_numbers<[1], [0], [0], [1], [0, 0, 1, 1], [], []>} : vector<32x32xf32>, vector<32x36xf32>, vector<32x36xf32> -> vector<32x36xf32>
    %305 = arith.addf %300, %304 : vector<32x36xf32>
    %c0_336 = arith.constant 0 : index
    %c2_337 = arith.constant 2 : index
    %306 = vector.load %arg38[%c0_336, %c2_337] : memref<32x50xf32, #tpu.memory_space<vmem>>, vector<32x36xf32>
    %c2_338 = arith.constant 2 : index
    %c0_339 = arith.constant 0 : index
    %c0_340 = arith.constant 0 : index
    %307 = vector.load %arg12[%c2_338, %c0_339, %c0_340] : memref<9x32x32xf32, #tpu.memory_space<vmem>>, vector<1x32x32xf32>
    %308 = vector.shape_cast %307 : vector<1x32x32xf32> to vector<32x32xf32>
    %cst_341 = arith.constant dense<0.000000e+00> : vector<32x36xf32>
    %309 = tpu.matmul %308, %306, %cst_341 {dimension_numbers = #tpu.dot_dimension_numbers<[1], [0], [0], [1], [0, 0, 1, 1], [], []>} : vector<32x32xf32>, vector<32x36xf32>, vector<32x36xf32> -> vector<32x36xf32>
    %310 = arith.addf %305, %309 : vector<32x36xf32>
    %c0_342 = arith.constant 0 : index
    %c6_343 = arith.constant 6 : index
    %311 = vector.load %arg38[%c0_342, %c6_343] : memref<32x50xf32, #tpu.memory_space<vmem>>, vector<32x36xf32>
    %c3_344 = arith.constant 3 : index
    %c0_345 = arith.constant 0 : index
    %c0_346 = arith.constant 0 : index
    %312 = vector.load %arg12[%c3_344, %c0_345, %c0_346] : memref<9x32x32xf32, #tpu.memory_space<vmem>>, vector<1x32x32xf32>
    %313 = vector.shape_cast %312 : vector<1x32x32xf32> to vector<32x32xf32>
    %cst_347 = arith.constant dense<0.000000e+00> : vector<32x36xf32>
    %314 = tpu.matmul %313, %311, %cst_347 {dimension_numbers = #tpu.dot_dimension_numbers<[1], [0], [0], [1], [0, 0, 1, 1], [], []>} : vector<32x32xf32>, vector<32x36xf32>, vector<32x36xf32> -> vector<32x36xf32>
    %315 = arith.addf %310, %314 : vector<32x36xf32>
    %c0_348 = arith.constant 0 : index
    %c7_349 = arith.constant 7 : index
    %316 = vector.load %arg38[%c0_348, %c7_349] : memref<32x50xf32, #tpu.memory_space<vmem>>, vector<32x36xf32>
    %c4_350 = arith.constant 4 : index
    %c0_351 = arith.constant 0 : index
    %c0_352 = arith.constant 0 : index
    %317 = vector.load %arg12[%c4_350, %c0_351, %c0_352] : memref<9x32x32xf32, #tpu.memory_space<vmem>>, vector<1x32x32xf32>
    %318 = vector.shape_cast %317 : vector<1x32x32xf32> to vector<32x32xf32>
    %cst_353 = arith.constant dense<0.000000e+00> : vector<32x36xf32>
    %319 = tpu.matmul %318, %316, %cst_353 {dimension_numbers = #tpu.dot_dimension_numbers<[1], [0], [0], [1], [0, 0, 1, 1], [], []>} : vector<32x32xf32>, vector<32x36xf32>, vector<32x36xf32> -> vector<32x36xf32>
    %320 = arith.addf %315, %319 : vector<32x36xf32>
    %c0_354 = arith.constant 0 : index
    %c8_355 = arith.constant 8 : index
    %321 = vector.load %arg38[%c0_354, %c8_355] : memref<32x50xf32, #tpu.memory_space<vmem>>, vector<32x36xf32>
    %c5_356 = arith.constant 5 : index
    %c0_357 = arith.constant 0 : index
    %c0_358 = arith.constant 0 : index
    %322 = vector.load %arg12[%c5_356, %c0_357, %c0_358] : memref<9x32x32xf32, #tpu.memory_space<vmem>>, vector<1x32x32xf32>
    %323 = vector.shape_cast %322 : vector<1x32x32xf32> to vector<32x32xf32>
    %cst_359 = arith.constant dense<0.000000e+00> : vector<32x36xf32>
    %324 = tpu.matmul %323, %321, %cst_359 {dimension_numbers = #tpu.dot_dimension_numbers<[1], [0], [0], [1], [0, 0, 1, 1], [], []>} : vector<32x32xf32>, vector<32x36xf32>, vector<32x36xf32> -> vector<32x36xf32>
    %325 = arith.addf %320, %324 : vector<32x36xf32>
    %c0_360 = arith.constant 0 : index
    %c12_361 = arith.constant 12 : index
    %326 = vector.load %arg38[%c0_360, %c12_361] : memref<32x50xf32, #tpu.memory_space<vmem>>, vector<32x36xf32>
    %c6_362 = arith.constant 6 : index
    %c0_363 = arith.constant 0 : index
    %c0_364 = arith.constant 0 : index
    %327 = vector.load %arg12[%c6_362, %c0_363, %c0_364] : memref<9x32x32xf32, #tpu.memory_space<vmem>>, vector<1x32x32xf32>
    %328 = vector.shape_cast %327 : vector<1x32x32xf32> to vector<32x32xf32>
    %cst_365 = arith.constant dense<0.000000e+00> : vector<32x36xf32>
    %329 = tpu.matmul %328, %326, %cst_365 {dimension_numbers = #tpu.dot_dimension_numbers<[1], [0], [0], [1], [0, 0, 1, 1], [], []>} : vector<32x32xf32>, vector<32x36xf32>, vector<32x36xf32> -> vector<32x36xf32>
    %330 = arith.addf %325, %329 : vector<32x36xf32>
    %c0_366 = arith.constant 0 : index
    %c13_367 = arith.constant 13 : index
    %331 = vector.load %arg38[%c0_366, %c13_367] : memref<32x50xf32, #tpu.memory_space<vmem>>, vector<32x36xf32>
    %c7_368 = arith.constant 7 : index
    %c0_369 = arith.constant 0 : index
    %c0_370 = arith.constant 0 : index
    %332 = vector.load %arg12[%c7_368, %c0_369, %c0_370] : memref<9x32x32xf32, #tpu.memory_space<vmem>>, vector<1x32x32xf32>
    %333 = vector.shape_cast %332 : vector<1x32x32xf32> to vector<32x32xf32>
    %cst_371 = arith.constant dense<0.000000e+00> : vector<32x36xf32>
    %334 = tpu.matmul %333, %331, %cst_371 {dimension_numbers = #tpu.dot_dimension_numbers<[1], [0], [0], [1], [0, 0, 1, 1], [], []>} : vector<32x32xf32>, vector<32x36xf32>, vector<32x36xf32> -> vector<32x36xf32>
    %335 = arith.addf %330, %334 : vector<32x36xf32>
    %c0_372 = arith.constant 0 : index
    %c14_373 = arith.constant 14 : index
    %336 = vector.load %arg38[%c0_372, %c14_373] : memref<32x50xf32, #tpu.memory_space<vmem>>, vector<32x36xf32>
    %c8_374 = arith.constant 8 : index
    %c0_375 = arith.constant 0 : index
    %c0_376 = arith.constant 0 : index
    %337 = vector.load %arg12[%c8_374, %c0_375, %c0_376] : memref<9x32x32xf32, #tpu.memory_space<vmem>>, vector<1x32x32xf32>
    %338 = vector.shape_cast %337 : vector<1x32x32xf32> to vector<32x32xf32>
    %cst_377 = arith.constant dense<0.000000e+00> : vector<32x36xf32>
    %339 = tpu.matmul %338, %336, %cst_377 {dimension_numbers = #tpu.dot_dimension_numbers<[1], [0], [0], [1], [0, 0, 1, 1], [], []>} : vector<32x32xf32>, vector<32x36xf32>, vector<32x36xf32> -> vector<32x36xf32>
    %340 = arith.addf %335, %339 : vector<32x36xf32>
    %c0_378 = arith.constant 0 : index
    %c0_379 = arith.constant 0 : index
    %341 = vector.load %arg13[%c0_378, %c0_379] : memref<32x1xf32, #tpu.memory_space<vmem>>, vector<32x1xf32>
    %342 = vector.broadcast %341 : vector<32x1xf32> to vector<32x36xf32>
    %343 = arith.addf %340, %342 : vector<32x36xf32>
    %cst_380 = arith.constant 0.000000e+00 : f32
    %344 = vector.broadcast %cst_380 : f32 to vector<32x36xf32>
    %345 = arith.maximumf %343, %344 : vector<32x36xf32>
    %c0_381 = arith.constant 0 : index
    %c0_382 = arith.constant 0 : index
    %346 = vector.load %arg34[%c0_381, %c0_382] : memref<1x36xf32, #tpu.memory_space<vmem>>, vector<1x36xf32>
    %347 = vector.broadcast %346 : vector<1x36xf32> to vector<32x36xf32>
    %348 = arith.mulf %345, %347 : vector<32x36xf32>
    %c0_383 = arith.constant 0 : index
    %c0_384 = arith.constant 0 : index
    %349 = vector.load %arg14[%c0_383, %c0_384] : memref<64x32xf32, #tpu.memory_space<vmem>>, vector<64x32xf32>
    %cst_385 = arith.constant dense<0.000000e+00> : vector<64x36xf32>
    %350 = tpu.matmul %349, %348, %cst_385 {dimension_numbers = #tpu.dot_dimension_numbers<[1], [0], [0], [1], [0, 0, 1, 1], [], []>} : vector<64x32xf32>, vector<32x36xf32>, vector<64x36xf32> -> vector<64x36xf32>
    %351 = vector.extract_strided_slice %350 {offsets = [0, 0], sizes = [16, 36], strides = [1, 1]} : vector<64x36xf32> to vector<16x36xf32>
    %c0_386 = arith.constant 0 : index
    %c0_387 = arith.constant 0 : index
    %c0_388 = arith.constant 0 : index
    %352 = vector.load %arg16[%c0_386, %c0_387, %c0_388] : memref<4x36x100xf32, #tpu.memory_space<vmem>>, vector<1x36x100xf32>
    %353 = vector.shape_cast %352 : vector<1x36x100xf32> to vector<36x100xf32>
    %cst_389 = arith.constant dense<0.000000e+00> : vector<16x100xf32>
    %354 = tpu.matmul %351, %353, %cst_389 {dimension_numbers = #tpu.dot_dimension_numbers<[1], [0], [0], [1], [0, 0, 1, 1], [], []>} : vector<16x36xf32>, vector<36x100xf32>, vector<16x100xf32> -> vector<16x100xf32>
    %355 = vector.extract_strided_slice %350 {offsets = [16, 0], sizes = [16, 36], strides = [1, 1]} : vector<64x36xf32> to vector<16x36xf32>
    %c1_390 = arith.constant 1 : index
    %c0_391 = arith.constant 0 : index
    %c0_392 = arith.constant 0 : index
    %356 = vector.load %arg16[%c1_390, %c0_391, %c0_392] : memref<4x36x100xf32, #tpu.memory_space<vmem>>, vector<1x36x100xf32>
    %357 = vector.shape_cast %356 : vector<1x36x100xf32> to vector<36x100xf32>
    %cst_393 = arith.constant dense<0.000000e+00> : vector<16x100xf32>
    %358 = tpu.matmul %355, %357, %cst_393 {dimension_numbers = #tpu.dot_dimension_numbers<[1], [0], [0], [1], [0, 0, 1, 1], [], []>} : vector<16x36xf32>, vector<36x100xf32>, vector<16x100xf32> -> vector<16x100xf32>
    %359 = arith.addf %354, %358 : vector<16x100xf32>
    %360 = vector.extract_strided_slice %350 {offsets = [32, 0], sizes = [16, 36], strides = [1, 1]} : vector<64x36xf32> to vector<16x36xf32>
    %c2_394 = arith.constant 2 : index
    %c0_395 = arith.constant 0 : index
    %c0_396 = arith.constant 0 : index
    %361 = vector.load %arg16[%c2_394, %c0_395, %c0_396] : memref<4x36x100xf32, #tpu.memory_space<vmem>>, vector<1x36x100xf32>
    %362 = vector.shape_cast %361 : vector<1x36x100xf32> to vector<36x100xf32>
    %cst_397 = arith.constant dense<0.000000e+00> : vector<16x100xf32>
    %363 = tpu.matmul %360, %362, %cst_397 {dimension_numbers = #tpu.dot_dimension_numbers<[1], [0], [0], [1], [0, 0, 1, 1], [], []>} : vector<16x36xf32>, vector<36x100xf32>, vector<16x100xf32> -> vector<16x100xf32>
    %364 = arith.addf %359, %363 : vector<16x100xf32>
    %365 = vector.extract_strided_slice %350 {offsets = [48, 0], sizes = [16, 36], strides = [1, 1]} : vector<64x36xf32> to vector<16x36xf32>
    %c3_398 = arith.constant 3 : index
    %c0_399 = arith.constant 0 : index
    %c0_400 = arith.constant 0 : index
    %366 = vector.load %arg16[%c3_398, %c0_399, %c0_400] : memref<4x36x100xf32, #tpu.memory_space<vmem>>, vector<1x36x100xf32>
    %367 = vector.shape_cast %366 : vector<1x36x100xf32> to vector<36x100xf32>
    %cst_401 = arith.constant dense<0.000000e+00> : vector<16x100xf32>
    %368 = tpu.matmul %365, %367, %cst_401 {dimension_numbers = #tpu.dot_dimension_numbers<[1], [0], [0], [1], [0, 0, 1, 1], [], []>} : vector<16x36xf32>, vector<36x100xf32>, vector<16x100xf32> -> vector<16x100xf32>
    %369 = arith.addf %364, %368 : vector<16x100xf32>
    %c0_402 = arith.constant 0 : index
    %c0_403 = arith.constant 0 : index
    %370 = vector.load %arg15[%c0_402, %c0_403] : memref<16x1xf32, #tpu.memory_space<vmem>>, vector<16x1xf32>
    %371 = vector.broadcast %370 : vector<16x1xf32> to vector<16x100xf32>
    %372 = arith.addf %369, %371 : vector<16x100xf32>
    %c0_404 = arith.constant 0 : index
    %c0_405 = arith.constant 0 : index
    %373 = vector.load %arg33[%c0_404, %c0_405] : memref<1x100xf32, #tpu.memory_space<vmem>>, vector<1x100xf32>
    %374 = vector.broadcast %373 : vector<1x100xf32> to vector<16x100xf32>
    %375 = arith.mulf %372, %374 : vector<16x100xf32>
    %c0_406 = arith.constant 0 : index
    %c11_407 = arith.constant 11 : index
    %376 = vector.load %arg37[%c0_406, %c11_407] : memref<32x122xf32, #tpu.memory_space<vmem>>, vector<16x100xf32>
    tpu.vector_store %arg37[%c0_406, %c11_407], %375 {strides = array<i32>} : memref<32x122xf32, #tpu.memory_space<vmem>>, vector<16x100xf32>,
    %c0_408 = arith.constant 0 : index
    %c0_409 = arith.constant 0 : index
    %377 = vector.load %arg37[%c0_408, %c0_409] : memref<32x122xf32, #tpu.memory_space<vmem>>, vector<32x100xf32>
    %c0_410 = arith.constant 0 : index
    %c0_411 = arith.constant 0 : index
    %c0_412 = arith.constant 0 : index
    %378 = vector.load %arg17[%c0_410, %c0_411, %c0_412] : memref<9x16x32xf32, #tpu.memory_space<vmem>>, vector<1x16x32xf32>
    %379 = vector.shape_cast %378 : vector<1x16x32xf32> to vector<16x32xf32>
    %cst_413 = arith.constant dense<0.000000e+00> : vector<16x100xf32>
    %380 = tpu.matmul %379, %377, %cst_413 {dimension_numbers = #tpu.dot_dimension_numbers<[1], [0], [0], [1], [0, 0, 1, 1], [], []>} : vector<16x32xf32>, vector<32x100xf32>, vector<16x100xf32> -> vector<16x100xf32>
    %c0_414 = arith.constant 0 : index
    %c1_415 = arith.constant 1 : index
    %381 = vector.load %arg37[%c0_414, %c1_415] : memref<32x122xf32, #tpu.memory_space<vmem>>, vector<32x100xf32>
    %c1_416 = arith.constant 1 : index
    %c0_417 = arith.constant 0 : index
    %c0_418 = arith.constant 0 : index
    %382 = vector.load %arg17[%c1_416, %c0_417, %c0_418] : memref<9x16x32xf32, #tpu.memory_space<vmem>>, vector<1x16x32xf32>
    %383 = vector.shape_cast %382 : vector<1x16x32xf32> to vector<16x32xf32>
    %cst_419 = arith.constant dense<0.000000e+00> : vector<16x100xf32>
    %384 = tpu.matmul %383, %381, %cst_419 {dimension_numbers = #tpu.dot_dimension_numbers<[1], [0], [0], [1], [0, 0, 1, 1], [], []>} : vector<16x32xf32>, vector<32x100xf32>, vector<16x100xf32> -> vector<16x100xf32>
    %385 = arith.addf %380, %384 : vector<16x100xf32>
    %c0_420 = arith.constant 0 : index
    %c2_421 = arith.constant 2 : index
    %386 = vector.load %arg37[%c0_420, %c2_421] : memref<32x122xf32, #tpu.memory_space<vmem>>, vector<32x100xf32>
    %c2_422 = arith.constant 2 : index
    %c0_423 = arith.constant 0 : index
    %c0_424 = arith.constant 0 : index
    %387 = vector.load %arg17[%c2_422, %c0_423, %c0_424] : memref<9x16x32xf32, #tpu.memory_space<vmem>>, vector<1x16x32xf32>
    %388 = vector.shape_cast %387 : vector<1x16x32xf32> to vector<16x32xf32>
    %cst_425 = arith.constant dense<0.000000e+00> : vector<16x100xf32>
    %389 = tpu.matmul %388, %386, %cst_425 {dimension_numbers = #tpu.dot_dimension_numbers<[1], [0], [0], [1], [0, 0, 1, 1], [], []>} : vector<16x32xf32>, vector<32x100xf32>, vector<16x100xf32> -> vector<16x100xf32>
    %390 = arith.addf %385, %389 : vector<16x100xf32>
    %c0_426 = arith.constant 0 : index
    %c10_427 = arith.constant 10 : index
    %391 = vector.load %arg37[%c0_426, %c10_427] : memref<32x122xf32, #tpu.memory_space<vmem>>, vector<32x100xf32>
    %c3_428 = arith.constant 3 : index
    %c0_429 = arith.constant 0 : index
    %c0_430 = arith.constant 0 : index
    %392 = vector.load %arg17[%c3_428, %c0_429, %c0_430] : memref<9x16x32xf32, #tpu.memory_space<vmem>>, vector<1x16x32xf32>
    %393 = vector.shape_cast %392 : vector<1x16x32xf32> to vector<16x32xf32>
    %cst_431 = arith.constant dense<0.000000e+00> : vector<16x100xf32>
    %394 = tpu.matmul %393, %391, %cst_431 {dimension_numbers = #tpu.dot_dimension_numbers<[1], [0], [0], [1], [0, 0, 1, 1], [], []>} : vector<16x32xf32>, vector<32x100xf32>, vector<16x100xf32> -> vector<16x100xf32>
    %395 = arith.addf %390, %394 : vector<16x100xf32>
    %c0_432 = arith.constant 0 : index
    %c11_433 = arith.constant 11 : index
    %396 = vector.load %arg37[%c0_432, %c11_433] : memref<32x122xf32, #tpu.memory_space<vmem>>, vector<32x100xf32>
    %c4_434 = arith.constant 4 : index
    %c0_435 = arith.constant 0 : index
    %c0_436 = arith.constant 0 : index
    %397 = vector.load %arg17[%c4_434, %c0_435, %c0_436] : memref<9x16x32xf32, #tpu.memory_space<vmem>>, vector<1x16x32xf32>
    %398 = vector.shape_cast %397 : vector<1x16x32xf32> to vector<16x32xf32>
    %cst_437 = arith.constant dense<0.000000e+00> : vector<16x100xf32>
    %399 = tpu.matmul %398, %396, %cst_437 {dimension_numbers = #tpu.dot_dimension_numbers<[1], [0], [0], [1], [0, 0, 1, 1], [], []>} : vector<16x32xf32>, vector<32x100xf32>, vector<16x100xf32> -> vector<16x100xf32>
    %400 = arith.addf %395, %399 : vector<16x100xf32>
    %c0_438 = arith.constant 0 : index
    %c12_439 = arith.constant 12 : index
    %401 = vector.load %arg37[%c0_438, %c12_439] : memref<32x122xf32, #tpu.memory_space<vmem>>, vector<32x100xf32>
    %c5_440 = arith.constant 5 : index
    %c0_441 = arith.constant 0 : index
    %c0_442 = arith.constant 0 : index
    %402 = vector.load %arg17[%c5_440, %c0_441, %c0_442] : memref<9x16x32xf32, #tpu.memory_space<vmem>>, vector<1x16x32xf32>
    %403 = vector.shape_cast %402 : vector<1x16x32xf32> to vector<16x32xf32>
    %cst_443 = arith.constant dense<0.000000e+00> : vector<16x100xf32>
    %404 = tpu.matmul %403, %401, %cst_443 {dimension_numbers = #tpu.dot_dimension_numbers<[1], [0], [0], [1], [0, 0, 1, 1], [], []>} : vector<16x32xf32>, vector<32x100xf32>, vector<16x100xf32> -> vector<16x100xf32>
    %405 = arith.addf %400, %404 : vector<16x100xf32>
    %c0_444 = arith.constant 0 : index
    %c20_445 = arith.constant 20 : index
    %406 = vector.load %arg37[%c0_444, %c20_445] : memref<32x122xf32, #tpu.memory_space<vmem>>, vector<32x100xf32>
    %c6_446 = arith.constant 6 : index
    %c0_447 = arith.constant 0 : index
    %c0_448 = arith.constant 0 : index
    %407 = vector.load %arg17[%c6_446, %c0_447, %c0_448] : memref<9x16x32xf32, #tpu.memory_space<vmem>>, vector<1x16x32xf32>
    %408 = vector.shape_cast %407 : vector<1x16x32xf32> to vector<16x32xf32>
    %cst_449 = arith.constant dense<0.000000e+00> : vector<16x100xf32>
    %409 = tpu.matmul %408, %406, %cst_449 {dimension_numbers = #tpu.dot_dimension_numbers<[1], [0], [0], [1], [0, 0, 1, 1], [], []>} : vector<16x32xf32>, vector<32x100xf32>, vector<16x100xf32> -> vector<16x100xf32>
    %410 = arith.addf %405, %409 : vector<16x100xf32>
    %c0_450 = arith.constant 0 : index
    %c21_451 = arith.constant 21 : index
    %411 = vector.load %arg37[%c0_450, %c21_451] : memref<32x122xf32, #tpu.memory_space<vmem>>, vector<32x100xf32>
    %c7_452 = arith.constant 7 : index
    %c0_453 = arith.constant 0 : index
    %c0_454 = arith.constant 0 : index
    %412 = vector.load %arg17[%c7_452, %c0_453, %c0_454] : memref<9x16x32xf32, #tpu.memory_space<vmem>>, vector<1x16x32xf32>
    %413 = vector.shape_cast %412 : vector<1x16x32xf32> to vector<16x32xf32>
    %cst_455 = arith.constant dense<0.000000e+00> : vector<16x100xf32>
    %414 = tpu.matmul %413, %411, %cst_455 {dimension_numbers = #tpu.dot_dimension_numbers<[1], [0], [0], [1], [0, 0, 1, 1], [], []>} : vector<16x32xf32>, vector<32x100xf32>, vector<16x100xf32> -> vector<16x100xf32>
    %415 = arith.addf %410, %414 : vector<16x100xf32>
    %c0_456 = arith.constant 0 : index
    %c22_457 = arith.constant 22 : index
    %416 = vector.load %arg37[%c0_456, %c22_457] : memref<32x122xf32, #tpu.memory_space<vmem>>, vector<32x100xf32>
    %c8_458 = arith.constant 8 : index
    %c0_459 = arith.constant 0 : index
    %c0_460 = arith.constant 0 : index
    %417 = vector.load %arg17[%c8_458, %c0_459, %c0_460] : memref<9x16x32xf32, #tpu.memory_space<vmem>>, vector<1x16x32xf32>
    %418 = vector.shape_cast %417 : vector<1x16x32xf32> to vector<16x32xf32>
    %cst_461 = arith.constant dense<0.000000e+00> : vector<16x100xf32>
    %419 = tpu.matmul %418, %416, %cst_461 {dimension_numbers = #tpu.dot_dimension_numbers<[1], [0], [0], [1], [0, 0, 1, 1], [], []>} : vector<16x32xf32>, vector<32x100xf32>, vector<16x100xf32> -> vector<16x100xf32>
    %420 = arith.addf %415, %419 : vector<16x100xf32>
    %c0_462 = arith.constant 0 : index
    %c0_463 = arith.constant 0 : index
    %421 = vector.load %arg18[%c0_462, %c0_463] : memref<16x1xf32, #tpu.memory_space<vmem>>, vector<16x1xf32>
    %422 = vector.broadcast %421 : vector<16x1xf32> to vector<16x100xf32>
    %423 = arith.addf %420, %422 : vector<16x100xf32>
    %cst_464 = arith.constant 0.000000e+00 : f32
    %424 = vector.broadcast %cst_464 : f32 to vector<16x100xf32>
    %425 = arith.maximumf %423, %424 : vector<16x100xf32>
    %c0_465 = arith.constant 0 : index
    %c0_466 = arith.constant 0 : index
    %426 = vector.load %arg33[%c0_465, %c0_466] : memref<1x100xf32, #tpu.memory_space<vmem>>, vector<1x100xf32>
    %427 = vector.broadcast %426 : vector<1x100xf32> to vector<16x100xf32>
    %428 = arith.mulf %425, %427 : vector<16x100xf32>
    %c0_467 = arith.constant 0 : index
    %c11_468 = arith.constant 11 : index
    %429 = vector.load %arg37[%c0_467, %c11_468] : memref<32x122xf32, #tpu.memory_space<vmem>>, vector<16x100xf32>
    tpu.vector_store %arg37[%c0_467, %c11_468], %428 {strides = array<i32>} : memref<32x122xf32, #tpu.memory_space<vmem>>, vector<16x100xf32>,
    %c0_469 = arith.constant 0 : index
    %c0_470 = arith.constant 0 : index
    %430 = vector.load %arg37[%c0_469, %c0_470] : memref<32x122xf32, #tpu.memory_space<vmem>>, vector<16x100xf32>
    %c0_471 = arith.constant 0 : index
    %c0_472 = arith.constant 0 : index
    %c0_473 = arith.constant 0 : index
    %431 = vector.load %arg19[%c0_471, %c0_472, %c0_473] : memref<9x16x16xf32, #tpu.memory_space<vmem>>, vector<1x16x16xf32>
    %432 = vector.shape_cast %431 : vector<1x16x16xf32> to vector<16x16xf32>
    %cst_474 = arith.constant dense<0.000000e+00> : vector<16x100xf32>
    %433 = tpu.matmul %432, %430, %cst_474 {dimension_numbers = #tpu.dot_dimension_numbers<[1], [0], [0], [1], [0, 0, 1, 1], [], []>} : vector<16x16xf32>, vector<16x100xf32>, vector<16x100xf32> -> vector<16x100xf32>
    %c0_475 = arith.constant 0 : index
    %c1_476 = arith.constant 1 : index
    %434 = vector.load %arg37[%c0_475, %c1_476] : memref<32x122xf32, #tpu.memory_space<vmem>>, vector<16x100xf32>
    %c1_477 = arith.constant 1 : index
    %c0_478 = arith.constant 0 : index
    %c0_479 = arith.constant 0 : index
    %435 = vector.load %arg19[%c1_477, %c0_478, %c0_479] : memref<9x16x16xf32, #tpu.memory_space<vmem>>, vector<1x16x16xf32>
    %436 = vector.shape_cast %435 : vector<1x16x16xf32> to vector<16x16xf32>
    %cst_480 = arith.constant dense<0.000000e+00> : vector<16x100xf32>
    %437 = tpu.matmul %436, %434, %cst_480 {dimension_numbers = #tpu.dot_dimension_numbers<[1], [0], [0], [1], [0, 0, 1, 1], [], []>} : vector<16x16xf32>, vector<16x100xf32>, vector<16x100xf32> -> vector<16x100xf32>
    %438 = arith.addf %433, %437 : vector<16x100xf32>
    %c0_481 = arith.constant 0 : index
    %c2_482 = arith.constant 2 : index
    %439 = vector.load %arg37[%c0_481, %c2_482] : memref<32x122xf32, #tpu.memory_space<vmem>>, vector<16x100xf32>
    %c2_483 = arith.constant 2 : index
    %c0_484 = arith.constant 0 : index
    %c0_485 = arith.constant 0 : index
    %440 = vector.load %arg19[%c2_483, %c0_484, %c0_485] : memref<9x16x16xf32, #tpu.memory_space<vmem>>, vector<1x16x16xf32>
    %441 = vector.shape_cast %440 : vector<1x16x16xf32> to vector<16x16xf32>
    %cst_486 = arith.constant dense<0.000000e+00> : vector<16x100xf32>
    %442 = tpu.matmul %441, %439, %cst_486 {dimension_numbers = #tpu.dot_dimension_numbers<[1], [0], [0], [1], [0, 0, 1, 1], [], []>} : vector<16x16xf32>, vector<16x100xf32>, vector<16x100xf32> -> vector<16x100xf32>
    %443 = arith.addf %438, %442 : vector<16x100xf32>
    %c0_487 = arith.constant 0 : index
    %c10_488 = arith.constant 10 : index
    %444 = vector.load %arg37[%c0_487, %c10_488] : memref<32x122xf32, #tpu.memory_space<vmem>>, vector<16x100xf32>
    %c3_489 = arith.constant 3 : index
    %c0_490 = arith.constant 0 : index
    %c0_491 = arith.constant 0 : index
    %445 = vector.load %arg19[%c3_489, %c0_490, %c0_491] : memref<9x16x16xf32, #tpu.memory_space<vmem>>, vector<1x16x16xf32>
    %446 = vector.shape_cast %445 : vector<1x16x16xf32> to vector<16x16xf32>
    %cst_492 = arith.constant dense<0.000000e+00> : vector<16x100xf32>
    %447 = tpu.matmul %446, %444, %cst_492 {dimension_numbers = #tpu.dot_dimension_numbers<[1], [0], [0], [1], [0, 0, 1, 1], [], []>} : vector<16x16xf32>, vector<16x100xf32>, vector<16x100xf32> -> vector<16x100xf32>
    %448 = arith.addf %443, %447 : vector<16x100xf32>
    %c0_493 = arith.constant 0 : index
    %c11_494 = arith.constant 11 : index
    %449 = vector.load %arg37[%c0_493, %c11_494] : memref<32x122xf32, #tpu.memory_space<vmem>>, vector<16x100xf32>
    %c4_495 = arith.constant 4 : index
    %c0_496 = arith.constant 0 : index
    %c0_497 = arith.constant 0 : index
    %450 = vector.load %arg19[%c4_495, %c0_496, %c0_497] : memref<9x16x16xf32, #tpu.memory_space<vmem>>, vector<1x16x16xf32>
    %451 = vector.shape_cast %450 : vector<1x16x16xf32> to vector<16x16xf32>
    %cst_498 = arith.constant dense<0.000000e+00> : vector<16x100xf32>
    %452 = tpu.matmul %451, %449, %cst_498 {dimension_numbers = #tpu.dot_dimension_numbers<[1], [0], [0], [1], [0, 0, 1, 1], [], []>} : vector<16x16xf32>, vector<16x100xf32>, vector<16x100xf32> -> vector<16x100xf32>
    %453 = arith.addf %448, %452 : vector<16x100xf32>
    %c0_499 = arith.constant 0 : index
    %c12_500 = arith.constant 12 : index
    %454 = vector.load %arg37[%c0_499, %c12_500] : memref<32x122xf32, #tpu.memory_space<vmem>>, vector<16x100xf32>
    %c5_501 = arith.constant 5 : index
    %c0_502 = arith.constant 0 : index
    %c0_503 = arith.constant 0 : index
    %455 = vector.load %arg19[%c5_501, %c0_502, %c0_503] : memref<9x16x16xf32, #tpu.memory_space<vmem>>, vector<1x16x16xf32>
    %456 = vector.shape_cast %455 : vector<1x16x16xf32> to vector<16x16xf32>
    %cst_504 = arith.constant dense<0.000000e+00> : vector<16x100xf32>
    %457 = tpu.matmul %456, %454, %cst_504 {dimension_numbers = #tpu.dot_dimension_numbers<[1], [0], [0], [1], [0, 0, 1, 1], [], []>} : vector<16x16xf32>, vector<16x100xf32>, vector<16x100xf32> -> vector<16x100xf32>
    %458 = arith.addf %453, %457 : vector<16x100xf32>
    %c0_505 = arith.constant 0 : index
    %c20_506 = arith.constant 20 : index
    %459 = vector.load %arg37[%c0_505, %c20_506] : memref<32x122xf32, #tpu.memory_space<vmem>>, vector<16x100xf32>
    %c6_507 = arith.constant 6 : index
    %c0_508 = arith.constant 0 : index
    %c0_509 = arith.constant 0 : index
    %460 = vector.load %arg19[%c6_507, %c0_508, %c0_509] : memref<9x16x16xf32, #tpu.memory_space<vmem>>, vector<1x16x16xf32>
    %461 = vector.shape_cast %460 : vector<1x16x16xf32> to vector<16x16xf32>
    %cst_510 = arith.constant dense<0.000000e+00> : vector<16x100xf32>
    %462 = tpu.matmul %461, %459, %cst_510 {dimension_numbers = #tpu.dot_dimension_numbers<[1], [0], [0], [1], [0, 0, 1, 1], [], []>} : vector<16x16xf32>, vector<16x100xf32>, vector<16x100xf32> -> vector<16x100xf32>
    %463 = arith.addf %458, %462 : vector<16x100xf32>
    %c0_511 = arith.constant 0 : index
    %c21_512 = arith.constant 21 : index
    %464 = vector.load %arg37[%c0_511, %c21_512] : memref<32x122xf32, #tpu.memory_space<vmem>>, vector<16x100xf32>
    %c7_513 = arith.constant 7 : index
    %c0_514 = arith.constant 0 : index
    %c0_515 = arith.constant 0 : index
    %465 = vector.load %arg19[%c7_513, %c0_514, %c0_515] : memref<9x16x16xf32, #tpu.memory_space<vmem>>, vector<1x16x16xf32>
    %466 = vector.shape_cast %465 : vector<1x16x16xf32> to vector<16x16xf32>
    %cst_516 = arith.constant dense<0.000000e+00> : vector<16x100xf32>
    %467 = tpu.matmul %466, %464, %cst_516 {dimension_numbers = #tpu.dot_dimension_numbers<[1], [0], [0], [1], [0, 0, 1, 1], [], []>} : vector<16x16xf32>, vector<16x100xf32>, vector<16x100xf32> -> vector<16x100xf32>
    %468 = arith.addf %463, %467 : vector<16x100xf32>
    %c0_517 = arith.constant 0 : index
    %c22_518 = arith.constant 22 : index
    %469 = vector.load %arg37[%c0_517, %c22_518] : memref<32x122xf32, #tpu.memory_space<vmem>>, vector<16x100xf32>
    %c8_519 = arith.constant 8 : index
    %c0_520 = arith.constant 0 : index
    %c0_521 = arith.constant 0 : index
    %470 = vector.load %arg19[%c8_519, %c0_520, %c0_521] : memref<9x16x16xf32, #tpu.memory_space<vmem>>, vector<1x16x16xf32>
    %471 = vector.shape_cast %470 : vector<1x16x16xf32> to vector<16x16xf32>
    %cst_522 = arith.constant dense<0.000000e+00> : vector<16x100xf32>
    %472 = tpu.matmul %471, %469, %cst_522 {dimension_numbers = #tpu.dot_dimension_numbers<[1], [0], [0], [1], [0, 0, 1, 1], [], []>} : vector<16x16xf32>, vector<16x100xf32>, vector<16x100xf32> -> vector<16x100xf32>
    %473 = arith.addf %468, %472 : vector<16x100xf32>
    %c0_523 = arith.constant 0 : index
    %c0_524 = arith.constant 0 : index
    %474 = vector.load %arg20[%c0_523, %c0_524] : memref<16x1xf32, #tpu.memory_space<vmem>>, vector<16x1xf32>
    %475 = vector.broadcast %474 : vector<16x1xf32> to vector<16x100xf32>
    %476 = arith.addf %473, %475 : vector<16x100xf32>
    %cst_525 = arith.constant 0.000000e+00 : f32
    %477 = vector.broadcast %cst_525 : f32 to vector<16x100xf32>
    %478 = arith.maximumf %476, %477 : vector<16x100xf32>
    %c0_526 = arith.constant 0 : index
    %c0_527 = arith.constant 0 : index
    %479 = vector.load %arg33[%c0_526, %c0_527] : memref<1x100xf32, #tpu.memory_space<vmem>>, vector<1x100xf32>
    %480 = vector.broadcast %479 : vector<1x100xf32> to vector<16x100xf32>
    %481 = arith.mulf %478, %480 : vector<16x100xf32>
    %c0_528 = arith.constant 0 : index
    %c0_529 = arith.constant 0 : index
    %482 = vector.load %arg21[%c0_528, %c0_529] : memref<32x16xf32, #tpu.memory_space<vmem>>, vector<32x16xf32>
    %cst_530 = arith.constant dense<0.000000e+00> : vector<32x100xf32>
    %483 = tpu.matmul %482, %481, %cst_530 {dimension_numbers = #tpu.dot_dimension_numbers<[1], [0], [0], [1], [0, 0, 1, 1], [], []>} : vector<32x16xf32>, vector<16x100xf32>, vector<32x100xf32> -> vector<32x100xf32>
    %484 = vector.extract_strided_slice %483 {offsets = [0, 0], sizes = [8, 100], strides = [1, 1]} : vector<32x100xf32> to vector<8x100xf32>
    %c0_531 = arith.constant 0 : index
    %c0_532 = arith.constant 0 : index
    %c0_533 = arith.constant 0 : index
    %485 = vector.load %arg23[%c0_531, %c0_532, %c0_533] : memref<4x100x324xf32, #tpu.memory_space<vmem>>, vector<1x100x324xf32>
    %486 = vector.shape_cast %485 : vector<1x100x324xf32> to vector<100x324xf32>
    %cst_534 = arith.constant dense<0.000000e+00> : vector<8x324xf32>
    %487 = tpu.matmul %484, %486, %cst_534 {dimension_numbers = #tpu.dot_dimension_numbers<[1], [0], [0], [1], [0, 0, 1, 1], [], []>} : vector<8x100xf32>, vector<100x324xf32>, vector<8x324xf32> -> vector<8x324xf32>
    %488 = vector.extract_strided_slice %483 {offsets = [8, 0], sizes = [8, 100], strides = [1, 1]} : vector<32x100xf32> to vector<8x100xf32>
    %c1_535 = arith.constant 1 : index
    %c0_536 = arith.constant 0 : index
    %c0_537 = arith.constant 0 : index
    %489 = vector.load %arg23[%c1_535, %c0_536, %c0_537] : memref<4x100x324xf32, #tpu.memory_space<vmem>>, vector<1x100x324xf32>
    %490 = vector.shape_cast %489 : vector<1x100x324xf32> to vector<100x324xf32>
    %cst_538 = arith.constant dense<0.000000e+00> : vector<8x324xf32>
    %491 = tpu.matmul %488, %490, %cst_538 {dimension_numbers = #tpu.dot_dimension_numbers<[1], [0], [0], [1], [0, 0, 1, 1], [], []>} : vector<8x100xf32>, vector<100x324xf32>, vector<8x324xf32> -> vector<8x324xf32>
    %492 = arith.addf %487, %491 : vector<8x324xf32>
    %493 = vector.extract_strided_slice %483 {offsets = [16, 0], sizes = [8, 100], strides = [1, 1]} : vector<32x100xf32> to vector<8x100xf32>
    %c2_539 = arith.constant 2 : index
    %c0_540 = arith.constant 0 : index
    %c0_541 = arith.constant 0 : index
    %494 = vector.load %arg23[%c2_539, %c0_540, %c0_541] : memref<4x100x324xf32, #tpu.memory_space<vmem>>, vector<1x100x324xf32>
    %495 = vector.shape_cast %494 : vector<1x100x324xf32> to vector<100x324xf32>
    %cst_542 = arith.constant dense<0.000000e+00> : vector<8x324xf32>
    %496 = tpu.matmul %493, %495, %cst_542 {dimension_numbers = #tpu.dot_dimension_numbers<[1], [0], [0], [1], [0, 0, 1, 1], [], []>} : vector<8x100xf32>, vector<100x324xf32>, vector<8x324xf32> -> vector<8x324xf32>
    %497 = arith.addf %492, %496 : vector<8x324xf32>
    %498 = vector.extract_strided_slice %483 {offsets = [24, 0], sizes = [8, 100], strides = [1, 1]} : vector<32x100xf32> to vector<8x100xf32>
    %c3_543 = arith.constant 3 : index
    %c0_544 = arith.constant 0 : index
    %c0_545 = arith.constant 0 : index
    %499 = vector.load %arg23[%c3_543, %c0_544, %c0_545] : memref<4x100x324xf32, #tpu.memory_space<vmem>>, vector<1x100x324xf32>
    %500 = vector.shape_cast %499 : vector<1x100x324xf32> to vector<100x324xf32>
    %cst_546 = arith.constant dense<0.000000e+00> : vector<8x324xf32>
    %501 = tpu.matmul %498, %500, %cst_546 {dimension_numbers = #tpu.dot_dimension_numbers<[1], [0], [0], [1], [0, 0, 1, 1], [], []>} : vector<8x100xf32>, vector<100x324xf32>, vector<8x324xf32> -> vector<8x324xf32>
    %502 = arith.addf %497, %501 : vector<8x324xf32>
    %c0_547 = arith.constant 0 : index
    %c0_548 = arith.constant 0 : index
    %503 = vector.load %arg22[%c0_547, %c0_548] : memref<8x1xf32, #tpu.memory_space<vmem>>, vector<8x1xf32>
    %504 = vector.broadcast %503 : vector<8x1xf32> to vector<8x324xf32>
    %505 = arith.addf %502, %504 : vector<8x324xf32>
    %c0_549 = arith.constant 0 : index
    %c0_550 = arith.constant 0 : index
    %506 = vector.load %arg32[%c0_549, %c0_550] : memref<1x324xf32, #tpu.memory_space<vmem>>, vector<1x324xf32>
    %507 = vector.broadcast %506 : vector<1x324xf32> to vector<8x324xf32>
    %508 = arith.mulf %505, %507 : vector<8x324xf32>
    %c0_551 = arith.constant 0 : index
    %c19_552 = arith.constant 19 : index
    %509 = vector.load %arg36[%c0_551, %c19_552] : memref<16x362xf32, #tpu.memory_space<vmem>>, vector<8x324xf32>
    tpu.vector_store %arg36[%c0_551, %c19_552], %508 {strides = array<i32>} : memref<16x362xf32, #tpu.memory_space<vmem>>, vector<8x324xf32>,
    %c0_553 = arith.constant 0 : index
    %c0_554 = arith.constant 0 : index
    %510 = vector.load %arg36[%c0_553, %c0_554] : memref<16x362xf32, #tpu.memory_space<vmem>>, vector<16x324xf32>
    %c0_555 = arith.constant 0 : index
    %c0_556 = arith.constant 0 : index
    %c0_557 = arith.constant 0 : index
    %511 = vector.load %arg24[%c0_555, %c0_556, %c0_557] : memref<9x8x16xf32, #tpu.memory_space<vmem>>, vector<1x8x16xf32>
    %512 = vector.shape_cast %511 : vector<1x8x16xf32> to vector<8x16xf32>
    %cst_558 = arith.constant dense<0.000000e+00> : vector<8x324xf32>
    %513 = tpu.matmul %512, %510, %cst_558 {dimension_numbers = #tpu.dot_dimension_numbers<[1], [0], [0], [1], [0, 0, 1, 1], [], []>} : vector<8x16xf32>, vector<16x324xf32>, vector<8x324xf32> -> vector<8x324xf32>
    %c0_559 = arith.constant 0 : index
    %c1_560 = arith.constant 1 : index
    %514 = vector.load %arg36[%c0_559, %c1_560] : memref<16x362xf32, #tpu.memory_space<vmem>>, vector<16x324xf32>
    %c1_561 = arith.constant 1 : index
    %c0_562 = arith.constant 0 : index
    %c0_563 = arith.constant 0 : index
    %515 = vector.load %arg24[%c1_561, %c0_562, %c0_563] : memref<9x8x16xf32, #tpu.memory_space<vmem>>, vector<1x8x16xf32>
    %516 = vector.shape_cast %515 : vector<1x8x16xf32> to vector<8x16xf32>
    %cst_564 = arith.constant dense<0.000000e+00> : vector<8x324xf32>
    %517 = tpu.matmul %516, %514, %cst_564 {dimension_numbers = #tpu.dot_dimension_numbers<[1], [0], [0], [1], [0, 0, 1, 1], [], []>} : vector<8x16xf32>, vector<16x324xf32>, vector<8x324xf32> -> vector<8x324xf32>
    %518 = arith.addf %513, %517 : vector<8x324xf32>
    %c0_565 = arith.constant 0 : index
    %c2_566 = arith.constant 2 : index
    %519 = vector.load %arg36[%c0_565, %c2_566] : memref<16x362xf32, #tpu.memory_space<vmem>>, vector<16x324xf32>
    %c2_567 = arith.constant 2 : index
    %c0_568 = arith.constant 0 : index
    %c0_569 = arith.constant 0 : index
    %520 = vector.load %arg24[%c2_567, %c0_568, %c0_569] : memref<9x8x16xf32, #tpu.memory_space<vmem>>, vector<1x8x16xf32>
    %521 = vector.shape_cast %520 : vector<1x8x16xf32> to vector<8x16xf32>
    %cst_570 = arith.constant dense<0.000000e+00> : vector<8x324xf32>
    %522 = tpu.matmul %521, %519, %cst_570 {dimension_numbers = #tpu.dot_dimension_numbers<[1], [0], [0], [1], [0, 0, 1, 1], [], []>} : vector<8x16xf32>, vector<16x324xf32>, vector<8x324xf32> -> vector<8x324xf32>
    %523 = arith.addf %518, %522 : vector<8x324xf32>
    %c0_571 = arith.constant 0 : index
    %c18_572 = arith.constant 18 : index
    %524 = vector.load %arg36[%c0_571, %c18_572] : memref<16x362xf32, #tpu.memory_space<vmem>>, vector<16x324xf32>
    %c3_573 = arith.constant 3 : index
    %c0_574 = arith.constant 0 : index
    %c0_575 = arith.constant 0 : index
    %525 = vector.load %arg24[%c3_573, %c0_574, %c0_575] : memref<9x8x16xf32, #tpu.memory_space<vmem>>, vector<1x8x16xf32>
    %526 = vector.shape_cast %525 : vector<1x8x16xf32> to vector<8x16xf32>
    %cst_576 = arith.constant dense<0.000000e+00> : vector<8x324xf32>
    %527 = tpu.matmul %526, %524, %cst_576 {dimension_numbers = #tpu.dot_dimension_numbers<[1], [0], [0], [1], [0, 0, 1, 1], [], []>} : vector<8x16xf32>, vector<16x324xf32>, vector<8x324xf32> -> vector<8x324xf32>
    %528 = arith.addf %523, %527 : vector<8x324xf32>
    %c0_577 = arith.constant 0 : index
    %c19_578 = arith.constant 19 : index
    %529 = vector.load %arg36[%c0_577, %c19_578] : memref<16x362xf32, #tpu.memory_space<vmem>>, vector<16x324xf32>
    %c4_579 = arith.constant 4 : index
    %c0_580 = arith.constant 0 : index
    %c0_581 = arith.constant 0 : index
    %530 = vector.load %arg24[%c4_579, %c0_580, %c0_581] : memref<9x8x16xf32, #tpu.memory_space<vmem>>, vector<1x8x16xf32>
    %531 = vector.shape_cast %530 : vector<1x8x16xf32> to vector<8x16xf32>
    %cst_582 = arith.constant dense<0.000000e+00> : vector<8x324xf32>
    %532 = tpu.matmul %531, %529, %cst_582 {dimension_numbers = #tpu.dot_dimension_numbers<[1], [0], [0], [1], [0, 0, 1, 1], [], []>} : vector<8x16xf32>, vector<16x324xf32>, vector<8x324xf32> -> vector<8x324xf32>
    %533 = arith.addf %528, %532 : vector<8x324xf32>
    %c0_583 = arith.constant 0 : index
    %c20_584 = arith.constant 20 : index
    %534 = vector.load %arg36[%c0_583, %c20_584] : memref<16x362xf32, #tpu.memory_space<vmem>>, vector<16x324xf32>
    %c5_585 = arith.constant 5 : index
    %c0_586 = arith.constant 0 : index
    %c0_587 = arith.constant 0 : index
    %535 = vector.load %arg24[%c5_585, %c0_586, %c0_587] : memref<9x8x16xf32, #tpu.memory_space<vmem>>, vector<1x8x16xf32>
    %536 = vector.shape_cast %535 : vector<1x8x16xf32> to vector<8x16xf32>
    %cst_588 = arith.constant dense<0.000000e+00> : vector<8x324xf32>
    %537 = tpu.matmul %536, %534, %cst_588 {dimension_numbers = #tpu.dot_dimension_numbers<[1], [0], [0], [1], [0, 0, 1, 1], [], []>} : vector<8x16xf32>, vector<16x324xf32>, vector<8x324xf32> -> vector<8x324xf32>
    %538 = arith.addf %533, %537 : vector<8x324xf32>
    %c0_589 = arith.constant 0 : index
    %c36_590 = arith.constant 36 : index
    %539 = vector.load %arg36[%c0_589, %c36_590] : memref<16x362xf32, #tpu.memory_space<vmem>>, vector<16x324xf32>
    %c6_591 = arith.constant 6 : index
    %c0_592 = arith.constant 0 : index
    %c0_593 = arith.constant 0 : index
    %540 = vector.load %arg24[%c6_591, %c0_592, %c0_593] : memref<9x8x16xf32, #tpu.memory_space<vmem>>, vector<1x8x16xf32>
    %541 = vector.shape_cast %540 : vector<1x8x16xf32> to vector<8x16xf32>
    %cst_594 = arith.constant dense<0.000000e+00> : vector<8x324xf32>
    %542 = tpu.matmul %541, %539, %cst_594 {dimension_numbers = #tpu.dot_dimension_numbers<[1], [0], [0], [1], [0, 0, 1, 1], [], []>} : vector<8x16xf32>, vector<16x324xf32>, vector<8x324xf32> -> vector<8x324xf32>
    %543 = arith.addf %538, %542 : vector<8x324xf32>
    %c0_595 = arith.constant 0 : index
    %c37_596 = arith.constant 37 : index
    %544 = vector.load %arg36[%c0_595, %c37_596] : memref<16x362xf32, #tpu.memory_space<vmem>>, vector<16x324xf32>
    %c7_597 = arith.constant 7 : index
    %c0_598 = arith.constant 0 : index
    %c0_599 = arith.constant 0 : index
    %545 = vector.load %arg24[%c7_597, %c0_598, %c0_599] : memref<9x8x16xf32, #tpu.memory_space<vmem>>, vector<1x8x16xf32>
    %546 = vector.shape_cast %545 : vector<1x8x16xf32> to vector<8x16xf32>
    %cst_600 = arith.constant dense<0.000000e+00> : vector<8x324xf32>
    %547 = tpu.matmul %546, %544, %cst_600 {dimension_numbers = #tpu.dot_dimension_numbers<[1], [0], [0], [1], [0, 0, 1, 1], [], []>} : vector<8x16xf32>, vector<16x324xf32>, vector<8x324xf32> -> vector<8x324xf32>
    %548 = arith.addf %543, %547 : vector<8x324xf32>
    %c0_601 = arith.constant 0 : index
    %c38_602 = arith.constant 38 : index
    %549 = vector.load %arg36[%c0_601, %c38_602] : memref<16x362xf32, #tpu.memory_space<vmem>>, vector<16x324xf32>
    %c8_603 = arith.constant 8 : index
    %c0_604 = arith.constant 0 : index
    %c0_605 = arith.constant 0 : index
    %550 = vector.load %arg24[%c8_603, %c0_604, %c0_605] : memref<9x8x16xf32, #tpu.memory_space<vmem>>, vector<1x8x16xf32>
    %551 = vector.shape_cast %550 : vector<1x8x16xf32> to vector<8x16xf32>
    %cst_606 = arith.constant dense<0.000000e+00> : vector<8x324xf32>
    %552 = tpu.matmul %551, %549, %cst_606 {dimension_numbers = #tpu.dot_dimension_numbers<[1], [0], [0], [1], [0, 0, 1, 1], [], []>} : vector<8x16xf32>, vector<16x324xf32>, vector<8x324xf32> -> vector<8x324xf32>
    %553 = arith.addf %548, %552 : vector<8x324xf32>
    %c0_607 = arith.constant 0 : index
    %c0_608 = arith.constant 0 : index
    %554 = vector.load %arg25[%c0_607, %c0_608] : memref<8x1xf32, #tpu.memory_space<vmem>>, vector<8x1xf32>
    %555 = vector.broadcast %554 : vector<8x1xf32> to vector<8x324xf32>
    %556 = arith.addf %553, %555 : vector<8x324xf32>
    %cst_609 = arith.constant 0.000000e+00 : f32
    %557 = vector.broadcast %cst_609 : f32 to vector<8x324xf32>
    %558 = arith.maximumf %556, %557 : vector<8x324xf32>
    %c0_610 = arith.constant 0 : index
    %c0_611 = arith.constant 0 : index
    %559 = vector.load %arg32[%c0_610, %c0_611] : memref<1x324xf32, #tpu.memory_space<vmem>>, vector<1x324xf32>
    %560 = vector.broadcast %559 : vector<1x324xf32> to vector<8x324xf32>
    %561 = arith.mulf %558, %560 : vector<8x324xf32>
    %c0_612 = arith.constant 0 : index
    %c19_613 = arith.constant 19 : index
    %562 = vector.load %arg36[%c0_612, %c19_613] : memref<16x362xf32, #tpu.memory_space<vmem>>, vector<8x324xf32>
    tpu.vector_store %arg36[%c0_612, %c19_613], %561 {strides = array<i32>} : memref<16x362xf32, #tpu.memory_space<vmem>>, vector<8x324xf32>,
    %c0_614 = arith.constant 0 : index
    %c0_615 = arith.constant 0 : index
    %563 = vector.load %arg36[%c0_614, %c0_615] : memref<16x362xf32, #tpu.memory_space<vmem>>, vector<8x324xf32>
    %c0_616 = arith.constant 0 : index
    %c0_617 = arith.constant 0 : index
    %c0_618 = arith.constant 0 : index
    %564 = vector.load %arg26[%c0_616, %c0_617, %c0_618] : memref<9x8x8xf32, #tpu.memory_space<vmem>>, vector<1x8x8xf32>
    %565 = vector.shape_cast %564 : vector<1x8x8xf32> to vector<8x8xf32>
    %cst_619 = arith.constant dense<0.000000e+00> : vector<8x324xf32>
    %566 = tpu.matmul %565, %563, %cst_619 {dimension_numbers = #tpu.dot_dimension_numbers<[1], [0], [0], [1], [0, 0, 1, 1], [], []>} : vector<8x8xf32>, vector<8x324xf32>, vector<8x324xf32> -> vector<8x324xf32>
    %c0_620 = arith.constant 0 : index
    %c1_621 = arith.constant 1 : index
    %567 = vector.load %arg36[%c0_620, %c1_621] : memref<16x362xf32, #tpu.memory_space<vmem>>, vector<8x324xf32>
    %c1_622 = arith.constant 1 : index
    %c0_623 = arith.constant 0 : index
    %c0_624 = arith.constant 0 : index
    %568 = vector.load %arg26[%c1_622, %c0_623, %c0_624] : memref<9x8x8xf32, #tpu.memory_space<vmem>>, vector<1x8x8xf32>
    %569 = vector.shape_cast %568 : vector<1x8x8xf32> to vector<8x8xf32>
    %cst_625 = arith.constant dense<0.000000e+00> : vector<8x324xf32>
    %570 = tpu.matmul %569, %567, %cst_625 {dimension_numbers = #tpu.dot_dimension_numbers<[1], [0], [0], [1], [0, 0, 1, 1], [], []>} : vector<8x8xf32>, vector<8x324xf32>, vector<8x324xf32> -> vector<8x324xf32>
    %571 = arith.addf %566, %570 : vector<8x324xf32>
    %c0_626 = arith.constant 0 : index
    %c2_627 = arith.constant 2 : index
    %572 = vector.load %arg36[%c0_626, %c2_627] : memref<16x362xf32, #tpu.memory_space<vmem>>, vector<8x324xf32>
    %c2_628 = arith.constant 2 : index
    %c0_629 = arith.constant 0 : index
    %c0_630 = arith.constant 0 : index
    %573 = vector.load %arg26[%c2_628, %c0_629, %c0_630] : memref<9x8x8xf32, #tpu.memory_space<vmem>>, vector<1x8x8xf32>
    %574 = vector.shape_cast %573 : vector<1x8x8xf32> to vector<8x8xf32>
    %cst_631 = arith.constant dense<0.000000e+00> : vector<8x324xf32>
    %575 = tpu.matmul %574, %572, %cst_631 {dimension_numbers = #tpu.dot_dimension_numbers<[1], [0], [0], [1], [0, 0, 1, 1], [], []>} : vector<8x8xf32>, vector<8x324xf32>, vector<8x324xf32> -> vector<8x324xf32>
    %576 = arith.addf %571, %575 : vector<8x324xf32>
    %c0_632 = arith.constant 0 : index
    %c18_633 = arith.constant 18 : index
    %577 = vector.load %arg36[%c0_632, %c18_633] : memref<16x362xf32, #tpu.memory_space<vmem>>, vector<8x324xf32>
    %c3_634 = arith.constant 3 : index
    %c0_635 = arith.constant 0 : index
    %c0_636 = arith.constant 0 : index
    %578 = vector.load %arg26[%c3_634, %c0_635, %c0_636] : memref<9x8x8xf32, #tpu.memory_space<vmem>>, vector<1x8x8xf32>
    %579 = vector.shape_cast %578 : vector<1x8x8xf32> to vector<8x8xf32>
    %cst_637 = arith.constant dense<0.000000e+00> : vector<8x324xf32>
    %580 = tpu.matmul %579, %577, %cst_637 {dimension_numbers = #tpu.dot_dimension_numbers<[1], [0], [0], [1], [0, 0, 1, 1], [], []>} : vector<8x8xf32>, vector<8x324xf32>, vector<8x324xf32> -> vector<8x324xf32>
    %581 = arith.addf %576, %580 : vector<8x324xf32>
    %c0_638 = arith.constant 0 : index
    %c19_639 = arith.constant 19 : index
    %582 = vector.load %arg36[%c0_638, %c19_639] : memref<16x362xf32, #tpu.memory_space<vmem>>, vector<8x324xf32>
    %c4_640 = arith.constant 4 : index
    %c0_641 = arith.constant 0 : index
    %c0_642 = arith.constant 0 : index
    %583 = vector.load %arg26[%c4_640, %c0_641, %c0_642] : memref<9x8x8xf32, #tpu.memory_space<vmem>>, vector<1x8x8xf32>
    %584 = vector.shape_cast %583 : vector<1x8x8xf32> to vector<8x8xf32>
    %cst_643 = arith.constant dense<0.000000e+00> : vector<8x324xf32>
    %585 = tpu.matmul %584, %582, %cst_643 {dimension_numbers = #tpu.dot_dimension_numbers<[1], [0], [0], [1], [0, 0, 1, 1], [], []>} : vector<8x8xf32>, vector<8x324xf32>, vector<8x324xf32> -> vector<8x324xf32>
    %586 = arith.addf %581, %585 : vector<8x324xf32>
    %c0_644 = arith.constant 0 : index
    %c20_645 = arith.constant 20 : index
    %587 = vector.load %arg36[%c0_644, %c20_645] : memref<16x362xf32, #tpu.memory_space<vmem>>, vector<8x324xf32>
    %c5_646 = arith.constant 5 : index
    %c0_647 = arith.constant 0 : index
    %c0_648 = arith.constant 0 : index
    %588 = vector.load %arg26[%c5_646, %c0_647, %c0_648] : memref<9x8x8xf32, #tpu.memory_space<vmem>>, vector<1x8x8xf32>
    %589 = vector.shape_cast %588 : vector<1x8x8xf32> to vector<8x8xf32>
    %cst_649 = arith.constant dense<0.000000e+00> : vector<8x324xf32>
    %590 = tpu.matmul %589, %587, %cst_649 {dimension_numbers = #tpu.dot_dimension_numbers<[1], [0], [0], [1], [0, 0, 1, 1], [], []>} : vector<8x8xf32>, vector<8x324xf32>, vector<8x324xf32> -> vector<8x324xf32>
    %591 = arith.addf %586, %590 : vector<8x324xf32>
    %c0_650 = arith.constant 0 : index
    %c36_651 = arith.constant 36 : index
    %592 = vector.load %arg36[%c0_650, %c36_651] : memref<16x362xf32, #tpu.memory_space<vmem>>, vector<8x324xf32>
    %c6_652 = arith.constant 6 : index
    %c0_653 = arith.constant 0 : index
    %c0_654 = arith.constant 0 : index
    %593 = vector.load %arg26[%c6_652, %c0_653, %c0_654] : memref<9x8x8xf32, #tpu.memory_space<vmem>>, vector<1x8x8xf32>
    %594 = vector.shape_cast %593 : vector<1x8x8xf32> to vector<8x8xf32>
    %cst_655 = arith.constant dense<0.000000e+00> : vector<8x324xf32>
    %595 = tpu.matmul %594, %592, %cst_655 {dimension_numbers = #tpu.dot_dimension_numbers<[1], [0], [0], [1], [0, 0, 1, 1], [], []>} : vector<8x8xf32>, vector<8x324xf32>, vector<8x324xf32> -> vector<8x324xf32>
    %596 = arith.addf %591, %595 : vector<8x324xf32>
    %c0_656 = arith.constant 0 : index
    %c37_657 = arith.constant 37 : index
    %597 = vector.load %arg36[%c0_656, %c37_657] : memref<16x362xf32, #tpu.memory_space<vmem>>, vector<8x324xf32>
    %c7_658 = arith.constant 7 : index
    %c0_659 = arith.constant 0 : index
    %c0_660 = arith.constant 0 : index
    %598 = vector.load %arg26[%c7_658, %c0_659, %c0_660] : memref<9x8x8xf32, #tpu.memory_space<vmem>>, vector<1x8x8xf32>
    %599 = vector.shape_cast %598 : vector<1x8x8xf32> to vector<8x8xf32>
    %cst_661 = arith.constant dense<0.000000e+00> : vector<8x324xf32>
    %600 = tpu.matmul %599, %597, %cst_661 {dimension_numbers = #tpu.dot_dimension_numbers<[1], [0], [0], [1], [0, 0, 1, 1], [], []>} : vector<8x8xf32>, vector<8x324xf32>, vector<8x324xf32> -> vector<8x324xf32>
    %601 = arith.addf %596, %600 : vector<8x324xf32>
    %c0_662 = arith.constant 0 : index
    %c38_663 = arith.constant 38 : index
    %602 = vector.load %arg36[%c0_662, %c38_663] : memref<16x362xf32, #tpu.memory_space<vmem>>, vector<8x324xf32>
    %c8_664 = arith.constant 8 : index
    %c0_665 = arith.constant 0 : index
    %c0_666 = arith.constant 0 : index
    %603 = vector.load %arg26[%c8_664, %c0_665, %c0_666] : memref<9x8x8xf32, #tpu.memory_space<vmem>>, vector<1x8x8xf32>
    %604 = vector.shape_cast %603 : vector<1x8x8xf32> to vector<8x8xf32>
    %cst_667 = arith.constant dense<0.000000e+00> : vector<8x324xf32>
    %605 = tpu.matmul %604, %602, %cst_667 {dimension_numbers = #tpu.dot_dimension_numbers<[1], [0], [0], [1], [0, 0, 1, 1], [], []>} : vector<8x8xf32>, vector<8x324xf32>, vector<8x324xf32> -> vector<8x324xf32>
    %606 = arith.addf %601, %605 : vector<8x324xf32>
    %c0_668 = arith.constant 0 : index
    %c0_669 = arith.constant 0 : index
    %607 = vector.load %arg27[%c0_668, %c0_669] : memref<8x1xf32, #tpu.memory_space<vmem>>, vector<8x1xf32>
    %608 = vector.broadcast %607 : vector<8x1xf32> to vector<8x324xf32>
    %609 = arith.addf %606, %608 : vector<8x324xf32>
    %cst_670 = arith.constant 0.000000e+00 : f32
    %610 = vector.broadcast %cst_670 : f32 to vector<8x324xf32>
    %611 = arith.maximumf %609, %610 : vector<8x324xf32>
    %c0_671 = arith.constant 0 : index
    %c0_672 = arith.constant 0 : index
    %612 = vector.load %arg32[%c0_671, %c0_672] : memref<1x324xf32, #tpu.memory_space<vmem>>, vector<1x324xf32>
    %613 = vector.broadcast %612 : vector<1x324xf32> to vector<8x324xf32>
    %614 = arith.mulf %611, %613 : vector<8x324xf32>
    %c0_673 = arith.constant 0 : index
    %c0_674 = arith.constant 0 : index
    %615 = vector.load %arg28[%c0_673, %c0_674] : memref<1x8xf32, #tpu.memory_space<vmem>>, vector<1x8xf32>
    %cst_675 = arith.constant dense<0.000000e+00> : vector<1x324xf32>
    %616 = tpu.matmul %615, %614, %cst_675 {dimension_numbers = #tpu.dot_dimension_numbers<[1], [0], [0], [1], [0, 0, 1, 1], [], []>} : vector<1x8xf32>, vector<8x324xf32>, vector<1x324xf32> -> vector<1x324xf32>
    %c0_676 = arith.constant 0 : index
    %c0_677 = arith.constant 0 : index
    %617 = vector.load %arg29[%c0_676, %c0_677] : memref<1x1xf32, #tpu.memory_space<vmem>>, vector<1x1xf32>
    %618 = vector.broadcast %617 : vector<1x1xf32> to vector<1x324xf32>
    %619 = arith.addf %616, %618 : vector<1x324xf32>
    %c0_678 = arith.constant 0 : index
    %c0_679 = arith.constant 0 : index
    %c0_680 = arith.constant 0 : index
    %620 = vector.load %arg35[%c0_678, %c0_679, %c0_680] : memref<1x1x324xf32, #tpu.memory_space<vmem>>, vector<1x1x324xf32>
    %621 = vector.shape_cast %620 : vector<1x1x324xf32> to vector<1x324xf32>
    %622 = vector.shape_cast %619 : vector<1x324xf32> to vector<1x1x324xf32>
    tpu.vector_store %arg35[%c0_678, %c0_679, %c0_680], %622 {strides = array<i32>} : memref<1x1x324xf32, #tpu.memory_space<vmem>>, vector<1x1x324xf32>,
    return
  }
  func.func @transform_0(%arg0: i32) -> (i32, i32, i32) {
    %c0_i32 = arith.constant 0 : i32
    %c0_i32_0 = arith.constant 0 : i32
    %c0_i32_1 = arith.constant 0 : i32
    return %arg0, %c0_i32, %c0_i32_0 : i32, i32, i32
  }
  func.func @transform_1(%arg0: i32) -> (i32, i32, i32) {
    %c0_i32 = arith.constant 0 : i32
    %c0_i32_0 = arith.constant 0 : i32
    %c0_i32_1 = arith.constant 0 : i32
    %c0_i32_2 = arith.constant 0 : i32
    return %c0_i32, %c0_i32_0, %c0_i32_1 : i32, i32, i32
  }
  func.func @transform_2(%arg0: i32) -> (i32, i32) {
    %c0_i32 = arith.constant 0 : i32
    %c0_i32_0 = arith.constant 0 : i32
    %c0_i32_1 = arith.constant 0 : i32
    return %c0_i32, %c0_i32_0 : i32, i32
  }
  func.func @transform_3(%arg0: i32) -> (i32, i32, i32) {
    %c0_i32 = arith.constant 0 : i32
    %c0_i32_0 = arith.constant 0 : i32
    %c0_i32_1 = arith.constant 0 : i32
    %c0_i32_2 = arith.constant 0 : i32
    return %c0_i32, %c0_i32_0, %c0_i32_1 : i32, i32, i32
  }
  func.func @transform_4(%arg0: i32) -> (i32, i32) {
    %c0_i32 = arith.constant 0 : i32
    %c0_i32_0 = arith.constant 0 : i32
    %c0_i32_1 = arith.constant 0 : i32
    return %c0_i32, %c0_i32_0 : i32, i32
  }
  func.func @transform_5(%arg0: i32) -> (i32, i32, i32) {
    %c0_i32 = arith.constant 0 : i32
    %c0_i32_0 = arith.constant 0 : i32
    %c0_i32_1 = arith.constant 0 : i32
    %c0_i32_2 = arith.constant 0 : i32
    return %c0_i32, %c0_i32_0, %c0_i32_1 : i32, i32, i32
  }
  func.func @transform_6(%arg0: i32) -> (i32, i32) {
    %c0_i32 = arith.constant 0 : i32
    %c0_i32_0 = arith.constant 0 : i32
    %c0_i32_1 = arith.constant 0 : i32
    return %c0_i32, %c0_i32_0 : i32, i32
  }
  func.func @transform_7(%arg0: i32) -> (i32, i32, i32) {
    %c0_i32 = arith.constant 0 : i32
    %c0_i32_0 = arith.constant 0 : i32
    %c0_i32_1 = arith.constant 0 : i32
    %c0_i32_2 = arith.constant 0 : i32
    return %c0_i32, %c0_i32_0, %c0_i32_1 : i32, i32, i32
  }
  func.func @transform_8(%arg0: i32) -> (i32, i32) {
    %c0_i32 = arith.constant 0 : i32
    %c0_i32_0 = arith.constant 0 : i32
    %c0_i32_1 = arith.constant 0 : i32
    return %c0_i32, %c0_i32_0 : i32, i32
  }
  func.func @transform_9(%arg0: i32) -> (i32, i32, i32) {
    %c0_i32 = arith.constant 0 : i32
    %c0_i32_0 = arith.constant 0 : i32
    %c0_i32_1 = arith.constant 0 : i32
    %c0_i32_2 = arith.constant 0 : i32
    return %c0_i32, %c0_i32_0, %c0_i32_1 : i32, i32, i32
  }
  func.func @transform_10(%arg0: i32) -> (i32, i32) {
    %c0_i32 = arith.constant 0 : i32
    %c0_i32_0 = arith.constant 0 : i32
    %c0_i32_1 = arith.constant 0 : i32
    return %c0_i32, %c0_i32_0 : i32, i32
  }
  func.func @transform_11(%arg0: i32) -> (i32, i32, i32) {
    %c0_i32 = arith.constant 0 : i32
    %c0_i32_0 = arith.constant 0 : i32
    %c0_i32_1 = arith.constant 0 : i32
    %c0_i32_2 = arith.constant 0 : i32
    return %c0_i32, %c0_i32_0, %c0_i32_1 : i32, i32, i32
  }
  func.func @transform_12(%arg0: i32) -> (i32, i32) {
    %c0_i32 = arith.constant 0 : i32
    %c0_i32_0 = arith.constant 0 : i32
    %c0_i32_1 = arith.constant 0 : i32
    return %c0_i32, %c0_i32_0 : i32, i32
  }
  func.func @transform_13(%arg0: i32) -> (i32, i32) {
    %c0_i32 = arith.constant 0 : i32
    %c0_i32_0 = arith.constant 0 : i32
    %c0_i32_1 = arith.constant 0 : i32
    return %c0_i32, %c0_i32_0 : i32, i32
  }
  func.func @transform_14(%arg0: i32) -> (i32, i32) {
    %c0_i32 = arith.constant 0 : i32
    %c0_i32_0 = arith.constant 0 : i32
    %c0_i32_1 = arith.constant 0 : i32
    return %c0_i32, %c0_i32_0 : i32, i32
  }
  func.func @transform_15(%arg0: i32) -> (i32, i32, i32) {
    %c0_i32 = arith.constant 0 : i32
    %c0_i32_0 = arith.constant 0 : i32
    %c0_i32_1 = arith.constant 0 : i32
    %c0_i32_2 = arith.constant 0 : i32
    return %c0_i32, %c0_i32_0, %c0_i32_1 : i32, i32, i32
  }
  func.func @transform_16(%arg0: i32) -> (i32, i32, i32) {
    %c0_i32 = arith.constant 0 : i32
    %c0_i32_0 = arith.constant 0 : i32
    %c0_i32_1 = arith.constant 0 : i32
    %c0_i32_2 = arith.constant 0 : i32
    return %c0_i32, %c0_i32_0, %c0_i32_1 : i32, i32, i32
  }
  func.func @transform_17(%arg0: i32) -> (i32, i32) {
    %c0_i32 = arith.constant 0 : i32
    %c0_i32_0 = arith.constant 0 : i32
    %c0_i32_1 = arith.constant 0 : i32
    return %c0_i32, %c0_i32_0 : i32, i32
  }
  func.func @transform_18(%arg0: i32) -> (i32, i32, i32) {
    %c0_i32 = arith.constant 0 : i32
    %c0_i32_0 = arith.constant 0 : i32
    %c0_i32_1 = arith.constant 0 : i32
    %c0_i32_2 = arith.constant 0 : i32
    return %c0_i32, %c0_i32_0, %c0_i32_1 : i32, i32, i32
  }
  func.func @transform_19(%arg0: i32) -> (i32, i32) {
    %c0_i32 = arith.constant 0 : i32
    %c0_i32_0 = arith.constant 0 : i32
    %c0_i32_1 = arith.constant 0 : i32
    return %c0_i32, %c0_i32_0 : i32, i32
  }
  func.func @transform_20(%arg0: i32) -> (i32, i32) {
    %c0_i32 = arith.constant 0 : i32
    %c0_i32_0 = arith.constant 0 : i32
    %c0_i32_1 = arith.constant 0 : i32
    return %c0_i32, %c0_i32_0 : i32, i32
  }
  func.func @transform_21(%arg0: i32) -> (i32, i32) {
    %c0_i32 = arith.constant 0 : i32
    %c0_i32_0 = arith.constant 0 : i32
    %c0_i32_1 = arith.constant 0 : i32
    return %c0_i32, %c0_i32_0 : i32, i32
  }
  func.func @transform_22(%arg0: i32) -> (i32, i32, i32) {
    %c0_i32 = arith.constant 0 : i32
    %c0_i32_0 = arith.constant 0 : i32
    %c0_i32_1 = arith.constant 0 : i32
    %c0_i32_2 = arith.constant 0 : i32
    return %c0_i32, %c0_i32_0, %c0_i32_1 : i32, i32, i32
  }
  func.func @transform_23(%arg0: i32) -> (i32, i32, i32) {
    %c0_i32 = arith.constant 0 : i32
    %c0_i32_0 = arith.constant 0 : i32
    %c0_i32_1 = arith.constant 0 : i32
    %c0_i32_2 = arith.constant 0 : i32
    return %c0_i32, %c0_i32_0, %c0_i32_1 : i32, i32, i32
  }
  func.func @transform_24(%arg0: i32) -> (i32, i32) {
    %c0_i32 = arith.constant 0 : i32
    %c0_i32_0 = arith.constant 0 : i32
    %c0_i32_1 = arith.constant 0 : i32
    return %c0_i32, %c0_i32_0 : i32, i32
  }
  func.func @transform_25(%arg0: i32) -> (i32, i32, i32) {
    %c0_i32 = arith.constant 0 : i32
    %c0_i32_0 = arith.constant 0 : i32
    %c0_i32_1 = arith.constant 0 : i32
    %c0_i32_2 = arith.constant 0 : i32
    return %c0_i32, %c0_i32_0, %c0_i32_1 : i32, i32, i32
  }
  func.func @transform_26(%arg0: i32) -> (i32, i32) {
    %c0_i32 = arith.constant 0 : i32
    %c0_i32_0 = arith.constant 0 : i32
    %c0_i32_1 = arith.constant 0 : i32
    return %c0_i32, %c0_i32_0 : i32, i32
  }
  func.func @transform_27(%arg0: i32) -> (i32, i32) {
    %c0_i32 = arith.constant 0 : i32
    %c0_i32_0 = arith.constant 0 : i32
    %c0_i32_1 = arith.constant 0 : i32
    return %c0_i32, %c0_i32_0 : i32, i32
  }
  func.func @transform_28(%arg0: i32) -> (i32, i32) {
    %c0_i32 = arith.constant 0 : i32
    %c0_i32_0 = arith.constant 0 : i32
    %c0_i32_1 = arith.constant 0 : i32
    return %c0_i32, %c0_i32_0 : i32, i32
  }
  func.func @transform_29(%arg0: i32) -> (i32, i32) {
    %c0_i32 = arith.constant 0 : i32
    %c0_i32_0 = arith.constant 0 : i32
    %c0_i32_1 = arith.constant 0 : i32
    return %c0_i32, %c0_i32_0 : i32, i32
  }
  func.func @transform_30(%arg0: i32) -> (i32, i32) {
    %c0_i32 = arith.constant 0 : i32
    %c0_i32_0 = arith.constant 0 : i32
    %c0_i32_1 = arith.constant 0 : i32
    return %c0_i32, %c0_i32_0 : i32, i32
  }
  func.func @transform_31(%arg0: i32) -> (i32, i32) {
    %c0_i32 = arith.constant 0 : i32
    %c0_i32_0 = arith.constant 0 : i32
    %c0_i32_1 = arith.constant 0 : i32
    return %c0_i32, %c0_i32_0 : i32, i32
  }
  func.func @transform_32(%arg0: i32) -> (i32, i32) {
    %c0_i32 = arith.constant 0 : i32
    %c0_i32_0 = arith.constant 0 : i32
    %c0_i32_1 = arith.constant 0 : i32
    return %c0_i32, %c0_i32_0 : i32, i32
  }
  func.func @transform_33(%arg0: i32) -> (i32, i32) {
    %c0_i32 = arith.constant 0 : i32
    %c0_i32_0 = arith.constant 0 : i32
    %c0_i32_1 = arith.constant 0 : i32
    return %c0_i32, %c0_i32_0 : i32, i32
  }
  func.func @transform_34(%arg0: i32) -> (i32, i32, i32) {
    %c0_i32 = arith.constant 0 : i32
    %c0_i32_0 = arith.constant 0 : i32
    %c0_i32_1 = arith.constant 0 : i32
    return %arg0, %c0_i32, %c0_i32_0 : i32, i32, i32
  }
}

</mosaic_0001>

<llo_original>
// kernel: unet1_forward.1
$region0: #{unet1_forward.1}
  #allocation0 [shape = 'u32[]', space=smem, size = 0x4, offset = 0x4, fixed_abs, tag = 'smem constant byte address 0x4 - core index']
  #allocation1 [shape = 'u32[72,128]{1,0:T(1,128)}', space=vmem, size = 0x9000, scoped, tag = 'internal scratch']
  #allocation2 [shape = 'f32[16,362]{1,0:T(8,128)}', space=vmem, size = 0x6000, scoped, tag = 'scratch operand']
  #allocation3 [shape = 'f32[32,122]{1,0:T(8,128)}', space=vmem, size = 0x4000, scoped, tag = 'scratch operand']
  #allocation4 [shape = 'f32[32,50]{1,0:T(8,128)}', space=vmem, size = 0x4000, scoped, tag = 'scratch operand']
  #allocation5 [shape = 'f32[1,1]{1,0:T(1,128)S(1)}', space=vmem, size = 0x200, scoped, tag = 'scoped memory for unet1_forward.1']
  %s0 = inlined_call_operand.smem [shape: u32[35], index: -1, kind: input, shape index: {}]
  %s1 = sld [smem:[%s0]]
  %s2 = scalar_lea.smem %s0, 1
  %s3 = sld [smem:[%s2]]
  %s4 = scalar_lea.smem %s0, 2
  %s5 = sld [smem:[%s4]]
  %s6 = scalar_lea.smem %s0, 3
  %s7 = sld [smem:[%s6]]
  %s8 = scalar_lea.smem %s0, 4
  %s9 = sld [smem:[%s8]]
  %s10 = scalar_lea.smem %s0, 5
  %s11 = sld [smem:[%s10]]
  %s12 = scalar_lea.smem %s0, 6
  %s13 = sld [smem:[%s12]]
  %s14 = scalar_lea.smem %s0, 7
  %s15 = sld [smem:[%s14]]
  %s16 = scalar_lea.smem %s0, 8
  %s17 = sld [smem:[%s16]]
  %s18 = scalar_lea.smem %s0, 9
  %s19 = sld [smem:[%s18]]
  %s20 = scalar_lea.smem %s0, 10
  %s21 = sld [smem:[%s20]]
  %s22 = scalar_lea.smem %s0, 11
  %s23 = sld [smem:[%s22]]
  %s24 = scalar_lea.smem %s0, 12
  %s25 = sld [smem:[%s24]]
  %s26 = scalar_lea.smem %s0, 13
  %s27 = sld [smem:[%s26]]
  %s28 = scalar_lea.smem %s0, 14
  %s29 = sld [smem:[%s28]]
  %s30 = scalar_lea.smem %s0, 15
  %s31 = sld [smem:[%s30]]
  %s32 = scalar_lea.smem %s0, 16
  %s33 = sld [smem:[%s32]]
  %s34 = scalar_lea.smem %s0, 17
  %s35 = sld [smem:[%s34]]
  %s36 = scalar_lea.smem %s0, 18
  %s37 = sld [smem:[%s36]]
  %s38 = scalar_lea.smem %s0, 19
  %s39 = sld [smem:[%s38]]
  %s40 = scalar_lea.smem %s0, 20
  %s41 = sld [smem:[%s40]]
  %s42 = scalar_lea.smem %s0, 21
  %s43 = sld [smem:[%s42]]
  %s44 = scalar_lea.smem %s0, 22
  %s45 = sld [smem:[%s44]]
  %s46 = scalar_lea.smem %s0, 23
  %s47 = sld [smem:[%s46]]
  %s48 = scalar_lea.smem %s0, 24
  %s49 = sld [smem:[%s48]]
  %s50 = scalar_lea.smem %s0, 25
  %s51 = sld [smem:[%s50]]
  %s52 = scalar_lea.smem %s0, 26
  %s53 = sld [smem:[%s52]]
  %s54 = scalar_lea.smem %s0, 27
  %s55 = sld [smem:[%s54]]
  %s56 = scalar_lea.smem %s0, 28
  %s57 = sld [smem:[%s56]]
  %s58 = scalar_lea.smem %s0, 29
  %s59 = sld [smem:[%s58]]
  %s60 = scalar_lea.smem %s0, 30
  %s61 = sld [smem:[%s60]]
  %s62 = scalar_lea.smem %s0, 31
  %s63 = sld [smem:[%s62]]
  %s64 = scalar_lea.smem %s0, 32
  %s65 = sld [smem:[%s64]]
  %s66 = scalar_lea.smem %s0, 33
  %s67 = sld [smem:[%s66]]
  %s68 = scalar_lea.smem %s0, 34
  %s69 = sld [smem:[%s68]]
  %s70 = sld [smem:[#allocation0]]
  $region173: #{unet1_forward.1} parent=0
    _
  %s72 = ssub.s32 1, %s70
  %s73 = scalar_select 0, %s72, %s70
  %v74 = vstv %s57
  %75 = vst [vmem:[#allocation5] sm:$0x1] %v74
  $region1: #{unet1_forward.1} parent=0
    #allocation6 [shape = 'u8[638976]{0}', space=vmem, size = 0x9c000, scoped, tag = 'input window, operand 22, single buffered']
    #allocation7 [shape = 's32[2]{0}', space=sflag, size = 0x8, scoped, tag = 'scoped memory for unet1_forward.1']
    %76 = vsyncpa [#allocation7], 0
    loop: start=0, step=1, limit=4
    $region2: #{unet1_forward.1} parent=1 // loop_pre_header
      _
    $region3: #{unet1_forward.1} parent=1 // loop_header
      %s78 = sphi 0, %s82
      %p79 = scmp.ge.s32.totalorder %s78, 4
      %s88 = sphi 0, %s90
      %s91 = sphi 0, %s88
      %s92 = sphi 0, %s91
      %s108 = sphi 0, %s92
      %s112 = sphi 0, %s112
      %s114 = sphi 0, %s112
      %s115 = sphi 0, %s114
      %s129 = sphi 0, %s115
      %s133 = sphi 0, %s133
      %s135 = sphi 0, %s133
      %s136 = sphi 0, %s135
      %s150 = sphi 0, %s136
      %s154 = sphi 0, %s154
      %s156 = sphi 0, %s154
      %s157 = sphi 0, %s156
      %s171 = sphi 0, %s157
      %s175 = sphi 0, %s175
      %s177 = sphi 0, %s175
      %s178 = sphi 0, %s177
      %s192 = sphi 0, %s178
      %s196 = sphi 0, %s196
      %s198 = sphi 0, %s196
      %s199 = sphi 0, %s198
      %s213 = sphi 0, %s199
      %s217 = sphi 0, %s217
      %s219 = sphi 0, %s217
      %s220 = sphi 0, %s219
      %s234 = sphi 0, %s220
      %s238 = sphi 0, %s238
      %s240 = sphi 0, %s238
      %s241 = sphi 0, %s240
      %s255 = sphi 0, %s241
      %s259 = sphi 0, %s259
      %s261 = sphi 0, %s259
      %s262 = sphi 0, %s261
      %s276 = sphi 0, %s262
      %s280 = sphi 0, %s280
      %s282 = sphi 0, %s280
      %s283 = sphi 0, %s282
      %s297 = sphi 0, %s283
      %s301 = sphi 0, %s301
      %s303 = sphi 0, %s301
      %s304 = sphi 0, %s303
      %s318 = sphi 0, %s304
      %s322 = sphi 0, %s322
      %s324 = sphi 0, %s322
      %s325 = sphi 0, %s324
      %s339 = sphi 0, %s325
      %s343 = sphi 0, %s343
      %s345 = sphi 0, %s343
      %s346 = sphi 0, %s345
      %s360 = sphi 0, %s346
      %s364 = sphi 0, %s364
      %s366 = sphi 0, %s364
      %s367 = sphi 0, %s366
      %s381 = sphi 0, %s367
      %s385 = sphi 0, %s385
      %s387 = sphi 0, %s385
      %s388 = sphi 0, %s387
      %s402 = sphi 0, %s388
      %s406 = sphi 0, %s406
      %s408 = sphi 0, %s406
      %s409 = sphi 0, %s408
      %s423 = sphi 0, %s409
      %s427 = sphi 0, %s427
      %s429 = sphi 0, %s427
      %s430 = sphi 0, %s429
      %s444 = sphi 0, %s430
      %s448 = sphi 0, %s448
      %s450 = sphi 0, %s448
      %s451 = sphi 0, %s450
      %s465 = sphi 0, %s451
      %s469 = sphi 0, %s469
      %s471 = sphi 0, %s469
      %s472 = sphi 0, %s471
      %s486 = sphi 0, %s472
      %s490 = sphi 0, %s490
      %s492 = sphi 0, %s490
      %s493 = sphi 0, %s492
      %s507 = sphi 0, %s493
      %s511 = sphi 0, %s511
      %s513 = sphi 0, %s511
      %s514 = sphi 0, %s513
      %s528 = sphi 0, %s514
      %s532 = sphi 0, %s532
      %s534 = sphi 0, %s532
      %s535 = sphi 0, %s534
      %s549 = sphi 0, %s535
      %s553 = sphi 0, %s553
      %s555 = sphi 0, %s553
      %s556 = sphi 0, %s555
      %s570 = sphi 0, %s556
      %s574 = sphi 0, %s574
      %s576 = sphi 0, %s574
      %s577 = sphi 0, %s576
      %s591 = sphi 0, %s577
      %s595 = sphi 0, %s595
      %s597 = sphi 0, %s595
      %s598 = sphi 0, %s597
      %s612 = sphi 0, %s598
      %s616 = sphi 0, %s616
      %s618 = sphi 0, %s616
      %s619 = sphi 0, %s618
      %s633 = sphi 0, %s619
      %s637 = sphi 0, %s637
      %s639 = sphi 0, %s637
      %s640 = sphi 0, %s639
      %s654 = sphi 0, %s640
      %s658 = sphi 0, %s658
      %s660 = sphi 0, %s658
      %s661 = sphi 0, %s660
      %s675 = sphi 0, %s661
      %s679 = sphi 0, %s679
      %s681 = sphi 0, %s679
      %s682 = sphi 0, %s681
      %s696 = sphi 0, %s682
      %s700 = sphi 0, %s700
      %s702 = sphi 0, %s700
      %s703 = sphi 0, %s702
      %s717 = sphi 0, %s703
      %s721 = sphi 0, %s721
      %s723 = sphi 0, %s721
      %s724 = sphi 0, %s723
      %s738 = sphi 0, %s724
      %s742 = sphi 0, %s742
      %s744 = sphi 0, %s742
      %s745 = sphi 0, %s744
      %s759 = sphi 0, %s745
      %s763 = sphi 0, %s763
      %s765 = sphi 0, %s763
      %s766 = sphi 0, %s765
      %s780 = sphi 0, %s766
      %s784 = sphi 0, %s784
      %s786 = sphi 0, %s784
      %s787 = sphi 0, %s786
      %s801 = sphi 0, %s787
      %s807 = sphi 0, %s809
      %s810 = sphi 0, %s807
      %s811 = sphi 0, %s810
      %s827 = sphi 0, %s811
    $region4: #{unet1_forward.1} parent=1 // loop_header_branch
      %81 = sbr.rel (%p79) target = $region8
    $region5: #{unet1_forward.1} parent=1 // loop_body
      %s83 = ssub.s32 %s78, 1
      %s84 = ssub.s32 %s78, 2
      %s85 = sadd.s32 %s78, 1
      %s86 = ssub.s32 %s78, %s85
      %p87 = scmp.eq.s32.totalorder %s86, 0
      %s89 = sadd.s32 %s88, 1
      %s90 = scalar_select %p87, %s88, %s89
      %p93 = pneg %p87
      %p94 = scmp.eq.s32.totalorder %s78, 1
      %p95 = por %p93, %p94
      %p96 = scmp.ne.s32.totalorder %s88, %s91
      %p97 = scmp.eq.s32.totalorder %s78, 0
      %p98 = por %p96, %p97
      %p99 = scmp.ne.s32.totalorder %s88, %s91
      %p100 = scmp.eq.s32.totalorder %s83, 1
      %p101 = por %p99, %p100
      %p102 = scmp.ne.s32.totalorder %s91, %s92
      %p103 = scmp.eq.s32.totalorder %s83, 0
      %p104 = por %p102, %p103
      %p105 = scmp.ne.s32.totalorder %s91, %s92
      %p106 = scmp.eq.s32.totalorder %s84, 1
      %p107 = por %p105, %p106
      %p109 = scmp.ne.s32.totalorder %s92, %s108
      %p110 = scmp.eq.s32.totalorder %s84, 0
      %p111 = por %p109, %p110
      %s113 = sadd.s32 %s112, 1
      %p116 = scmp.eq.s32.totalorder %s78, 1
      %p117 = scmp.ne.s32.totalorder %s112, %s114
      %p118 = scmp.eq.s32.totalorder %s78, 0
      %p119 = por %p117, %p118
      %p120 = scmp.ne.s32.totalorder %s112, %s114
      %p121 = scmp.eq.s32.totalorder %s83, 1
      %p122 = por %p120, %p121
      %p123 = scmp.ne.s32.totalorder %s114, %s115
      %p124 = scmp.eq.s32.totalorder %s83, 0
      %p125 = por %p123, %p124
      %p126 = scmp.ne.s32.totalorder %s114, %s115
      %p127 = scmp.eq.s32.totalorder %s84, 1
      %p128 = por %p126, %p127
      %p130 = scmp.ne.s32.totalorder %s115, %s129
      %p131 = scmp.eq.s32.totalorder %s84, 0
      %p132 = por %p130, %p131
      %s134 = sadd.s32 %s133, 1
      %p137 = scmp.eq.s32.totalorder %s78, 1
      %p138 = scmp.ne.s32.totalorder %s133, %s135
      %p139 = scmp.eq.s32.totalorder %s78, 0
      %p140 = por %p138, %p139
      %p141 = scmp.ne.s32.totalorder %s133, %s135
      %p142 = scmp.eq.s32.totalorder %s83, 1
      %p143 = por %p141, %p142
      %p144 = scmp.ne.s32.totalorder %s135, %s136
      %p145 = scmp.eq.s32.totalorder %s83, 0
      %p146 = por %p144, %p145
      %p147 = scmp.ne.s32.totalorder %s135, %s136
      %p148 = scmp.eq.s32.totalorder %s84, 1
      %p149 = por %p147, %p148
      %p151 = scmp.ne.s32.totalorder %s136, %s150
      %p152 = scmp.eq.s32.totalorder %s84, 0
      %p153 = por %p151, %p152
      %s155 = sadd.s32 %s154, 1
      %p158 = scmp.eq.s32.totalorder %s78, 1
      %p159 = scmp.ne.s32.totalorder %s154, %s156
      %p160 = scmp.eq.s32.totalorder %s78, 0
      %p161 = por %p159, %p160
      %p162 = scmp.ne.s32.totalorder %s154, %s156
      %p163 = scmp.eq.s32.totalorder %s83, 1
      %p164 = por %p162, %p163
      %p165 = scmp.ne.s32.totalorder %s156, %s157
      %p166 = scmp.eq.s32.totalorder %s83, 0
      %p167 = por %p165, %p166
      %p168 = scmp.ne.s32.totalorder %s156, %s157
      %p169 = scmp.eq.s32.totalorder %s84, 1
      %p170 = por %p168, %p169
      %p172 = scmp.ne.s32.totalorder %s157, %s171
      %p173 = scmp.eq.s32.totalorder %s84, 0
      %p174 = por %p172, %p173
      %s176 = sadd.s32 %s175, 1
      %p179 = scmp.eq.s32.totalorder %s78, 1
      %p180 = scmp.ne.s32.totalorder %s175, %s177
      %p181 = scmp.eq.s32.totalorder %s78, 0
      %p182 = por %p180, %p181
      %p183 = scmp.ne.s32.totalorder %s175, %s177
      %p184 = scmp.eq.s32.totalorder %s83, 1
      %p185 = por %p183, %p184
      %p186 = scmp.ne.s32.totalorder %s177, %s178
      %p187 = scmp.eq.s32.totalorder %s83, 0
      %p188 = por %p186, %p187
      %p189 = scmp.ne.s32.totalorder %s177, %s178
      %p190 = scmp.eq.s32.totalorder %s84, 1
      %p191 = por %p189, %p190
      %p193 = scmp.ne.s32.totalorder %s178, %s192
      %p194 = scmp.eq.s32.totalorder %s84, 0
      %p195 = por %p193, %p194
      %s197 = sadd.s32 %s196, 1
      %p200 = scmp.eq.s32.totalorder %s78, 1
      %p201 = scmp.ne.s32.totalorder %s196, %s198
      %p202 = scmp.eq.s32.totalorder %s78, 0
      %p203 = por %p201, %p202
      %p204 = scmp.ne.s32.totalorder %s196, %s198
      %p205 = scmp.eq.s32.totalorder %s83, 1
      %p206 = por %p204, %p205
      %p207 = scmp.ne.s32.totalorder %s198, %s199
      %p208 = scmp.eq.s32.totalorder %s83, 0
      %p209 = por %p207, %p208
      %p210 = scmp.ne.s32.totalorder %s198, %s199
      %p211 = scmp.eq.s32.totalorder %s84, 1
      %p212 = por %p210, %p211
      %p214 = scmp.ne.s32.totalorder %s199, %s213
      %p215 = scmp.eq.s32.totalorder %s84, 0
      %p216 = por %p214, %p215
      %s218 = sadd.s32 %s217, 1
      %p221 = scmp.eq.s32.totalorder %s78, 1
      %p222 = scmp.ne.s32.totalorder %s217, %s219
      %p223 = scmp.eq.s32.totalorder %s78, 0
      %p224 = por %p222, %p223
      %p225 = scmp.ne.s32.totalorder %s217, %s219
      %p226 = scmp.eq.s32.totalorder %s83, 1
      %p227 = por %p225, %p226
      %p228 = scmp.ne.s32.totalorder %s219, %s220
      %p229 = scmp.eq.s32.totalorder %s83, 0
      %p230 = por %p228, %p229
      %p231 = scmp.ne.s32.totalorder %s219, %s220
      %p232 = scmp.eq.s32.totalorder %s84, 1
      %p233 = por %p231, %p232
      %p235 = scmp.ne.s32.totalorder %s220, %s234
      %p236 = scmp.eq.s32.totalorder %s84, 0
      %p237 = por %p235, %p236
      %s239 = sadd.s32 %s238, 1
      %p242 = scmp.eq.s32.totalorder %s78, 1
      %p243 = scmp.ne.s32.totalorder %s238, %s240
      %p244 = scmp.eq.s32.totalorder %s78, 0
      %p245 = por %p243, %p244
      %p246 = scmp.ne.s32.totalorder %s238, %s240
      %p247 = scmp.eq.s32.totalorder %s83, 1
      %p248 = por %p246, %p247
      %p249 = scmp.ne.s32.totalorder %s240, %s241
      %p250 = scmp.eq.s32.totalorder %s83, 0
      %p251 = por %p249, %p250
      %p252 = scmp.ne.s32.totalorder %s240, %s241
      %p253 = scmp.eq.s32.totalorder %s84, 1
      %p254 = por %p252, %p253
      %p256 = scmp.ne.s32.totalorder %s241, %s255
      %p257 = scmp.eq.s32.totalorder %s84, 0
      %p258 = por %p256, %p257
      %s260 = sadd.s32 %s259, 1
      %p263 = scmp.eq.s32.totalorder %s78, 1
      %p264 = scmp.ne.s32.totalorder %s259, %s261
      %p265 = scmp.eq.s32.totalorder %s78, 0
      %p266 = por %p264, %p265
      %p267 = scmp.ne.s32.totalorder %s259, %s261
      %p268 = scmp.eq.s32.totalorder %s83, 1
      %p269 = por %p267, %p268
      %p270 = scmp.ne.s32.totalorder %s261, %s262
      %p271 = scmp.eq.s32.totalorder %s83, 0
      %p272 = por %p270, %p271
      %p273 = scmp.ne.s32.totalorder %s261, %s262
      %p274 = scmp.eq.s32.totalorder %s84, 1
      %p275 = por %p273, %p274
      %p277 = scmp.ne.s32.totalorder %s262, %s276
      %p278 = scmp.eq.s32.totalorder %s84, 0
      %p279 = por %p277, %p278
      %s281 = sadd.s32 %s280, 1
      %p284 = scmp.eq.s32.totalorder %s78, 1
      %p285 = scmp.ne.s32.totalorder %s280, %s282
      %p286 = scmp.eq.s32.totalorder %s78, 0
      %p287 = por %p285, %p286
      %p288 = scmp.ne.s32.totalorder %s280, %s282
      %p289 = scmp.eq.s32.totalorder %s83, 1
      %p290 = por %p288, %p289
      %p291 = scmp.ne.s32.totalorder %s282, %s283
      %p292 = scmp.eq.s32.totalorder %s83, 0
      %p293 = por %p291, %p292
      %p294 = scmp.ne.s32.totalorder %s282, %s283
      %p295 = scmp.eq.s32.totalorder %s84, 1
      %p296 = por %p294, %p295
      %p298 = scmp.ne.s32.totalorder %s283, %s297
      %p299 = scmp.eq.s32.totalorder %s84, 0
      %p300 = por %p298, %p299
      %s302 = sadd.s32 %s301, 1
      %p305 = scmp.eq.s32.totalorder %s78, 1
      %p306 = scmp.ne.s32.totalorder %s301, %s303
      %p307 = scmp.eq.s32.totalorder %s78, 0
      %p308 = por %p306, %p307
      %p309 = scmp.ne.s32.totalorder %s301, %s303
      %p310 = scmp.eq.s32.totalorder %s83, 1
      %p311 = por %p309, %p310
      %p312 = scmp.ne.s32.totalorder %s303, %s304
      %p313 = scmp.eq.s32.totalorder %s83, 0
      %p314 = por %p312, %p313
      %p315 = scmp.ne.s32.totalorder %s303, %s304
      %p316 = scmp.eq.s32.totalorder %s84, 1
      %p317 = por %p315, %p316
      %p319 = scmp.ne.s32.totalorder %s304, %s318
      %p320 = scmp.eq.s32.totalorder %s84, 0
      %p321 = por %p319, %p320
      %s323 = sadd.s32 %s322, 1
      %p326 = scmp.eq.s32.totalorder %s78, 1
      %p327 = scmp.ne.s32.totalorder %s322, %s324
      %p328 = scmp.eq.s32.totalorder %s78, 0
      %p329 = por %p327, %p328
      %p330 = scmp.ne.s32.totalorder %s322, %s324
      %p331 = scmp.eq.s32.totalorder %s83, 1
      %p332 = por %p330, %p331
      %p333 = scmp.ne.s32.totalorder %s324, %s325
      %p334 = scmp.eq.s32.totalorder %s83, 0
      %p335 = por %p333, %p334
      %p336 = scmp.ne.s32.totalorder %s324, %s325
      %p337 = scmp.eq.s32.totalorder %s84, 1
      %p338 = por %p336, %p337
      %p340 = scmp.ne.s32.totalorder %s325, %s339
      %p341 = scmp.eq.s32.totalorder %s84, 0
      %p342 = por %p340, %p341
      %s344 = sadd.s32 %s343, 1
      %p347 = scmp.eq.s32.totalorder %s78, 1
      %p348 = scmp.ne.s32.totalorder %s343, %s345
      %p349 = scmp.eq.s32.totalorder %s78, 0
      %p350 = por %p348, %p349
      %p351 = scmp.ne.s32.totalorder %s343, %s345
      %p352 = scmp.eq.s32.totalorder %s83, 1
      %p353 = por %p351, %p352
      %p354 = scmp.ne.s32.totalorder %s345, %s346
      %p355 = scmp.eq.s32.totalorder %s83, 0
      %p356 = por %p354, %p355
      %p357 = scmp.ne.s32.totalorder %s345, %s346
      %p358 = scmp.eq.s32.totalorder %s84, 1
      %p359 = por %p357, %p358
      %p361 = scmp.ne.s32.totalorder %s346, %s360
      %p362 = scmp.eq.s32.totalorder %s84, 0
      %p363 = por %p361, %p362
      %s365 = sadd.s32 %s364, 1
      %p368 = scmp.eq.s32.totalorder %s78, 1
      %p369 = scmp.ne.s32.totalorder %s364, %s366
      %p370 = scmp.eq.s32.totalorder %s78, 0
      %p371 = por %p369, %p370
      %p372 = scmp.ne.s32.totalorder %s364, %s366
      %p373 = scmp.eq.s32.totalorder %s83, 1
      %p374 = por %p372, %p373
      %p375 = scmp.ne.s32.totalorder %s366, %s367
      %p376 = scmp.eq.s32.totalorder %s83, 0
      %p377 = por %p375, %p376
      %p378 = scmp.ne.s32.totalorder %s366, %s367
      %p379 = scmp.eq.s32.totalorder %s84, 1
      %p380 = por %p378, %p379
      %p382 = scmp.ne.s32.totalorder %s367, %s381
      %p383 = scmp.eq.s32.totalorder %s84, 0
      %p384 = por %p382, %p383
      %s386 = sadd.s32 %s385, 1
      %p389 = scmp.eq.s32.totalorder %s78, 1
      %p390 = scmp.ne.s32.totalorder %s385, %s387
      %p391 = scmp.eq.s32.totalorder %s78, 0
      %p392 = por %p390, %p391
      %p393 = scmp.ne.s32.totalorder %s385, %s387
      %p394 = scmp.eq.s32.totalorder %s83, 1
      %p395 = por %p393, %p394
      %p396 = scmp.ne.s32.totalorder %s387, %s388
      %p397 = scmp.eq.s32.totalorder %s83, 0
      %p398 = por %p396, %p397
      %p399 = scmp.ne.s32.totalorder %s387, %s388
      %p400 = scmp.eq.s32.totalorder %s84, 1
      %p401 = por %p399, %p400
      %p403 = scmp.ne.s32.totalorder %s388, %s402
      %p404 = scmp.eq.s32.totalorder %s84, 0
      %p405 = por %p403, %p404
      %s407 = sadd.s32 %s406, 1
      %p410 = scmp.eq.s32.totalorder %s78, 1
      %p411 = scmp.ne.s32.totalorder %s406, %s408
      %p412 = scmp.eq.s32.totalorder %s78, 0
      %p413 = por %p411, %p412
      %p414 = scmp.ne.s32.totalorder %s406, %s408
      %p415 = scmp.eq.s32.totalorder %s83, 1
      %p416 = por %p414, %p415
      %p417 = scmp.ne.s32.totalorder %s408, %s409
      %p418 = scmp.eq.s32.totalorder %s83, 0
      %p419 = por %p417, %p418
      %p420 = scmp.ne.s32.totalorder %s408, %s409
      %p421 = scmp.eq.s32.totalorder %s84, 1
      %p422 = por %p420, %p421
      %p424 = scmp.ne.s32.totalorder %s409, %s423
      %p425 = scmp.eq.s32.totalorder %s84, 0
      %p426 = por %p424, %p425
      %s428 = sadd.s32 %s427, 1
      %p431 = scmp.eq.s32.totalorder %s78, 1
      %p432 = scmp.ne.s32.totalorder %s427, %s429
      %p433 = scmp.eq.s32.totalorder %s78, 0
      %p434 = por %p432, %p433
      %p435 = scmp.ne.s32.totalorder %s427, %s429
      %p436 = scmp.eq.s32.totalorder %s83, 1
      %p437 = por %p435, %p436
      %p438 = scmp.ne.s32.totalorder %s429, %s430
      %p439 = scmp.eq.s32.totalorder %s83, 0
      %p440 = por %p438, %p439
      %p441 = scmp.ne.s32.totalorder %s429, %s430
      %p442 = scmp.eq.s32.totalorder %s84, 1
      %p443 = por %p441, %p442
      %p445 = scmp.ne.s32.totalorder %s430, %s444
      %p446 = scmp.eq.s32.totalorder %s84, 0
      %p447 = por %p445, %p446
      %s449 = sadd.s32 %s448, 1
      %p452 = scmp.eq.s32.totalorder %s78, 1
      %p453 = scmp.ne.s32.totalorder %s448, %s450
      %p454 = scmp.eq.s32.totalorder %s78, 0
      %p455 = por %p453, %p454
      %p456 = scmp.ne.s32.totalorder %s448, %s450
      %p457 = scmp.eq.s32.totalorder %s83, 1
      %p458 = por %p456, %p457
      %p459 = scmp.ne.s32.totalorder %s450, %s451
      %p460 = scmp.eq.s32.totalorder %s83, 0
      %p461 = por %p459, %p460
      %p462 = scmp.ne.s32.totalorder %s450, %s451
      %p463 = scmp.eq.s32.totalorder %s84, 1
      %p464 = por %p462, %p463
      %p466 = scmp.ne.s32.totalorder %s451, %s465
      %p467 = scmp.eq.s32.totalorder %s84, 0
      %p468 = por %p466, %p467
      %s470 = sadd.s32 %s469, 1
      %p473 = scmp.eq.s32.totalorder %s78, 1
      %p474 = scmp.ne.s32.totalorder %s469, %s471
      %p475 = scmp.eq.s32.totalorder %s78, 0
      %p476 = por %p474, %p475
      %p477 = scmp.ne.s32.totalorder %s469, %s471
      %p478 = scmp.eq.s32.totalorder %s83, 1
      %p479 = por %p477, %p478
      %p480 = scmp.ne.s32.totalorder %s471, %s472
      %p481 = scmp.eq.s32.totalorder %s83, 0
      %p482 = por %p480, %p481
      %p483 = scmp.ne.s32.totalorder %s471, %s472
      %p484 = scmp.eq.s32.totalorder %s84, 1
      %p485 = por %p483, %p484
      %p487 = scmp.ne.s32.totalorder %s472, %s486
      %p488 = scmp.eq.s32.totalorder %s84, 0
      %p489 = por %p487, %p488
      %s491 = sadd.s32 %s490, 1
      %p494 = scmp.eq.s32.totalorder %s78, 1
      %p495 = scmp.ne.s32.totalorder %s490, %s492
      %p496 = scmp.eq.s32.totalorder %s78, 0
      %p497 = por %p495, %p496
      %p498 = scmp.ne.s32.totalorder %s490, %s492
      %p499 = scmp.eq.s32.totalorder %s83, 1
      %p500 = por %p498, %p499
      %p501 = scmp.ne.s32.totalorder %s492, %s493
      %p502 = scmp.eq.s32.totalorder %s83, 0
      %p503 = por %p501, %p502
      %p504 = scmp.ne.s32.totalorder %s492, %s493
      %p505 = scmp.eq.s32.totalorder %s84, 1
      %p506 = por %p504, %p505
      %p508 = scmp.ne.s32.totalorder %s493, %s507
      %p509 = scmp.eq.s32.totalorder %s84, 0
      %p510 = por %p508, %p509
      %s512 = sadd.s32 %s511, 1
      %p515 = scmp.eq.s32.totalorder %s78, 1
      %p516 = scmp.ne.s32.totalorder %s511, %s513
      %p517 = scmp.eq.s32.totalorder %s78, 0
      %p518 = por %p516, %p517
      %p519 = scmp.ne.s32.totalorder %s511, %s513
      %p520 = scmp.eq.s32.totalorder %s83, 1
      %p521 = por %p519, %p520
      %p522 = scmp.ne.s32.totalorder %s513, %s514
      %p523 = scmp.eq.s32.totalorder %s83, 0
      %p524 = por %p522, %p523
      %p525 = scmp.ne.s32.totalorder %s513, %s514
      %p526 = scmp.eq.s32.totalorder %s84, 1
      %p527 = por %p525, %p526
      %p529 = scmp.ne.s32.totalorder %s514, %s528
      %p530 = scmp.eq.s32.totalorder %s84, 0
      %p531 = por %p529, %p530
      %s533 = sadd.s32 %s532, 1
      %p536 = scmp.eq.s32.totalorder %s78, 1
      %p537 = scmp.ne.s32.totalorder %s532, %s534
      %p538 = scmp.eq.s32.totalorder %s78, 0
      %p539 = por %p537, %p538
      %p540 = scmp.ne.s32.totalorder %s532, %s534
      %p541 = scmp.eq.s32.totalorder %s83, 1
      %p542 = por %p540, %p541
      %p543 = scmp.ne.s32.totalorder %s534, %s535
      %p544 = scmp.eq.s32.totalorder %s83, 0
      %p545 = por %p543, %p544
      %p546 = scmp.ne.s32.totalorder %s534, %s535
      %p547 = scmp.eq.s32.totalorder %s84, 1
      %p548 = por %p546, %p547
      %p550 = scmp.ne.s32.totalorder %s535, %s549
      %p551 = scmp.eq.s32.totalorder %s84, 0
      %p552 = por %p550, %p551
      %s554 = sadd.s32 %s553, 1
      %p557 = scmp.eq.s32.totalorder %s78, 1
      %p558 = scmp.ne.s32.totalorder %s553, %s555
      %p559 = scmp.eq.s32.totalorder %s78, 0
      %p560 = por %p558, %p559
      %p561 = scmp.ne.s32.totalorder %s553, %s555
      %p562 = scmp.eq.s32.totalorder %s83, 1
      %p563 = por %p561, %p562
      %p564 = scmp.ne.s32.totalorder %s555, %s556
      %p565 = scmp.eq.s32.totalorder %s83, 0
      %p566 = por %p564, %p565
      %p567 = scmp.ne.s32.totalorder %s555, %s556
      %p568 = scmp.eq.s32.totalorder %s84, 1
      %p569 = por %p567, %p568
      %p571 = scmp.ne.s32.totalorder %s556, %s570
      %p572 = scmp.eq.s32.totalorder %s84, 0
      %p573 = por %p571, %p572
      %s575 = sadd.s32 %s574, 1
      %p578 = scmp.eq.s32.totalorder %s78, 1
      %p579 = scmp.ne.s32.totalorder %s574, %s576
      %p580 = scmp.eq.s32.totalorder %s78, 0
      %p581 = por %p579, %p580
      %p582 = scmp.ne.s32.totalorder %s574, %s576
      %p583 = scmp.eq.s32.totalorder %s83, 1
      %p584 = por %p582, %p583
      %p585 = scmp.ne.s32.totalorder %s576, %s577
      %p586 = scmp.eq.s32.totalorder %s83, 0
      %p587 = por %p585, %p586
      %p588 = scmp.ne.s32.totalorder %s576, %s577
      %p589 = scmp.eq.s32.totalorder %s84, 1
      %p590 = por %p588, %p589
      %p592 = scmp.ne.s32.totalorder %s577, %s591
      %p593 = scmp.eq.s32.totalorder %s84, 0
      %p594 = por %p592, %p593
      %s596 = sadd.s32 %s595, 1
      %p599 = scmp.eq.s32.totalorder %s78, 1
      %p600 = scmp.ne.s32.totalorder %s595, %s597
      %p601 = scmp.eq.s32.totalorder %s78, 0
      %p602 = por %p600, %p601
      %p603 = scmp.ne.s32.totalorder %s595, %s597
      %p604 = scmp.eq.s32.totalorder %s83, 1
      %p605 = por %p603, %p604
      %p606 = scmp.ne.s32.totalorder %s597, %s598
      %p607 = scmp.eq.s32.totalorder %s83, 0
      %p608 = por %p606, %p607
      %p609 = scmp.ne.s32.totalorder %s597, %s598
      %p610 = scmp.eq.s32.totalorder %s84, 1
      %p611 = por %p609, %p610
      %p613 = scmp.ne.s32.totalorder %s598, %s612
      %p614 = scmp.eq.s32.totalorder %s84, 0
      %p615 = por %p613, %p614
      %s617 = sadd.s32 %s616, 1
      %p620 = scmp.eq.s32.totalorder %s78, 1
      %p621 = scmp.ne.s32.totalorder %s616, %s618
      %p622 = scmp.eq.s32.totalorder %s78, 0
      %p623 = por %p621, %p622
      %p624 = scmp.ne.s32.totalorder %s616, %s618
      %p625 = scmp.eq.s32.totalorder %s83, 1
      %p626 = por %p624, %p625
      %p627 = scmp.ne.s32.totalorder %s618, %s619
      %p628 = scmp.eq.s32.totalorder %s83, 0
      %p629 = por %p627, %p628
      %p630 = scmp.ne.s32.totalorder %s618, %s619
      %p631 = scmp.eq.s32.totalorder %s84, 1
      %p632 = por %p630, %p631
      %p634 = scmp.ne.s32.totalorder %s619, %s633
      %p635 = scmp.eq.s32.totalorder %s84, 0
      %p636 = por %p634, %p635
      %s638 = sadd.s32 %s637, 1
      %p641 = scmp.eq.s32.totalorder %s78, 1
      %p642 = scmp.ne.s32.totalorder %s637, %s639
      %p643 = scmp.eq.s32.totalorder %s78, 0
      %p644 = por %p642, %p643
      %p645 = scmp.ne.s32.totalorder %s637, %s639
      %p646 = scmp.eq.s32.totalorder %s83, 1
      %p647 = por %p645, %p646
      %p648 = scmp.ne.s32.totalorder %s639, %s640
      %p649 = scmp.eq.s32.totalorder %s83, 0
      %p650 = por %p648, %p649
      %p651 = scmp.ne.s32.totalorder %s639, %s640
      %p652 = scmp.eq.s32.totalorder %s84, 1
      %p653 = por %p651, %p652
      %p655 = scmp.ne.s32.totalorder %s640, %s654
      %p656 = scmp.eq.s32.totalorder %s84, 0
      %p657 = por %p655, %p656
      %s659 = sadd.s32 %s658, 1
      %p662 = scmp.eq.s32.totalorder %s78, 1
      %p663 = scmp.ne.s32.totalorder %s658, %s660
      %p664 = scmp.eq.s32.totalorder %s78, 0
      %p665 = por %p663, %p664
      %p666 = scmp.ne.s32.totalorder %s658, %s660
      %p667 = scmp.eq.s32.totalorder %s83, 1
      %p668 = por %p666, %p667
      %p669 = scmp.ne.s32.totalorder %s660, %s661
      %p670 = scmp.eq.s32.totalorder %s83, 0
      %p671 = por %p669, %p670
      %p672 = scmp.ne.s32.totalorder %s660, %s661
      %p673 = scmp.eq.s32.totalorder %s84, 1
      %p674 = por %p672, %p673
      %p676 = scmp.ne.s32.totalorder %s661, %s675
      %p677 = scmp.eq.s32.totalorder %s84, 0
      %p678 = por %p676, %p677
      %s680 = sadd.s32 %s679, 1
      %p683 = scmp.eq.s32.totalorder %s78, 1
      %p684 = scmp.ne.s32.totalorder %s679, %s681
      %p685 = scmp.eq.s32.totalorder %s78, 0
      %p686 = por %p684, %p685
      %p687 = scmp.ne.s32.totalorder %s679, %s681
      %p688 = scmp.eq.s32.totalorder %s83, 1
      %p689 = por %p687, %p688
      %p690 = scmp.ne.s32.totalorder %s681, %s682
      %p691 = scmp.eq.s32.totalorder %s83, 0
      %p692 = por %p690, %p691
      %p693 = scmp.ne.s32.totalorder %s681, %s682
      %p694 = scmp.eq.s32.totalorder %s84, 1
      %p695 = por %p693, %p694
      %p697 = scmp.ne.s32.totalorder %s682, %s696
      %p698 = scmp.eq.s32.totalorder %s84, 0
      %p699 = por %p697, %p698
      %s701 = sadd.s32 %s700, 1
      %p704 = scmp.eq.s32.totalorder %s78, 1
      %p705 = scmp.ne.s32.totalorder %s700, %s702
      %p706 = scmp.eq.s32.totalorder %s78, 0
      %p707 = por %p705, %p706
      %p708 = scmp.ne.s32.totalorder %s700, %s702
      %p709 = scmp.eq.s32.totalorder %s83, 1
      %p710 = por %p708, %p709
      %p711 = scmp.ne.s32.totalorder %s702, %s703
      %p712 = scmp.eq.s32.totalorder %s83, 0
      %p713 = por %p711, %p712
      %p714 = scmp.ne.s32.totalorder %s702, %s703
      %p715 = scmp.eq.s32.totalorder %s84, 1
      %p716 = por %p714, %p715
      %p718 = scmp.ne.s32.totalorder %s703, %s717
      %p719 = scmp.eq.s32.totalorder %s84, 0
      %p720 = por %p718, %p719
      %s722 = sadd.s32 %s721, 1
      %p725 = scmp.eq.s32.totalorder %s78, 1
      %p726 = scmp.ne.s32.totalorder %s721, %s723
      %p727 = scmp.eq.s32.totalorder %s78, 0
      %p728 = por %p726, %p727
      %p729 = scmp.ne.s32.totalorder %s721, %s723
      %p730 = scmp.eq.s32.totalorder %s83, 1
      %p731 = por %p729, %p730
      %p732 = scmp.ne.s32.totalorder %s723, %s724
      %p733 = scmp.eq.s32.totalorder %s83, 0
      %p734 = por %p732, %p733
      %p735 = scmp.ne.s32.totalorder %s723, %s724
      %p736 = scmp.eq.s32.totalorder %s84, 1
      %p737 = por %p735, %p736
      %p739 = scmp.ne.s32.totalorder %s724, %s738
      %p740 = scmp.eq.s32.totalorder %s84, 0
      %p741 = por %p739, %p740
      %s743 = sadd.s32 %s742, 1
      %p746 = scmp.eq.s32.totalorder %s78, 1
      %p747 = scmp.ne.s32.totalorder %s742, %s744
      %p748 = scmp.eq.s32.totalorder %s78, 0
      %p749 = por %p747, %p748
      %p750 = scmp.ne.s32.totalorder %s742, %s744
      %p751 = scmp.eq.s32.totalorder %s83, 1
      %p752 = por %p750, %p751
      %p753 = scmp.ne.s32.totalorder %s744, %s745
      %p754 = scmp.eq.s32.totalorder %s83, 0
      %p755 = por %p753, %p754
      %p756 = scmp.ne.s32.totalorder %s744, %s745
      %p757 = scmp.eq.s32.totalorder %s84, 1
      %p758 = por %p756, %p757
      %p760 = scmp.ne.s32.totalorder %s745, %s759
      %p761 = scmp.eq.s32.totalorder %s84, 0
      %p762 = por %p760, %p761
      %s764 = sadd.s32 %s763, 1
      %p767 = scmp.eq.s32.totalorder %s78, 1
      %p768 = scmp.ne.s32.totalorder %s763, %s765
      %p769 = scmp.eq.s32.totalorder %s78, 0
      %p770 = por %p768, %p769
      %p771 = scmp.ne.s32.totalorder %s763, %s765
      %p772 = scmp.eq.s32.totalorder %s83, 1
      %p773 = por %p771, %p772
      %p774 = scmp.ne.s32.totalorder %s765, %s766
      %p775 = scmp.eq.s32.totalorder %s83, 0
      %p776 = por %p774, %p775
      %p777 = scmp.ne.s32.totalorder %s765, %s766
      %p778 = scmp.eq.s32.totalorder %s84, 1
      %p779 = por %p777, %p778
      %p781 = scmp.ne.s32.totalorder %s766, %s780
      %p782 = scmp.eq.s32.totalorder %s84, 0
      %p783 = por %p781, %p782
      %s785 = sadd.s32 %s784, 1
      %p788 = scmp.eq.s32.totalorder %s78, 1
      %p789 = scmp.ne.s32.totalorder %s784, %s786
      %p790 = scmp.eq.s32.totalorder %s78, 0
      %p791 = por %p789, %p790
      %p792 = scmp.ne.s32.totalorder %s784, %s786
      %p793 = scmp.eq.s32.totalorder %s83, 1
      %p794 = por %p792, %p793
      %p795 = scmp.ne.s32.totalorder %s786, %s787
      %p796 = scmp.eq.s32.totalorder %s83, 0
      %p797 = por %p795, %p796
      %p798 = scmp.ne.s32.totalorder %s786, %s787
      %p799 = scmp.eq.s32.totalorder %s84, 1
      %p800 = por %p798, %p799
      %p802 = scmp.ne.s32.totalorder %s787, %s801
      %p803 = scmp.eq.s32.totalorder %s84, 0
      %p804 = por %p802, %p803
      %s805 = ssub.s32 %s78, %s85
      %p806 = scmp.eq.s32.totalorder %s805, 0
      %s808 = sadd.s32 %s807, 1
      %s809 = scalar_select %p806, %s807, %s808
      %p812 = pneg %p806
      %p813 = scmp.eq.s32.totalorder %s78, 1
      %p814 = por %p812, %p813
      %p815 = scmp.ne.s32.totalorder %s807, %s810
      %p816 = scmp.eq.s32.totalorder %s78, 0
      %p817 = por %p815, %p816
      %p818 = scmp.ne.s32.totalorder %s807, %s810
      %p819 = scmp.eq.s32.totalorder %s83, 1
      %p820 = por %p818, %p819
      %p821 = scmp.ne.s32.totalorder %s810, %s811
      %p822 = scmp.eq.s32.totalorder %s83, 0
      %p823 = por %p821, %p822
      %p824 = scmp.ne.s32.totalorder %s810, %s811
      %p825 = scmp.eq.s32.totalorder %s84, 1
      %p826 = por %p824, %p825
      %p828 = scmp.ne.s32.totalorder %s811, %s827
      %p829 = scmp.eq.s32.totalorder %s84, 0
      %p830 = por %p828, %p829
      %p831 = scmp.le.s32.totalorder 1, %s78
      %p832 = scmp.lt.s32.totalorder %s78, 3
      %p833 = pnand %p831, %p832
      %p834 = pneg %p833
      // Predicated region
      $region9: #{unet1_forward.1} parent=5 // pred_check
        _
      $region10: #{unet1_forward.1} parent=5 // pred_check_branch
        %836 = sbr.rel (%p833) target = $region12
      $region11: #{unet1_forward.1} parent=5 // pred_region
        %s837 = ssub.s32 %s78, 1
        // Predicated region
        $region13: #{unet1_forward.1} parent=11 // pred_check
          %p838 = pneg %p125
        $region14: #{unet1_forward.1} parent=11 // pred_check_branch
          %840 = sbr.rel (%p838) target = $region16
        $region15: #{unet1_forward.1} parent=11 // pred_region
          _
        $region16: #{unet1_forward.1} parent=11 // pred_fallthru
          _
        // Predicated region
        $region17: #{unet1_forward.1} parent=11 // pred_check
          %p841 = pneg %p146
        $region18: #{unet1_forward.1} parent=11 // pred_check_branch
          %843 = sbr.rel (%p841) target = $region20
        $region19: #{unet1_forward.1} parent=11 // pred_region
          _
        $region20: #{unet1_forward.1} parent=11 // pred_fallthru
          _
        // Predicated region
        $region21: #{unet1_forward.1} parent=11 // pred_check
          %p844 = pneg %p167
        $region22: #{unet1_forward.1} parent=11 // pred_check_branch
          %846 = sbr.rel (%p844) target = $region24
        $region23: #{unet1_forward.1} parent=11 // pred_region
          _
        $region24: #{unet1_forward.1} parent=11 // pred_fallthru
          _
        // Predicated region
        $region25: #{unet1_forward.1} parent=11 // pred_check
          %p847 = pneg %p188
        $region26: #{unet1_forward.1} parent=11 // pred_check_branch
          %849 = sbr.rel (%p847) target = $region28
        $region27: #{unet1_forward.1} parent=11 // pred_region
          _
        $region28: #{unet1_forward.1} parent=11 // pred_fallthru
          _
        // Predicated region
        $region29: #{unet1_forward.1} parent=11 // pred_check
          %p850 = pneg %p209
        $region30: #{unet1_forward.1} parent=11 // pred_check_branch
          %852 = sbr.rel (%p850) target = $region32
        $region31: #{unet1_forward.1} parent=11 // pred_region
          _
        $region32: #{unet1_forward.1} parent=11 // pred_fallthru
          _
        // Predicated region
        $region33: #{unet1_forward.1} parent=11 // pred_check
          %p853 = pneg %p230
        $region34: #{unet1_forward.1} parent=11 // pred_check_branch
          %855 = sbr.rel (%p853) target = $region36
        $region35: #{unet1_forward.1} parent=11 // pred_region
          _
        $region36: #{unet1_forward.1} parent=11 // pred_fallthru
          _
        // Predicated region
        $region37: #{unet1_forward.1} parent=11 // pred_check
          %p856 = pneg %p251
        $region38: #{unet1_forward.1} parent=11 // pred_check_branch
          %858 = sbr.rel (%p856) target = $region40
        $region39: #{unet1_forward.1} parent=11 // pred_region
          _
        $region40: #{unet1_forward.1} parent=11 // pred_fallthru
          _
        // Predicated region
        $region41: #{unet1_forward.1} parent=11 // pred_check
          %p859 = pneg %p272
        $region42: #{unet1_forward.1} parent=11 // pred_check_branch
          %861 = sbr.rel (%p859) target = $region44
        $region43: #{unet1_forward.1} parent=11 // pred_region
          _
        $region44: #{unet1_forward.1} parent=11 // pred_fallthru
          _
        // Predicated region
        $region45: #{unet1_forward.1} parent=11 // pred_check
          %p862 = pneg %p293
        $region46: #{unet1_forward.1} parent=11 // pred_check_branch
          %864 = sbr.rel (%p862) target = $region48
        $region47: #{unet1_forward.1} parent=11 // pred_region
          _
        $region48: #{unet1_forward.1} parent=11 // pred_fallthru
          _
        // Predicated region
        $region49: #{unet1_forward.1} parent=11 // pred_check
          %p865 = pneg %p314
        $region50: #{unet1_forward.1} parent=11 // pred_check_branch
          %867 = sbr.rel (%p865) target = $region52
        $region51: #{unet1_forward.1} parent=11 // pred_region
          _
        $region52: #{unet1_forward.1} parent=11 // pred_fallthru
          _
        // Predicated region
        $region53: #{unet1_forward.1} parent=11 // pred_check
          %p868 = pneg %p335
        $region54: #{unet1_forward.1} parent=11 // pred_check_branch
          %870 = sbr.rel (%p868) target = $region56
        $region55: #{unet1_forward.1} parent=11 // pred_region
          _
        $region56: #{unet1_forward.1} parent=11 // pred_fallthru
          _
        // Predicated region
        $region57: #{unet1_forward.1} parent=11 // pred_check
          %p871 = pneg %p356
        $region58: #{unet1_forward.1} parent=11 // pred_check_branch
          %873 = sbr.rel (%p871) target = $region60
        $region59: #{unet1_forward.1} parent=11 // pred_region
          _
        $region60: #{unet1_forward.1} parent=11 // pred_fallthru
          _
        // Predicated region
        $region61: #{unet1_forward.1} parent=11 // pred_check
          %p874 = pneg %p377
        $region62: #{unet1_forward.1} parent=11 // pred_check_branch
          %876 = sbr.rel (%p874) target = $region64
        $region63: #{unet1_forward.1} parent=11 // pred_region
          _
        $region64: #{unet1_forward.1} parent=11 // pred_fallthru
          _
        // Predicated region
        $region65: #{unet1_forward.1} parent=11 // pred_check
          %p877 = pneg %p398
        $region66: #{unet1_forward.1} parent=11 // pred_check_branch
          %879 = sbr.rel (%p877) target = $region68
        $region67: #{unet1_forward.1} parent=11 // pred_region
          _
        $region68: #{unet1_forward.1} parent=11 // pred_fallthru
          _
        // Predicated region
        $region69: #{unet1_forward.1} parent=11 // pred_check
          %p880 = pneg %p419
        $region70: #{unet1_forward.1} parent=11 // pred_check_branch
          %882 = sbr.rel (%p880) target = $region72
        $region71: #{unet1_forward.1} parent=11 // pred_region
          _
        $region72: #{unet1_forward.1} parent=11 // pred_fallthru
          _
        // Predicated region
        $region73: #{unet1_forward.1} parent=11 // pred_check
          %p883 = pneg %p440
        $region74: #{unet1_forward.1} parent=11 // pred_check_branch
          %885 = sbr.rel (%p883) target = $region76
        $region75: #{unet1_forward.1} parent=11 // pred_region
          _
        $region76: #{unet1_forward.1} parent=11 // pred_fallthru
          _
        // Predicated region
        $region77: #{unet1_forward.1} parent=11 // pred_check
          %p886 = pneg %p461
        $region78: #{unet1_forward.1} parent=11 // pred_check_branch
          %888 = sbr.rel (%p886) target = $region80
        $region79: #{unet1_forward.1} parent=11 // pred_region
          _
        $region80: #{unet1_forward.1} parent=11 // pred_fallthru
          _
        // Predicated region
        $region81: #{unet1_forward.1} parent=11 // pred_check
          %p889 = pneg %p482
        $region82: #{unet1_forward.1} parent=11 // pred_check_branch
          %891 = sbr.rel (%p889) target = $region84
        $region83: #{unet1_forward.1} parent=11 // pred_region
          _
        $region84: #{unet1_forward.1} parent=11 // pred_fallthru
          _
        // Predicated region
        $region85: #{unet1_forward.1} parent=11 // pred_check
          %p892 = pneg %p503
        $region86: #{unet1_forward.1} parent=11 // pred_check_branch
          %894 = sbr.rel (%p892) target = $region88
        $region87: #{unet1_forward.1} parent=11 // pred_region
          _
        $region88: #{unet1_forward.1} parent=11 // pred_fallthru
          _
        // Predicated region
        $region89: #{unet1_forward.1} parent=11 // pred_check
          %p895 = pneg %p524
        $region90: #{unet1_forward.1} parent=11 // pred_check_branch
          %897 = sbr.rel (%p895) target = $region92
        $region91: #{unet1_forward.1} parent=11 // pred_region
          _
        $region92: #{unet1_forward.1} parent=11 // pred_fallthru
          _
        // Predicated region
        $region93: #{unet1_forward.1} parent=11 // pred_check
          %p898 = pneg %p545
        $region94: #{unet1_forward.1} parent=11 // pred_check_branch
          %900 = sbr.rel (%p898) target = $region96
        $region95: #{unet1_forward.1} parent=11 // pred_region
          _
        $region96: #{unet1_forward.1} parent=11 // pred_fallthru
          _
        // Predicated region
        $region97: #{unet1_forward.1} parent=11 // pred_check
          %p901 = pneg %p566
        $region98: #{unet1_forward.1} parent=11 // pred_check_branch
          %903 = sbr.rel (%p901) target = $region100
        $region99: #{unet1_forward.1} parent=11 // pred_region
          %905 = vsyncadd [#allocation7], 0
          %s906 = sshll.u32 %s45, 4
          %s907 = int_to_ptr.hbm [resolvable:$true] %s906
          %s908 = sshll.u32 [#allocation6], 4
          %s909 = int_to_ptr.vmem [resolvable:$true] %s908
          %914 = dma.hbm_to_vmem [thread:$0]  %s907, 19968, %s909, [#allocation7], 384, 384, 24
        $region100: #{unet1_forward.1} parent=11 // pred_fallthru
          _
        // Predicated region
        $region101: #{unet1_forward.1} parent=11 // pred_check
          %p915 = pneg %p587
        $region102: #{unet1_forward.1} parent=11 // pred_check_branch
          %917 = sbr.rel (%p915) target = $region104
        $region103: #{unet1_forward.1} parent=11 // pred_region
          _
        $region104: #{unet1_forward.1} parent=11 // pred_fallthru
          _
        // Predicated region
        $region105: #{unet1_forward.1} parent=11 // pred_check
          %p918 = pneg %p608
        $region106: #{unet1_forward.1} parent=11 // pred_check_branch
          %920 = sbr.rel (%p918) target = $region108
        $region107: #{unet1_forward.1} parent=11 // pred_region
          _
        $region108: #{unet1_forward.1} parent=11 // pred_fallthru
          _
        // Predicated region
        $region109: #{unet1_forward.1} parent=11 // pred_check
          %p921 = pneg %p629
        $region110: #{unet1_forward.1} parent=11 // pred_check_branch
          %923 = sbr.rel (%p921) target = $region112
        $region111: #{unet1_forward.1} parent=11 // pred_region
          _
        $region112: #{unet1_forward.1} parent=11 // pred_fallthru
          _
        // Predicated region
        $region113: #{unet1_forward.1} parent=11 // pred_check
          %p924 = pneg %p650
        $region114: #{unet1_forward.1} parent=11 // pred_check_branch
          %926 = sbr.rel (%p924) target = $region116
        $region115: #{unet1_forward.1} parent=11 // pred_region
          _
        $region116: #{unet1_forward.1} parent=11 // pred_fallthru
          _
        // Predicated region
        $region117: #{unet1_forward.1} parent=11 // pred_check
          %p927 = pneg %p671
        $region118: #{unet1_forward.1} parent=11 // pred_check_branch
          %929 = sbr.rel (%p927) target = $region120
        $region119: #{unet1_forward.1} parent=11 // pred_region
          _
        $region120: #{unet1_forward.1} parent=11 // pred_fallthru
          _
        // Predicated region
        $region121: #{unet1_forward.1} parent=11 // pred_check
          %p930 = pneg %p692
        $region122: #{unet1_forward.1} parent=11 // pred_check_branch
          %932 = sbr.rel (%p930) target = $region124
        $region123: #{unet1_forward.1} parent=11 // pred_region
          _
        $region124: #{unet1_forward.1} parent=11 // pred_fallthru
          _
        // Predicated region
        $region125: #{unet1_forward.1} parent=11 // pred_check
          %p933 = pneg %p713
        $region126: #{unet1_forward.1} parent=11 // pred_check_branch
          %935 = sbr.rel (%p933) target = $region128
        $region127: #{unet1_forward.1} parent=11 // pred_region
          _
        $region128: #{unet1_forward.1} parent=11 // pred_fallthru
          _
        // Predicated region
        $region129: #{unet1_forward.1} parent=11 // pred_check
          %p936 = pneg %p734
        $region130: #{unet1_forward.1} parent=11 // pred_check_branch
          %938 = sbr.rel (%p936) target = $region132
        $region131: #{unet1_forward.1} parent=11 // pred_region
          _
        $region132: #{unet1_forward.1} parent=11 // pred_fallthru
          _
        // Predicated region
        $region133: #{unet1_forward.1} parent=11 // pred_check
          %p939 = pneg %p755
        $region134: #{unet1_forward.1} parent=11 // pred_check_branch
          %941 = sbr.rel (%p939) target = $region136
        $region135: #{unet1_forward.1} parent=11 // pred_region
          _
        $region136: #{unet1_forward.1} parent=11 // pred_fallthru
          _
        // Predicated region
        $region137: #{unet1_forward.1} parent=11 // pred_check
          %p942 = pneg %p776
        $region138: #{unet1_forward.1} parent=11 // pred_check_branch
          %944 = sbr.rel (%p942) target = $region140
        $region139: #{unet1_forward.1} parent=11 // pred_region
          _
        $region140: #{unet1_forward.1} parent=11 // pred_fallthru
          _
        // Predicated region
        $region141: #{unet1_forward.1} parent=11 // pred_check
          %p945 = pneg %p797
        $region142: #{unet1_forward.1} parent=11 // pred_check_branch
          %947 = sbr.rel (%p945) target = $region144
        $region143: #{unet1_forward.1} parent=11 // pred_region
          _
        $region144: #{unet1_forward.1} parent=11 // pred_fallthru
          _
      $region12: #{unet1_forward.1} parent=5 // pred_fallthru
        _
      %p948 = scmp.lt.s32.totalorder %s78, 2
      // Predicated region
      $region145: #{unet1_forward.1} parent=5 // pred_check
        %p949 = pneg %p948
      $region146: #{unet1_forward.1} parent=5 // pred_check_branch
        %951 = sbr.rel (%p949) target = $region148
      $region147: #{unet1_forward.1} parent=5 // pred_region
        // Predicated region
        $region149: #{unet1_forward.1} parent=147 // pred_check
          %p952 = pneg %p98
        $region150: #{unet1_forward.1} parent=147 // pred_check_branch
          %954 = sbr.rel (%p952) target = $region152
        $region151: #{unet1_forward.1} parent=147 // pred_region
          %p955 = scmp.lt.s32.totalorder %s78, 1
          %s956 = scalar_select %p955, %s78, 1
          %s957 = smul.addr %s956, 3
          %s958 = smul.addr %s957, 8
          %s959 = scalar_lea.vmem %s1, %s958
        $region152: #{unet1_forward.1} parent=147 // pred_fallthru
          _
      $region148: #{unet1_forward.1} parent=5 // pred_fallthru
        _
      %p960 = scmp.le.s32.totalorder 1, %s78
      %p961 = scmp.lt.s32.totalorder %s78, 3
      %p962 = pnand %p960, %p961
      %p963 = pneg %p962
      // Predicated region
      $region153: #{unet1_forward.1} parent=5 // pred_check
        _
      $region154: #{unet1_forward.1} parent=5 // pred_check_branch
        %965 = sbr.rel (%p962) target = $region156
      $region155: #{unet1_forward.1} parent=5 // pred_region
        %s966 = ssub.s32 %s78, 1
        // Predicated region
        $region157: #{unet1_forward.1} parent=155 // pred_check
          %p967 = pneg %p566
        $region158: #{unet1_forward.1} parent=155 // pred_check_branch
          %969 = sbr.rel (%p967) target = $region160
        $region159: #{unet1_forward.1} parent=155 // pred_region
          %971 = dma.done [#allocation7], 19968
        $region160: #{unet1_forward.1} parent=155 // pred_fallthru
          _
        %p972 = scmp.lt.s32.totalorder %s83, 1
        %s973 = scalar_select %p972, %s83, 1
        %s974 = smul.addr %s973, 3
        %s975 = smul.addr %s974, 8
        %s976 = scalar_lea.vmem %s1, %s975
        %p977 = pneg %p104
        %p978 = pneg %p101
        %p979 = pneg %p125
        %p980 = pneg %p122
        %p981 = pneg %p146
        %p982 = pneg %p143
        %p983 = pneg %p167
        %p984 = pneg %p164
        %p985 = pneg %p188
        %p986 = pneg %p185
        %p987 = pneg %p209
        %p988 = pneg %p206
        %p989 = pneg %p230
        %p990 = pneg %p227
        %p991 = pneg %p251
        %p992 = pneg %p248
        %p993 = pneg %p272
        %p994 = pneg %p269
        %p995 = pneg %p293
        %p996 = pneg %p290
        %p997 = pneg %p314
        %p998 = pneg %p311
        %p999 = pneg %p335
        %p1000 = pneg %p332
        %p1001 = pneg %p356
        %p1002 = pneg %p353
        %p1003 = pneg %p377
        %p1004 = pneg %p374
        %p1005 = pneg %p398
        %p1006 = pneg %p395
        %p1007 = pneg %p419
        %p1008 = pneg %p416
        %p1009 = pneg %p440
        %p1010 = pneg %p437
        %p1011 = pneg %p461
        %p1012 = pneg %p458
        %p1013 = pneg %p482
        %p1014 = pneg %p479
        %p1015 = pneg %p503
        %p1016 = pneg %p500
        %p1017 = pneg %p524
        %p1018 = pneg %p521
        %p1019 = pneg %p545
        %p1020 = pneg %p542
        %p1021 = pneg %p566
        %p1022 = pneg %p563
        %p1023 = pneg %p587
        %p1024 = pneg %p584
        %p1025 = pneg %p608
        %p1026 = pneg %p605
        %p1027 = pneg %p629
        %p1028 = pneg %p626
        %p1029 = pneg %p650
        %p1030 = pneg %p647
        %p1031 = pneg %p671
        %p1032 = pneg %p668
        %p1033 = pneg %p692
        %p1034 = pneg %p689
        %p1035 = pneg %p713
        %p1036 = pneg %p710
        %p1037 = pneg %p734
        %p1038 = pneg %p731
        %p1039 = pneg %p755
        %p1040 = pneg %p752
        %p1041 = pneg %p776
        %p1042 = pneg %p773
        %p1043 = pneg %p797
        %p1044 = pneg %p794
        %p1045 = pneg %p823
        %p1046 = pneg %p820
        %p1047 = scmp.lt.s32.totalorder %s83, 1
        %s1048 = scalar_select %p1047, %s83, 1
        %s1049 = smul.addr %s1048, 3
        %s1050 = scalar_lea.vmem %s69, %s1049
        %p1051 = scmp.lt.s32.totalorder %s83, 1
        %s1052 = scalar_select %p1051, %s83, 1
        %s1053 = smul.addr %s1052, 3
        %s1054 = smul.addr %s1053, 8
        %s1055 = scalar_lea.vmem %s1, %s1054
        %p1056 = scmp.lt.s32.totalorder %s83, 1
        %s1057 = scalar_select %p1056, %s83, 1
        %s1058 = smul.addr %s1057, 3
        %s1059 = scalar_lea.vmem %s69, %s1058
        %vm1060 = vcmask 154624
        %1061 = vst.msk [vmem:[#allocation2] sm:$0xff] %vm1060, 0.0
        %1062 = vst.msk [vmem:[#allocation2 + $0x18] sm:$0xff] %vm1060, 0.0
        %vm1063 = vcmask 868024
        %1064 = vst.msk [vmem:[#allocation2 + $0x10] sm:$0xff] %vm1063, 0.0
        %1065 = vst.msk [vmem:[#allocation2 + $0x28] sm:$0xff] %vm1063, 0.0
        %vm1066 = vcmask 89088
        %1067 = vst.msk [vmem:[#allocation3] sm:$0xff] %vm1066, 0.0
        %1068 = vst.msk [vmem:[#allocation3 + $0x8] sm:$0xff] %vm1066, 0.0
        %1069 = vst.msk [vmem:[#allocation3 + $0x10] sm:$0xff] %vm1066, 0.0
        %1070 = vst.msk [vmem:[#allocation3 + $0x18] sm:$0xff] %vm1066, 0.0
        %vm1071 = vcmask 999288
        %1072 = vst.msk [vmem:[#allocation3] sm:$0xff] %vm1071, 0.0
        %1073 = vst.msk [vmem:[#allocation3 + $0x8] sm:$0xff] %vm1071, 0.0
        %1074 = vst.msk [vmem:[#allocation3 + $0x10] sm:$0xff] %vm1071, 0.0
        %1075 = vst.msk [vmem:[#allocation3 + $0x18] sm:$0xff] %vm1071, 0.0
        %vm1076 = vcmask 56320
        %1077 = vst.msk [vmem:[#allocation4] sm:$0xff] %vm1076, 0.0
        %1078 = vst.msk [vmem:[#allocation4 + $0x8] sm:$0xff] %vm1076, 0.0
        %1079 = vst.msk [vmem:[#allocation4 + $0x10] sm:$0xff] %vm1076, 0.0
        %1080 = vst.msk [vmem:[#allocation4 + $0x18] sm:$0xff] %vm1076, 0.0
        %vm1081 = vcmask 408920
        %1082 = vst.msk [vmem:[#allocation4] sm:$0xff] %vm1081, 0.0
        %1083 = vst.msk [vmem:[#allocation4 + $0x8] sm:$0xff] %vm1081, 0.0
        %1084 = vst.msk [vmem:[#allocation4 + $0x10] sm:$0xff] %vm1081, 0.0
        %1085 = vst.msk [vmem:[#allocation4 + $0x18] sm:$0xff] %vm1081, 0.0
        %v1086 = vld [vmem:[%s1055] sm:$0xff]
        %v1087 = vld [vmem:[%s1055 + $0x8] sm:$0xff]
        %v1088 = vld [vmem:[%s1055 + $0x10] sm:$0xff]
        %1092 = vrot.lane.b32.xlu0 %v1086, 19
        %v1093 = vpop.permute.xlu0 %1092
        %1094 = vrot.lane.b32.xlu0 %v1087, 19
        %v1095 = vpop.permute.xlu0 %1094
        %1096 = vrot.lane.b32.xlu0 %v1088, 19
        %v1097 = vpop.permute.xlu0 %1096
        %v1098 = vsel %vm1060, %v1093, %v1095
        %v1099 = vsel %vm1060, %v1095, %v1097
        %vm1103 = vcmask 1047704
        %1104 = vst.msk [vmem:[#allocation2] sm:$0xff] %vm1103, %v1093
        %1105 = vst [vmem:[#allocation2 + $0x8] sm:$0xff] %v1098
        %vm1106 = vcmask 711680
        %1107 = vst.msk [vmem:[#allocation2 + $0x10] sm:$0xff] %vm1106, %v1099
        %v1108 = vld [vmem:[#allocation2] sm:$0xff]
        %v1109 = vld [vmem:[#allocation2 + $0x8] sm:$0xff]
        %v1110 = vld [vmem:[#allocation2 + $0x10] sm:$0xff]
        %v1111 = vld [vmem:[%s3] sm:$0xff]
        %s1112 = scalar_lea.vmem %s3, 8
        %v1113 = vld [vmem:[%s1112] sm:$0xff]
        %1117 = vrot.lane.b32.xlu0 %v1108, 127
        %v1118 = vpop.permute.xlu0 %1117
        %1119 = vrot.lane.b32.xlu0 %v1109, 127
        %v1120 = vpop.permute.xlu0 %1119
        %1121 = vrot.lane.b32.xlu0 %v1110, 127
        %v1122 = vpop.permute.xlu0 %1121
        %vm1123 = vcmask 1039360
        %v1124 = vsel %vm1123, %v1118, %v1120
        %v1125 = vsel %vm1123, %v1120, %v1122
        %vm1129 = vcmask 64512
        %v1131 = vsel %vm1129, %v1113, 0
        %1133 = vmatpush.msra.mxu0 0.0
        %1134 = vmatpush.msra.mxu0 0.0
        %1135 = vmatpush.msra.mxu0 0.0
        %1136 = vmatpush.msra.mxu0 0.0
        %1137 = vmatpush.msra.mxu0 0.0
        %1138 = vmatpush.msra.mxu0 0.0
        %1139 = vmatpush.msra.mxu0 0.0
        %1140 = vmatpush.msra.mxu0 0.0
        %1141 = vmatpush.msra.mxu0 0.0
        %1142 = vmatpush.msra.mxu0 0.0
        %1143 = vmatpush.msra.mxu0 0.0
        %1144 = vmatpush.msra.mxu0 0.0
        %1145 = vmatpush.msra.mxu0 0.0
        %1146 = vmatpush.msra.mxu0 0.0
        %1147 = vmatpush.msra.mxu0 0.0
        %1148 = vmatpush.msra.mxu0 %v1124
        %1149 = vmatmul.f32.gmra.mxu0 %v1131
        %v1150 = vpop.f32.mrf.mxu0
        %v1151 = vadd.f32 0.0, %v1150
        %1152 = vdwg.mxu0
        %1153 = vmatpush.msra.mxu0 0.0
        %1154 = vmatpush.msra.mxu0 0.0
        %1155 = vmatpush.msra.mxu0 0.0
        %1156 = vmatpush.msra.mxu0 0.0
        %1157 = vmatpush.msra.mxu0 0.0
        %1158 = vmatpush.msra.mxu0 0.0
        %1159 = vmatpush.msra.mxu0 0.0
        %1160 = vmatpush.msra.mxu0 0.0
        %1161 = vmatpush.msra.mxu0 0.0
        %1162 = vmatpush.msra.mxu0 0.0
        %1163 = vmatpush.msra.mxu0 0.0
        %1164 = vmatpush.msra.mxu0 0.0
        %1165 = vmatpush.msra.mxu0 0.0
        %1166 = vmatpush.msra.mxu0 0.0
        %1167 = vmatpush.msra.mxu0 0.0
        %1168 = vmatpush.msra.mxu0 %v1125
        %1169 = vmatmul.f32.gmra.mxu0 %v1131
        %v1170 = vpop.f32.mrf.mxu0
        %v1171 = vadd.f32 0.0, %v1170
        %1172 = vdwg.mxu0
        %1173 = vmatpush.msra.mxu0 0.0
        %1174 = vmatpush.msra.mxu0 0.0
        %1175 = vmatpush.msra.mxu0 0.0
        %1176 = vmatpush.msra.mxu0 0.0
        %1177 = vmatpush.msra.mxu0 0.0
        %1178 = vmatpush.msra.mxu0 0.0
        %1179 = vmatpush.msra.mxu0 0.0
        %1180 = vmatpush.msra.mxu0 0.0
        %1181 = vmatpush.msra.mxu0 0.0
        %1182 = vmatpush.msra.mxu0 0.0
        %1183 = vmatpush.msra.mxu0 0.0
        %1184 = vmatpush.msra.mxu0 0.0
        %1185 = vmatpush.msra.mxu0 0.0
        %1186 = vmatpush.msra.mxu0 0.0
        %1187 = vmatpush.msra.mxu0 0.0
        %1188 = vmatpush.msra.mxu0 %v1122
        %1189 = vmatmul.f32.gmra.mxu0 %v1131
        %v1190 = vpop.f32.mrf.mxu0
        %v1191 = vadd.f32 0.0, %v1190
        %1192 = vdwg.mxu0
        %v1194 = vsel %vm1129, %v1111, 0
        %1196 = vmatpush.msra.mxu0 0.0
        %1197 = vmatpush.msra.mxu0 0.0
        %1198 = vmatpush.msra.mxu0 0.0
        %1199 = vmatpush.msra.mxu0 0.0
        %1200 = vmatpush.msra.mxu0 0.0
        %1201 = vmatpush.msra.mxu0 0.0
        %1202 = vmatpush.msra.mxu0 0.0
        %1203 = vmatpush.msra.mxu0 0.0
        %1204 = vmatpush.msra.mxu0 0.0
        %1205 = vmatpush.msra.mxu0 0.0
        %1206 = vmatpush.msra.mxu0 0.0
        %1207 = vmatpush.msra.mxu0 0.0
        %1208 = vmatpush.msra.mxu0 0.0
        %1209 = vmatpush.msra.mxu0 0.0
        %1210 = vmatpush.msra.mxu0 0.0
        %1211 = vmatpush.msra.mxu0 %v1108
        %1212 = vmatmul.f32.gmra.mxu0 %v1194
        %v1213 = vpop.f32.mrf.mxu0
        %v1214 = vadd.f32 %v1151, %v1213
        %1215 = vdwg.mxu0
        %1216 = vmatpush.msra.mxu0 0.0
        %1217 = vmatpush.msra.mxu0 0.0
        %1218 = vmatpush.msra.mxu0 0.0
        %1219 = vmatpush.msra.mxu0 0.0
        %1220 = vmatpush.msra.mxu0 0.0
        %1221 = vmatpush.msra.mxu0 0.0
        %1222 = vmatpush.msra.mxu0 0.0
        %1223 = vmatpush.msra.mxu0 0.0
        %1224 = vmatpush.msra.mxu0 0.0
        %1225 = vmatpush.msra.mxu0 0.0
        %1226 = vmatpush.msra.mxu0 0.0
        %1227 = vmatpush.msra.mxu0 0.0
        %1228 = vmatpush.msra.mxu0 0.0
        %1229 = vmatpush.msra.mxu0 0.0
        %1230 = vmatpush.msra.mxu0 0.0
        %1231 = vmatpush.msra.mxu0 %v1109
        %1232 = vmatmul.f32.gmra.mxu0 %v1194
        %v1233 = vpop.f32.mrf.mxu0
        %v1234 = vadd.f32 %v1171, %v1233
        %1235 = vdwg.mxu0
        %1236 = vmatpush.msra.mxu0 0.0
        %1237 = vmatpush.msra.mxu0 0.0
        %1238 = vmatpush.msra.mxu0 0.0
        %1239 = vmatpush.msra.mxu0 0.0
        %1240 = vmatpush.msra.mxu0 0.0
        %1241 = vmatpush.msra.mxu0 0.0
        %1242 = vmatpush.msra.mxu0 0.0
        %1243 = vmatpush.msra.mxu0 0.0
        %1244 = vmatpush.msra.mxu0 0.0
        %1245 = vmatpush.msra.mxu0 0.0
        %1246 = vmatpush.msra.mxu0 0.0
        %1247 = vmatpush.msra.mxu0 0.0
        %1248 = vmatpush.msra.mxu0 0.0
        %1249 = vmatpush.msra.mxu0 0.0
        %1250 = vmatpush.msra.mxu0 0.0
        %1251 = vmatpush.msra.mxu0 %v1110
        %1252 = vmatmul.f32.gmra.mxu0 %v1194
        %v1253 = vpop.f32.mrf.mxu0
        %v1254 = vadd.f32 %v1191, %v1253
        %1255 = vdwg.mxu0
        %s1256 = scalar_lea.vmem %s3, 16
        %v1257 = vld [vmem:[%s1256] sm:$0xff]
        %1258 = vrot.lane.b32.xlu0 %v1108, 126
        %v1259 = vpop.permute.xlu0 %1258
        %1260 = vrot.lane.b32.xlu0 %v1109, 126
        %v1261 = vpop.permute.xlu0 %1260
        %1262 = vrot.lane.b32.xlu0 %v1110, 126
        %v1263 = vpop.permute.xlu0 %1262
        %vm1264 = vcmask 1031168
        %v1265 = vsel %vm1264, %v1259, %v1261
        %v1266 = vsel %vm1264, %v1261, %v1263
        %v1271 = vsel %vm1129, %v1257, 0
        %1273 = vmatpush.msra.mxu0 0.0
        %1274 = vmatpush.msra.mxu0 0.0
        %1275 = vmatpush.msra.mxu0 0.0
        %1276 = vmatpush.msra.mxu0 0.0
        %1277 = vmatpush.msra.mxu0 0.0
        %1278 = vmatpush.msra.mxu0 0.0
        %1279 = vmatpush.msra.mxu0 0.0
        %1280 = vmatpush.msra.mxu0 0.0
        %1281 = vmatpush.msra.mxu0 0.0
        %1282 = vmatpush.msra.mxu0 0.0
        %1283 = vmatpush.msra.mxu0 0.0
        %1284 = vmatpush.msra.mxu0 0.0
        %1285 = vmatpush.msra.mxu0 0.0
        %1286 = vmatpush.msra.mxu0 0.0
        %1287 = vmatpush.msra.mxu0 0.0
        %1288 = vmatpush.msra.mxu0 %v1265
        %1289 = vmatmul.f32.gmra.mxu0 %v1271
        %v1290 = vpop.f32.mrf.mxu0
        %v1291 = vadd.f32 0.0, %v1290
        %1292 = vdwg.mxu0
        %1293 = vmatpush.msra.mxu0 0.0
        %1294 = vmatpush.msra.mxu0 0.0
        %1295 = vmatpush.msra.mxu0 0.0
        %1296 = vmatpush.msra.mxu0 0.0
        %1297 = vmatpush.msra.mxu0 0.0
        %1298 = vmatpush.msra.mxu0 0.0
        %1299 = vmatpush.msra.mxu0 0.0
        %1300 = vmatpush.msra.mxu0 0.0
        %1301 = vmatpush.msra.mxu0 0.0
        %1302 = vmatpush.msra.mxu0 0.0
        %1303 = vmatpush.msra.mxu0 0.0
        %1304 = vmatpush.msra.mxu0 0.0
        %1305 = vmatpush.msra.mxu0 0.0
        %1306 = vmatpush.msra.mxu0 0.0
        %1307 = vmatpush.msra.mxu0 0.0
        %1308 = vmatpush.msra.mxu0 %v1266
        %1309 = vmatmul.f32.gmra.mxu0 %v1271
        %v1310 = vpop.f32.mrf.mxu0
        %v1311 = vadd.f32 0.0, %v1310
        %1312 = vdwg.mxu0
        %1313 = vmatpush.msra.mxu0 0.0
        %1314 = vmatpush.msra.mxu0 0.0
        %1315 = vmatpush.msra.mxu0 0.0
        %1316 = vmatpush.msra.mxu0 0.0
        %1317 = vmatpush.msra.mxu0 0.0
        %1318 = vmatpush.msra.mxu0 0.0
        %1319 = vmatpush.msra.mxu0 0.0
        %1320 = vmatpush.msra.mxu0 0.0
        %1321 = vmatpush.msra.mxu0 0.0
        %1322 = vmatpush.msra.mxu0 0.0
        %1323 = vmatpush.msra.mxu0 0.0
        %1324 = vmatpush.msra.mxu0 0.0
        %1325 = vmatpush.msra.mxu0 0.0
        %1326 = vmatpush.msra.mxu0 0.0
        %1327 = vmatpush.msra.mxu0 0.0
        %1328 = vmatpush.msra.mxu0 %v1263
        %1329 = vmatmul.f32.gmra.mxu0 %v1271
        %v1330 = vpop.f32.mrf.mxu0
        %v1331 = vadd.f32 0.0, %v1330
        %1332 = vdwg.mxu0
        %v1333 = vadd.f32 %v1214, %v1291
        %v1334 = vadd.f32 %v1234, %v1311
        %v1335 = vadd.f32 %v1254, %v1331
        %s1336 = scalar_lea.vmem %s3, 24
        %v1337 = vld [vmem:[%s1336] sm:$0xff]
        %1338 = vrot.lane.b32.xlu0 %v1108, 110
        %v1339 = vpop.permute.xlu0 %1338
        %1340 = vrot.lane.b32.xlu0 %v1109, 110
        %v1341 = vpop.permute.xlu0 %1340
        %1342 = vrot.lane.b32.xlu0 %v1110, 110
        %v1343 = vpop.permute.xlu0 %1342
        %vm1344 = vcmask 900096
        %v1345 = vsel %vm1344, %v1339, %v1341
        %v1346 = vsel %vm1344, %v1341, %v1343
        %v1351 = vsel %vm1129, %v1337, 0
        %1353 = vmatpush.msra.mxu0 0.0
        %1354 = vmatpush.msra.mxu0 0.0
        %1355 = vmatpush.msra.mxu0 0.0
        %1356 = vmatpush.msra.mxu0 0.0
        %1357 = vmatpush.msra.mxu0 0.0
        %1358 = vmatpush.msra.mxu0 0.0
        %1359 = vmatpush.msra.mxu0 0.0
        %1360 = vmatpush.msra.mxu0 0.0
        %1361 = vmatpush.msra.mxu0 0.0
        %1362 = vmatpush.msra.mxu0 0.0
        %1363 = vmatpush.msra.mxu0 0.0
        %1364 = vmatpush.msra.mxu0 0.0
        %1365 = vmatpush.msra.mxu0 0.0
        %1366 = vmatpush.msra.mxu0 0.0
        %1367 = vmatpush.msra.mxu0 0.0
        %1368 = vmatpush.msra.mxu0 %v1345
        %1369 = vmatmul.f32.gmra.mxu0 %v1351
        %v1370 = vpop.f32.mrf.mxu0
        %v1371 = vadd.f32 0.0, %v1370
        %1372 = vdwg.mxu0
        %1373 = vmatpush.msra.mxu0 0.0
        %1374 = vmatpush.msra.mxu0 0.0
        %1375 = vmatpush.msra.mxu0 0.0
        %1376 = vmatpush.msra.mxu0 0.0
        %1377 = vmatpush.msra.mxu0 0.0
        %1378 = vmatpush.msra.mxu0 0.0
        %1379 = vmatpush.msra.mxu0 0.0
        %1380 = vmatpush.msra.mxu0 0.0
        %1381 = vmatpush.msra.mxu0 0.0
        %1382 = vmatpush.msra.mxu0 0.0
        %1383 = vmatpush.msra.mxu0 0.0
        %1384 = vmatpush.msra.mxu0 0.0
        %1385 = vmatpush.msra.mxu0 0.0
        %1386 = vmatpush.msra.mxu0 0.0
        %1387 = vmatpush.msra.mxu0 0.0
        %1388 = vmatpush.msra.mxu0 %v1346
        %1389 = vmatmul.f32.gmra.mxu0 %v1351
        %v1390 = vpop.f32.mrf.mxu0
        %v1391 = vadd.f32 0.0, %v1390
        %1392 = vdwg.mxu0
        %1393 = vmatpush.msra.mxu0 0.0
        %1394 = vmatpush.msra.mxu0 0.0
        %1395 = vmatpush.msra.mxu0 0.0
        %1396 = vmatpush.msra.mxu0 0.0
        %1397 = vmatpush.msra.mxu0 0.0
        %1398 = vmatpush.msra.mxu0 0.0
        %1399 = vmatpush.msra.mxu0 0.0
        %1400 = vmatpush.msra.mxu0 0.0
        %1401 = vmatpush.msra.mxu0 0.0
        %1402 = vmatpush.msra.mxu0 0.0
        %1403 = vmatpush.msra.mxu0 0.0
        %1404 = vmatpush.msra.mxu0 0.0
        %1405 = vmatpush.msra.mxu0 0.0
        %1406 = vmatpush.msra.mxu0 0.0
        %1407 = vmatpush.msra.mxu0 0.0
        %1408 = vmatpush.msra.mxu0 %v1343
        %1409 = vmatmul.f32.gmra.mxu0 %v1351
        %v1410 = vpop.f32.mrf.mxu0
        %v1411 = vadd.f32 0.0, %v1410
        %1412 = vdwg.mxu0
        %v1413 = vadd.f32 %v1333, %v1371
        %v1414 = vadd.f32 %v1334, %v1391
        %v1415 = vadd.f32 %v1335, %v1411
        %s1416 = scalar_lea.vmem %s3, 32
        %v1417 = vld [vmem:[%s1416] sm:$0xff]
        %1418 = vrot.lane.b32.xlu0 %v1108, 109
        %v1419 = vpop.permute.xlu0 %1418
        %1420 = vrot.lane.b32.xlu0 %v1109, 109
        %v1421 = vpop.permute.xlu0 %1420
        %1422 = vrot.lane.b32.xlu0 %v1110, 109
        %v1423 = vpop.permute.xlu0 %1422
        %vm1424 = vcmask 891904
        %v1425 = vsel %vm1424, %v1419, %v1421
        %v1426 = vsel %vm1424, %v1421, %v1423
        %v1431 = vsel %vm1129, %v1417, 0
        %1433 = vmatpush.msra.mxu0 0.0
        %1434 = vmatpush.msra.mxu0 0.0
        %1435 = vmatpush.msra.mxu0 0.0
        %1436 = vmatpush.msra.mxu0 0.0
        %1437 = vmatpush.msra.mxu0 0.0
        %1438 = vmatpush.msra.mxu0 0.0
        %1439 = vmatpush.msra.mxu0 0.0
        %1440 = vmatpush.msra.mxu0 0.0
        %1441 = vmatpush.msra.mxu0 0.0
        %1442 = vmatpush.msra.mxu0 0.0
        %1443 = vmatpush.msra.mxu0 0.0
        %1444 = vmatpush.msra.mxu0 0.0
        %1445 = vmatpush.msra.mxu0 0.0
        %1446 = vmatpush.msra.mxu0 0.0
        %1447 = vmatpush.msra.mxu0 0.0
        %1448 = vmatpush.msra.mxu0 %v1425
        %1449 = vmatmul.f32.gmra.mxu0 %v1431
        %v1450 = vpop.f32.mrf.mxu0
        %v1451 = vadd.f32 0.0, %v1450
        %1452 = vdwg.mxu0
        %1453 = vmatpush.msra.mxu0 0.0
        %1454 = vmatpush.msra.mxu0 0.0
        %1455 = vmatpush.msra.mxu0 0.0
        %1456 = vmatpush.msra.mxu0 0.0
        %1457 = vmatpush.msra.mxu0 0.0
        %1458 = vmatpush.msra.mxu0 0.0
        %1459 = vmatpush.msra.mxu0 0.0
        %1460 = vmatpush.msra.mxu0 0.0
        %1461 = vmatpush.msra.mxu0 0.0
        %1462 = vmatpush.msra.mxu0 0.0
        %1463 = vmatpush.msra.mxu0 0.0
        %1464 = vmatpush.msra.mxu0 0.0
        %1465 = vmatpush.msra.mxu0 0.0
        %1466 = vmatpush.msra.mxu0 0.0
        %1467 = vmatpush.msra.mxu0 0.0
        %1468 = vmatpush.msra.mxu0 %v1426
        %1469 = vmatmul.f32.gmra.mxu0 %v1431
        %v1470 = vpop.f32.mrf.mxu0
        %v1471 = vadd.f32 0.0, %v1470
        %1472 = vdwg.mxu0
        %1473 = vmatpush.msra.mxu0 0.0
        %1474 = vmatpush.msra.mxu0 0.0
        %1475 = vmatpush.msra.mxu0 0.0
        %1476 = vmatpush.msra.mxu0 0.0
        %1477 = vmatpush.msra.mxu0 0.0
        %1478 = vmatpush.msra.mxu0 0.0
        %1479 = vmatpush.msra.mxu0 0.0
        %1480 = vmatpush.msra.mxu0 0.0
        %1481 = vmatpush.msra.mxu0 0.0
        %1482 = vmatpush.msra.mxu0 0.0
        %1483 = vmatpush.msra.mxu0 0.0
        %1484 = vmatpush.msra.mxu0 0.0
        %1485 = vmatpush.msra.mxu0 0.0
        %1486 = vmatpush.msra.mxu0 0.0
        %1487 = vmatpush.msra.mxu0 0.0
        %1488 = vmatpush.msra.mxu0 %v1423
        %1489 = vmatmul.f32.gmra.mxu0 %v1431
        %v1490 = vpop.f32.mrf.mxu0
        %v1491 = vadd.f32 0.0, %v1490
        %1492 = vdwg.mxu0
        %v1493 = vadd.f32 %v1413, %v1451
        %v1494 = vadd.f32 %v1414, %v1471
        %v1495 = vadd.f32 %v1415, %v1491
        %s1496 = scalar_lea.vmem %s3, 40
        %v1497 = vld [vmem:[%s1496] sm:$0xff]
        %1498 = vrot.lane.b32.xlu0 %v1108, 108
        %v1499 = vpop.permute.xlu0 %1498
        %1500 = vrot.lane.b32.xlu0 %v1109, 108
        %v1501 = vpop.permute.xlu0 %1500
        %1502 = vrot.lane.b32.xlu0 %v1110, 108
        %v1503 = vpop.permute.xlu0 %1502
        %vm1504 = vcmask 883712
        %v1505 = vsel %vm1504, %v1499, %v1501
        %v1506 = vsel %vm1504, %v1501, %v1503
        %v1511 = vsel %vm1129, %v1497, 0
        %1513 = vmatpush.msra.mxu0 0.0
        %1514 = vmatpush.msra.mxu0 0.0
        %1515 = vmatpush.msra.mxu0 0.0
        %1516 = vmatpush.msra.mxu0 0.0
        %1517 = vmatpush.msra.mxu0 0.0
        %1518 = vmatpush.msra.mxu0 0.0
        %1519 = vmatpush.msra.mxu0 0.0
        %1520 = vmatpush.msra.mxu0 0.0
        %1521 = vmatpush.msra.mxu0 0.0
        %1522 = vmatpush.msra.mxu0 0.0
        %1523 = vmatpush.msra.mxu0 0.0
        %1524 = vmatpush.msra.mxu0 0.0
        %1525 = vmatpush.msra.mxu0 0.0
        %1526 = vmatpush.msra.mxu0 0.0
        %1527 = vmatpush.msra.mxu0 0.0
        %1528 = vmatpush.msra.mxu0 %v1505
        %1529 = vmatmul.f32.gmra.mxu0 %v1511
        %v1530 = vpop.f32.mrf.mxu0
        %v1531 = vadd.f32 0.0, %v1530
        %1532 = vdwg.mxu0
        %1533 = vmatpush.msra.mxu0 0.0
        %1534 = vmatpush.msra.mxu0 0.0
        %1535 = vmatpush.msra.mxu0 0.0
        %1536 = vmatpush.msra.mxu0 0.0
        %1537 = vmatpush.msra.mxu0 0.0
        %1538 = vmatpush.msra.mxu0 0.0
        %1539 = vmatpush.msra.mxu0 0.0
        %1540 = vmatpush.msra.mxu0 0.0
        %1541 = vmatpush.msra.mxu0 0.0
        %1542 = vmatpush.msra.mxu0 0.0
        %1543 = vmatpush.msra.mxu0 0.0
        %1544 = vmatpush.msra.mxu0 0.0
        %1545 = vmatpush.msra.mxu0 0.0
        %1546 = vmatpush.msra.mxu0 0.0
        %1547 = vmatpush.msra.mxu0 0.0
        %1548 = vmatpush.msra.mxu0 %v1506
        %1549 = vmatmul.f32.gmra.mxu0 %v1511
        %v1550 = vpop.f32.mrf.mxu0
        %v1551 = vadd.f32 0.0, %v1550
        %1552 = vdwg.mxu0
        %1553 = vmatpush.msra.mxu0 0.0
        %1554 = vmatpush.msra.mxu0 0.0
        %1555 = vmatpush.msra.mxu0 0.0
        %1556 = vmatpush.msra.mxu0 0.0
        %1557 = vmatpush.msra.mxu0 0.0
        %1558 = vmatpush.msra.mxu0 0.0
        %1559 = vmatpush.msra.mxu0 0.0
        %1560 = vmatpush.msra.mxu0 0.0
        %1561 = vmatpush.msra.mxu0 0.0
        %1562 = vmatpush.msra.mxu0 0.0
        %1563 = vmatpush.msra.mxu0 0.0
        %1564 = vmatpush.msra.mxu0 0.0
        %1565 = vmatpush.msra.mxu0 0.0
        %1566 = vmatpush.msra.mxu0 0.0
        %1567 = vmatpush.msra.mxu0 0.0
        %1568 = vmatpush.msra.mxu0 %v1503
        %1569 = vmatmul.f32.gmra.mxu0 %v1511
        %v1570 = vpop.f32.mrf.mxu0
        %v1571 = vadd.f32 0.0, %v1570
        %1572 = vdwg.mxu0
        %v1573 = vadd.f32 %v1493, %v1531
        %v1574 = vadd.f32 %v1494, %v1551
        %v1575 = vadd.f32 %v1495, %v1571
        %s1576 = scalar_lea.vmem %s3, 48
        %v1577 = vld [vmem:[%s1576] sm:$0xff]
        %1578 = vrot.lane.b32.xlu0 %v1108, 92
        %v1579 = vpop.permute.xlu0 %1578
        %1580 = vrot.lane.b32.xlu0 %v1109, 92
        %v1581 = vpop.permute.xlu0 %1580
        %1582 = vrot.lane.b32.xlu0 %v1110, 92
        %v1583 = vpop.permute.xlu0 %1582
        %vm1584 = vcmask 752640
        %v1585 = vsel %vm1584, %v1579, %v1581
        %v1586 = vsel %vm1584, %v1581, %v1583
        %v1591 = vsel %vm1129, %v1577, 0
        %1593 = vmatpush.msra.mxu0 0.0
        %1594 = vmatpush.msra.mxu0 0.0
        %1595 = vmatpush.msra.mxu0 0.0
        %1596 = vmatpush.msra.mxu0 0.0
        %1597 = vmatpush.msra.mxu0 0.0
        %1598 = vmatpush.msra.mxu0 0.0
        %1599 = vmatpush.msra.mxu0 0.0
        %1600 = vmatpush.msra.mxu0 0.0
        %1601 = vmatpush.msra.mxu0 0.0
        %1602 = vmatpush.msra.mxu0 0.0
        %1603 = vmatpush.msra.mxu0 0.0
        %1604 = vmatpush.msra.mxu0 0.0
        %1605 = vmatpush.msra.mxu0 0.0
        %1606 = vmatpush.msra.mxu0 0.0
        %1607 = vmatpush.msra.mxu0 0.0
        %1608 = vmatpush.msra.mxu0 %v1585
        %1609 = vmatmul.f32.gmra.mxu0 %v1591
        %v1610 = vpop.f32.mrf.mxu0
        %v1611 = vadd.f32 0.0, %v1610
        %1612 = vdwg.mxu0
        %1613 = vmatpush.msra.mxu0 0.0
        %1614 = vmatpush.msra.mxu0 0.0
        %1615 = vmatpush.msra.mxu0 0.0
        %1616 = vmatpush.msra.mxu0 0.0
        %1617 = vmatpush.msra.mxu0 0.0
        %1618 = vmatpush.msra.mxu0 0.0
        %1619 = vmatpush.msra.mxu0 0.0
        %1620 = vmatpush.msra.mxu0 0.0
        %1621 = vmatpush.msra.mxu0 0.0
        %1622 = vmatpush.msra.mxu0 0.0
        %1623 = vmatpush.msra.mxu0 0.0
        %1624 = vmatpush.msra.mxu0 0.0
        %1625 = vmatpush.msra.mxu0 0.0
        %1626 = vmatpush.msra.mxu0 0.0
        %1627 = vmatpush.msra.mxu0 0.0
        %1628 = vmatpush.msra.mxu0 %v1586
        %1629 = vmatmul.f32.gmra.mxu0 %v1591
        %v1630 = vpop.f32.mrf.mxu0
        %v1631 = vadd.f32 0.0, %v1630
        %1632 = vdwg.mxu0
        %1633 = vmatpush.msra.mxu0 0.0
        %1634 = vmatpush.msra.mxu0 0.0
        %1635 = vmatpush.msra.mxu0 0.0
        %1636 = vmatpush.msra.mxu0 0.0
        %1637 = vmatpush.msra.mxu0 0.0
        %1638 = vmatpush.msra.mxu0 0.0
        %1639 = vmatpush.msra.mxu0 0.0
        %1640 = vmatpush.msra.mxu0 0.0
        %1641 = vmatpush.msra.mxu0 0.0
        %1642 = vmatpush.msra.mxu0 0.0
        %1643 = vmatpush.msra.mxu0 0.0
        %1644 = vmatpush.msra.mxu0 0.0
        %1645 = vmatpush.msra.mxu0 0.0
        %1646 = vmatpush.msra.mxu0 0.0
        %1647 = vmatpush.msra.mxu0 0.0
        %1648 = vmatpush.msra.mxu0 %v1583
        %1649 = vmatmul.f32.gmra.mxu0 %v1591
        %v1650 = vpop.f32.mrf.mxu0
        %v1651 = vadd.f32 0.0, %v1650
        %1652 = vdwg.mxu0
        %v1653 = vadd.f32 %v1573, %v1611
        %v1654 = vadd.f32 %v1574, %v1631
        %v1655 = vadd.f32 %v1575, %v1651
        %s1656 = scalar_lea.vmem %s3, 56
        %v1657 = vld [vmem:[%s1656] sm:$0xff]
        %1658 = vrot.lane.b32.xlu0 %v1108, 91
        %v1659 = vpop.permute.xlu0 %1658
        %1660 = vrot.lane.b32.xlu0 %v1109, 91
        %v1661 = vpop.permute.xlu0 %1660
        %1662 = vrot.lane.b32.xlu0 %v1110, 91
        %v1663 = vpop.permute.xlu0 %1662
        %vm1664 = vcmask 744448
        %v1665 = vsel %vm1664, %v1659, %v1661
        %v1666 = vsel %vm1664, %v1661, %v1663
        %v1671 = vsel %vm1129, %v1657, 0
        %1673 = vmatpush.msra.mxu0 0.0
        %1674 = vmatpush.msra.mxu0 0.0
        %1675 = vmatpush.msra.mxu0 0.0
        %1676 = vmatpush.msra.mxu0 0.0
        %1677 = vmatpush.msra.mxu0 0.0
        %1678 = vmatpush.msra.mxu0 0.0
        %1679 = vmatpush.msra.mxu0 0.0
        %1680 = vmatpush.msra.mxu0 0.0
        %1681 = vmatpush.msra.mxu0 0.0
        %1682 = vmatpush.msra.mxu0 0.0
        %1683 = vmatpush.msra.mxu0 0.0
        %1684 = vmatpush.msra.mxu0 0.0
        %1685 = vmatpush.msra.mxu0 0.0
        %1686 = vmatpush.msra.mxu0 0.0
        %1687 = vmatpush.msra.mxu0 0.0
        %1688 = vmatpush.msra.mxu0 %v1665
        %1689 = vmatmul.f32.gmra.mxu0 %v1671
        %v1690 = vpop.f32.mrf.mxu0
        %v1691 = vadd.f32 0.0, %v1690
        %1692 = vdwg.mxu0
        %1693 = vmatpush.msra.mxu0 0.0
        %1694 = vmatpush.msra.mxu0 0.0
        %1695 = vmatpush.msra.mxu0 0.0
        %1696 = vmatpush.msra.mxu0 0.0
        %1697 = vmatpush.msra.mxu0 0.0
        %1698 = vmatpush.msra.mxu0 0.0
        %1699 = vmatpush.msra.mxu0 0.0
        %1700 = vmatpush.msra.mxu0 0.0
        %1701 = vmatpush.msra.mxu0 0.0
        %1702 = vmatpush.msra.mxu0 0.0
        %1703 = vmatpush.msra.mxu0 0.0
        %1704 = vmatpush.msra.mxu0 0.0
        %1705 = vmatpush.msra.mxu0 0.0
        %1706 = vmatpush.msra.mxu0 0.0
        %1707 = vmatpush.msra.mxu0 0.0
        %1708 = vmatpush.msra.mxu0 %v1666
        %1709 = vmatmul.f32.gmra.mxu0 %v1671
        %v1710 = vpop.f32.mrf.mxu0
        %v1711 = vadd.f32 0.0, %v1710
        %1712 = vdwg.mxu0
        %1713 = vmatpush.msra.mxu0 0.0
        %1714 = vmatpush.msra.mxu0 0.0
        %1715 = vmatpush.msra.mxu0 0.0
        %1716 = vmatpush.msra.mxu0 0.0
        %1717 = vmatpush.msra.mxu0 0.0
        %1718 = vmatpush.msra.mxu0 0.0
        %1719 = vmatpush.msra.mxu0 0.0
        %1720 = vmatpush.msra.mxu0 0.0
        %1721 = vmatpush.msra.mxu0 0.0
        %1722 = vmatpush.msra.mxu0 0.0
        %1723 = vmatpush.msra.mxu0 0.0
        %1724 = vmatpush.msra.mxu0 0.0
        %1725 = vmatpush.msra.mxu0 0.0
        %1726 = vmatpush.msra.mxu0 0.0
        %1727 = vmatpush.msra.mxu0 0.0
        %1728 = vmatpush.msra.mxu0 %v1663
        %1729 = vmatmul.f32.gmra.mxu0 %v1671
        %v1730 = vpop.f32.mrf.mxu0
        %v1731 = vadd.f32 0.0, %v1730
        %1732 = vdwg.mxu0
        %v1733 = vadd.f32 %v1653, %v1691
        %v1734 = vadd.f32 %v1654, %v1711
        %v1735 = vadd.f32 %v1655, %v1731
        %s1736 = scalar_lea.vmem %s3, 64
        %v1737 = vld [vmem:[%s1736] sm:$0xff]
        %1738 = vrot.lane.b32.xlu0 %v1108, 90
        %v1739 = vpop.permute.xlu0 %1738
        %1740 = vrot.lane.b32.xlu0 %v1109, 90
        %v1741 = vpop.permute.xlu0 %1740
        %1742 = vrot.lane.b32.xlu0 %v1110, 90
        %v1743 = vpop.permute.xlu0 %1742
        %vm1744 = vcmask 736256
        %v1745 = vsel %vm1744, %v1739, %v1741
        %v1746 = vsel %vm1744, %v1741, %v1743
        %v1751 = vsel %vm1129, %v1737, 0
        %1753 = vmatpush.msra.mxu0 0.0
        %1754 = vmatpush.msra.mxu0 0.0
        %1755 = vmatpush.msra.mxu0 0.0
        %1756 = vmatpush.msra.mxu0 0.0
        %1757 = vmatpush.msra.mxu0 0.0
        %1758 = vmatpush.msra.mxu0 0.0
        %1759 = vmatpush.msra.mxu0 0.0
        %1760 = vmatpush.msra.mxu0 0.0
        %1761 = vmatpush.msra.mxu0 0.0
        %1762 = vmatpush.msra.mxu0 0.0
        %1763 = vmatpush.msra.mxu0 0.0
        %1764 = vmatpush.msra.mxu0 0.0
        %1765 = vmatpush.msra.mxu0 0.0
        %1766 = vmatpush.msra.mxu0 0.0
        %1767 = vmatpush.msra.mxu0 0.0
        %1768 = vmatpush.msra.mxu0 %v1745
        %1769 = vmatmul.f32.gmra.mxu0 %v1751
        %v1770 = vpop.f32.mrf.mxu0
        %v1771 = vadd.f32 0.0, %v1770
        %1772 = vdwg.mxu0
        %1773 = vmatpush.msra.mxu0 0.0
        %1774 = vmatpush.msra.mxu0 0.0
        %1775 = vmatpush.msra.mxu0 0.0
        %1776 = vmatpush.msra.mxu0 0.0
        %1777 = vmatpush.msra.mxu0 0.0
        %1778 = vmatpush.msra.mxu0 0.0
        %1779 = vmatpush.msra.mxu0 0.0
        %1780 = vmatpush.msra.mxu0 0.0
        %1781 = vmatpush.msra.mxu0 0.0
        %1782 = vmatpush.msra.mxu0 0.0
        %1783 = vmatpush.msra.mxu0 0.0
        %1784 = vmatpush.msra.mxu0 0.0
        %1785 = vmatpush.msra.mxu0 0.0
        %1786 = vmatpush.msra.mxu0 0.0
        %1787 = vmatpush.msra.mxu0 0.0
        %1788 = vmatpush.msra.mxu0 %v1746
        %1789 = vmatmul.f32.gmra.mxu0 %v1751
        %v1790 = vpop.f32.mrf.mxu0
        %v1791 = vadd.f32 0.0, %v1790
        %1792 = vdwg.mxu0
        %1793 = vmatpush.msra.mxu0 0.0
        %1794 = vmatpush.msra.mxu0 0.0
        %1795 = vmatpush.msra.mxu0 0.0
        %1796 = vmatpush.msra.mxu0 0.0
        %1797 = vmatpush.msra.mxu0 0.0
        %1798 = vmatpush.msra.mxu0 0.0
        %1799 = vmatpush.msra.mxu0 0.0
        %1800 = vmatpush.msra.mxu0 0.0
        %1801 = vmatpush.msra.mxu0 0.0
        %1802 = vmatpush.msra.mxu0 0.0
        %1803 = vmatpush.msra.mxu0 0.0
        %1804 = vmatpush.msra.mxu0 0.0
        %1805 = vmatpush.msra.mxu0 0.0
        %1806 = vmatpush.msra.mxu0 0.0
        %1807 = vmatpush.msra.mxu0 0.0
        %1808 = vmatpush.msra.mxu0 %v1743
        %1809 = vmatmul.f32.gmra.mxu0 %v1751
        %v1810 = vpop.f32.mrf.mxu0
        %v1811 = vadd.f32 0.0, %v1810
        %1812 = vdwg.mxu0
        %v1813 = vadd.f32 %v1733, %v1771
        %v1814 = vadd.f32 %v1734, %v1791
        %v1815 = vadd.f32 %v1735, %v1811
        %v1816 = vld [vmem:[%s5] sm:$0xff]
        %1818 = vset.pattern.permute.xlu0 0
        %1819 = vperm.xlu0 %1818, %v1816
        %v1820 = vpop.permute.xlu0 %1819
        %v1822 = vadd.f32 %v1813, %v1820
        %v1823 = vadd.f32 %v1814, %v1820
        %v1824 = vadd.f32 %v1815, %v1820
        %v1825 = vmax.f32 %v1822, 0.0
        %v1826 = vmax.f32 %v1823, 0.0
        %v1827 = vmax.f32 %v1824, 0.0
        %v1828 = vld [vmem:[%s63] sm:$0x7]
        %v1830 = vperm.slane %v1828, 0
        %v1831 = vperm.slane %v1828, 1
        %v1832 = vperm.slane %v1828, 2
        %v1836 = vmul.f32 %v1825, %v1830
        %v1837 = vmul.f32 %v1826, %v1831
        %v1838 = vmul.f32 %v1827, %v1832
        %1842 = vrot.lane.b32.xlu0 %v1836, 19
        %v1843 = vpop.permute.xlu0 %1842
        %1844 = vrot.lane.b32.xlu0 %v1837, 19
        %v1845 = vpop.permute.xlu0 %1844
        %1846 = vrot.lane.b32.xlu0 %v1838, 19
        %v1847 = vpop.permute.xlu0 %1846
        %v1848 = vsel %vm1060, %v1843, %v1845
        %v1849 = vsel %vm1060, %v1845, %v1847
        %1853 = vst.msk [vmem:[#allocation2] sm:$0xff] %vm1103, %v1843
        %1854 = vst [vmem:[#allocation2 + $0x8] sm:$0xff] %v1848
        %1855 = vst.msk [vmem:[#allocation2 + $0x10] sm:$0xff] %vm1106, %v1849
        %v1856 = vld [vmem:[#allocation2] sm:$0xff]
        %v1857 = vld [vmem:[#allocation2 + $0x8] sm:$0xff]
        %v1858 = vld [vmem:[#allocation2 + $0x10] sm:$0xff]
        %v1859 = vld [vmem:[%s7] sm:$0xff]
        %s1860 = scalar_lea.vmem %s7, 8
        %v1861 = vld [vmem:[%s1860] sm:$0xff]
        %1865 = vrot.lane.b32.xlu0 %v1856, 127
        %v1866 = vpop.permute.xlu0 %1865
        %1867 = vrot.lane.b32.xlu0 %v1857, 127
        %v1868 = vpop.permute.xlu0 %1867
        %1869 = vrot.lane.b32.xlu0 %v1858, 127
        %v1870 = vpop.permute.xlu0 %1869
        %v1871 = vsel %vm1123, %v1866, %v1868
        %v1872 = vsel %vm1123, %v1868, %v1870
        %v1877 = vsel %vm1129, %v1861, 0
        %1879 = vmatpush.msra.mxu0 0.0
        %1880 = vmatpush.msra.mxu0 0.0
        %1881 = vmatpush.msra.mxu0 0.0
        %1882 = vmatpush.msra.mxu0 0.0
        %1883 = vmatpush.msra.mxu0 0.0
        %1884 = vmatpush.msra.mxu0 0.0
        %1885 = vmatpush.msra.mxu0 0.0
        %1886 = vmatpush.msra.mxu0 0.0
        %1887 = vmatpush.msra.mxu0 0.0
        %1888 = vmatpush.msra.mxu0 0.0
        %1889 = vmatpush.msra.mxu0 0.0
        %1890 = vmatpush.msra.mxu0 0.0
        %1891 = vmatpush.msra.mxu0 0.0
        %1892 = vmatpush.msra.mxu0 0.0
        %1893 = vmatpush.msra.mxu0 0.0
        %1894 = vmatpush.msra.mxu0 %v1871
        %1895 = vmatmul.f32.gmra.mxu0 %v1877
        %v1896 = vpop.f32.mrf.mxu0
        %v1897 = vadd.f32 0.0, %v1896
        %1898 = vdwg.mxu0
        %1899 = vmatpush.msra.mxu0 0.0
        %1900 = vmatpush.msra.mxu0 0.0
        %1901 = vmatpush.msra.mxu0 0.0
        %1902 = vmatpush.msra.mxu0 0.0
        %1903 = vmatpush.msra.mxu0 0.0
        %1904 = vmatpush.msra.mxu0 0.0
        %1905 = vmatpush.msra.mxu0 0.0
        %1906 = vmatpush.msra.mxu0 0.0
        %1907 = vmatpush.msra.mxu0 0.0
        %1908 = vmatpush.msra.mxu0 0.0
        %1909 = vmatpush.msra.mxu0 0.0
        %1910 = vmatpush.msra.mxu0 0.0
        %1911 = vmatpush.msra.mxu0 0.0
        %1912 = vmatpush.msra.mxu0 0.0
        %1913 = vmatpush.msra.mxu0 0.0
        %1914 = vmatpush.msra.mxu0 %v1872
        %1915 = vmatmul.f32.gmra.mxu0 %v1877
        %v1916 = vpop.f32.mrf.mxu0
        %v1917 = vadd.f32 0.0, %v1916
        %1918 = vdwg.mxu0
        %1919 = vmatpush.msra.mxu0 0.0
        %1920 = vmatpush.msra.mxu0 0.0
        %1921 = vmatpush.msra.mxu0 0.0
        %1922 = vmatpush.msra.mxu0 0.0
        %1923 = vmatpush.msra.mxu0 0.0
        %1924 = vmatpush.msra.mxu0 0.0
        %1925 = vmatpush.msra.mxu0 0.0
        %1926 = vmatpush.msra.mxu0 0.0
        %1927 = vmatpush.msra.mxu0 0.0
        %1928 = vmatpush.msra.mxu0 0.0
        %1929 = vmatpush.msra.mxu0 0.0
        %1930 = vmatpush.msra.mxu0 0.0
        %1931 = vmatpush.msra.mxu0 0.0
        %1932 = vmatpush.msra.mxu0 0.0
        %1933 = vmatpush.msra.mxu0 0.0
        %1934 = vmatpush.msra.mxu0 %v1870
        %1935 = vmatmul.f32.gmra.mxu0 %v1877
        %v1936 = vpop.f32.mrf.mxu0
        %v1937 = vadd.f32 0.0, %v1936
        %1938 = vdwg.mxu0
        %v1940 = vsel %vm1129, %v1859, 0
        %1942 = vmatpush.msra.mxu0 0.0
        %1943 = vmatpush.msra.mxu0 0.0
        %1944 = vmatpush.msra.mxu0 0.0
        %1945 = vmatpush.msra.mxu0 0.0
        %1946 = vmatpush.msra.mxu0 0.0
        %1947 = vmatpush.msra.mxu0 0.0
        %1948 = vmatpush.msra.mxu0 0.0
        %1949 = vmatpush.msra.mxu0 0.0
        %1950 = vmatpush.msra.mxu0 0.0
        %1951 = vmatpush.msra.mxu0 0.0
        %1952 = vmatpush.msra.mxu0 0.0
        %1953 = vmatpush.msra.mxu0 0.0
        %1954 = vmatpush.msra.mxu0 0.0
        %1955 = vmatpush.msra.mxu0 0.0
        %1956 = vmatpush.msra.mxu0 0.0
        %1957 = vmatpush.msra.mxu0 %v1856
        %1958 = vmatmul.f32.gmra.mxu0 %v1940
        %v1959 = vpop.f32.mrf.mxu0
        %v1960 = vadd.f32 %v1897, %v1959
        %1961 = vdwg.mxu0
        %1962 = vmatpush.msra.mxu0 0.0
        %1963 = vmatpush.msra.mxu0 0.0
        %1964 = vmatpush.msra.mxu0 0.0
        %1965 = vmatpush.msra.mxu0 0.0
        %1966 = vmatpush.msra.mxu0 0.0
        %1967 = vmatpush.msra.mxu0 0.0
        %1968 = vmatpush.msra.mxu0 0.0
        %1969 = vmatpush.msra.mxu0 0.0
        %1970 = vmatpush.msra.mxu0 0.0
        %1971 = vmatpush.msra.mxu0 0.0
        %1972 = vmatpush.msra.mxu0 0.0
        %1973 = vmatpush.msra.mxu0 0.0
        %1974 = vmatpush.msra.mxu0 0.0
        %1975 = vmatpush.msra.mxu0 0.0
        %1976 = vmatpush.msra.mxu0 0.0
        %1977 = vmatpush.msra.mxu0 %v1857
        %1978 = vmatmul.f32.gmra.mxu0 %v1940
        %v1979 = vpop.f32.mrf.mxu0
        %v1980 = vadd.f32 %v1917, %v1979
        %1981 = vdwg.mxu0
        %1982 = vmatpush.msra.mxu0 0.0
        %1983 = vmatpush.msra.mxu0 0.0
        %1984 = vmatpush.msra.mxu0 0.0
        %1985 = vmatpush.msra.mxu0 0.0
        %1986 = vmatpush.msra.mxu0 0.0
        %1987 = vmatpush.msra.mxu0 0.0
        %1988 = vmatpush.msra.mxu0 0.0
        %1989 = vmatpush.msra.mxu0 0.0
        %1990 = vmatpush.msra.mxu0 0.0
        %1991 = vmatpush.msra.mxu0 0.0
        %1992 = vmatpush.msra.mxu0 0.0
        %1993 = vmatpush.msra.mxu0 0.0
        %1994 = vmatpush.msra.mxu0 0.0
        %1995 = vmatpush.msra.mxu0 0.0
        %1996 = vmatpush.msra.mxu0 0.0
        %1997 = vmatpush.msra.mxu0 %v1858
        %1998 = vmatmul.f32.gmra.mxu0 %v1940
        %v1999 = vpop.f32.mrf.mxu0
        %v2000 = vadd.f32 %v1937, %v1999
        %2001 = vdwg.mxu0
        %s2002 = scalar_lea.vmem %s7, 16
        %v2003 = vld [vmem:[%s2002] sm:$0xff]
        %2004 = vrot.lane.b32.xlu0 %v1856, 126
        %v2005 = vpop.permute.xlu0 %2004
        %2006 = vrot.lane.b32.xlu0 %v1857, 126
        %v2007 = vpop.permute.xlu0 %2006
        %2008 = vrot.lane.b32.xlu0 %v1858, 126
        %v2009 = vpop.permute.xlu0 %2008
        %v2010 = vsel %vm1264, %v2005, %v2007
        %v2011 = vsel %vm1264, %v2007, %v2009
        %v2016 = vsel %vm1129, %v2003, 0
        %2018 = vmatpush.msra.mxu0 0.0
        %2019 = vmatpush.msra.mxu0 0.0
        %2020 = vmatpush.msra.mxu0 0.0
        %2021 = vmatpush.msra.mxu0 0.0
        %2022 = vmatpush.msra.mxu0 0.0
        %2023 = vmatpush.msra.mxu0 0.0
        %2024 = vmatpush.msra.mxu0 0.0
        %2025 = vmatpush.msra.mxu0 0.0
        %2026 = vmatpush.msra.mxu0 0.0
        %2027 = vmatpush.msra.mxu0 0.0
        %2028 = vmatpush.msra.mxu0 0.0
        %2029 = vmatpush.msra.mxu0 0.0
        %2030 = vmatpush.msra.mxu0 0.0
        %2031 = vmatpush.msra.mxu0 0.0
        %2032 = vmatpush.msra.mxu0 0.0
        %2033 = vmatpush.msra.mxu0 %v2010
        %2034 = vmatmul.f32.gmra.mxu0 %v2016
        %v2035 = vpop.f32.mrf.mxu0
        %v2036 = vadd.f32 0.0, %v2035
        %2037 = vdwg.mxu0
        %2038 = vmatpush.msra.mxu0 0.0
        %2039 = vmatpush.msra.mxu0 0.0
        %2040 = vmatpush.msra.mxu0 0.0
        %2041 = vmatpush.msra.mxu0 0.0
        %2042 = vmatpush.msra.mxu0 0.0
        %2043 = vmatpush.msra.mxu0 0.0
        %2044 = vmatpush.msra.mxu0 0.0
        %2045 = vmatpush.msra.mxu0 0.0
        %2046 = vmatpush.msra.mxu0 0.0
        %2047 = vmatpush.msra.mxu0 0.0
        %2048 = vmatpush.msra.mxu0 0.0
        %2049 = vmatpush.msra.mxu0 0.0
        %2050 = vmatpush.msra.mxu0 0.0
        %2051 = vmatpush.msra.mxu0 0.0
        %2052 = vmatpush.msra.mxu0 0.0
        %2053 = vmatpush.msra.mxu0 %v2011
        %2054 = vmatmul.f32.gmra.mxu0 %v2016
        %v2055 = vpop.f32.mrf.mxu0
        %v2056 = vadd.f32 0.0, %v2055
        %2057 = vdwg.mxu0
        %2058 = vmatpush.msra.mxu0 0.0
        %2059 = vmatpush.msra.mxu0 0.0
        %2060 = vmatpush.msra.mxu0 0.0
        %2061 = vmatpush.msra.mxu0 0.0
        %2062 = vmatpush.msra.mxu0 0.0
        %2063 = vmatpush.msra.mxu0 0.0
        %2064 = vmatpush.msra.mxu0 0.0
        %2065 = vmatpush.msra.mxu0 0.0
        %2066 = vmatpush.msra.mxu0 0.0
        %2067 = vmatpush.msra.mxu0 0.0
        %2068 = vmatpush.msra.mxu0 0.0
        %2069 = vmatpush.msra.mxu0 0.0
        %2070 = vmatpush.msra.mxu0 0.0
        %2071 = vmatpush.msra.mxu0 0.0
        %2072 = vmatpush.msra.mxu0 0.0
        %2073 = vmatpush.msra.mxu0 %v2009
        %2074 = vmatmul.f32.gmra.mxu0 %v2016
        %v2075 = vpop.f32.mrf.mxu0
        %v2076 = vadd.f32 0.0, %v2075
        %2077 = vdwg.mxu0
        %v2078 = vadd.f32 %v1960, %v2036
        %v2079 = vadd.f32 %v1980, %v2056
        %v2080 = vadd.f32 %v2000, %v2076
        %s2081 = scalar_lea.vmem %s7, 24
        %v2082 = vld [vmem:[%s2081] sm:$0xff]
        %2083 = vrot.lane.b32.xlu0 %v1856, 110
        %v2084 = vpop.permute.xlu0 %2083
        %2085 = vrot.lane.b32.xlu0 %v1857, 110
        %v2086 = vpop.permute.xlu0 %2085
        %2087 = vrot.lane.b32.xlu0 %v1858, 110
        %v2088 = vpop.permute.xlu0 %2087
        %v2089 = vsel %vm1344, %v2084, %v2086
        %v2090 = vsel %vm1344, %v2086, %v2088
        %v2095 = vsel %vm1129, %v2082, 0
        %2097 = vmatpush.msra.mxu0 0.0
        %2098 = vmatpush.msra.mxu0 0.0
        %2099 = vmatpush.msra.mxu0 0.0
        %2100 = vmatpush.msra.mxu0 0.0
        %2101 = vmatpush.msra.mxu0 0.0
        %2102 = vmatpush.msra.mxu0 0.0
        %2103 = vmatpush.msra.mxu0 0.0
        %2104 = vmatpush.msra.mxu0 0.0
        %2105 = vmatpush.msra.mxu0 0.0
        %2106 = vmatpush.msra.mxu0 0.0
        %2107 = vmatpush.msra.mxu0 0.0
        %2108 = vmatpush.msra.mxu0 0.0
        %2109 = vmatpush.msra.mxu0 0.0
        %2110 = vmatpush.msra.mxu0 0.0
        %2111 = vmatpush.msra.mxu0 0.0
        %2112 = vmatpush.msra.mxu0 %v2089
        %2113 = vmatmul.f32.gmra.mxu0 %v2095
        %v2114 = vpop.f32.mrf.mxu0
        %v2115 = vadd.f32 0.0, %v2114
        %2116 = vdwg.mxu0
        %2117 = vmatpush.msra.mxu0 0.0
        %2118 = vmatpush.msra.mxu0 0.0
        %2119 = vmatpush.msra.mxu0 0.0
        %2120 = vmatpush.msra.mxu0 0.0
        %2121 = vmatpush.msra.mxu0 0.0
        %2122 = vmatpush.msra.mxu0 0.0
        %2123 = vmatpush.msra.mxu0 0.0
        %2124 = vmatpush.msra.mxu0 0.0
        %2125 = vmatpush.msra.mxu0 0.0
        %2126 = vmatpush.msra.mxu0 0.0
        %2127 = vmatpush.msra.mxu0 0.0
        %2128 = vmatpush.msra.mxu0 0.0
        %2129 = vmatpush.msra.mxu0 0.0
        %2130 = vmatpush.msra.mxu0 0.0
        %2131 = vmatpush.msra.mxu0 0.0
        %2132 = vmatpush.msra.mxu0 %v2090
        %2133 = vmatmul.f32.gmra.mxu0 %v2095
        %v2134 = vpop.f32.mrf.mxu0
        %v2135 = vadd.f32 0.0, %v2134
        %2136 = vdwg.mxu0
        %2137 = vmatpush.msra.mxu0 0.0
        %2138 = vmatpush.msra.mxu0 0.0
        %2139 = vmatpush.msra.mxu0 0.0
        %2140 = vmatpush.msra.mxu0 0.0
        %2141 = vmatpush.msra.mxu0 0.0
        %2142 = vmatpush.msra.mxu0 0.0
        %2143 = vmatpush.msra.mxu0 0.0
        %2144 = vmatpush.msra.mxu0 0.0
        %2145 = vmatpush.msra.mxu0 0.0
        %2146 = vmatpush.msra.mxu0 0.0
        %2147 = vmatpush.msra.mxu0 0.0
        %2148 = vmatpush.msra.mxu0 0.0
        %2149 = vmatpush.msra.mxu0 0.0
        %2150 = vmatpush.msra.mxu0 0.0
        %2151 = vmatpush.msra.mxu0 0.0
        %2152 = vmatpush.msra.mxu0 %v2088
        %2153 = vmatmul.f32.gmra.mxu0 %v2095
        %v2154 = vpop.f32.mrf.mxu0
        %v2155 = vadd.f32 0.0, %v2154
        %2156 = vdwg.mxu0
        %v2157 = vadd.f32 %v2078, %v2115
        %v2158 = vadd.f32 %v2079, %v2135
        %v2159 = vadd.f32 %v2080, %v2155
        %s2160 = scalar_lea.vmem %s7, 32
        %v2161 = vld [vmem:[%s2160] sm:$0xff]
        %2162 = vrot.lane.b32.xlu0 %v1856, 109
        %v2163 = vpop.permute.xlu0 %2162
        %2164 = vrot.lane.b32.xlu0 %v1857, 109
        %v2165 = vpop.permute.xlu0 %2164
        %2166 = vrot.lane.b32.xlu0 %v1858, 109
        %v2167 = vpop.permute.xlu0 %2166
        %v2168 = vsel %vm1424, %v2163, %v2165
        %v2169 = vsel %vm1424, %v2165, %v2167
        %v2174 = vsel %vm1129, %v2161, 0
        %2176 = vmatpush.msra.mxu0 0.0
        %2177 = vmatpush.msra.mxu0 0.0
        %2178 = vmatpush.msra.mxu0 0.0
        %2179 = vmatpush.msra.mxu0 0.0
        %2180 = vmatpush.msra.mxu0 0.0
        %2181 = vmatpush.msra.mxu0 0.0
        %2182 = vmatpush.msra.mxu0 0.0
        %2183 = vmatpush.msra.mxu0 0.0
        %2184 = vmatpush.msra.mxu0 0.0
        %2185 = vmatpush.msra.mxu0 0.0
        %2186 = vmatpush.msra.mxu0 0.0
        %2187 = vmatpush.msra.mxu0 0.0
        %2188 = vmatpush.msra.mxu0 0.0
        %2189 = vmatpush.msra.mxu0 0.0
        %2190 = vmatpush.msra.mxu0 0.0
        %2191 = vmatpush.msra.mxu0 %v2168
        %2192 = vmatmul.f32.gmra.mxu0 %v2174
        %v2193 = vpop.f32.mrf.mxu0
        %v2194 = vadd.f32 0.0, %v2193
        %2195 = vdwg.mxu0
        %2196 = vmatpush.msra.mxu0 0.0
        %2197 = vmatpush.msra.mxu0 0.0
        %2198 = vmatpush.msra.mxu0 0.0
        %2199 = vmatpush.msra.mxu0 0.0
        %2200 = vmatpush.msra.mxu0 0.0
        %2201 = vmatpush.msra.mxu0 0.0
        %2202 = vmatpush.msra.mxu0 0.0
        %2203 = vmatpush.msra.mxu0 0.0
        %2204 = vmatpush.msra.mxu0 0.0
        %2205 = vmatpush.msra.mxu0 0.0
        %2206 = vmatpush.msra.mxu0 0.0
        %2207 = vmatpush.msra.mxu0 0.0
        %2208 = vmatpush.msra.mxu0 0.0
        %2209 = vmatpush.msra.mxu0 0.0
        %2210 = vmatpush.msra.mxu0 0.0
        %2211 = vmatpush.msra.mxu0 %v2169
        %2212 = vmatmul.f32.gmra.mxu0 %v2174
        %v2213 = vpop.f32.mrf.mxu0
        %v2214 = vadd.f32 0.0, %v2213
        %2215 = vdwg.mxu0
        %2216 = vmatpush.msra.mxu0 0.0
        %2217 = vmatpush.msra.mxu0 0.0
        %2218 = vmatpush.msra.mxu0 0.0
        %2219 = vmatpush.msra.mxu0 0.0
        %2220 = vmatpush.msra.mxu0 0.0
        %2221 = vmatpush.msra.mxu0 0.0
        %2222 = vmatpush.msra.mxu0 0.0
        %2223 = vmatpush.msra.mxu0 0.0
        %2224 = vmatpush.msra.mxu0 0.0
        %2225 = vmatpush.msra.mxu0 0.0
        %2226 = vmatpush.msra.mxu0 0.0
        %2227 = vmatpush.msra.mxu0 0.0
        %2228 = vmatpush.msra.mxu0 0.0
        %2229 = vmatpush.msra.mxu0 0.0
        %2230 = vmatpush.msra.mxu0 0.0
        %2231 = vmatpush.msra.mxu0 %v2167
        %2232 = vmatmul.f32.gmra.mxu0 %v2174
        %v2233 = vpop.f32.mrf.mxu0
        %v2234 = vadd.f32 0.0, %v2233
        %2235 = vdwg.mxu0
        %v2236 = vadd.f32 %v2157, %v2194
        %v2237 = vadd.f32 %v2158, %v2214
        %v2238 = vadd.f32 %v2159, %v2234
        %s2239 = scalar_lea.vmem %s7, 40
        %v2240 = vld [vmem:[%s2239] sm:$0xff]
        %2241 = vrot.lane.b32.xlu0 %v1856, 108
        %v2242 = vpop.permute.xlu0 %2241
        %2243 = vrot.lane.b32.xlu0 %v1857, 108
        %v2244 = vpop.permute.xlu0 %2243
        %2245 = vrot.lane.b32.xlu0 %v1858, 108
        %v2246 = vpop.permute.xlu0 %2245
        %v2247 = vsel %vm1504, %v2242, %v2244
        %v2248 = vsel %vm1504, %v2244, %v2246
        %v2253 = vsel %vm1129, %v2240, 0
        %2255 = vmatpush.msra.mxu0 0.0
        %2256 = vmatpush.msra.mxu0 0.0
        %2257 = vmatpush.msra.mxu0 0.0
        %2258 = vmatpush.msra.mxu0 0.0
        %2259 = vmatpush.msra.mxu0 0.0
        %2260 = vmatpush.msra.mxu0 0.0
        %2261 = vmatpush.msra.mxu0 0.0
        %2262 = vmatpush.msra.mxu0 0.0
        %2263 = vmatpush.msra.mxu0 0.0
        %2264 = vmatpush.msra.mxu0 0.0
        %2265 = vmatpush.msra.mxu0 0.0
        %2266 = vmatpush.msra.mxu0 0.0
        %2267 = vmatpush.msra.mxu0 0.0
        %2268 = vmatpush.msra.mxu0 0.0
        %2269 = vmatpush.msra.mxu0 0.0
        %2270 = vmatpush.msra.mxu0 %v2247
        %2271 = vmatmul.f32.gmra.mxu0 %v2253
        %v2272 = vpop.f32.mrf.mxu0
        %v2273 = vadd.f32 0.0, %v2272
        %2274 = vdwg.mxu0
        %2275 = vmatpush.msra.mxu0 0.0
        %2276 = vmatpush.msra.mxu0 0.0
        %2277 = vmatpush.msra.mxu0 0.0
        %2278 = vmatpush.msra.mxu0 0.0
        %2279 = vmatpush.msra.mxu0 0.0
        %2280 = vmatpush.msra.mxu0 0.0
        %2281 = vmatpush.msra.mxu0 0.0
        %2282 = vmatpush.msra.mxu0 0.0
        %2283 = vmatpush.msra.mxu0 0.0
        %2284 = vmatpush.msra.mxu0 0.0
        %2285 = vmatpush.msra.mxu0 0.0
        %2286 = vmatpush.msra.mxu0 0.0
        %2287 = vmatpush.msra.mxu0 0.0
        %2288 = vmatpush.msra.mxu0 0.0
        %2289 = vmatpush.msra.mxu0 0.0
        %2290 = vmatpush.msra.mxu0 %v2248
        %2291 = vmatmul.f32.gmra.mxu0 %v2253
        %v2292 = vpop.f32.mrf.mxu0
        %v2293 = vadd.f32 0.0, %v2292
        %2294 = vdwg.mxu0
        %2295 = vmatpush.msra.mxu0 0.0
        %2296 = vmatpush.msra.mxu0 0.0
        %2297 = vmatpush.msra.mxu0 0.0
        %2298 = vmatpush.msra.mxu0 0.0
        %2299 = vmatpush.msra.mxu0 0.0
        %2300 = vmatpush.msra.mxu0 0.0
        %2301 = vmatpush.msra.mxu0 0.0
        %2302 = vmatpush.msra.mxu0 0.0
        %2303 = vmatpush.msra.mxu0 0.0
        %2304 = vmatpush.msra.mxu0 0.0
        %2305 = vmatpush.msra.mxu0 0.0
        %2306 = vmatpush.msra.mxu0 0.0
        %2307 = vmatpush.msra.mxu0 0.0
        %2308 = vmatpush.msra.mxu0 0.0
        %2309 = vmatpush.msra.mxu0 0.0
        %2310 = vmatpush.msra.mxu0 %v2246
        %2311 = vmatmul.f32.gmra.mxu0 %v2253
        %v2312 = vpop.f32.mrf.mxu0
        %v2313 = vadd.f32 0.0, %v2312
        %2314 = vdwg.mxu0
        %v2315 = vadd.f32 %v2236, %v2273
        %v2316 = vadd.f32 %v2237, %v2293
        %v2317 = vadd.f32 %v2238, %v2313
        %s2318 = scalar_lea.vmem %s7, 48
        %v2319 = vld [vmem:[%s2318] sm:$0xff]
        %2320 = vrot.lane.b32.xlu0 %v1856, 92
        %v2321 = vpop.permute.xlu0 %2320
        %2322 = vrot.lane.b32.xlu0 %v1857, 92
        %v2323 = vpop.permute.xlu0 %2322
        %2324 = vrot.lane.b32.xlu0 %v1858, 92
        %v2325 = vpop.permute.xlu0 %2324
        %v2326 = vsel %vm1584, %v2321, %v2323
        %v2327 = vsel %vm1584, %v2323, %v2325
        %v2332 = vsel %vm1129, %v2319, 0
        %2334 = vmatpush.msra.mxu0 0.0
        %2335 = vmatpush.msra.mxu0 0.0
        %2336 = vmatpush.msra.mxu0 0.0
        %2337 = vmatpush.msra.mxu0 0.0
        %2338 = vmatpush.msra.mxu0 0.0
        %2339 = vmatpush.msra.mxu0 0.0
        %2340 = vmatpush.msra.mxu0 0.0
        %2341 = vmatpush.msra.mxu0 0.0
        %2342 = vmatpush.msra.mxu0 0.0
        %2343 = vmatpush.msra.mxu0 0.0
        %2344 = vmatpush.msra.mxu0 0.0
        %2345 = vmatpush.msra.mxu0 0.0
        %2346 = vmatpush.msra.mxu0 0.0
        %2347 = vmatpush.msra.mxu0 0.0
        %2348 = vmatpush.msra.mxu0 0.0
        %2349 = vmatpush.msra.mxu0 %v2326
        %2350 = vmatmul.f32.gmra.mxu0 %v2332
        %v2351 = vpop.f32.mrf.mxu0
        %v2352 = vadd.f32 0.0, %v2351
        %2353 = vdwg.mxu0
        %2354 = vmatpush.msra.mxu0 0.0
        %2355 = vmatpush.msra.mxu0 0.0
        %2356 = vmatpush.msra.mxu0 0.0
        %2357 = vmatpush.msra.mxu0 0.0
        %2358 = vmatpush.msra.mxu0 0.0
        %2359 = vmatpush.msra.mxu0 0.0
        %2360 = vmatpush.msra.mxu0 0.0
        %2361 = vmatpush.msra.mxu0 0.0
        %2362 = vmatpush.msra.mxu0 0.0
        %2363 = vmatpush.msra.mxu0 0.0
        %2364 = vmatpush.msra.mxu0 0.0
        %2365 = vmatpush.msra.mxu0 0.0
        %2366 = vmatpush.msra.mxu0 0.0
        %2367 = vmatpush.msra.mxu0 0.0
        %2368 = vmatpush.msra.mxu0 0.0
        %2369 = vmatpush.msra.mxu0 %v2327
        %2370 = vmatmul.f32.gmra.mxu0 %v2332
        %v2371 = vpop.f32.mrf.mxu0
        %v2372 = vadd.f32 0.0, %v2371
        %2373 = vdwg.mxu0
        %2374 = vmatpush.msra.mxu0 0.0
        %2375 = vmatpush.msra.mxu0 0.0
        %2376 = vmatpush.msra.mxu0 0.0
        %2377 = vmatpush.msra.mxu0 0.0
        %2378 = vmatpush.msra.mxu0 0.0
        %2379 = vmatpush.msra.mxu0 0.0
        %2380 = vmatpush.msra.mxu0 0.0
        %2381 = vmatpush.msra.mxu0 0.0
        %2382 = vmatpush.msra.mxu0 0.0
        %2383 = vmatpush.msra.mxu0 0.0
        %2384 = vmatpush.msra.mxu0 0.0
        %2385 = vmatpush.msra.mxu0 0.0
        %2386 = vmatpush.msra.mxu0 0.0
        %2387 = vmatpush.msra.mxu0 0.0
        %2388 = vmatpush.msra.mxu0 0.0
        %2389 = vmatpush.msra.mxu0 %v2325
        %2390 = vmatmul.f32.gmra.mxu0 %v2332
        %v2391 = vpop.f32.mrf.mxu0
        %v2392 = vadd.f32 0.0, %v2391
        %2393 = vdwg.mxu0
        %v2394 = vadd.f32 %v2315, %v2352
        %v2395 = vadd.f32 %v2316, %v2372
        %v2396 = vadd.f32 %v2317, %v2392
        %s2397 = scalar_lea.vmem %s7, 56
        %v2398 = vld [vmem:[%s2397] sm:$0xff]
        %2399 = vrot.lane.b32.xlu0 %v1856, 91
        %v2400 = vpop.permute.xlu0 %2399
        %2401 = vrot.lane.b32.xlu0 %v1857, 91
        %v2402 = vpop.permute.xlu0 %2401
        %2403 = vrot.lane.b32.xlu0 %v1858, 91
        %v2404 = vpop.permute.xlu0 %2403
        %v2405 = vsel %vm1664, %v2400, %v2402
        %v2406 = vsel %vm1664, %v2402, %v2404
        %v2411 = vsel %vm1129, %v2398, 0
        %2413 = vmatpush.msra.mxu0 0.0
        %2414 = vmatpush.msra.mxu0 0.0
        %2415 = vmatpush.msra.mxu0 0.0
        %2416 = vmatpush.msra.mxu0 0.0
        %2417 = vmatpush.msra.mxu0 0.0
        %2418 = vmatpush.msra.mxu0 0.0
        %2419 = vmatpush.msra.mxu0 0.0
        %2420 = vmatpush.msra.mxu0 0.0
        %2421 = vmatpush.msra.mxu0 0.0
        %2422 = vmatpush.msra.mxu0 0.0
        %2423 = vmatpush.msra.mxu0 0.0
        %2424 = vmatpush.msra.mxu0 0.0
        %2425 = vmatpush.msra.mxu0 0.0
        %2426 = vmatpush.msra.mxu0 0.0
        %2427 = vmatpush.msra.mxu0 0.0
        %2428 = vmatpush.msra.mxu0 %v2405
        %2429 = vmatmul.f32.gmra.mxu0 %v2411
        %v2430 = vpop.f32.mrf.mxu0
        %v2431 = vadd.f32 0.0, %v2430
        %2432 = vdwg.mxu0
        %2433 = vmatpush.msra.mxu0 0.0
        %2434 = vmatpush.msra.mxu0 0.0
        %2435 = vmatpush.msra.mxu0 0.0
        %2436 = vmatpush.msra.mxu0 0.0
        %2437 = vmatpush.msra.mxu0 0.0
        %2438 = vmatpush.msra.mxu0 0.0
        %2439 = vmatpush.msra.mxu0 0.0
        %2440 = vmatpush.msra.mxu0 0.0
        %2441 = vmatpush.msra.mxu0 0.0
        %2442 = vmatpush.msra.mxu0 0.0
        %2443 = vmatpush.msra.mxu0 0.0
        %2444 = vmatpush.msra.mxu0 0.0
        %2445 = vmatpush.msra.mxu0 0.0
        %2446 = vmatpush.msra.mxu0 0.0
        %2447 = vmatpush.msra.mxu0 0.0
        %2448 = vmatpush.msra.mxu0 %v2406
        %2449 = vmatmul.f32.gmra.mxu0 %v2411
        %v2450 = vpop.f32.mrf.mxu0
        %v2451 = vadd.f32 0.0, %v2450
        %2452 = vdwg.mxu0
        %2453 = vmatpush.msra.mxu0 0.0
        %2454 = vmatpush.msra.mxu0 0.0
        %2455 = vmatpush.msra.mxu0 0.0
        %2456 = vmatpush.msra.mxu0 0.0
        %2457 = vmatpush.msra.mxu0 0.0
        %2458 = vmatpush.msra.mxu0 0.0
        %2459 = vmatpush.msra.mxu0 0.0
        %2460 = vmatpush.msra.mxu0 0.0
        %2461 = vmatpush.msra.mxu0 0.0
        %2462 = vmatpush.msra.mxu0 0.0
        %2463 = vmatpush.msra.mxu0 0.0
        %2464 = vmatpush.msra.mxu0 0.0
        %2465 = vmatpush.msra.mxu0 0.0
        %2466 = vmatpush.msra.mxu0 0.0
        %2467 = vmatpush.msra.mxu0 0.0
        %2468 = vmatpush.msra.mxu0 %v2404
        %2469 = vmatmul.f32.gmra.mxu0 %v2411
        %v2470 = vpop.f32.mrf.mxu0
        %v2471 = vadd.f32 0.0, %v2470
        %2472 = vdwg.mxu0
        %v2473 = vadd.f32 %v2394, %v2431
        %v2474 = vadd.f32 %v2395, %v2451
        %v2475 = vadd.f32 %v2396, %v2471
        %s2476 = scalar_lea.vmem %s7, 64
        %v2477 = vld [vmem:[%s2476] sm:$0xff]
        %2478 = vrot.lane.b32.xlu0 %v1856, 90
        %v2479 = vpop.permute.xlu0 %2478
        %2480 = vrot.lane.b32.xlu0 %v1857, 90
        %v2481 = vpop.permute.xlu0 %2480
        %2482 = vrot.lane.b32.xlu0 %v1858, 90
        %v2483 = vpop.permute.xlu0 %2482
        %v2484 = vsel %vm1744, %v2479, %v2481
        %v2485 = vsel %vm1744, %v2481, %v2483
        %v2490 = vsel %vm1129, %v2477, 0
        %2492 = vmatpush.msra.mxu0 0.0
        %2493 = vmatpush.msra.mxu0 0.0
        %2494 = vmatpush.msra.mxu0 0.0
        %2495 = vmatpush.msra.mxu0 0.0
        %2496 = vmatpush.msra.mxu0 0.0
        %2497 = vmatpush.msra.mxu0 0.0
        %2498 = vmatpush.msra.mxu0 0.0
        %2499 = vmatpush.msra.mxu0 0.0
        %2500 = vmatpush.msra.mxu0 0.0
        %2501 = vmatpush.msra.mxu0 0.0
        %2502 = vmatpush.msra.mxu0 0.0
        %2503 = vmatpush.msra.mxu0 0.0
        %2504 = vmatpush.msra.mxu0 0.0
        %2505 = vmatpush.msra.mxu0 0.0
        %2506 = vmatpush.msra.mxu0 0.0
        %2507 = vmatpush.msra.mxu0 %v2484
        %2508 = vmatmul.f32.gmra.mxu0 %v2490
        %v2509 = vpop.f32.mrf.mxu0
        %v2510 = vadd.f32 0.0, %v2509
        %2511 = vdwg.mxu0
        %2512 = vmatpush.msra.mxu0 0.0
        %2513 = vmatpush.msra.mxu0 0.0
        %2514 = vmatpush.msra.mxu0 0.0
        %2515 = vmatpush.msra.mxu0 0.0
        %2516 = vmatpush.msra.mxu0 0.0
        %2517 = vmatpush.msra.mxu0 0.0
        %2518 = vmatpush.msra.mxu0 0.0
        %2519 = vmatpush.msra.mxu0 0.0
        %2520 = vmatpush.msra.mxu0 0.0
        %2521 = vmatpush.msra.mxu0 0.0
        %2522 = vmatpush.msra.mxu0 0.0
        %2523 = vmatpush.msra.mxu0 0.0
        %2524 = vmatpush.msra.mxu0 0.0
        %2525 = vmatpush.msra.mxu0 0.0
        %2526 = vmatpush.msra.mxu0 0.0
        %2527 = vmatpush.msra.mxu0 %v2485
        %2528 = vmatmul.f32.gmra.mxu0 %v2490
        %v2529 = vpop.f32.mrf.mxu0
        %v2530 = vadd.f32 0.0, %v2529
        %2531 = vdwg.mxu0
        %2532 = vmatpush.msra.mxu0 0.0
        %2533 = vmatpush.msra.mxu0 0.0
        %2534 = vmatpush.msra.mxu0 0.0
        %2535 = vmatpush.msra.mxu0 0.0
        %2536 = vmatpush.msra.mxu0 0.0
        %2537 = vmatpush.msra.mxu0 0.0
        %2538 = vmatpush.msra.mxu0 0.0
        %2539 = vmatpush.msra.mxu0 0.0
        %2540 = vmatpush.msra.mxu0 0.0
        %2541 = vmatpush.msra.mxu0 0.0
        %2542 = vmatpush.msra.mxu0 0.0
        %2543 = vmatpush.msra.mxu0 0.0
        %2544 = vmatpush.msra.mxu0 0.0
        %2545 = vmatpush.msra.mxu0 0.0
        %2546 = vmatpush.msra.mxu0 0.0
        %2547 = vmatpush.msra.mxu0 %v2483
        %2548 = vmatmul.f32.gmra.mxu0 %v2490
        %v2549 = vpop.f32.mrf.mxu0
        %v2550 = vadd.f32 0.0, %v2549
        %2551 = vdwg.mxu0
        %v2552 = vadd.f32 %v2473, %v2510
        %v2553 = vadd.f32 %v2474, %v2530
        %v2554 = vadd.f32 %v2475, %v2550
        %v2555 = vld [vmem:[%s9] sm:$0xff]
        %2557 = vset.pattern.permute.xlu0 0
        %2558 = vperm.xlu0 %2557, %v2555
        %v2559 = vpop.permute.xlu0 %2558
        %v2561 = vadd.f32 %v2552, %v2559
        %v2562 = vadd.f32 %v2553, %v2559
        %v2563 = vadd.f32 %v2554, %v2559
        %v2564 = vmax.f32 %v2561, 0.0
        %v2565 = vmax.f32 %v2562, 0.0
        %v2566 = vmax.f32 %v2563, 0.0
        %v2567 = vld [vmem:[%s63] sm:$0x7]
        %v2569 = vperm.slane %v2567, 0
        %v2570 = vperm.slane %v2567, 1
        %v2571 = vperm.slane %v2567, 2
        %v2575 = vmul.f32 %v2564, %v2569
        %v2576 = vmul.f32 %v2565, %v2570
        %v2577 = vmul.f32 %v2566, %v2571
        %2581 = vrot.lane.b32.xlu0 %v2575, 19
        %v2582 = vpop.permute.xlu0 %2581
        %2583 = vrot.lane.b32.xlu0 %v2576, 19
        %v2584 = vpop.permute.xlu0 %2583
        %2585 = vrot.lane.b32.xlu0 %v2577, 19
        %v2586 = vpop.permute.xlu0 %2585
        %v2587 = vsel %vm1060, %v2582, %v2584
        %v2588 = vsel %vm1060, %v2584, %v2586
        %2592 = vst.msk [vmem:[#allocation2 + $0x18] sm:$0xff] %vm1103, %v2582
        %2593 = vst [vmem:[#allocation2 + $0x20] sm:$0xff] %v2587
        %2594 = vst.msk [vmem:[#allocation2 + $0x28] sm:$0xff] %vm1106, %v2588
        %v2595 = vld [vmem:[#allocation2 + $0x18] sm:$0xff]
        %v2596 = vld [vmem:[#allocation2 + $0x20] sm:$0xff]
        %v2597 = vld [vmem:[#allocation2 + $0x28] sm:$0xff]
        %2601 = vrot.lane.b32.xlu0 %v2595, 127
        %v2602 = vpop.permute.xlu0 %2601
        %2603 = vrot.lane.b32.xlu0 %v2596, 127
        %v2604 = vpop.permute.xlu0 %2603
        %2605 = vrot.lane.b32.xlu0 %v2597, 127
        %v2606 = vpop.permute.xlu0 %2605
        %v2607 = vsel %vm1123, %v2602, %v2604
        %v2608 = vsel %vm1123, %v2604, %v2606
        %v2612 = vmax.f32 %v2595, %v2607
        %v2613 = vmax.f32 %v2596, %v2608
        %v2614 = vmax.f32 %v2597, %v2606
        %2618 = vrot.lane.b32.xlu0 %v2612, 110
        %v2619 = vpop.permute.xlu0 %2618
        %2620 = vrot.lane.b32.xlu0 %v2613, 110
        %v2621 = vpop.permute.xlu0 %2620
        %2622 = vrot.lane.b32.xlu0 %v2614, 110
        %v2623 = vpop.permute.xlu0 %2622
        %v2624 = vsel %vm1344, %v2619, %v2621
        %v2625 = vsel %vm1344, %v2621, %v2623
        %v2629 = vmax.f32 %v2612, %v2624
        %v2630 = vmax.f32 %v2613, %v2625
        %v2631 = vmax.f32 %v2614, %v2623
        %v2632 = vld [vmem:[%s59] sm:$0xff]
        %v2633 = vld [vmem:[%s59 + $0x8] sm:$0xff]
        %v2634 = vld [vmem:[%s59 + $0x10] sm:$0xff]
        %v2635 = vld [vmem:[%s59 + $0x18] sm:$0xff]
        %v2636 = vld [vmem:[%s59 + $0x20] sm:$0xff]
        %v2637 = vld [vmem:[%s59 + $0x28] sm:$0xff]
        %v2638 = vld [vmem:[%s59 + $0x30] sm:$0xff]
        %v2639 = vld [vmem:[%s59 + $0x38] sm:$0xff]
        %v2640 = vld [vmem:[%s59 + $0x40] sm:$0xff]
        %v2641 = vld [vmem:[%s59 + $0x48] sm:$0xff]
        %v2642 = vld [vmem:[%s59 + $0x50] sm:$0xff]
        %v2643 = vld [vmem:[%s59 + $0x58] sm:$0xff]
        %v2644 = vld [vmem:[%s59 + $0x60] sm:$0xff]
        %v2645 = vld [vmem:[%s59 + $0x68] sm:$0xff]
        %v2646 = vld [vmem:[%s59 + $0x70] sm:$0xff]
        %v2647 = vld [vmem:[%s59 + $0x78] sm:$0xff]
        %v2648 = vld [vmem:[%s59 + $0x80] sm:$0xff]
        %v2649 = vld [vmem:[%s59 + $0x88] sm:$0xff]
        %v2650 = vld [vmem:[%s59 + $0x90] sm:$0xff]
        %v2651 = vld [vmem:[%s59 + $0x98] sm:$0xff]
        %v2652 = vld [vmem:[%s59 + $0xa0] sm:$0xff]
        %v2653 = vld [vmem:[%s59 + $0xa8] sm:$0xff]
        %v2654 = vld [vmem:[%s59 + $0xb0] sm:$0xff]
        %v2655 = vld [vmem:[%s59 + $0xb8] sm:$0xff]
        %v2656 = vld [vmem:[%s59 + $0xc0] sm:$0xff]
        %v2657 = vld [vmem:[%s59 + $0xc8] sm:$0xff]
        %v2658 = vld [vmem:[%s59 + $0xd0] sm:$0xff]
        %v2659 = vld [vmem:[%s59 + $0xd8] sm:$0xff]
        %v2660 = vld [vmem:[%s59 + $0xe0] sm:$0xff]
        %v2661 = vld [vmem:[%s59 + $0xe8] sm:$0xff]
        %v2662 = vld [vmem:[%s59 + $0xf0] sm:$0xff]
        %v2663 = vld [vmem:[%s59 + $0xf8] sm:$0xff]
        %v2664 = vld [vmem:[%s59 + $0x100] sm:$0xff]
        %v2665 = vld [vmem:[%s59 + $0x108] sm:$0xff]
        %v2666 = vld [vmem:[%s59 + $0x110] sm:$0xff]
        %v2667 = vld [vmem:[%s59 + $0x118] sm:$0xff]
        %v2668 = vld [vmem:[%s59 + $0x120] sm:$0xff]
        %v2669 = vld [vmem:[%s59 + $0x128] sm:$0xff]
        %v2670 = vld [vmem:[%s59 + $0x130] sm:$0xff]
        %v2671 = vld [vmem:[%s59 + $0x138] sm:$0xff]
        %v2672 = vld [vmem:[%s59 + $0x140] sm:$0xf]
        %2676 = vrot.lane.b32.xlu0 %v2629, 109
        %v2677 = vpop.permute.xlu0 %2676
        %2678 = vrot.lane.b32.xlu0 %v2630, 109
        %v2679 = vpop.permute.xlu0 %2678
        %2680 = vrot.lane.b32.xlu0 %v2631, 109
        %v2681 = vpop.permute.xlu0 %2680
        %v2682 = vsel %vm1424, %v2677, %v2679
        %v2683 = vsel %vm1424, %v2679, %v2681
        %vm2686 = vcmask 556032
        %v2687 = vsel %vm2686, %v2681, 0
        %vm2689 = vcmask 1043456
        %v2691 = vsel %vm2689, %v2672, 0
        %2693 = vmatpush.msra.mxu0 %v2647
        %2694 = vmatpush.msra.mxu0 %v2646
        %2695 = vmatpush.msra.mxu0 %v2645
        %2696 = vmatpush.msra.mxu0 %v2644
        %2697 = vmatpush.msra.mxu0 %v2643
        %2698 = vmatpush.msra.mxu0 %v2642
        %2699 = vmatpush.msra.mxu0 %v2641
        %2700 = vmatpush.msra.mxu0 %v2640
        %2701 = vmatpush.msra.mxu0 %v2639
        %2702 = vmatpush.msra.mxu0 %v2638
        %2703 = vmatpush.msra.mxu0 %v2637
        %2704 = vmatpush.msra.mxu0 %v2636
        %2705 = vmatpush.msra.mxu0 %v2635
        %2706 = vmatpush.msra.mxu0 %v2634
        %2707 = vmatpush.msra.mxu0 %v2633
        %2708 = vmatpush.msra.mxu0 %v2632
        %2709 = vmatmul.f32.gmra.mxu0 %v2682
        %v2710 = vpop.f32.mrf.mxu0
        %v2711 = vadd.f32 0.0, %v2710
        %2712 = vdwg.mxu0
        %2713 = vmatpush.msra.mxu0 %v2663
        %2714 = vmatpush.msra.mxu0 %v2662
        %2715 = vmatpush.msra.mxu0 %v2661
        %2716 = vmatpush.msra.mxu0 %v2660
        %2717 = vmatpush.msra.mxu0 %v2659
        %2718 = vmatpush.msra.mxu0 %v2658
        %2719 = vmatpush.msra.mxu0 %v2657
        %2720 = vmatpush.msra.mxu0 %v2656
        %2721 = vmatpush.msra.mxu0 %v2655
        %2722 = vmatpush.msra.mxu0 %v2654
        %2723 = vmatpush.msra.mxu0 %v2653
        %2724 = vmatpush.msra.mxu0 %v2652
        %2725 = vmatpush.msra.mxu0 %v2651
        %2726 = vmatpush.msra.mxu0 %v2650
        %2727 = vmatpush.msra.mxu0 %v2649
        %2728 = vmatpush.msra.mxu0 %v2648
        %2729 = vmatmul.f32.gmra.mxu0 %v2683
        %v2730 = vpop.f32.mrf.mxu0
        %v2731 = vadd.f32 %v2711, %v2730
        %2732 = vdwg.mxu0
        %2733 = vmatpush.msra.mxu0 0.0
        %2734 = vmatpush.msra.mxu0 0.0
        %2735 = vmatpush.msra.mxu0 0.0
        %2736 = vmatpush.msra.mxu0 0.0
        %2737 = vmatpush.msra.mxu0 0.0
        %2738 = vmatpush.msra.mxu0 0.0
        %2739 = vmatpush.msra.mxu0 0.0
        %2740 = vmatpush.msra.mxu0 %v2691
        %2741 = vmatpush.msra.mxu0 %v2671
        %2742 = vmatpush.msra.mxu0 %v2670
        %2743 = vmatpush.msra.mxu0 %v2669
        %2744 = vmatpush.msra.mxu0 %v2668
        %2745 = vmatpush.msra.mxu0 %v2667
        %2746 = vmatpush.msra.mxu0 %v2666
        %2747 = vmatpush.msra.mxu0 %v2665
        %2748 = vmatpush.msra.mxu0 %v2664
        %2749 = vmatmul.f32.gmra.mxu0 %v2687
        %v2750 = vpop.f32.mrf.mxu0
        %v2751 = vadd.f32 %v2731, %v2750
        %2752 = vdwg.mxu0
        %2754 = vrot.lane.b32.xlu0 %v2751, 11
        %v2755 = vpop.permute.xlu0 %2754
        %vm2757 = vcmask 908376
        %2758 = vst.msk [vmem:[#allocation3] sm:$0xff] %vm2757, %v2755
        %v2759 = vld [vmem:[#allocation3] sm:$0xff]
        %v2760 = vld [vmem:[%s11] sm:$0xff]
        %v2761 = vld [vmem:[%s11 + $0x8] sm:$0xff]
        %s2762 = scalar_lea.vmem %s11, 16
        %v2763 = vld [vmem:[%s2762] sm:$0xff]
        %v2764 = vld [vmem:[%s2762 + $0x8] sm:$0xff]
        %2766 = vrot.lane.b32.xlu0 %v2759, 127
        %v2767 = vpop.permute.xlu0 %2766
        %v2770 = vsel %vm1129, %v2763, 0
        %v2773 = vsel %vm1129, %v2764, 0
        %2775 = vmatpush.msra.mxu0 0.0
        %2776 = vmatpush.msra.mxu0 0.0
        %2777 = vmatpush.msra.mxu0 0.0
        %2778 = vmatpush.msra.mxu0 0.0
        %2779 = vmatpush.msra.mxu0 0.0
        %2780 = vmatpush.msra.mxu0 0.0
        %2781 = vmatpush.msra.mxu0 0.0
        %2782 = vmatpush.msra.mxu0 0.0
        %2783 = vmatpush.msra.mxu0 0.0
        %2784 = vmatpush.msra.mxu0 0.0
        %2785 = vmatpush.msra.mxu0 0.0
        %2786 = vmatpush.msra.mxu0 0.0
        %2787 = vmatpush.msra.mxu0 0.0
        %2788 = vmatpush.msra.mxu0 0.0
        %2789 = vmatpush.msra.mxu0 0.0
        %2790 = vmatpush.msra.mxu0 %v2767
        %2791 = vmatmul.f32.gmra.mxu0 %v2770
        %v2792 = vpop.f32.mrf.mxu0
        %v2793 = vadd.f32 0.0, %v2792
        %2794 = vmatmul.f32.gmra.mxu0 %v2773
        %v2795 = vpop.f32.mrf.mxu0
        %v2796 = vadd.f32 0.0, %v2795
        %2797 = vdwg.mxu0
        %v2799 = vsel %vm1129, %v2760, 0
        %v2802 = vsel %vm1129, %v2761, 0
        %2804 = vmatpush.msra.mxu0 0.0
        %2805 = vmatpush.msra.mxu0 0.0
        %2806 = vmatpush.msra.mxu0 0.0
        %2807 = vmatpush.msra.mxu0 0.0
        %2808 = vmatpush.msra.mxu0 0.0
        %2809 = vmatpush.msra.mxu0 0.0
        %2810 = vmatpush.msra.mxu0 0.0
        %2811 = vmatpush.msra.mxu0 0.0
        %2812 = vmatpush.msra.mxu0 0.0
        %2813 = vmatpush.msra.mxu0 0.0
        %2814 = vmatpush.msra.mxu0 0.0
        %2815 = vmatpush.msra.mxu0 0.0
        %2816 = vmatpush.msra.mxu0 0.0
        %2817 = vmatpush.msra.mxu0 0.0
        %2818 = vmatpush.msra.mxu0 0.0
        %2819 = vmatpush.msra.mxu0 %v2759
        %2820 = vmatmul.f32.gmra.mxu0 %v2799
        %v2821 = vpop.f32.mrf.mxu0
        %v2822 = vadd.f32 %v2793, %v2821
        %2823 = vmatmul.f32.gmra.mxu0 %v2802
        %v2824 = vpop.f32.mrf.mxu0
        %v2825 = vadd.f32 %v2796, %v2824
        %2826 = vdwg.mxu0
        %s2827 = scalar_lea.vmem %s11, 32
        %v2828 = vld [vmem:[%s2827] sm:$0xff]
        %v2829 = vld [vmem:[%s2827 + $0x8] sm:$0xff]
        %2830 = vrot.lane.b32.xlu0 %v2759, 126
        %v2831 = vpop.permute.xlu0 %2830
        %v2834 = vsel %vm1129, %v2828, 0
        %v2837 = vsel %vm1129, %v2829, 0
        %2839 = vmatpush.msra.mxu0 0.0
        %2840 = vmatpush.msra.mxu0 0.0
        %2841 = vmatpush.msra.mxu0 0.0
        %2842 = vmatpush.msra.mxu0 0.0
        %2843 = vmatpush.msra.mxu0 0.0
        %2844 = vmatpush.msra.mxu0 0.0
        %2845 = vmatpush.msra.mxu0 0.0
        %2846 = vmatpush.msra.mxu0 0.0
        %2847 = vmatpush.msra.mxu0 0.0
        %2848 = vmatpush.msra.mxu0 0.0
        %2849 = vmatpush.msra.mxu0 0.0
        %2850 = vmatpush.msra.mxu0 0.0
        %2851 = vmatpush.msra.mxu0 0.0
        %2852 = vmatpush.msra.mxu0 0.0
        %2853 = vmatpush.msra.mxu0 0.0
        %2854 = vmatpush.msra.mxu0 %v2831
        %2855 = vmatmul.f32.gmra.mxu0 %v2834
        %v2856 = vpop.f32.mrf.mxu0
        %v2857 = vadd.f32 0.0, %v2856
        %2858 = vmatmul.f32.gmra.mxu0 %v2837
        %v2859 = vpop.f32.mrf.mxu0
        %v2860 = vadd.f32 0.0, %v2859
        %2861 = vdwg.mxu0
        %v2862 = vadd.f32 %v2822, %v2857
        %v2863 = vadd.f32 %v2825, %v2860
        %s2864 = scalar_lea.vmem %s11, 48
        %v2865 = vld [vmem:[%s2864] sm:$0xff]
        %v2866 = vld [vmem:[%s2864 + $0x8] sm:$0xff]
        %2867 = vrot.lane.b32.xlu0 %v2759, 118
        %v2868 = vpop.permute.xlu0 %2867
        %v2871 = vsel %vm1129, %v2865, 0
        %v2874 = vsel %vm1129, %v2866, 0
        %2876 = vmatpush.msra.mxu0 0.0
        %2877 = vmatpush.msra.mxu0 0.0
        %2878 = vmatpush.msra.mxu0 0.0
        %2879 = vmatpush.msra.mxu0 0.0
        %2880 = vmatpush.msra.mxu0 0.0
        %2881 = vmatpush.msra.mxu0 0.0
        %2882 = vmatpush.msra.mxu0 0.0
        %2883 = vmatpush.msra.mxu0 0.0
        %2884 = vmatpush.msra.mxu0 0.0
        %2885 = vmatpush.msra.mxu0 0.0
        %2886 = vmatpush.msra.mxu0 0.0
        %2887 = vmatpush.msra.mxu0 0.0
        %2888 = vmatpush.msra.mxu0 0.0
        %2889 = vmatpush.msra.mxu0 0.0
        %2890 = vmatpush.msra.mxu0 0.0
        %2891 = vmatpush.msra.mxu0 %v2868
        %2892 = vmatmul.f32.gmra.mxu0 %v2871
        %v2893 = vpop.f32.mrf.mxu0
        %v2894 = vadd.f32 0.0, %v2893
        %2895 = vmatmul.f32.gmra.mxu0 %v2874
        %v2896 = vpop.f32.mrf.mxu0
        %v2897 = vadd.f32 0.0, %v2896
        %2898 = vdwg.mxu0
        %v2899 = vadd.f32 %v2862, %v2894
        %v2900 = vadd.f32 %v2863, %v2897
        %s2901 = scalar_lea.vmem %s11, 64
        %v2902 = vld [vmem:[%s2901] sm:$0xff]
        %v2903 = vld [vmem:[%s2901 + $0x8] sm:$0xff]
        %2904 = vrot.lane.b32.xlu0 %v2759, 117
        %v2905 = vpop.permute.xlu0 %2904
        %v2908 = vsel %vm1129, %v2902, 0
        %v2911 = vsel %vm1129, %v2903, 0
        %2913 = vmatpush.msra.mxu0 0.0
        %2914 = vmatpush.msra.mxu0 0.0
        %2915 = vmatpush.msra.mxu0 0.0
        %2916 = vmatpush.msra.mxu0 0.0
        %2917 = vmatpush.msra.mxu0 0.0
        %2918 = vmatpush.msra.mxu0 0.0
        %2919 = vmatpush.msra.mxu0 0.0
        %2920 = vmatpush.msra.mxu0 0.0
        %2921 = vmatpush.msra.mxu0 0.0
        %2922 = vmatpush.msra.mxu0 0.0
        %2923 = vmatpush.msra.mxu0 0.0
        %2924 = vmatpush.msra.mxu0 0.0
        %2925 = vmatpush.msra.mxu0 0.0
        %2926 = vmatpush.msra.mxu0 0.0
        %2927 = vmatpush.msra.mxu0 0.0
        %2928 = vmatpush.msra.mxu0 %v2905
        %2929 = vmatmul.f32.gmra.mxu0 %v2908
        %v2930 = vpop.f32.mrf.mxu0
        %v2931 = vadd.f32 0.0, %v2930
        %2932 = vmatmul.f32.gmra.mxu0 %v2911
        %v2933 = vpop.f32.mrf.mxu0
        %v2934 = vadd.f32 0.0, %v2933
        %2935 = vdwg.mxu0
        %v2936 = vadd.f32 %v2899, %v2931
        %v2937 = vadd.f32 %v2900, %v2934
        %s2938 = scalar_lea.vmem %s11, 80
        %v2939 = vld [vmem:[%s2938] sm:$0xff]
        %v2940 = vld [vmem:[%s2938 + $0x8] sm:$0xff]
        %2941 = vrot.lane.b32.xlu0 %v2759, 116
        %v2942 = vpop.permute.xlu0 %2941
        %v2945 = vsel %vm1129, %v2939, 0
        %v2948 = vsel %vm1129, %v2940, 0
        %2950 = vmatpush.msra.mxu0 0.0
        %2951 = vmatpush.msra.mxu0 0.0
        %2952 = vmatpush.msra.mxu0 0.0
        %2953 = vmatpush.msra.mxu0 0.0
        %2954 = vmatpush.msra.mxu0 0.0
        %2955 = vmatpush.msra.mxu0 0.0
        %2956 = vmatpush.msra.mxu0 0.0
        %2957 = vmatpush.msra.mxu0 0.0
        %2958 = vmatpush.msra.mxu0 0.0
        %2959 = vmatpush.msra.mxu0 0.0
        %2960 = vmatpush.msra.mxu0 0.0
        %2961 = vmatpush.msra.mxu0 0.0
        %2962 = vmatpush.msra.mxu0 0.0
        %2963 = vmatpush.msra.mxu0 0.0
        %2964 = vmatpush.msra.mxu0 0.0
        %2965 = vmatpush.msra.mxu0 %v2942
        %2966 = vmatmul.f32.gmra.mxu0 %v2945
        %v2967 = vpop.f32.mrf.mxu0
        %v2968 = vadd.f32 0.0, %v2967
        %2969 = vmatmul.f32.gmra.mxu0 %v2948
        %v2970 = vpop.f32.mrf.mxu0
        %v2971 = vadd.f32 0.0, %v2970
        %2972 = vdwg.mxu0
        %v2973 = vadd.f32 %v2936, %v2968
        %v2974 = vadd.f32 %v2937, %v2971
        %s2975 = scalar_lea.vmem %s11, 96
        %v2976 = vld [vmem:[%s2975] sm:$0xff]
        %v2977 = vld [vmem:[%s2975 + $0x8] sm:$0xff]
        %2978 = vrot.lane.b32.xlu0 %v2759, 108
        %v2979 = vpop.permute.xlu0 %2978
        %v2982 = vsel %vm1129, %v2976, 0
        %v2985 = vsel %vm1129, %v2977, 0
        %2987 = vmatpush.msra.mxu0 0.0
        %2988 = vmatpush.msra.mxu0 0.0
        %2989 = vmatpush.msra.mxu0 0.0
        %2990 = vmatpush.msra.mxu0 0.0
        %2991 = vmatpush.msra.mxu0 0.0
        %2992 = vmatpush.msra.mxu0 0.0
        %2993 = vmatpush.msra.mxu0 0.0
        %2994 = vmatpush.msra.mxu0 0.0
        %2995 = vmatpush.msra.mxu0 0.0
        %2996 = vmatpush.msra.mxu0 0.0
        %2997 = vmatpush.msra.mxu0 0.0
        %2998 = vmatpush.msra.mxu0 0.0
        %2999 = vmatpush.msra.mxu0 0.0
        %3000 = vmatpush.msra.mxu0 0.0
        %3001 = vmatpush.msra.mxu0 0.0
        %3002 = vmatpush.msra.mxu0 %v2979
        %3003 = vmatmul.f32.gmra.mxu0 %v2982
        %v3004 = vpop.f32.mrf.mxu0
        %v3005 = vadd.f32 0.0, %v3004
        %3006 = vmatmul.f32.gmra.mxu0 %v2985
        %v3007 = vpop.f32.mrf.mxu0
        %v3008 = vadd.f32 0.0, %v3007
        %3009 = vdwg.mxu0
        %v3010 = vadd.f32 %v2973, %v3005
        %v3011 = vadd.f32 %v2974, %v3008
        %s3012 = scalar_lea.vmem %s11, 112
        %v3013 = vld [vmem:[%s3012] sm:$0xff]
        %v3014 = vld [vmem:[%s3012 + $0x8] sm:$0xff]
        %3015 = vrot.lane.b32.xlu0 %v2759, 107
        %v3016 = vpop.permute.xlu0 %3015
        %v3019 = vsel %vm1129, %v3013, 0
        %v3022 = vsel %vm1129, %v3014, 0
        %3024 = vmatpush.msra.mxu0 0.0
        %3025 = vmatpush.msra.mxu0 0.0
        %3026 = vmatpush.msra.mxu0 0.0
        %3027 = vmatpush.msra.mxu0 0.0
        %3028 = vmatpush.msra.mxu0 0.0
        %3029 = vmatpush.msra.mxu0 0.0
        %3030 = vmatpush.msra.mxu0 0.0
        %3031 = vmatpush.msra.mxu0 0.0
        %3032 = vmatpush.msra.mxu0 0.0
        %3033 = vmatpush.msra.mxu0 0.0
        %3034 = vmatpush.msra.mxu0 0.0
        %3035 = vmatpush.msra.mxu0 0.0
        %3036 = vmatpush.msra.mxu0 0.0
        %3037 = vmatpush.msra.mxu0 0.0
        %3038 = vmatpush.msra.mxu0 0.0
        %3039 = vmatpush.msra.mxu0 %v3016
        %3040 = vmatmul.f32.gmra.mxu0 %v3019
        %v3041 = vpop.f32.mrf.mxu0
        %v3042 = vadd.f32 0.0, %v3041
        %3043 = vmatmul.f32.gmra.mxu0 %v3022
        %v3044 = vpop.f32.mrf.mxu0
        %v3045 = vadd.f32 0.0, %v3044
        %3046 = vdwg.mxu0
        %v3047 = vadd.f32 %v3010, %v3042
        %v3048 = vadd.f32 %v3011, %v3045
        %s3049 = scalar_lea.vmem %s11, 128
        %v3050 = vld [vmem:[%s3049] sm:$0xff]
        %v3051 = vld [vmem:[%s3049 + $0x8] sm:$0xff]
        %3052 = vrot.lane.b32.xlu0 %v2759, 106
        %v3053 = vpop.permute.xlu0 %3052
        %v3056 = vsel %vm1129, %v3050, 0
        %v3059 = vsel %vm1129, %v3051, 0
        %3061 = vmatpush.msra.mxu0 0.0
        %3062 = vmatpush.msra.mxu0 0.0
        %3063 = vmatpush.msra.mxu0 0.0
        %3064 = vmatpush.msra.mxu0 0.0
        %3065 = vmatpush.msra.mxu0 0.0
        %3066 = vmatpush.msra.mxu0 0.0
        %3067 = vmatpush.msra.mxu0 0.0
        %3068 = vmatpush.msra.mxu0 0.0
        %3069 = vmatpush.msra.mxu0 0.0
        %3070 = vmatpush.msra.mxu0 0.0
        %3071 = vmatpush.msra.mxu0 0.0
        %3072 = vmatpush.msra.mxu0 0.0
        %3073 = vmatpush.msra.mxu0 0.0
        %3074 = vmatpush.msra.mxu0 0.0
        %3075 = vmatpush.msra.mxu0 0.0
        %3076 = vmatpush.msra.mxu0 %v3053
        %3077 = vmatmul.f32.gmra.mxu0 %v3056
        %v3078 = vpop.f32.mrf.mxu0
        %v3079 = vadd.f32 0.0, %v3078
        %3080 = vmatmul.f32.gmra.mxu0 %v3059
        %v3081 = vpop.f32.mrf.mxu0
        %v3082 = vadd.f32 0.0, %v3081
        %3083 = vdwg.mxu0
        %v3084 = vadd.f32 %v3047, %v3079
        %v3085 = vadd.f32 %v3048, %v3082
        %v3086 = vld [vmem:[%s13] sm:$0xff]
        %v3087 = vld [vmem:[%s13 + $0x8] sm:$0xff]
        %3089 = vset.pattern.permute.xlu0 0
        %3090 = vperm.xlu0 %3089, %v3086
        %v3091 = vpop.permute.xlu0 %3090
        %3094 = vset.pattern.permute.xlu0 0
        %3095 = vperm.xlu0 %3094, %v3087
        %v3096 = vpop.permute.xlu0 %3095
        %v3098 = vadd.f32 %v3084, %v3091
        %v3099 = vadd.f32 %v3085, %v3096
        %v3100 = vmax.f32 %v3098, 0.0
        %v3101 = vmax.f32 %v3099, 0.0
        %v3102 = vld [vmem:[%s65] sm:$0x1]
        %v3104 = vperm.slane %v3102, 0
        %v3106 = vmul.f32 %v3100, %v3104
        %v3107 = vmul.f32 %v3101, %v3104
        %3110 = vrot.lane.b32.xlu0 %v3106, 11
        %v3111 = vpop.permute.xlu0 %3110
        %3112 = vrot.lane.b32.xlu0 %v3107, 11
        %v3113 = vpop.permute.xlu0 %3112
        %3116 = vst.msk [vmem:[#allocation3] sm:$0xff] %vm2757, %v3111
        %3117 = vst.msk [vmem:[#allocation3 + $0x8] sm:$0xff] %vm2757, %v3113
        %v3118 = vld [vmem:[#allocation3] sm:$0xff]
        %v3119 = vld [vmem:[#allocation3 + $0x8] sm:$0xff]
        %v3120 = vld [vmem:[%s15] sm:$0xff]
        %v3121 = vld [vmem:[%s15 + $0x8] sm:$0xff]
        %s3122 = scalar_lea.vmem %s15, 16
        %v3123 = vld [vmem:[%s3122] sm:$0xff]
        %v3124 = vld [vmem:[%s3122 + $0x8] sm:$0xff]
        %3127 = vrot.lane.b32.xlu0 %v3118, 127
        %v3128 = vpop.permute.xlu0 %3127
        %3129 = vrot.lane.b32.xlu0 %v3119, 127
        %v3130 = vpop.permute.xlu0 %3129
        %vm3133 = vcmask 130048
        %v3135 = vsel %vm3133, %v3123, 0
        %v3138 = vsel %vm3133, %v3124, 0
        %3140 = vmatpush.msra.mxu0 0.0
        %3141 = vmatpush.msra.mxu0 0.0
        %3142 = vmatpush.msra.mxu0 0.0
        %3143 = vmatpush.msra.mxu0 0.0
        %3144 = vmatpush.msra.mxu0 0.0
        %3145 = vmatpush.msra.mxu0 0.0
        %3146 = vmatpush.msra.mxu0 0.0
        %3147 = vmatpush.msra.mxu0 0.0
        %3148 = vmatpush.msra.mxu0 0.0
        %3149 = vmatpush.msra.mxu0 0.0
        %3150 = vmatpush.msra.mxu0 0.0
        %3151 = vmatpush.msra.mxu0 0.0
        %3152 = vmatpush.msra.mxu0 0.0
        %3153 = vmatpush.msra.mxu0 0.0
        %3154 = vmatpush.msra.mxu0 %v3130
        %3155 = vmatpush.msra.mxu0 %v3128
        %3156 = vmatmul.f32.gmra.mxu0 %v3135
        %v3157 = vpop.f32.mrf.mxu0
        %v3158 = vadd.f32 0.0, %v3157
        %3159 = vmatmul.f32.gmra.mxu0 %v3138
        %v3160 = vpop.f32.mrf.mxu0
        %v3161 = vadd.f32 0.0, %v3160
        %3162 = vdwg.mxu0
        %v3164 = vsel %vm3133, %v3120, 0
        %v3167 = vsel %vm3133, %v3121, 0
        %3169 = vmatpush.msra.mxu0 0.0
        %3170 = vmatpush.msra.mxu0 0.0
        %3171 = vmatpush.msra.mxu0 0.0
        %3172 = vmatpush.msra.mxu0 0.0
        %3173 = vmatpush.msra.mxu0 0.0
        %3174 = vmatpush.msra.mxu0 0.0
        %3175 = vmatpush.msra.mxu0 0.0
        %3176 = vmatpush.msra.mxu0 0.0
        %3177 = vmatpush.msra.mxu0 0.0
        %3178 = vmatpush.msra.mxu0 0.0
        %3179 = vmatpush.msra.mxu0 0.0
        %3180 = vmatpush.msra.mxu0 0.0
        %3181 = vmatpush.msra.mxu0 0.0
        %3182 = vmatpush.msra.mxu0 0.0
        %3183 = vmatpush.msra.mxu0 %v3119
        %3184 = vmatpush.msra.mxu0 %v3118
        %3185 = vmatmul.f32.gmra.mxu0 %v3164
        %v3186 = vpop.f32.mrf.mxu0
        %v3187 = vadd.f32 %v3158, %v3186
        %3188 = vmatmul.f32.gmra.mxu0 %v3167
        %v3189 = vpop.f32.mrf.mxu0
        %v3190 = vadd.f32 %v3161, %v3189
        %3191 = vdwg.mxu0
        %s3192 = scalar_lea.vmem %s15, 32
        %v3193 = vld [vmem:[%s3192] sm:$0xff]
        %v3194 = vld [vmem:[%s3192 + $0x8] sm:$0xff]
        %3195 = vrot.lane.b32.xlu0 %v3118, 126
        %v3196 = vpop.permute.xlu0 %3195
        %3197 = vrot.lane.b32.xlu0 %v3119, 126
        %v3198 = vpop.permute.xlu0 %3197
        %v3202 = vsel %vm3133, %v3193, 0
        %v3205 = vsel %vm3133, %v3194, 0
        %3207 = vmatpush.msra.mxu0 0.0
        %3208 = vmatpush.msra.mxu0 0.0
        %3209 = vmatpush.msra.mxu0 0.0
        %3210 = vmatpush.msra.mxu0 0.0
        %3211 = vmatpush.msra.mxu0 0.0
        %3212 = vmatpush.msra.mxu0 0.0
        %3213 = vmatpush.msra.mxu0 0.0
        %3214 = vmatpush.msra.mxu0 0.0
        %3215 = vmatpush.msra.mxu0 0.0
        %3216 = vmatpush.msra.mxu0 0.0
        %3217 = vmatpush.msra.mxu0 0.0
        %3218 = vmatpush.msra.mxu0 0.0
        %3219 = vmatpush.msra.mxu0 0.0
        %3220 = vmatpush.msra.mxu0 0.0
        %3221 = vmatpush.msra.mxu0 %v3198
        %3222 = vmatpush.msra.mxu0 %v3196
        %3223 = vmatmul.f32.gmra.mxu0 %v3202
        %v3224 = vpop.f32.mrf.mxu0
        %v3225 = vadd.f32 0.0, %v3224
        %3226 = vmatmul.f32.gmra.mxu0 %v3205
        %v3227 = vpop.f32.mrf.mxu0
        %v3228 = vadd.f32 0.0, %v3227
        %3229 = vdwg.mxu0
        %v3230 = vadd.f32 %v3187, %v3225
        %v3231 = vadd.f32 %v3190, %v3228
        %s3232 = scalar_lea.vmem %s15, 48
        %v3233 = vld [vmem:[%s3232] sm:$0xff]
        %v3234 = vld [vmem:[%s3232 + $0x8] sm:$0xff]
        %3235 = vrot.lane.b32.xlu0 %v3118, 118
        %v3236 = vpop.permute.xlu0 %3235
        %3237 = vrot.lane.b32.xlu0 %v3119, 118
        %v3238 = vpop.permute.xlu0 %3237
        %v3242 = vsel %vm3133, %v3233, 0
        %v3245 = vsel %vm3133, %v3234, 0
        %3247 = vmatpush.msra.mxu0 0.0
        %3248 = vmatpush.msra.mxu0 0.0
        %3249 = vmatpush.msra.mxu0 0.0
        %3250 = vmatpush.msra.mxu0 0.0
        %3251 = vmatpush.msra.mxu0 0.0
        %3252 = vmatpush.msra.mxu0 0.0
        %3253 = vmatpush.msra.mxu0 0.0
        %3254 = vmatpush.msra.mxu0 0.0
        %3255 = vmatpush.msra.mxu0 0.0
        %3256 = vmatpush.msra.mxu0 0.0
        %3257 = vmatpush.msra.mxu0 0.0
        %3258 = vmatpush.msra.mxu0 0.0
        %3259 = vmatpush.msra.mxu0 0.0
        %3260 = vmatpush.msra.mxu0 0.0
        %3261 = vmatpush.msra.mxu0 %v3238
        %3262 = vmatpush.msra.mxu0 %v3236
        %3263 = vmatmul.f32.gmra.mxu0 %v3242
        %v3264 = vpop.f32.mrf.mxu0
        %v3265 = vadd.f32 0.0, %v3264
        %3266 = vmatmul.f32.gmra.mxu0 %v3245
        %v3267 = vpop.f32.mrf.mxu0
        %v3268 = vadd.f32 0.0, %v3267
        %3269 = vdwg.mxu0
        %v3270 = vadd.f32 %v3230, %v3265
        %v3271 = vadd.f32 %v3231, %v3268
        %s3272 = scalar_lea.vmem %s15, 64
        %v3273 = vld [vmem:[%s3272] sm:$0xff]
        %v3274 = vld [vmem:[%s3272 + $0x8] sm:$0xff]
        %3275 = vrot.lane.b32.xlu0 %v3118, 117
        %v3276 = vpop.permute.xlu0 %3275
        %3277 = vrot.lane.b32.xlu0 %v3119, 117
        %v3278 = vpop.permute.xlu0 %3277
        %v3282 = vsel %vm3133, %v3273, 0
        %v3285 = vsel %vm3133, %v3274, 0
        %3287 = vmatpush.msra.mxu0 0.0
        %3288 = vmatpush.msra.mxu0 0.0
        %3289 = vmatpush.msra.mxu0 0.0
        %3290 = vmatpush.msra.mxu0 0.0
        %3291 = vmatpush.msra.mxu0 0.0
        %3292 = vmatpush.msra.mxu0 0.0
        %3293 = vmatpush.msra.mxu0 0.0
        %3294 = vmatpush.msra.mxu0 0.0
        %3295 = vmatpush.msra.mxu0 0.0
        %3296 = vmatpush.msra.mxu0 0.0
        %3297 = vmatpush.msra.mxu0 0.0
        %3298 = vmatpush.msra.mxu0 0.0
        %3299 = vmatpush.msra.mxu0 0.0
        %3300 = vmatpush.msra.mxu0 0.0
        %3301 = vmatpush.msra.mxu0 %v3278
        %3302 = vmatpush.msra.mxu0 %v3276
        %3303 = vmatmul.f32.gmra.mxu0 %v3282
        %v3304 = vpop.f32.mrf.mxu0
        %v3305 = vadd.f32 0.0, %v3304
        %3306 = vmatmul.f32.gmra.mxu0 %v3285
        %v3307 = vpop.f32.mrf.mxu0
        %v3308 = vadd.f32 0.0, %v3307
        %3309 = vdwg.mxu0
        %v3310 = vadd.f32 %v3270, %v3305
        %v3311 = vadd.f32 %v3271, %v3308
        %s3312 = scalar_lea.vmem %s15, 80
        %v3313 = vld [vmem:[%s3312] sm:$0xff]
        %v3314 = vld [vmem:[%s3312 + $0x8] sm:$0xff]
        %3315 = vrot.lane.b32.xlu0 %v3118, 116
        %v3316 = vpop.permute.xlu0 %3315
        %3317 = vrot.lane.b32.xlu0 %v3119, 116
        %v3318 = vpop.permute.xlu0 %3317
        %v3322 = vsel %vm3133, %v3313, 0
        %v3325 = vsel %vm3133, %v3314, 0
        %3327 = vmatpush.msra.mxu0 0.0
        %3328 = vmatpush.msra.mxu0 0.0
        %3329 = vmatpush.msra.mxu0 0.0
        %3330 = vmatpush.msra.mxu0 0.0
        %3331 = vmatpush.msra.mxu0 0.0
        %3332 = vmatpush.msra.mxu0 0.0
        %3333 = vmatpush.msra.mxu0 0.0
        %3334 = vmatpush.msra.mxu0 0.0
        %3335 = vmatpush.msra.mxu0 0.0
        %3336 = vmatpush.msra.mxu0 0.0
        %3337 = vmatpush.msra.mxu0 0.0
        %3338 = vmatpush.msra.mxu0 0.0
        %3339 = vmatpush.msra.mxu0 0.0
        %3340 = vmatpush.msra.mxu0 0.0
        %3341 = vmatpush.msra.mxu0 %v3318
        %3342 = vmatpush.msra.mxu0 %v3316
        %3343 = vmatmul.f32.gmra.mxu0 %v3322
        %v3344 = vpop.f32.mrf.mxu0
        %v3345 = vadd.f32 0.0, %v3344
        %3346 = vmatmul.f32.gmra.mxu0 %v3325
        %v3347 = vpop.f32.mrf.mxu0
        %v3348 = vadd.f32 0.0, %v3347
        %3349 = vdwg.mxu0
        %v3350 = vadd.f32 %v3310, %v3345
        %v3351 = vadd.f32 %v3311, %v3348
        %s3352 = scalar_lea.vmem %s15, 96
        %v3353 = vld [vmem:[%s3352] sm:$0xff]
        %v3354 = vld [vmem:[%s3352 + $0x8] sm:$0xff]
        %3355 = vrot.lane.b32.xlu0 %v3118, 108
        %v3356 = vpop.permute.xlu0 %3355
        %3357 = vrot.lane.b32.xlu0 %v3119, 108
        %v3358 = vpop.permute.xlu0 %3357
        %v3362 = vsel %vm3133, %v3353, 0
        %v3365 = vsel %vm3133, %v3354, 0
        %3367 = vmatpush.msra.mxu0 0.0
        %3368 = vmatpush.msra.mxu0 0.0
        %3369 = vmatpush.msra.mxu0 0.0
        %3370 = vmatpush.msra.mxu0 0.0
        %3371 = vmatpush.msra.mxu0 0.0
        %3372 = vmatpush.msra.mxu0 0.0
        %3373 = vmatpush.msra.mxu0 0.0
        %3374 = vmatpush.msra.mxu0 0.0
        %3375 = vmatpush.msra.mxu0 0.0
        %3376 = vmatpush.msra.mxu0 0.0
        %3377 = vmatpush.msra.mxu0 0.0
        %3378 = vmatpush.msra.mxu0 0.0
        %3379 = vmatpush.msra.mxu0 0.0
        %3380 = vmatpush.msra.mxu0 0.0
        %3381 = vmatpush.msra.mxu0 %v3358
        %3382 = vmatpush.msra.mxu0 %v3356
        %3383 = vmatmul.f32.gmra.mxu0 %v3362
        %v3384 = vpop.f32.mrf.mxu0
        %v3385 = vadd.f32 0.0, %v3384
        %3386 = vmatmul.f32.gmra.mxu0 %v3365
        %v3387 = vpop.f32.mrf.mxu0
        %v3388 = vadd.f32 0.0, %v3387
        %3389 = vdwg.mxu0
        %v3390 = vadd.f32 %v3350, %v3385
        %v3391 = vadd.f32 %v3351, %v3388
        %s3392 = scalar_lea.vmem %s15, 112
        %v3393 = vld [vmem:[%s3392] sm:$0xff]
        %v3394 = vld [vmem:[%s3392 + $0x8] sm:$0xff]
        %3395 = vrot.lane.b32.xlu0 %v3118, 107
        %v3396 = vpop.permute.xlu0 %3395
        %3397 = vrot.lane.b32.xlu0 %v3119, 107
        %v3398 = vpop.permute.xlu0 %3397
        %v3402 = vsel %vm3133, %v3393, 0
        %v3405 = vsel %vm3133, %v3394, 0
        %3407 = vmatpush.msra.mxu0 0.0
        %3408 = vmatpush.msra.mxu0 0.0
        %3409 = vmatpush.msra.mxu0 0.0
        %3410 = vmatpush.msra.mxu0 0.0
        %3411 = vmatpush.msra.mxu0 0.0
        %3412 = vmatpush.msra.mxu0 0.0
        %3413 = vmatpush.msra.mxu0 0.0
        %3414 = vmatpush.msra.mxu0 0.0
        %3415 = vmatpush.msra.mxu0 0.0
        %3416 = vmatpush.msra.mxu0 0.0
        %3417 = vmatpush.msra.mxu0 0.0
        %3418 = vmatpush.msra.mxu0 0.0
        %3419 = vmatpush.msra.mxu0 0.0
        %3420 = vmatpush.msra.mxu0 0.0
        %3421 = vmatpush.msra.mxu0 %v3398
        %3422 = vmatpush.msra.mxu0 %v3396
        %3423 = vmatmul.f32.gmra.mxu0 %v3402
        %v3424 = vpop.f32.mrf.mxu0
        %v3425 = vadd.f32 0.0, %v3424
        %3426 = vmatmul.f32.gmra.mxu0 %v3405
        %v3427 = vpop.f32.mrf.mxu0
        %v3428 = vadd.f32 0.0, %v3427
        %3429 = vdwg.mxu0
        %v3430 = vadd.f32 %v3390, %v3425
        %v3431 = vadd.f32 %v3391, %v3428
        %s3432 = scalar_lea.vmem %s15, 128
        %v3433 = vld [vmem:[%s3432] sm:$0xff]
        %v3434 = vld [vmem:[%s3432 + $0x8] sm:$0xff]
        %3435 = vrot.lane.b32.xlu0 %v3118, 106
        %v3436 = vpop.permute.xlu0 %3435
        %3437 = vrot.lane.b32.xlu0 %v3119, 106
        %v3438 = vpop.permute.xlu0 %3437
        %v3442 = vsel %vm3133, %v3433, 0
        %v3445 = vsel %vm3133, %v3434, 0
        %3447 = vmatpush.msra.mxu0 0.0
        %3448 = vmatpush.msra.mxu0 0.0
        %3449 = vmatpush.msra.mxu0 0.0
        %3450 = vmatpush.msra.mxu0 0.0
        %3451 = vmatpush.msra.mxu0 0.0
        %3452 = vmatpush.msra.mxu0 0.0
        %3453 = vmatpush.msra.mxu0 0.0
        %3454 = vmatpush.msra.mxu0 0.0
        %3455 = vmatpush.msra.mxu0 0.0
        %3456 = vmatpush.msra.mxu0 0.0
        %3457 = vmatpush.msra.mxu0 0.0
        %3458 = vmatpush.msra.mxu0 0.0
        %3459 = vmatpush.msra.mxu0 0.0
        %3460 = vmatpush.msra.mxu0 0.0
        %3461 = vmatpush.msra.mxu0 %v3438
        %3462 = vmatpush.msra.mxu0 %v3436
        %3463 = vmatmul.f32.gmra.mxu0 %v3442
        %v3464 = vpop.f32.mrf.mxu0
        %v3465 = vadd.f32 0.0, %v3464
        %3466 = vmatmul.f32.gmra.mxu0 %v3445
        %v3467 = vpop.f32.mrf.mxu0
        %v3468 = vadd.f32 0.0, %v3467
        %3469 = vdwg.mxu0
        %v3470 = vadd.f32 %v3430, %v3465
        %v3471 = vadd.f32 %v3431, %v3468
        %v3472 = vld [vmem:[%s17] sm:$0xff]
        %v3473 = vld [vmem:[%s17 + $0x8] sm:$0xff]
        %3475 = vset.pattern.permute.xlu0 0
        %3476 = vperm.xlu0 %3475, %v3472
        %v3477 = vpop.permute.xlu0 %3476
        %3480 = vset.pattern.permute.xlu0 0
        %3481 = vperm.xlu0 %3480, %v3473
        %v3482 = vpop.permute.xlu0 %3481
        %v3484 = vadd.f32 %v3470, %v3477
        %v3485 = vadd.f32 %v3471, %v3482
        %v3486 = vmax.f32 %v3484, 0.0
        %v3487 = vmax.f32 %v3485, 0.0
        %v3488 = vld [vmem:[%s65] sm:$0x1]
        %v3490 = vperm.slane %v3488, 0
        %v3492 = vmul.f32 %v3486, %v3490
        %v3493 = vmul.f32 %v3487, %v3490
        %3496 = vrot.lane.b32.xlu0 %v3492, 11
        %v3497 = vpop.permute.xlu0 %3496
        %3498 = vrot.lane.b32.xlu0 %v3493, 11
        %v3499 = vpop.permute.xlu0 %3498
        %3502 = vst.msk [vmem:[#allocation3 + $0x10] sm:$0xff] %vm2757, %v3497
        %3503 = vst.msk [vmem:[#allocation3 + $0x18] sm:$0xff] %vm2757, %v3499
        %v3504 = vld [vmem:[#allocation3 + $0x10] sm:$0xff]
        %v3505 = vld [vmem:[#allocation3 + $0x18] sm:$0xff]
        %3508 = vrot.lane.b32.xlu0 %v3504, 127
        %v3509 = vpop.permute.xlu0 %3508
        %3510 = vrot.lane.b32.xlu0 %v3505, 127
        %v3511 = vpop.permute.xlu0 %3510
        %v3514 = vmax.f32 %v3504, %v3509
        %v3515 = vmax.f32 %v3505, %v3511
        %3518 = vrot.lane.b32.xlu0 %v3514, 118
        %v3519 = vpop.permute.xlu0 %3518
        %3520 = vrot.lane.b32.xlu0 %v3515, 118
        %v3521 = vpop.permute.xlu0 %3520
        %v3524 = vmax.f32 %v3514, %v3519
        %v3525 = vmax.f32 %v3515, %v3521
        %v3526 = vld [vmem:[%s61] sm:$0xff]
        %v3527 = vld [vmem:[%s61 + $0x8] sm:$0xff]
        %v3528 = vld [vmem:[%s61 + $0x10] sm:$0xff]
        %v3529 = vld [vmem:[%s61 + $0x18] sm:$0xff]
        %v3530 = vld [vmem:[%s61 + $0x20] sm:$0xff]
        %v3531 = vld [vmem:[%s61 + $0x28] sm:$0xff]
        %v3532 = vld [vmem:[%s61 + $0x30] sm:$0xff]
        %v3533 = vld [vmem:[%s61 + $0x38] sm:$0xff]
        %v3534 = vld [vmem:[%s61 + $0x40] sm:$0xff]
        %v3535 = vld [vmem:[%s61 + $0x48] sm:$0xff]
        %v3536 = vld [vmem:[%s61 + $0x50] sm:$0xff]
        %v3537 = vld [vmem:[%s61 + $0x58] sm:$0xff]
        %v3538 = vld [vmem:[%s61 + $0x60] sm:$0xf]
        %3541 = vrot.lane.b32.xlu0 %v3524, 117
        %v3542 = vpop.permute.xlu0 %3541
        %3543 = vrot.lane.b32.xlu0 %v3525, 117
        %v3544 = vpop.permute.xlu0 %3543
        %vm3545 = vcmask 818176
        %v3546 = vsel %vm3545, %v3542, 0
        %v3548 = vsel %vm3545, %v3544, 0
        %v3551 = vsel %vm2689, %v3538, 0
        %3553 = vmatpush.msra.mxu0 0.0
        %3554 = vmatpush.msra.mxu0 0.0
        %3555 = vmatpush.msra.mxu0 0.0
        %3556 = vmatpush.msra.mxu0 %v3551
        %3557 = vmatpush.msra.mxu0 %v3537
        %3558 = vmatpush.msra.mxu0 %v3536
        %3559 = vmatpush.msra.mxu0 %v3535
        %3560 = vmatpush.msra.mxu0 %v3534
        %3561 = vmatpush.msra.mxu0 %v3533
        %3562 = vmatpush.msra.mxu0 %v3532
        %3563 = vmatpush.msra.mxu0 %v3531
        %3564 = vmatpush.msra.mxu0 %v3530
        %3565 = vmatpush.msra.mxu0 %v3529
        %3566 = vmatpush.msra.mxu0 %v3528
        %3567 = vmatpush.msra.mxu0 %v3527
        %3568 = vmatpush.msra.mxu0 %v3526
        %3569 = vmatmul.f32.gmra.mxu0 %v3546
        %v3570 = vpop.f32.mrf.mxu0
        %v3571 = vadd.f32 0.0, %v3570
        %3572 = vmatmul.f32.gmra.mxu0 %v3548
        %v3573 = vpop.f32.mrf.mxu0
        %v3574 = vadd.f32 0.0, %v3573
        %3575 = vdwg.mxu0
        %3578 = vrot.lane.b32.xlu0 %v3571, 7
        %v3579 = vpop.permute.xlu0 %3578
        %3580 = vrot.lane.b32.xlu0 %v3574, 7
        %v3581 = vpop.permute.xlu0 %3580
        %vm3584 = vcmask 351288
        %3585 = vst.msk [vmem:[#allocation4] sm:$0xff] %vm3584, %v3579
        %3586 = vst.msk [vmem:[#allocation4 + $0x8] sm:$0xff] %vm3584, %v3581
        %v3587 = vld [vmem:[#allocation4] sm:$0xff]
        %v3588 = vld [vmem:[#allocation4 + $0x8] sm:$0xff]
        %v3589 = vld [vmem:[%s19] sm:$0xff]
        %v3590 = vld [vmem:[%s19 + $0x8] sm:$0xff]
        %v3591 = vld [vmem:[%s19 + $0x10] sm:$0xff]
        %v3592 = vld [vmem:[%s19 + $0x18] sm:$0xff]
        %s3593 = scalar_lea.vmem %s19, 32
        %v3594 = vld [vmem:[%s3593] sm:$0xff]
        %v3595 = vld [vmem:[%s3593 + $0x8] sm:$0xff]
        %v3596 = vld [vmem:[%s3593 + $0x10] sm:$0xff]
        %v3597 = vld [vmem:[%s3593 + $0x18] sm:$0xff]
        %3600 = vrot.lane.b32.xlu0 %v3587, 127
        %v3601 = vpop.permute.xlu0 %3600
        %3602 = vrot.lane.b32.xlu0 %v3588, 127
        %v3603 = vpop.permute.xlu0 %3602
        %v3607 = vsel %vm3133, %v3594, 0
        %v3610 = vsel %vm3133, %v3595, 0
        %v3613 = vsel %vm3133, %v3596, 0
        %v3616 = vsel %vm3133, %v3597, 0
        %3618 = vmatpush.msra.mxu0 0.0
        %3619 = vmatpush.msra.mxu0 0.0
        %3620 = vmatpush.msra.mxu0 0.0
        %3621 = vmatpush.msra.mxu0 0.0
        %3622 = vmatpush.msra.mxu0 0.0
        %3623 = vmatpush.msra.mxu0 0.0
        %3624 = vmatpush.msra.mxu0 0.0
        %3625 = vmatpush.msra.mxu0 0.0
        %3626 = vmatpush.msra.mxu0 0.0
        %3627 = vmatpush.msra.mxu0 0.0
        %3628 = vmatpush.msra.mxu0 0.0
        %3629 = vmatpush.msra.mxu0 0.0
        %3630 = vmatpush.msra.mxu0 0.0
        %3631 = vmatpush.msra.mxu0 0.0
        %3632 = vmatpush.msra.mxu0 %v3603
        %3633 = vmatpush.msra.mxu0 %v3601
        %3634 = vmatmul.f32.gmra.mxu0 %v3607
        %v3635 = vpop.f32.mrf.mxu0
        %v3636 = vadd.f32 0.0, %v3635
        %3637 = vmatmul.f32.gmra.mxu0 %v3610
        %v3638 = vpop.f32.mrf.mxu0
        %v3639 = vadd.f32 0.0, %v3638
        %3640 = vmatmul.f32.gmra.mxu0 %v3613
        %v3641 = vpop.f32.mrf.mxu0
        %v3642 = vadd.f32 0.0, %v3641
        %3643 = vmatmul.f32.gmra.mxu0 %v3616
        %v3644 = vpop.f32.mrf.mxu0
        %v3645 = vadd.f32 0.0, %v3644
        %3646 = vdwg.mxu0
        %v3648 = vsel %vm3133, %v3589, 0
        %v3651 = vsel %vm3133, %v3590, 0
        %v3654 = vsel %vm3133, %v3591, 0
        %v3657 = vsel %vm3133, %v3592, 0
        %3659 = vmatpush.msra.mxu0 0.0
        %3660 = vmatpush.msra.mxu0 0.0
        %3661 = vmatpush.msra.mxu0 0.0
        %3662 = vmatpush.msra.mxu0 0.0
        %3663 = vmatpush.msra.mxu0 0.0
        %3664 = vmatpush.msra.mxu0 0.0
        %3665 = vmatpush.msra.mxu0 0.0
        %3666 = vmatpush.msra.mxu0 0.0
        %3667 = vmatpush.msra.mxu0 0.0
        %3668 = vmatpush.msra.mxu0 0.0
        %3669 = vmatpush.msra.mxu0 0.0
        %3670 = vmatpush.msra.mxu0 0.0
        %3671 = vmatpush.msra.mxu0 0.0
        %3672 = vmatpush.msra.mxu0 0.0
        %3673 = vmatpush.msra.mxu0 %v3588
        %3674 = vmatpush.msra.mxu0 %v3587
        %3675 = vmatmul.f32.gmra.mxu0 %v3648
        %v3676 = vpop.f32.mrf.mxu0
        %v3677 = vadd.f32 %v3636, %v3676
        %3678 = vmatmul.f32.gmra.mxu0 %v3651
        %v3679 = vpop.f32.mrf.mxu0
        %v3680 = vadd.f32 %v3639, %v3679
        %3681 = vmatmul.f32.gmra.mxu0 %v3654
        %v3682 = vpop.f32.mrf.mxu0
        %v3683 = vadd.f32 %v3642, %v3682
        %3684 = vmatmul.f32.gmra.mxu0 %v3657
        %v3685 = vpop.f32.mrf.mxu0
        %v3686 = vadd.f32 %v3645, %v3685
        %3687 = vdwg.mxu0
        %s3688 = scalar_lea.vmem %s19, 64
        %v3689 = vld [vmem:[%s3688] sm:$0xff]
        %v3690 = vld [vmem:[%s3688 + $0x8] sm:$0xff]
        %v3691 = vld [vmem:[%s3688 + $0x10] sm:$0xff]
        %v3692 = vld [vmem:[%s3688 + $0x18] sm:$0xff]
        %3693 = vrot.lane.b32.xlu0 %v3587, 126
        %v3694 = vpop.permute.xlu0 %3693
        %3695 = vrot.lane.b32.xlu0 %v3588, 126
        %v3696 = vpop.permute.xlu0 %3695
        %v3700 = vsel %vm3133, %v3689, 0
        %v3703 = vsel %vm3133, %v3690, 0
        %v3706 = vsel %vm3133, %v3691, 0
        %v3709 = vsel %vm3133, %v3692, 0
        %3711 = vmatpush.msra.mxu0 0.0
        %3712 = vmatpush.msra.mxu0 0.0
        %3713 = vmatpush.msra.mxu0 0.0
        %3714 = vmatpush.msra.mxu0 0.0
        %3715 = vmatpush.msra.mxu0 0.0
        %3716 = vmatpush.msra.mxu0 0.0
        %3717 = vmatpush.msra.mxu0 0.0
        %3718 = vmatpush.msra.mxu0 0.0
        %3719 = vmatpush.msra.mxu0 0.0
        %3720 = vmatpush.msra.mxu0 0.0
        %3721 = vmatpush.msra.mxu0 0.0
        %3722 = vmatpush.msra.mxu0 0.0
        %3723 = vmatpush.msra.mxu0 0.0
        %3724 = vmatpush.msra.mxu0 0.0
        %3725 = vmatpush.msra.mxu0 %v3696
        %3726 = vmatpush.msra.mxu0 %v3694
        %3727 = vmatmul.f32.gmra.mxu0 %v3700
        %v3728 = vpop.f32.mrf.mxu0
        %v3729 = vadd.f32 0.0, %v3728
        %3730 = vmatmul.f32.gmra.mxu0 %v3703
        %v3731 = vpop.f32.mrf.mxu0
        %v3732 = vadd.f32 0.0, %v3731
        %3733 = vmatmul.f32.gmra.mxu0 %v3706
        %v3734 = vpop.f32.mrf.mxu0
        %v3735 = vadd.f32 0.0, %v3734
        %3736 = vmatmul.f32.gmra.mxu0 %v3709
        %v3737 = vpop.f32.mrf.mxu0
        %v3738 = vadd.f32 0.0, %v3737
        %3739 = vdwg.mxu0
        %v3740 = vadd.f32 %v3677, %v3729
        %v3741 = vadd.f32 %v3680, %v3732
        %v3742 = vadd.f32 %v3683, %v3735
        %v3743 = vadd.f32 %v3686, %v3738
        %s3744 = scalar_lea.vmem %s19, 96
        %v3745 = vld [vmem:[%s3744] sm:$0xff]
        %v3746 = vld [vmem:[%s3744 + $0x8] sm:$0xff]
        %v3747 = vld [vmem:[%s3744 + $0x10] sm:$0xff]
        %v3748 = vld [vmem:[%s3744 + $0x18] sm:$0xff]
        %3749 = vrot.lane.b32.xlu0 %v3587, 122
        %v3750 = vpop.permute.xlu0 %3749
        %3751 = vrot.lane.b32.xlu0 %v3588, 122
        %v3752 = vpop.permute.xlu0 %3751
        %v3756 = vsel %vm3133, %v3745, 0
        %v3759 = vsel %vm3133, %v3746, 0
        %v3762 = vsel %vm3133, %v3747, 0
        %v3765 = vsel %vm3133, %v3748, 0
        %3767 = vmatpush.msra.mxu0 0.0
        %3768 = vmatpush.msra.mxu0 0.0
        %3769 = vmatpush.msra.mxu0 0.0
        %3770 = vmatpush.msra.mxu0 0.0
        %3771 = vmatpush.msra.mxu0 0.0
        %3772 = vmatpush.msra.mxu0 0.0
        %3773 = vmatpush.msra.mxu0 0.0
        %3774 = vmatpush.msra.mxu0 0.0
        %3775 = vmatpush.msra.mxu0 0.0
        %3776 = vmatpush.msra.mxu0 0.0
        %3777 = vmatpush.msra.mxu0 0.0
        %3778 = vmatpush.msra.mxu0 0.0
        %3779 = vmatpush.msra.mxu0 0.0
        %3780 = vmatpush.msra.mxu0 0.0
        %3781 = vmatpush.msra.mxu0 %v3752
        %3782 = vmatpush.msra.mxu0 %v3750
        %3783 = vmatmul.f32.gmra.mxu0 %v3756
        %v3784 = vpop.f32.mrf.mxu0
        %v3785 = vadd.f32 0.0, %v3784
        %3786 = vmatmul.f32.gmra.mxu0 %v3759
        %v3787 = vpop.f32.mrf.mxu0
        %v3788 = vadd.f32 0.0, %v3787
        %3789 = vmatmul.f32.gmra.mxu0 %v3762
        %v3790 = vpop.f32.mrf.mxu0
        %v3791 = vadd.f32 0.0, %v3790
        %3792 = vmatmul.f32.gmra.mxu0 %v3765
        %v3793 = vpop.f32.mrf.mxu0
        %v3794 = vadd.f32 0.0, %v3793
        %3795 = vdwg.mxu0
        %v3796 = vadd.f32 %v3740, %v3785
        %v3797 = vadd.f32 %v3741, %v3788
        %v3798 = vadd.f32 %v3742, %v3791
        %v3799 = vadd.f32 %v3743, %v3794
        %s3800 = scalar_lea.vmem %s19, 128
        %v3801 = vld [vmem:[%s3800] sm:$0xff]
        %v3802 = vld [vmem:[%s3800 + $0x8] sm:$0xff]
        %v3803 = vld [vmem:[%s3800 + $0x10] sm:$0xff]
        %v3804 = vld [vmem:[%s3800 + $0x18] sm:$0xff]
        %3805 = vrot.lane.b32.xlu0 %v3587, 121
        %v3806 = vpop.permute.xlu0 %3805
        %3807 = vrot.lane.b32.xlu0 %v3588, 121
        %v3808 = vpop.permute.xlu0 %3807
        %v3812 = vsel %vm3133, %v3801, 0
        %v3815 = vsel %vm3133, %v3802, 0
        %v3818 = vsel %vm3133, %v3803, 0
        %v3821 = vsel %vm3133, %v3804, 0
        %3823 = vmatpush.msra.mxu0 0.0
        %3824 = vmatpush.msra.mxu0 0.0
        %3825 = vmatpush.msra.mxu0 0.0
        %3826 = vmatpush.msra.mxu0 0.0
        %3827 = vmatpush.msra.mxu0 0.0
        %3828 = vmatpush.msra.mxu0 0.0
        %3829 = vmatpush.msra.mxu0 0.0
        %3830 = vmatpush.msra.mxu0 0.0
        %3831 = vmatpush.msra.mxu0 0.0
        %3832 = vmatpush.msra.mxu0 0.0
        %3833 = vmatpush.msra.mxu0 0.0
        %3834 = vmatpush.msra.mxu0 0.0
        %3835 = vmatpush.msra.mxu0 0.0
        %3836 = vmatpush.msra.mxu0 0.0
        %3837 = vmatpush.msra.mxu0 %v3808
        %3838 = vmatpush.msra.mxu0 %v3806
        %3839 = vmatmul.f32.gmra.mxu0 %v3812
        %v3840 = vpop.f32.mrf.mxu0
        %v3841 = vadd.f32 0.0, %v3840
        %3842 = vmatmul.f32.gmra.mxu0 %v3815
        %v3843 = vpop.f32.mrf.mxu0
        %v3844 = vadd.f32 0.0, %v3843
        %3845 = vmatmul.f32.gmra.mxu0 %v3818
        %v3846 = vpop.f32.mrf.mxu0
        %v3847 = vadd.f32 0.0, %v3846
        %3848 = vmatmul.f32.gmra.mxu0 %v3821
        %v3849 = vpop.f32.mrf.mxu0
        %v3850 = vadd.f32 0.0, %v3849
        %3851 = vdwg.mxu0
        %v3852 = vadd.f32 %v3796, %v3841
        %v3853 = vadd.f32 %v3797, %v3844
        %v3854 = vadd.f32 %v3798, %v3847
        %v3855 = vadd.f32 %v3799, %v3850
        %s3856 = scalar_lea.vmem %s19, 160
        %v3857 = vld [vmem:[%s3856] sm:$0xff]
        %v3858 = vld [vmem:[%s3856 + $0x8] sm:$0xff]
        %v3859 = vld [vmem:[%s3856 + $0x10] sm:$0xff]
        %v3860 = vld [vmem:[%s3856 + $0x18] sm:$0xff]
        %3861 = vrot.lane.b32.xlu0 %v3587, 120
        %v3862 = vpop.permute.xlu0 %3861
        %3863 = vrot.lane.b32.xlu0 %v3588, 120
        %v3864 = vpop.permute.xlu0 %3863
        %v3868 = vsel %vm3133, %v3857, 0
        %v3871 = vsel %vm3133, %v3858, 0
        %v3874 = vsel %vm3133, %v3859, 0
        %v3877 = vsel %vm3133, %v3860, 0
        %3879 = vmatpush.msra.mxu0 0.0
        %3880 = vmatpush.msra.mxu0 0.0
        %3881 = vmatpush.msra.mxu0 0.0
        %3882 = vmatpush.msra.mxu0 0.0
        %3883 = vmatpush.msra.mxu0 0.0
        %3884 = vmatpush.msra.mxu0 0.0
        %3885 = vmatpush.msra.mxu0 0.0
        %3886 = vmatpush.msra.mxu0 0.0
        %3887 = vmatpush.msra.mxu0 0.0
        %3888 = vmatpush.msra.mxu0 0.0
        %3889 = vmatpush.msra.mxu0 0.0
        %3890 = vmatpush.msra.mxu0 0.0
        %3891 = vmatpush.msra.mxu0 0.0
        %3892 = vmatpush.msra.mxu0 0.0
        %3893 = vmatpush.msra.mxu0 %v3864
        %3894 = vmatpush.msra.mxu0 %v3862
        %3895 = vmatmul.f32.gmra.mxu0 %v3868
        %v3896 = vpop.f32.mrf.mxu0
        %v3897 = vadd.f32 0.0, %v3896
        %3898 = vmatmul.f32.gmra.mxu0 %v3871
        %v3899 = vpop.f32.mrf.mxu0
        %v3900 = vadd.f32 0.0, %v3899
        %3901 = vmatmul.f32.gmra.mxu0 %v3874
        %v3902 = vpop.f32.mrf.mxu0
        %v3903 = vadd.f32 0.0, %v3902
        %3904 = vmatmul.f32.gmra.mxu0 %v3877
        %v3905 = vpop.f32.mrf.mxu0
        %v3906 = vadd.f32 0.0, %v3905
        %3907 = vdwg.mxu0
        %v3908 = vadd.f32 %v3852, %v3897
        %v3909 = vadd.f32 %v3853, %v3900
        %v3910 = vadd.f32 %v3854, %v3903
        %v3911 = vadd.f32 %v3855, %v3906
        %s3912 = scalar_lea.vmem %s19, 192
        %v3913 = vld [vmem:[%s3912] sm:$0xff]
        %v3914 = vld [vmem:[%s3912 + $0x8] sm:$0xff]
        %v3915 = vld [vmem:[%s3912 + $0x10] sm:$0xff]
        %v3916 = vld [vmem:[%s3912 + $0x18] sm:$0xff]
        %3917 = vrot.lane.b32.xlu0 %v3587, 116
        %v3918 = vpop.permute.xlu0 %3917
        %3919 = vrot.lane.b32.xlu0 %v3588, 116
        %v3920 = vpop.permute.xlu0 %3919
        %v3924 = vsel %vm3133, %v3913, 0
        %v3927 = vsel %vm3133, %v3914, 0
        %v3930 = vsel %vm3133, %v3915, 0
        %v3933 = vsel %vm3133, %v3916, 0
        %3935 = vmatpush.msra.mxu0 0.0
        %3936 = vmatpush.msra.mxu0 0.0
        %3937 = vmatpush.msra.mxu0 0.0
        %3938 = vmatpush.msra.mxu0 0.0
        %3939 = vmatpush.msra.mxu0 0.0
        %3940 = vmatpush.msra.mxu0 0.0
        %3941 = vmatpush.msra.mxu0 0.0
        %3942 = vmatpush.msra.mxu0 0.0
        %3943 = vmatpush.msra.mxu0 0.0
        %3944 = vmatpush.msra.mxu0 0.0
        %3945 = vmatpush.msra.mxu0 0.0
        %3946 = vmatpush.msra.mxu0 0.0
        %3947 = vmatpush.msra.mxu0 0.0
        %3948 = vmatpush.msra.mxu0 0.0
        %3949 = vmatpush.msra.mxu0 %v3920
        %3950 = vmatpush.msra.mxu0 %v3918
        %3951 = vmatmul.f32.gmra.mxu0 %v3924
        %v3952 = vpop.f32.mrf.mxu0
        %v3953 = vadd.f32 0.0, %v3952
        %3954 = vmatmul.f32.gmra.mxu0 %v3927
        %v3955 = vpop.f32.mrf.mxu0
        %v3956 = vadd.f32 0.0, %v3955
        %3957 = vmatmul.f32.gmra.mxu0 %v3930
        %v3958 = vpop.f32.mrf.mxu0
        %v3959 = vadd.f32 0.0, %v3958
        %3960 = vmatmul.f32.gmra.mxu0 %v3933
        %v3961 = vpop.f32.mrf.mxu0
        %v3962 = vadd.f32 0.0, %v3961
        %3963 = vdwg.mxu0
        %v3964 = vadd.f32 %v3908, %v3953
        %v3965 = vadd.f32 %v3909, %v3956
        %v3966 = vadd.f32 %v3910, %v3959
        %v3967 = vadd.f32 %v3911, %v3962
        %s3968 = scalar_lea.vmem %s19, 224
        %v3969 = vld [vmem:[%s3968] sm:$0xff]
        %v3970 = vld [vmem:[%s3968 + $0x8] sm:$0xff]
        %v3971 = vld [vmem:[%s3968 + $0x10] sm:$0xff]
        %v3972 = vld [vmem:[%s3968 + $0x18] sm:$0xff]
        %3973 = vrot.lane.b32.xlu0 %v3587, 115
        %v3974 = vpop.permute.xlu0 %3973
        %3975 = vrot.lane.b32.xlu0 %v3588, 115
        %v3976 = vpop.permute.xlu0 %3975
        %v3980 = vsel %vm3133, %v3969, 0
        %v3983 = vsel %vm3133, %v3970, 0
        %v3986 = vsel %vm3133, %v3971, 0
        %v3989 = vsel %vm3133, %v3972, 0
        %3991 = vmatpush.msra.mxu0 0.0
        %3992 = vmatpush.msra.mxu0 0.0
        %3993 = vmatpush.msra.mxu0 0.0
        %3994 = vmatpush.msra.mxu0 0.0
        %3995 = vmatpush.msra.mxu0 0.0
        %3996 = vmatpush.msra.mxu0 0.0
        %3997 = vmatpush.msra.mxu0 0.0
        %3998 = vmatpush.msra.mxu0 0.0
        %3999 = vmatpush.msra.mxu0 0.0
        %4000 = vmatpush.msra.mxu0 0.0
        %4001 = vmatpush.msra.mxu0 0.0
        %4002 = vmatpush.msra.mxu0 0.0
        %4003 = vmatpush.msra.mxu0 0.0
        %4004 = vmatpush.msra.mxu0 0.0
        %4005 = vmatpush.msra.mxu0 %v3976
        %4006 = vmatpush.msra.mxu0 %v3974
        %4007 = vmatmul.f32.gmra.mxu0 %v3980
        %v4008 = vpop.f32.mrf.mxu0
        %v4009 = vadd.f32 0.0, %v4008
        %4010 = vmatmul.f32.gmra.mxu0 %v3983
        %v4011 = vpop.f32.mrf.mxu0
        %v4012 = vadd.f32 0.0, %v4011
        %4013 = vmatmul.f32.gmra.mxu0 %v3986
        %v4014 = vpop.f32.mrf.mxu0
        %v4015 = vadd.f32 0.0, %v4014
        %4016 = vmatmul.f32.gmra.mxu0 %v3989
        %v4017 = vpop.f32.mrf.mxu0
        %v4018 = vadd.f32 0.0, %v4017
        %4019 = vdwg.mxu0
        %v4020 = vadd.f32 %v3964, %v4009
        %v4021 = vadd.f32 %v3965, %v4012
        %v4022 = vadd.f32 %v3966, %v4015
        %v4023 = vadd.f32 %v3967, %v4018
        %s4024 = scalar_lea.vmem %s19, 256
        %v4025 = vld [vmem:[%s4024] sm:$0xff]
        %v4026 = vld [vmem:[%s4024 + $0x8] sm:$0xff]
        %v4027 = vld [vmem:[%s4024 + $0x10] sm:$0xff]
        %v4028 = vld [vmem:[%s4024 + $0x18] sm:$0xff]
        %4029 = vrot.lane.b32.xlu0 %v3587, 114
        %v4030 = vpop.permute.xlu0 %4029
        %4031 = vrot.lane.b32.xlu0 %v3588, 114
        %v4032 = vpop.permute.xlu0 %4031
        %v4036 = vsel %vm3133, %v4025, 0
        %v4039 = vsel %vm3133, %v4026, 0
        %v4042 = vsel %vm3133, %v4027, 0
        %v4045 = vsel %vm3133, %v4028, 0
        %4047 = vmatpush.msra.mxu0 0.0
        %4048 = vmatpush.msra.mxu0 0.0
        %4049 = vmatpush.msra.mxu0 0.0
        %4050 = vmatpush.msra.mxu0 0.0
        %4051 = vmatpush.msra.mxu0 0.0
        %4052 = vmatpush.msra.mxu0 0.0
        %4053 = vmatpush.msra.mxu0 0.0
        %4054 = vmatpush.msra.mxu0 0.0
        %4055 = vmatpush.msra.mxu0 0.0
        %4056 = vmatpush.msra.mxu0 0.0
        %4057 = vmatpush.msra.mxu0 0.0
        %4058 = vmatpush.msra.mxu0 0.0
        %4059 = vmatpush.msra.mxu0 0.0
        %4060 = vmatpush.msra.mxu0 0.0
        %4061 = vmatpush.msra.mxu0 %v4032
        %4062 = vmatpush.msra.mxu0 %v4030
        %4063 = vmatmul.f32.gmra.mxu0 %v4036
        %v4064 = vpop.f32.mrf.mxu0
        %v4065 = vadd.f32 0.0, %v4064
        %4066 = vmatmul.f32.gmra.mxu0 %v4039
        %v4067 = vpop.f32.mrf.mxu0
        %v4068 = vadd.f32 0.0, %v4067
        %4069 = vmatmul.f32.gmra.mxu0 %v4042
        %v4070 = vpop.f32.mrf.mxu0
        %v4071 = vadd.f32 0.0, %v4070
        %4072 = vmatmul.f32.gmra.mxu0 %v4045
        %v4073 = vpop.f32.mrf.mxu0
        %v4074 = vadd.f32 0.0, %v4073
        %4075 = vdwg.mxu0
        %v4076 = vadd.f32 %v4020, %v4065
        %v4077 = vadd.f32 %v4021, %v4068
        %v4078 = vadd.f32 %v4022, %v4071
        %v4079 = vadd.f32 %v4023, %v4074
        %v4080 = vld [vmem:[%s21] sm:$0xff]
        %v4081 = vld [vmem:[%s21 + $0x8] sm:$0xff]
        %v4082 = vld [vmem:[%s21 + $0x10] sm:$0xff]
        %v4083 = vld [vmem:[%s21 + $0x18] sm:$0xff]
        %4085 = vset.pattern.permute.xlu0 0
        %4086 = vperm.xlu0 %4085, %v4080
        %v4087 = vpop.permute.xlu0 %4086
        %4090 = vset.pattern.permute.xlu0 0
        %4091 = vperm.xlu0 %4090, %v4081
        %v4092 = vpop.permute.xlu0 %4091
        %4095 = vset.pattern.permute.xlu0 0
        %4096 = vperm.xlu0 %4095, %v4082
        %v4097 = vpop.permute.xlu0 %4096
        %4100 = vset.pattern.permute.xlu0 0
        %4101 = vperm.xlu0 %4100, %v4083
        %v4102 = vpop.permute.xlu0 %4101
        %v4104 = vadd.f32 %v4076, %v4087
        %v4105 = vadd.f32 %v4077, %v4092
        %v4106 = vadd.f32 %v4078, %v4097
        %v4107 = vadd.f32 %v4079, %v4102
        %v4108 = vmax.f32 %v4104, 0.0
        %v4109 = vmax.f32 %v4105, 0.0
        %v4110 = vmax.f32 %v4106, 0.0
        %v4111 = vmax.f32 %v4107, 0.0
        %v4112 = vld [vmem:[%s67] sm:$0x1]
        %v4114 = vperm.slane %v4112, 0
        %v4116 = vmul.f32 %v4108, %v4114
        %v4117 = vmul.f32 %v4109, %v4114
        %v4118 = vmul.f32 %v4110, %v4114
        %v4119 = vmul.f32 %v4111, %v4114
        %4124 = vrot.lane.b32.xlu0 %v4116, 7
        %v4125 = vpop.permute.xlu0 %4124
        %4126 = vrot.lane.b32.xlu0 %v4117, 7
        %v4127 = vpop.permute.xlu0 %4126
        %4128 = vrot.lane.b32.xlu0 %v4118, 7
        %v4129 = vpop.permute.xlu0 %4128
        %4130 = vrot.lane.b32.xlu0 %v4119, 7
        %v4131 = vpop.permute.xlu0 %4130
        %4136 = vst.msk [vmem:[#allocation4] sm:$0xff] %vm3584, %v4125
        %4137 = vst.msk [vmem:[#allocation4 + $0x8] sm:$0xff] %vm3584, %v4127
        %4138 = vst.msk [vmem:[#allocation4 + $0x10] sm:$0xff] %vm3584, %v4129
        %4139 = vst.msk [vmem:[#allocation4 + $0x18] sm:$0xff] %vm3584, %v4131
        %v4140 = vld [vmem:[#allocation4] sm:$0xff]
        %v4141 = vld [vmem:[#allocation4 + $0x8] sm:$0xff]
        %v4142 = vld [vmem:[#allocation4 + $0x10] sm:$0xff]
        %v4143 = vld [vmem:[#allocation4 + $0x18] sm:$0xff]
        %v4144 = vld [vmem:[%s23] sm:$0xff]
        %v4145 = vld [vmem:[%s23 + $0x8] sm:$0xff]
        %v4146 = vld [vmem:[%s23 + $0x10] sm:$0xff]
        %v4147 = vld [vmem:[%s23 + $0x18] sm:$0xff]
        %s4148 = scalar_lea.vmem %s23, 32
        %v4149 = vld [vmem:[%s4148] sm:$0xff]
        %v4150 = vld [vmem:[%s4148 + $0x8] sm:$0xff]
        %v4151 = vld [vmem:[%s4148 + $0x10] sm:$0xff]
        %v4152 = vld [vmem:[%s4148 + $0x18] sm:$0xff]
        %4157 = vrot.lane.b32.xlu0 %v4140, 127
        %v4158 = vpop.permute.xlu0 %4157
        %4159 = vrot.lane.b32.xlu0 %v4141, 127
        %v4160 = vpop.permute.xlu0 %4159
        %4161 = vrot.lane.b32.xlu0 %v4142, 127
        %v4162 = vpop.permute.xlu0 %4161
        %4163 = vrot.lane.b32.xlu0 %v4143, 127
        %v4164 = vpop.permute.xlu0 %4163
        %vm4169 = vcmask 261120
        %v4171 = vsel %vm4169, %v4149, 0
        %v4174 = vsel %vm4169, %v4150, 0
        %v4177 = vsel %vm4169, %v4151, 0
        %v4180 = vsel %vm4169, %v4152, 0
        %4182 = vmatpush.msra.mxu0 0.0
        %4183 = vmatpush.msra.mxu0 0.0
        %4184 = vmatpush.msra.mxu0 0.0
        %4185 = vmatpush.msra.mxu0 0.0
        %4186 = vmatpush.msra.mxu0 0.0
        %4187 = vmatpush.msra.mxu0 0.0
        %4188 = vmatpush.msra.mxu0 0.0
        %4189 = vmatpush.msra.mxu0 0.0
        %4190 = vmatpush.msra.mxu0 0.0
        %4191 = vmatpush.msra.mxu0 0.0
        %4192 = vmatpush.msra.mxu0 0.0
        %4193 = vmatpush.msra.mxu0 0.0
        %4194 = vmatpush.msra.mxu0 %v4164
        %4195 = vmatpush.msra.mxu0 %v4162
        %4196 = vmatpush.msra.mxu0 %v4160
        %4197 = vmatpush.msra.mxu0 %v4158
        %4198 = vmatmul.f32.gmra.mxu0 %v4171
        %v4199 = vpop.f32.mrf.mxu0
        %v4200 = vadd.f32 0.0, %v4199
        %4201 = vmatmul.f32.gmra.mxu0 %v4174
        %v4202 = vpop.f32.mrf.mxu0
        %v4203 = vadd.f32 0.0, %v4202
        %4204 = vmatmul.f32.gmra.mxu0 %v4177
        %v4205 = vpop.f32.mrf.mxu0
        %v4206 = vadd.f32 0.0, %v4205
        %4207 = vmatmul.f32.gmra.mxu0 %v4180
        %v4208 = vpop.f32.mrf.mxu0
        %v4209 = vadd.f32 0.0, %v4208
        %4210 = vdwg.mxu0
        %v4212 = vsel %vm4169, %v4144, 0
        %v4215 = vsel %vm4169, %v4145, 0
        %v4218 = vsel %vm4169, %v4146, 0
        %v4221 = vsel %vm4169, %v4147, 0
        %4223 = vmatpush.msra.mxu0 0.0
        %4224 = vmatpush.msra.mxu0 0.0
        %4225 = vmatpush.msra.mxu0 0.0
        %4226 = vmatpush.msra.mxu0 0.0
        %4227 = vmatpush.msra.mxu0 0.0
        %4228 = vmatpush.msra.mxu0 0.0
        %4229 = vmatpush.msra.mxu0 0.0
        %4230 = vmatpush.msra.mxu0 0.0
        %4231 = vmatpush.msra.mxu0 0.0
        %4232 = vmatpush.msra.mxu0 0.0
        %4233 = vmatpush.msra.mxu0 0.0
        %4234 = vmatpush.msra.mxu0 0.0
        %4235 = vmatpush.msra.mxu0 %v4143
        %4236 = vmatpush.msra.mxu0 %v4142
        %4237 = vmatpush.msra.mxu0 %v4141
        %4238 = vmatpush.msra.mxu0 %v4140
        %4239 = vmatmul.f32.gmra.mxu0 %v4212
        %v4240 = vpop.f32.mrf.mxu0
        %v4241 = vadd.f32 %v4200, %v4240
        %4242 = vmatmul.f32.gmra.mxu0 %v4215
        %v4243 = vpop.f32.mrf.mxu0
        %v4244 = vadd.f32 %v4203, %v4243
        %4245 = vmatmul.f32.gmra.mxu0 %v4218
        %v4246 = vpop.f32.mrf.mxu0
        %v4247 = vadd.f32 %v4206, %v4246
        %4248 = vmatmul.f32.gmra.mxu0 %v4221
        %v4249 = vpop.f32.mrf.mxu0
        %v4250 = vadd.f32 %v4209, %v4249
        %4251 = vdwg.mxu0
        %s4252 = scalar_lea.vmem %s23, 64
        %v4253 = vld [vmem:[%s4252] sm:$0xff]
        %v4254 = vld [vmem:[%s4252 + $0x8] sm:$0xff]
        %v4255 = vld [vmem:[%s4252 + $0x10] sm:$0xff]
        %v4256 = vld [vmem:[%s4252 + $0x18] sm:$0xff]
        %4257 = vrot.lane.b32.xlu0 %v4140, 126
        %v4258 = vpop.permute.xlu0 %4257
        %4259 = vrot.lane.b32.xlu0 %v4141, 126
        %v4260 = vpop.permute.xlu0 %4259
        %4261 = vrot.lane.b32.xlu0 %v4142, 126
        %v4262 = vpop.permute.xlu0 %4261
        %4263 = vrot.lane.b32.xlu0 %v4143, 126
        %v4264 = vpop.permute.xlu0 %4263
        %v4270 = vsel %vm4169, %v4253, 0
        %v4273 = vsel %vm4169, %v4254, 0
        %v4276 = vsel %vm4169, %v4255, 0
        %v4279 = vsel %vm4169, %v4256, 0
        %4281 = vmatpush.msra.mxu0 0.0
        %4282 = vmatpush.msra.mxu0 0.0
        %4283 = vmatpush.msra.mxu0 0.0
        %4284 = vmatpush.msra.mxu0 0.0
        %4285 = vmatpush.msra.mxu0 0.0
        %4286 = vmatpush.msra.mxu0 0.0
        %4287 = vmatpush.msra.mxu0 0.0
        %4288 = vmatpush.msra.mxu0 0.0
        %4289 = vmatpush.msra.mxu0 0.0
        %4290 = vmatpush.msra.mxu0 0.0
        %4291 = vmatpush.msra.mxu0 0.0
        %4292 = vmatpush.msra.mxu0 0.0
        %4293 = vmatpush.msra.mxu0 %v4264
        %4294 = vmatpush.msra.mxu0 %v4262
        %4295 = vmatpush.msra.mxu0 %v4260
        %4296 = vmatpush.msra.mxu0 %v4258
        %4297 = vmatmul.f32.gmra.mxu0 %v4270
        %v4298 = vpop.f32.mrf.mxu0
        %v4299 = vadd.f32 0.0, %v4298
        %4300 = vmatmul.f32.gmra.mxu0 %v4273
        %v4301 = vpop.f32.mrf.mxu0
        %v4302 = vadd.f32 0.0, %v4301
        %4303 = vmatmul.f32.gmra.mxu0 %v4276
        %v4304 = vpop.f32.mrf.mxu0
        %v4305 = vadd.f32 0.0, %v4304
        %4306 = vmatmul.f32.gmra.mxu0 %v4279
        %v4307 = vpop.f32.mrf.mxu0
        %v4308 = vadd.f32 0.0, %v4307
        %4309 = vdwg.mxu0
        %v4310 = vadd.f32 %v4241, %v4299
        %v4311 = vadd.f32 %v4244, %v4302
        %v4312 = vadd.f32 %v4247, %v4305
        %v4313 = vadd.f32 %v4250, %v4308
        %s4314 = scalar_lea.vmem %s23, 96
        %v4315 = vld [vmem:[%s4314] sm:$0xff]
        %v4316 = vld [vmem:[%s4314 + $0x8] sm:$0xff]
        %v4317 = vld [vmem:[%s4314 + $0x10] sm:$0xff]
        %v4318 = vld [vmem:[%s4314 + $0x18] sm:$0xff]
        %4319 = vrot.lane.b32.xlu0 %v4140, 122
        %v4320 = vpop.permute.xlu0 %4319
        %4321 = vrot.lane.b32.xlu0 %v4141, 122
        %v4322 = vpop.permute.xlu0 %4321
        %4323 = vrot.lane.b32.xlu0 %v4142, 122
        %v4324 = vpop.permute.xlu0 %4323
        %4325 = vrot.lane.b32.xlu0 %v4143, 122
        %v4326 = vpop.permute.xlu0 %4325
        %v4332 = vsel %vm4169, %v4315, 0
        %v4335 = vsel %vm4169, %v4316, 0
        %v4338 = vsel %vm4169, %v4317, 0
        %v4341 = vsel %vm4169, %v4318, 0
        %4343 = vmatpush.msra.mxu0 0.0
        %4344 = vmatpush.msra.mxu0 0.0
        %4345 = vmatpush.msra.mxu0 0.0
        %4346 = vmatpush.msra.mxu0 0.0
        %4347 = vmatpush.msra.mxu0 0.0
        %4348 = vmatpush.msra.mxu0 0.0
        %4349 = vmatpush.msra.mxu0 0.0
        %4350 = vmatpush.msra.mxu0 0.0
        %4351 = vmatpush.msra.mxu0 0.0
        %4352 = vmatpush.msra.mxu0 0.0
        %4353 = vmatpush.msra.mxu0 0.0
        %4354 = vmatpush.msra.mxu0 0.0
        %4355 = vmatpush.msra.mxu0 %v4326
        %4356 = vmatpush.msra.mxu0 %v4324
        %4357 = vmatpush.msra.mxu0 %v4322
        %4358 = vmatpush.msra.mxu0 %v4320
        %4359 = vmatmul.f32.gmra.mxu0 %v4332
        %v4360 = vpop.f32.mrf.mxu0
        %v4361 = vadd.f32 0.0, %v4360
        %4362 = vmatmul.f32.gmra.mxu0 %v4335
        %v4363 = vpop.f32.mrf.mxu0
        %v4364 = vadd.f32 0.0, %v4363
        %4365 = vmatmul.f32.gmra.mxu0 %v4338
        %v4366 = vpop.f32.mrf.mxu0
        %v4367 = vadd.f32 0.0, %v4366
        %4368 = vmatmul.f32.gmra.mxu0 %v4341
        %v4369 = vpop.f32.mrf.mxu0
        %v4370 = vadd.f32 0.0, %v4369
        %4371 = vdwg.mxu0
        %v4372 = vadd.f32 %v4310, %v4361
        %v4373 = vadd.f32 %v4311, %v4364
        %v4374 = vadd.f32 %v4312, %v4367
        %v4375 = vadd.f32 %v4313, %v4370
        %s4376 = scalar_lea.vmem %s23, 128
        %v4377 = vld [vmem:[%s4376] sm:$0xff]
        %v4378 = vld [vmem:[%s4376 + $0x8] sm:$0xff]
        %v4379 = vld [vmem:[%s4376 + $0x10] sm:$0xff]
        %v4380 = vld [vmem:[%s4376 + $0x18] sm:$0xff]
        %4381 = vrot.lane.b32.xlu0 %v4140, 121
        %v4382 = vpop.permute.xlu0 %4381
        %4383 = vrot.lane.b32.xlu0 %v4141, 121
        %v4384 = vpop.permute.xlu0 %4383
        %4385 = vrot.lane.b32.xlu0 %v4142, 121
        %v4386 = vpop.permute.xlu0 %4385
        %4387 = vrot.lane.b32.xlu0 %v4143, 121
        %v4388 = vpop.permute.xlu0 %4387
        %v4394 = vsel %vm4169, %v4377, 0
        %v4397 = vsel %vm4169, %v4378, 0
        %v4400 = vsel %vm4169, %v4379, 0
        %v4403 = vsel %vm4169, %v4380, 0
        %4405 = vmatpush.msra.mxu0 0.0
        %4406 = vmatpush.msra.mxu0 0.0
        %4407 = vmatpush.msra.mxu0 0.0
        %4408 = vmatpush.msra.mxu0 0.0
        %4409 = vmatpush.msra.mxu0 0.0
        %4410 = vmatpush.msra.mxu0 0.0
        %4411 = vmatpush.msra.mxu0 0.0
        %4412 = vmatpush.msra.mxu0 0.0
        %4413 = vmatpush.msra.mxu0 0.0
        %4414 = vmatpush.msra.mxu0 0.0
        %4415 = vmatpush.msra.mxu0 0.0
        %4416 = vmatpush.msra.mxu0 0.0
        %4417 = vmatpush.msra.mxu0 %v4388
        %4418 = vmatpush.msra.mxu0 %v4386
        %4419 = vmatpush.msra.mxu0 %v4384
        %4420 = vmatpush.msra.mxu0 %v4382
        %4421 = vmatmul.f32.gmra.mxu0 %v4394
        %v4422 = vpop.f32.mrf.mxu0
        %v4423 = vadd.f32 0.0, %v4422
        %4424 = vmatmul.f32.gmra.mxu0 %v4397
        %v4425 = vpop.f32.mrf.mxu0
        %v4426 = vadd.f32 0.0, %v4425
        %4427 = vmatmul.f32.gmra.mxu0 %v4400
        %v4428 = vpop.f32.mrf.mxu0
        %v4429 = vadd.f32 0.0, %v4428
        %4430 = vmatmul.f32.gmra.mxu0 %v4403
        %v4431 = vpop.f32.mrf.mxu0
        %v4432 = vadd.f32 0.0, %v4431
        %4433 = vdwg.mxu0
        %v4434 = vadd.f32 %v4372, %v4423
        %v4435 = vadd.f32 %v4373, %v4426
        %v4436 = vadd.f32 %v4374, %v4429
        %v4437 = vadd.f32 %v4375, %v4432
        %s4438 = scalar_lea.vmem %s23, 160
        %v4439 = vld [vmem:[%s4438] sm:$0xff]
        %v4440 = vld [vmem:[%s4438 + $0x8] sm:$0xff]
        %v4441 = vld [vmem:[%s4438 + $0x10] sm:$0xff]
        %v4442 = vld [vmem:[%s4438 + $0x18] sm:$0xff]
        %4443 = vrot.lane.b32.xlu0 %v4140, 120
        %v4444 = vpop.permute.xlu0 %4443
        %4445 = vrot.lane.b32.xlu0 %v4141, 120
        %v4446 = vpop.permute.xlu0 %4445
        %4447 = vrot.lane.b32.xlu0 %v4142, 120
        %v4448 = vpop.permute.xlu0 %4447
        %4449 = vrot.lane.b32.xlu0 %v4143, 120
        %v4450 = vpop.permute.xlu0 %4449
        %v4456 = vsel %vm4169, %v4439, 0
        %v4459 = vsel %vm4169, %v4440, 0
        %v4462 = vsel %vm4169, %v4441, 0
        %v4465 = vsel %vm4169, %v4442, 0
        %4467 = vmatpush.msra.mxu0 0.0
        %4468 = vmatpush.msra.mxu0 0.0
        %4469 = vmatpush.msra.mxu0 0.0
        %4470 = vmatpush.msra.mxu0 0.0
        %4471 = vmatpush.msra.mxu0 0.0
        %4472 = vmatpush.msra.mxu0 0.0
        %4473 = vmatpush.msra.mxu0 0.0
        %4474 = vmatpush.msra.mxu0 0.0
        %4475 = vmatpush.msra.mxu0 0.0
        %4476 = vmatpush.msra.mxu0 0.0
        %4477 = vmatpush.msra.mxu0 0.0
        %4478 = vmatpush.msra.mxu0 0.0
        %4479 = vmatpush.msra.mxu0 %v4450
        %4480 = vmatpush.msra.mxu0 %v4448
        %4481 = vmatpush.msra.mxu0 %v4446
        %4482 = vmatpush.msra.mxu0 %v4444
        %4483 = vmatmul.f32.gmra.mxu0 %v4456
        %v4484 = vpop.f32.mrf.mxu0
        %v4485 = vadd.f32 0.0, %v4484
        %4486 = vmatmul.f32.gmra.mxu0 %v4459
        %v4487 = vpop.f32.mrf.mxu0
        %v4488 = vadd.f32 0.0, %v4487
        %4489 = vmatmul.f32.gmra.mxu0 %v4462
        %v4490 = vpop.f32.mrf.mxu0
        %v4491 = vadd.f32 0.0, %v4490
        %4492 = vmatmul.f32.gmra.mxu0 %v4465
        %v4493 = vpop.f32.mrf.mxu0
        %v4494 = vadd.f32 0.0, %v4493
        %4495 = vdwg.mxu0
        %v4496 = vadd.f32 %v4434, %v4485
        %v4497 = vadd.f32 %v4435, %v4488
        %v4498 = vadd.f32 %v4436, %v4491
        %v4499 = vadd.f32 %v4437, %v4494
        %s4500 = scalar_lea.vmem %s23, 192
        %v4501 = vld [vmem:[%s4500] sm:$0xff]
        %v4502 = vld [vmem:[%s4500 + $0x8] sm:$0xff]
        %v4503 = vld [vmem:[%s4500 + $0x10] sm:$0xff]
        %v4504 = vld [vmem:[%s4500 + $0x18] sm:$0xff]
        %4505 = vrot.lane.b32.xlu0 %v4140, 116
        %v4506 = vpop.permute.xlu0 %4505
        %4507 = vrot.lane.b32.xlu0 %v4141, 116
        %v4508 = vpop.permute.xlu0 %4507
        %4509 = vrot.lane.b32.xlu0 %v4142, 116
        %v4510 = vpop.permute.xlu0 %4509
        %4511 = vrot.lane.b32.xlu0 %v4143, 116
        %v4512 = vpop.permute.xlu0 %4511
        %v4518 = vsel %vm4169, %v4501, 0
        %v4521 = vsel %vm4169, %v4502, 0
        %v4524 = vsel %vm4169, %v4503, 0
        %v4527 = vsel %vm4169, %v4504, 0
        %4529 = vmatpush.msra.mxu0 0.0
        %4530 = vmatpush.msra.mxu0 0.0
        %4531 = vmatpush.msra.mxu0 0.0
        %4532 = vmatpush.msra.mxu0 0.0
        %4533 = vmatpush.msra.mxu0 0.0
        %4534 = vmatpush.msra.mxu0 0.0
        %4535 = vmatpush.msra.mxu0 0.0
        %4536 = vmatpush.msra.mxu0 0.0
        %4537 = vmatpush.msra.mxu0 0.0
        %4538 = vmatpush.msra.mxu0 0.0
        %4539 = vmatpush.msra.mxu0 0.0
        %4540 = vmatpush.msra.mxu0 0.0
        %4541 = vmatpush.msra.mxu0 %v4512
        %4542 = vmatpush.msra.mxu0 %v4510
        %4543 = vmatpush.msra.mxu0 %v4508
        %4544 = vmatpush.msra.mxu0 %v4506
        %4545 = vmatmul.f32.gmra.mxu0 %v4518
        %v4546 = vpop.f32.mrf.mxu0
        %v4547 = vadd.f32 0.0, %v4546
        %4548 = vmatmul.f32.gmra.mxu0 %v4521
        %v4549 = vpop.f32.mrf.mxu0
        %v4550 = vadd.f32 0.0, %v4549
        %4551 = vmatmul.f32.gmra.mxu0 %v4524
        %v4552 = vpop.f32.mrf.mxu0
        %v4553 = vadd.f32 0.0, %v4552
        %4554 = vmatmul.f32.gmra.mxu0 %v4527
        %v4555 = vpop.f32.mrf.mxu0
        %v4556 = vadd.f32 0.0, %v4555
        %4557 = vdwg.mxu0
        %v4558 = vadd.f32 %v4496, %v4547
        %v4559 = vadd.f32 %v4497, %v4550
        %v4560 = vadd.f32 %v4498, %v4553
        %v4561 = vadd.f32 %v4499, %v4556
        %s4562 = scalar_lea.vmem %s23, 224
        %v4563 = vld [vmem:[%s4562] sm:$0xff]
        %v4564 = vld [vmem:[%s4562 + $0x8] sm:$0xff]
        %v4565 = vld [vmem:[%s4562 + $0x10] sm:$0xff]
        %v4566 = vld [vmem:[%s4562 + $0x18] sm:$0xff]
        %4567 = vrot.lane.b32.xlu0 %v4140, 115
        %v4568 = vpop.permute.xlu0 %4567
        %4569 = vrot.lane.b32.xlu0 %v4141, 115
        %v4570 = vpop.permute.xlu0 %4569
        %4571 = vrot.lane.b32.xlu0 %v4142, 115
        %v4572 = vpop.permute.xlu0 %4571
        %4573 = vrot.lane.b32.xlu0 %v4143, 115
        %v4574 = vpop.permute.xlu0 %4573
        %v4580 = vsel %vm4169, %v4563, 0
        %v4583 = vsel %vm4169, %v4564, 0
        %v4586 = vsel %vm4169, %v4565, 0
        %v4589 = vsel %vm4169, %v4566, 0
        %4591 = vmatpush.msra.mxu0 0.0
        %4592 = vmatpush.msra.mxu0 0.0
        %4593 = vmatpush.msra.mxu0 0.0
        %4594 = vmatpush.msra.mxu0 0.0
        %4595 = vmatpush.msra.mxu0 0.0
        %4596 = vmatpush.msra.mxu0 0.0
        %4597 = vmatpush.msra.mxu0 0.0
        %4598 = vmatpush.msra.mxu0 0.0
        %4599 = vmatpush.msra.mxu0 0.0
        %4600 = vmatpush.msra.mxu0 0.0
        %4601 = vmatpush.msra.mxu0 0.0
        %4602 = vmatpush.msra.mxu0 0.0
        %4603 = vmatpush.msra.mxu0 %v4574
        %4604 = vmatpush.msra.mxu0 %v4572
        %4605 = vmatpush.msra.mxu0 %v4570
        %4606 = vmatpush.msra.mxu0 %v4568
        %4607 = vmatmul.f32.gmra.mxu0 %v4580
        %v4608 = vpop.f32.mrf.mxu0
        %v4609 = vadd.f32 0.0, %v4608
        %4610 = vmatmul.f32.gmra.mxu0 %v4583
        %v4611 = vpop.f32.mrf.mxu0
        %v4612 = vadd.f32 0.0, %v4611
        %4613 = vmatmul.f32.gmra.mxu0 %v4586
        %v4614 = vpop.f32.mrf.mxu0
        %v4615 = vadd.f32 0.0, %v4614
        %4616 = vmatmul.f32.gmra.mxu0 %v4589
        %v4617 = vpop.f32.mrf.mxu0
        %v4618 = vadd.f32 0.0, %v4617
        %4619 = vdwg.mxu0
        %v4620 = vadd.f32 %v4558, %v4609
        %v4621 = vadd.f32 %v4559, %v4612
        %v4622 = vadd.f32 %v4560, %v4615
        %v4623 = vadd.f32 %v4561, %v4618
        %s4624 = scalar_lea.vmem %s23, 256
        %v4625 = vld [vmem:[%s4624] sm:$0xff]
        %v4626 = vld [vmem:[%s4624 + $0x8] sm:$0xff]
        %v4627 = vld [vmem:[%s4624 + $0x10] sm:$0xff]
        %v4628 = vld [vmem:[%s4624 + $0x18] sm:$0xff]
        %4629 = vrot.lane.b32.xlu0 %v4140, 114
        %v4630 = vpop.permute.xlu0 %4629
        %4631 = vrot.lane.b32.xlu0 %v4141, 114
        %v4632 = vpop.permute.xlu0 %4631
        %4633 = vrot.lane.b32.xlu0 %v4142, 114
        %v4634 = vpop.permute.xlu0 %4633
        %4635 = vrot.lane.b32.xlu0 %v4143, 114
        %v4636 = vpop.permute.xlu0 %4635
        %v4642 = vsel %vm4169, %v4625, 0
        %v4645 = vsel %vm4169, %v4626, 0
        %v4648 = vsel %vm4169, %v4627, 0
        %v4651 = vsel %vm4169, %v4628, 0
        %4653 = vmatpush.msra.mxu0 0.0
        %4654 = vmatpush.msra.mxu0 0.0
        %4655 = vmatpush.msra.mxu0 0.0
        %4656 = vmatpush.msra.mxu0 0.0
        %4657 = vmatpush.msra.mxu0 0.0
        %4658 = vmatpush.msra.mxu0 0.0
        %4659 = vmatpush.msra.mxu0 0.0
        %4660 = vmatpush.msra.mxu0 0.0
        %4661 = vmatpush.msra.mxu0 0.0
        %4662 = vmatpush.msra.mxu0 0.0
        %4663 = vmatpush.msra.mxu0 0.0
        %4664 = vmatpush.msra.mxu0 0.0
        %4665 = vmatpush.msra.mxu0 %v4636
        %4666 = vmatpush.msra.mxu0 %v4634
        %4667 = vmatpush.msra.mxu0 %v4632
        %4668 = vmatpush.msra.mxu0 %v4630
        %4669 = vmatmul.f32.gmra.mxu0 %v4642
        %v4670 = vpop.f32.mrf.mxu0
        %v4671 = vadd.f32 0.0, %v4670
        %4672 = vmatmul.f32.gmra.mxu0 %v4645
        %v4673 = vpop.f32.mrf.mxu0
        %v4674 = vadd.f32 0.0, %v4673
        %4675 = vmatmul.f32.gmra.mxu0 %v4648
        %v4676 = vpop.f32.mrf.mxu0
        %v4677 = vadd.f32 0.0, %v4676
        %4678 = vmatmul.f32.gmra.mxu0 %v4651
        %v4679 = vpop.f32.mrf.mxu0
        %v4680 = vadd.f32 0.0, %v4679
        %4681 = vdwg.mxu0
        %v4682 = vadd.f32 %v4620, %v4671
        %v4683 = vadd.f32 %v4621, %v4674
        %v4684 = vadd.f32 %v4622, %v4677
        %v4685 = vadd.f32 %v4623, %v4680
        %v4686 = vld [vmem:[%s25] sm:$0xff]
        %v4687 = vld [vmem:[%s25 + $0x8] sm:$0xff]
        %v4688 = vld [vmem:[%s25 + $0x10] sm:$0xff]
        %v4689 = vld [vmem:[%s25 + $0x18] sm:$0xff]
        %4691 = vset.pattern.permute.xlu0 0
        %4692 = vperm.xlu0 %4691, %v4686
        %v4693 = vpop.permute.xlu0 %4692
        %4696 = vset.pattern.permute.xlu0 0
        %4697 = vperm.xlu0 %4696, %v4687
        %v4698 = vpop.permute.xlu0 %4697
        %4701 = vset.pattern.permute.xlu0 0
        %4702 = vperm.xlu0 %4701, %v4688
        %v4703 = vpop.permute.xlu0 %4702
        %4706 = vset.pattern.permute.xlu0 0
        %4707 = vperm.xlu0 %4706, %v4689
        %v4708 = vpop.permute.xlu0 %4707
        %v4710 = vadd.f32 %v4682, %v4693
        %v4711 = vadd.f32 %v4683, %v4698
        %v4712 = vadd.f32 %v4684, %v4703
        %v4713 = vadd.f32 %v4685, %v4708
        %v4714 = vmax.f32 %v4710, 0.0
        %v4715 = vmax.f32 %v4711, 0.0
        %v4716 = vmax.f32 %v4712, 0.0
        %v4717 = vmax.f32 %v4713, 0.0
        %v4718 = vld [vmem:[%s67] sm:$0x1]
        %v4720 = vperm.slane %v4718, 0
        %v4722 = vmul.f32 %v4714, %v4720
        %v4723 = vmul.f32 %v4715, %v4720
        %v4724 = vmul.f32 %v4716, %v4720
        %v4725 = vmul.f32 %v4717, %v4720
        %v4726 = vld [vmem:[%s27] sm:$0xff]
        %v4727 = vld [vmem:[%s27 + $0x8] sm:$0xff]
        %v4728 = vld [vmem:[%s27 + $0x10] sm:$0xff]
        %v4729 = vld [vmem:[%s27 + $0x18] sm:$0xff]
        %v4730 = vld [vmem:[%s27 + $0x20] sm:$0xff]
        %v4731 = vld [vmem:[%s27 + $0x28] sm:$0xff]
        %v4732 = vld [vmem:[%s27 + $0x30] sm:$0xff]
        %v4733 = vld [vmem:[%s27 + $0x38] sm:$0xff]
        %v4735 = vsel %vm4169, %v4726, 0
        %v4738 = vsel %vm4169, %v4727, 0
        %v4741 = vsel %vm4169, %v4728, 0
        %v4744 = vsel %vm4169, %v4729, 0
        %v4747 = vsel %vm4169, %v4730, 0
        %v4750 = vsel %vm4169, %v4731, 0
        %v4753 = vsel %vm4169, %v4732, 0
        %v4756 = vsel %vm4169, %v4733, 0
        %4758 = vmatpush.msra.mxu0 0.0
        %4759 = vmatpush.msra.mxu0 0.0
        %4760 = vmatpush.msra.mxu0 0.0
        %4761 = vmatpush.msra.mxu0 0.0
        %4762 = vmatpush.msra.mxu0 0.0
        %4763 = vmatpush.msra.mxu0 0.0
        %4764 = vmatpush.msra.mxu0 0.0
        %4765 = vmatpush.msra.mxu0 0.0
        %4766 = vmatpush.msra.mxu0 0.0
        %4767 = vmatpush.msra.mxu0 0.0
        %4768 = vmatpush.msra.mxu0 0.0
        %4769 = vmatpush.msra.mxu0 0.0
        %4770 = vmatpush.msra.mxu0 %v4725
        %4771 = vmatpush.msra.mxu0 %v4724
        %4772 = vmatpush.msra.mxu0 %v4723
        %4773 = vmatpush.msra.mxu0 %v4722
        %4774 = vmatmul.f32.gmra.mxu0 %v4735
        %v4775 = vpop.f32.mrf.mxu0
        %v4776 = vadd.f32 0.0, %v4775
        %4777 = vmatmul.f32.gmra.mxu0 %v4738
        %v4778 = vpop.f32.mrf.mxu0
        %v4779 = vadd.f32 0.0, %v4778
        %4780 = vmatmul.f32.gmra.mxu0 %v4741
        %v4781 = vpop.f32.mrf.mxu0
        %v4782 = vadd.f32 0.0, %v4781
        %4783 = vmatmul.f32.gmra.mxu0 %v4744
        %v4784 = vpop.f32.mrf.mxu0
        %v4785 = vadd.f32 0.0, %v4784
        %4786 = vmatmul.f32.gmra.mxu0 %v4747
        %v4787 = vpop.f32.mrf.mxu0
        %v4788 = vadd.f32 0.0, %v4787
        %4789 = vmatmul.f32.gmra.mxu0 %v4750
        %v4790 = vpop.f32.mrf.mxu0
        %v4791 = vadd.f32 0.0, %v4790
        %4792 = vmatmul.f32.gmra.mxu0 %v4753
        %v4793 = vpop.f32.mrf.mxu0
        %v4794 = vadd.f32 0.0, %v4793
        %4795 = vmatmul.f32.gmra.mxu0 %v4756
        %v4796 = vpop.f32.mrf.mxu0
        %v4797 = vadd.f32 0.0, %v4796
        %4798 = vdwg.mxu0
        %v4799 = vld [vmem:[%s31] sm:$0xff]
        %v4800 = vld [vmem:[%s31 + $0x8] sm:$0xff]
        %v4801 = vld [vmem:[%s31 + $0x10] sm:$0xff]
        %v4802 = vld [vmem:[%s31 + $0x18] sm:$0xff]
        %v4803 = vld [vmem:[%s31 + $0x20] sm:$0xf]
        %s4804 = scalar_lea.vmem %s31, 40
        %v4805 = vld [vmem:[%s4804] sm:$0xff]
        %v4806 = vld [vmem:[%s4804 + $0x8] sm:$0xff]
        %v4807 = vld [vmem:[%s4804 + $0x10] sm:$0xff]
        %v4808 = vld [vmem:[%s4804 + $0x18] sm:$0xff]
        %v4809 = vld [vmem:[%s4804 + $0x20] sm:$0xf]
        %vm4810 = vcmask 293888
        %v4812 = vsel %vm4810, %v4782, 0
        %v4815 = vsel %vm4810, %v4785, 0
        %v4818 = vsel %vm2689, %v4809, 0
        %4820 = vmatpush.msra.mxu0 0.0
        %4821 = vmatpush.msra.mxu0 0.0
        %4822 = vmatpush.msra.mxu0 0.0
        %4823 = vmatpush.msra.mxu0 0.0
        %4824 = vmatpush.msra.mxu0 0.0
        %4825 = vmatpush.msra.mxu0 0.0
        %4826 = vmatpush.msra.mxu0 0.0
        %4827 = vmatpush.msra.mxu0 0.0
        %4828 = vmatpush.msra.mxu0 0.0
        %4829 = vmatpush.msra.mxu0 0.0
        %4830 = vmatpush.msra.mxu0 0.0
        %4831 = vmatpush.msra.mxu0 %v4818
        %4832 = vmatpush.msra.mxu0 %v4808
        %4833 = vmatpush.msra.mxu0 %v4807
        %4834 = vmatpush.msra.mxu0 %v4806
        %4835 = vmatpush.msra.mxu0 %v4805
        %4836 = vmatmul.f32.gmra.mxu0 %v4812
        %v4837 = vpop.f32.mrf.mxu0
        %v4838 = vadd.f32 0.0, %v4837
        %4839 = vmatmul.f32.gmra.mxu0 %v4815
        %v4840 = vpop.f32.mrf.mxu0
        %v4841 = vadd.f32 0.0, %v4840
        %4842 = vdwg.mxu0
        %v4844 = vsel %vm4810, %v4776, 0
        %v4847 = vsel %vm4810, %v4779, 0
        %v4850 = vsel %vm2689, %v4803, 0
        %4852 = vmatpush.msra.mxu0 0.0
        %4853 = vmatpush.msra.mxu0 0.0
        %4854 = vmatpush.msra.mxu0 0.0
        %4855 = vmatpush.msra.mxu0 0.0
        %4856 = vmatpush.msra.mxu0 0.0
        %4857 = vmatpush.msra.mxu0 0.0
        %4858 = vmatpush.msra.mxu0 0.0
        %4859 = vmatpush.msra.mxu0 0.0
        %4860 = vmatpush.msra.mxu0 0.0
        %4861 = vmatpush.msra.mxu0 0.0
        %4862 = vmatpush.msra.mxu0 0.0
        %4863 = vmatpush.msra.mxu0 %v4850
        %4864 = vmatpush.msra.mxu0 %v4802
        %4865 = vmatpush.msra.mxu0 %v4801
        %4866 = vmatpush.msra.mxu0 %v4800
        %4867 = vmatpush.msra.mxu0 %v4799
        %4868 = vmatmul.f32.gmra.mxu0 %v4844
        %v4869 = vpop.f32.mrf.mxu0
        %v4870 = vadd.f32 %v4838, %v4869
        %4871 = vmatmul.f32.gmra.mxu0 %v4847
        %v4872 = vpop.f32.mrf.mxu0
        %v4873 = vadd.f32 %v4841, %v4872
        %4874 = vdwg.mxu0
        %s4875 = scalar_lea.vmem %s31, 80
        %v4876 = vld [vmem:[%s4875] sm:$0xff]
        %v4877 = vld [vmem:[%s4875 + $0x8] sm:$0xff]
        %v4878 = vld [vmem:[%s4875 + $0x10] sm:$0xff]
        %v4879 = vld [vmem:[%s4875 + $0x18] sm:$0xff]
        %v4880 = vld [vmem:[%s4875 + $0x20] sm:$0xf]
        %v4882 = vsel %vm4810, %v4788, 0
        %v4885 = vsel %vm4810, %v4791, 0
        %v4888 = vsel %vm2689, %v4880, 0
        %4890 = vmatpush.msra.mxu0 0.0
        %4891 = vmatpush.msra.mxu0 0.0
        %4892 = vmatpush.msra.mxu0 0.0
        %4893 = vmatpush.msra.mxu0 0.0
        %4894 = vmatpush.msra.mxu0 0.0
        %4895 = vmatpush.msra.mxu0 0.0
        %4896 = vmatpush.msra.mxu0 0.0
        %4897 = vmatpush.msra.mxu0 0.0
        %4898 = vmatpush.msra.mxu0 0.0
        %4899 = vmatpush.msra.mxu0 0.0
        %4900 = vmatpush.msra.mxu0 0.0
        %4901 = vmatpush.msra.mxu0 %v4888
        %4902 = vmatpush.msra.mxu0 %v4879
        %4903 = vmatpush.msra.mxu0 %v4878
        %4904 = vmatpush.msra.mxu0 %v4877
        %4905 = vmatpush.msra.mxu0 %v4876
        %4906 = vmatmul.f32.gmra.mxu0 %v4882
        %v4907 = vpop.f32.mrf.mxu0
        %v4908 = vadd.f32 0.0, %v4907
        %4909 = vmatmul.f32.gmra.mxu0 %v4885
        %v4910 = vpop.f32.mrf.mxu0
        %v4911 = vadd.f32 0.0, %v4910
        %4912 = vdwg.mxu0
        %v4913 = vadd.f32 %v4870, %v4908
        %v4914 = vadd.f32 %v4873, %v4911
        %s4915 = scalar_lea.vmem %s31, 120
        %v4916 = vld [vmem:[%s4915] sm:$0xff]
        %v4917 = vld [vmem:[%s4915 + $0x8] sm:$0xff]
        %v4918 = vld [vmem:[%s4915 + $0x10] sm:$0xff]
        %v4919 = vld [vmem:[%s4915 + $0x18] sm:$0xff]
        %v4920 = vld [vmem:[%s4915 + $0x20] sm:$0xf]
        %v4922 = vsel %vm4810, %v4794, 0
        %v4925 = vsel %vm4810, %v4797, 0
        %v4928 = vsel %vm2689, %v4920, 0
        %4930 = vmatpush.msra.mxu0 0.0
        %4931 = vmatpush.msra.mxu0 0.0
        %4932 = vmatpush.msra.mxu0 0.0
        %4933 = vmatpush.msra.mxu0 0.0
        %4934 = vmatpush.msra.mxu0 0.0
        %4935 = vmatpush.msra.mxu0 0.0
        %4936 = vmatpush.msra.mxu0 0.0
        %4937 = vmatpush.msra.mxu0 0.0
        %4938 = vmatpush.msra.mxu0 0.0
        %4939 = vmatpush.msra.mxu0 0.0
        %4940 = vmatpush.msra.mxu0 0.0
        %4941 = vmatpush.msra.mxu0 %v4928
        %4942 = vmatpush.msra.mxu0 %v4919
        %4943 = vmatpush.msra.mxu0 %v4918
        %4944 = vmatpush.msra.mxu0 %v4917
        %4945 = vmatpush.msra.mxu0 %v4916
        %4946 = vmatmul.f32.gmra.mxu0 %v4922
        %v4947 = vpop.f32.mrf.mxu0
        %v4948 = vadd.f32 0.0, %v4947
        %4949 = vmatmul.f32.gmra.mxu0 %v4925
        %v4950 = vpop.f32.mrf.mxu0
        %v4951 = vadd.f32 0.0, %v4950
        %4952 = vdwg.mxu0
        %v4953 = vadd.f32 %v4913, %v4948
        %v4954 = vadd.f32 %v4914, %v4951
        %v4955 = vld [vmem:[%s29] sm:$0xff]
        %v4956 = vld [vmem:[%s29 + $0x8] sm:$0xff]
        %4958 = vset.pattern.permute.xlu0 0
        %4959 = vperm.xlu0 %4958, %v4955
        %v4960 = vpop.permute.xlu0 %4959
        %4963 = vset.pattern.permute.xlu0 0
        %4964 = vperm.xlu0 %4963, %v4956
        %v4965 = vpop.permute.xlu0 %4964
        %v4967 = vadd.f32 %v4953, %v4960
        %v4968 = vadd.f32 %v4954, %v4965
        %v4969 = vld [vmem:[%s65] sm:$0x1]
        %v4971 = vperm.slane %v4969, 0
        %v4973 = vmul.f32 %v4967, %v4971
        %v4974 = vmul.f32 %v4968, %v4971
        %4977 = vrot.lane.b32.xlu0 %v4973, 11
        %v4978 = vpop.permute.xlu0 %4977
        %4979 = vrot.lane.b32.xlu0 %v4974, 11
        %v4980 = vpop.permute.xlu0 %4979
        %4983 = vst.msk [vmem:[#allocation3] sm:$0xff] %vm2757, %v4978
        %4984 = vst.msk [vmem:[#allocation3 + $0x8] sm:$0xff] %vm2757, %v4980
        %v4985 = vld [vmem:[#allocation3] sm:$0xff]
        %v4986 = vld [vmem:[#allocation3 + $0x8] sm:$0xff]
        %v4987 = vld [vmem:[#allocation3 + $0x10] sm:$0xff]
        %v4988 = vld [vmem:[#allocation3 + $0x18] sm:$0xff]
        %v4989 = vld [vmem:[%s33] sm:$0xff]
        %v4990 = vld [vmem:[%s33 + $0x8] sm:$0xff]
        %s4991 = scalar_lea.vmem %s33, 16
        %v4992 = vld [vmem:[%s4991] sm:$0xff]
        %v4993 = vld [vmem:[%s4991 + $0x8] sm:$0xff]
        %4998 = vrot.lane.b32.xlu0 %v4985, 127
        %v4999 = vpop.permute.xlu0 %4998
        %5000 = vrot.lane.b32.xlu0 %v4986, 127
        %v5001 = vpop.permute.xlu0 %5000
        %5002 = vrot.lane.b32.xlu0 %v4987, 127
        %v5003 = vpop.permute.xlu0 %5002
        %5004 = vrot.lane.b32.xlu0 %v4988, 127
        %v5005 = vpop.permute.xlu0 %5004
        %v5011 = vsel %vm4169, %v4992, 0
        %v5014 = vsel %vm4169, %v4993, 0
        %5016 = vmatpush.msra.mxu0 0.0
        %5017 = vmatpush.msra.mxu0 0.0
        %5018 = vmatpush.msra.mxu0 0.0
        %5019 = vmatpush.msra.mxu0 0.0
        %5020 = vmatpush.msra.mxu0 0.0
        %5021 = vmatpush.msra.mxu0 0.0
        %5022 = vmatpush.msra.mxu0 0.0
        %5023 = vmatpush.msra.mxu0 0.0
        %5024 = vmatpush.msra.mxu0 0.0
        %5025 = vmatpush.msra.mxu0 0.0
        %5026 = vmatpush.msra.mxu0 0.0
        %5027 = vmatpush.msra.mxu0 0.0
        %5028 = vmatpush.msra.mxu0 %v5005
        %5029 = vmatpush.msra.mxu0 %v5003
        %5030 = vmatpush.msra.mxu0 %v5001
        %5031 = vmatpush.msra.mxu0 %v4999
        %5032 = vmatmul.f32.gmra.mxu0 %v5011
        %v5033 = vpop.f32.mrf.mxu0
        %v5034 = vadd.f32 0.0, %v5033
        %5035 = vmatmul.f32.gmra.mxu0 %v5014
        %v5036 = vpop.f32.mrf.mxu0
        %v5037 = vadd.f32 0.0, %v5036
        %5038 = vdwg.mxu0
        %v5040 = vsel %vm4169, %v4989, 0
        %v5043 = vsel %vm4169, %v4990, 0
        %5045 = vmatpush.msra.mxu0 0.0
        %5046 = vmatpush.msra.mxu0 0.0
        %5047 = vmatpush.msra.mxu0 0.0
        %5048 = vmatpush.msra.mxu0 0.0
        %5049 = vmatpush.msra.mxu0 0.0
        %5050 = vmatpush.msra.mxu0 0.0
        %5051 = vmatpush.msra.mxu0 0.0
        %5052 = vmatpush.msra.mxu0 0.0
        %5053 = vmatpush.msra.mxu0 0.0
        %5054 = vmatpush.msra.mxu0 0.0
        %5055 = vmatpush.msra.mxu0 0.0
        %5056 = vmatpush.msra.mxu0 0.0
        %5057 = vmatpush.msra.mxu0 %v4988
        %5058 = vmatpush.msra.mxu0 %v4987
        %5059 = vmatpush.msra.mxu0 %v4986
        %5060 = vmatpush.msra.mxu0 %v4985
        %5061 = vmatmul.f32.gmra.mxu0 %v5040
        %v5062 = vpop.f32.mrf.mxu0
        %v5063 = vadd.f32 %v5034, %v5062
        %5064 = vmatmul.f32.gmra.mxu0 %v5043
        %v5065 = vpop.f32.mrf.mxu0
        %v5066 = vadd.f32 %v5037, %v5065
        %5067 = vdwg.mxu0
        %s5068 = scalar_lea.vmem %s33, 32
        %v5069 = vld [vmem:[%s5068] sm:$0xff]
        %v5070 = vld [vmem:[%s5068 + $0x8] sm:$0xff]
        %5071 = vrot.lane.b32.xlu0 %v4985, 126
        %v5072 = vpop.permute.xlu0 %5071
        %5073 = vrot.lane.b32.xlu0 %v4986, 126
        %v5074 = vpop.permute.xlu0 %5073
        %5075 = vrot.lane.b32.xlu0 %v4987, 126
        %v5076 = vpop.permute.xlu0 %5075
        %5077 = vrot.lane.b32.xlu0 %v4988, 126
        %v5078 = vpop.permute.xlu0 %5077
        %v5084 = vsel %vm4169, %v5069, 0
        %v5087 = vsel %vm4169, %v5070, 0
        %5089 = vmatpush.msra.mxu0 0.0
        %5090 = vmatpush.msra.mxu0 0.0
        %5091 = vmatpush.msra.mxu0 0.0
        %5092 = vmatpush.msra.mxu0 0.0
        %5093 = vmatpush.msra.mxu0 0.0
        %5094 = vmatpush.msra.mxu0 0.0
        %5095 = vmatpush.msra.mxu0 0.0
        %5096 = vmatpush.msra.mxu0 0.0
        %5097 = vmatpush.msra.mxu0 0.0
        %5098 = vmatpush.msra.mxu0 0.0
        %5099 = vmatpush.msra.mxu0 0.0
        %5100 = vmatpush.msra.mxu0 0.0
        %5101 = vmatpush.msra.mxu0 %v5078
        %5102 = vmatpush.msra.mxu0 %v5076
        %5103 = vmatpush.msra.mxu0 %v5074
        %5104 = vmatpush.msra.mxu0 %v5072
        %5105 = vmatmul.f32.gmra.mxu0 %v5084
        %v5106 = vpop.f32.mrf.mxu0
        %v5107 = vadd.f32 0.0, %v5106
        %5108 = vmatmul.f32.gmra.mxu0 %v5087
        %v5109 = vpop.f32.mrf.mxu0
        %v5110 = vadd.f32 0.0, %v5109
        %5111 = vdwg.mxu0
        %v5112 = vadd.f32 %v5063, %v5107
        %v5113 = vadd.f32 %v5066, %v5110
        %s5114 = scalar_lea.vmem %s33, 48
        %v5115 = vld [vmem:[%s5114] sm:$0xff]
        %v5116 = vld [vmem:[%s5114 + $0x8] sm:$0xff]
        %5117 = vrot.lane.b32.xlu0 %v4985, 118
        %v5118 = vpop.permute.xlu0 %5117
        %5119 = vrot.lane.b32.xlu0 %v4986, 118
        %v5120 = vpop.permute.xlu0 %5119
        %5121 = vrot.lane.b32.xlu0 %v4987, 118
        %v5122 = vpop.permute.xlu0 %5121
        %5123 = vrot.lane.b32.xlu0 %v4988, 118
        %v5124 = vpop.permute.xlu0 %5123
        %v5130 = vsel %vm4169, %v5115, 0
        %v5133 = vsel %vm4169, %v5116, 0
        %5135 = vmatpush.msra.mxu0 0.0
        %5136 = vmatpush.msra.mxu0 0.0
        %5137 = vmatpush.msra.mxu0 0.0
        %5138 = vmatpush.msra.mxu0 0.0
        %5139 = vmatpush.msra.mxu0 0.0
        %5140 = vmatpush.msra.mxu0 0.0
        %5141 = vmatpush.msra.mxu0 0.0
        %5142 = vmatpush.msra.mxu0 0.0
        %5143 = vmatpush.msra.mxu0 0.0
        %5144 = vmatpush.msra.mxu0 0.0
        %5145 = vmatpush.msra.mxu0 0.0
        %5146 = vmatpush.msra.mxu0 0.0
        %5147 = vmatpush.msra.mxu0 %v5124
        %5148 = vmatpush.msra.mxu0 %v5122
        %5149 = vmatpush.msra.mxu0 %v5120
        %5150 = vmatpush.msra.mxu0 %v5118
        %5151 = vmatmul.f32.gmra.mxu0 %v5130
        %v5152 = vpop.f32.mrf.mxu0
        %v5153 = vadd.f32 0.0, %v5152
        %5154 = vmatmul.f32.gmra.mxu0 %v5133
        %v5155 = vpop.f32.mrf.mxu0
        %v5156 = vadd.f32 0.0, %v5155
        %5157 = vdwg.mxu0
        %v5158 = vadd.f32 %v5112, %v5153
        %v5159 = vadd.f32 %v5113, %v5156
        %s5160 = scalar_lea.vmem %s33, 64
        %v5161 = vld [vmem:[%s5160] sm:$0xff]
        %v5162 = vld [vmem:[%s5160 + $0x8] sm:$0xff]
        %5163 = vrot.lane.b32.xlu0 %v4985, 117
        %v5164 = vpop.permute.xlu0 %5163
        %5165 = vrot.lane.b32.xlu0 %v4986, 117
        %v5166 = vpop.permute.xlu0 %5165
        %5167 = vrot.lane.b32.xlu0 %v4987, 117
        %v5168 = vpop.permute.xlu0 %5167
        %5169 = vrot.lane.b32.xlu0 %v4988, 117
        %v5170 = vpop.permute.xlu0 %5169
        %v5176 = vsel %vm4169, %v5161, 0
        %v5179 = vsel %vm4169, %v5162, 0
        %5181 = vmatpush.msra.mxu0 0.0
        %5182 = vmatpush.msra.mxu0 0.0
        %5183 = vmatpush.msra.mxu0 0.0
        %5184 = vmatpush.msra.mxu0 0.0
        %5185 = vmatpush.msra.mxu0 0.0
        %5186 = vmatpush.msra.mxu0 0.0
        %5187 = vmatpush.msra.mxu0 0.0
        %5188 = vmatpush.msra.mxu0 0.0
        %5189 = vmatpush.msra.mxu0 0.0
        %5190 = vmatpush.msra.mxu0 0.0
        %5191 = vmatpush.msra.mxu0 0.0
        %5192 = vmatpush.msra.mxu0 0.0
        %5193 = vmatpush.msra.mxu0 %v5170
        %5194 = vmatpush.msra.mxu0 %v5168
        %5195 = vmatpush.msra.mxu0 %v5166
        %5196 = vmatpush.msra.mxu0 %v5164
        %5197 = vmatmul.f32.gmra.mxu0 %v5176
        %v5198 = vpop.f32.mrf.mxu0
        %v5199 = vadd.f32 0.0, %v5198
        %5200 = vmatmul.f32.gmra.mxu0 %v5179
        %v5201 = vpop.f32.mrf.mxu0
        %v5202 = vadd.f32 0.0, %v5201
        %5203 = vdwg.mxu0
        %v5204 = vadd.f32 %v5158, %v5199
        %v5205 = vadd.f32 %v5159, %v5202
        %s5206 = scalar_lea.vmem %s33, 80
        %v5207 = vld [vmem:[%s5206] sm:$0xff]
        %v5208 = vld [vmem:[%s5206 + $0x8] sm:$0xff]
        %5209 = vrot.lane.b32.xlu0 %v4985, 116
        %v5210 = vpop.permute.xlu0 %5209
        %5211 = vrot.lane.b32.xlu0 %v4986, 116
        %v5212 = vpop.permute.xlu0 %5211
        %5213 = vrot.lane.b32.xlu0 %v4987, 116
        %v5214 = vpop.permute.xlu0 %5213
        %5215 = vrot.lane.b32.xlu0 %v4988, 116
        %v5216 = vpop.permute.xlu0 %5215
        %v5222 = vsel %vm4169, %v5207, 0
        %v5225 = vsel %vm4169, %v5208, 0
        %5227 = vmatpush.msra.mxu0 0.0
        %5228 = vmatpush.msra.mxu0 0.0
        %5229 = vmatpush.msra.mxu0 0.0
        %5230 = vmatpush.msra.mxu0 0.0
        %5231 = vmatpush.msra.mxu0 0.0
        %5232 = vmatpush.msra.mxu0 0.0
        %5233 = vmatpush.msra.mxu0 0.0
        %5234 = vmatpush.msra.mxu0 0.0
        %5235 = vmatpush.msra.mxu0 0.0
        %5236 = vmatpush.msra.mxu0 0.0
        %5237 = vmatpush.msra.mxu0 0.0
        %5238 = vmatpush.msra.mxu0 0.0
        %5239 = vmatpush.msra.mxu0 %v5216
        %5240 = vmatpush.msra.mxu0 %v5214
        %5241 = vmatpush.msra.mxu0 %v5212
        %5242 = vmatpush.msra.mxu0 %v5210
        %5243 = vmatmul.f32.gmra.mxu0 %v5222
        %v5244 = vpop.f32.mrf.mxu0
        %v5245 = vadd.f32 0.0, %v5244
        %5246 = vmatmul.f32.gmra.mxu0 %v5225
        %v5247 = vpop.f32.mrf.mxu0
        %v5248 = vadd.f32 0.0, %v5247
        %5249 = vdwg.mxu0
        %v5250 = vadd.f32 %v5204, %v5245
        %v5251 = vadd.f32 %v5205, %v5248
        %s5252 = scalar_lea.vmem %s33, 96
        %v5253 = vld [vmem:[%s5252] sm:$0xff]
        %v5254 = vld [vmem:[%s5252 + $0x8] sm:$0xff]
        %5255 = vrot.lane.b32.xlu0 %v4985, 108
        %v5256 = vpop.permute.xlu0 %5255
        %5257 = vrot.lane.b32.xlu0 %v4986, 108
        %v5258 = vpop.permute.xlu0 %5257
        %5259 = vrot.lane.b32.xlu0 %v4987, 108
        %v5260 = vpop.permute.xlu0 %5259
        %5261 = vrot.lane.b32.xlu0 %v4988, 108
        %v5262 = vpop.permute.xlu0 %5261
        %v5268 = vsel %vm4169, %v5253, 0
        %v5271 = vsel %vm4169, %v5254, 0
        %5273 = vmatpush.msra.mxu0 0.0
        %5274 = vmatpush.msra.mxu0 0.0
        %5275 = vmatpush.msra.mxu0 0.0
        %5276 = vmatpush.msra.mxu0 0.0
        %5277 = vmatpush.msra.mxu0 0.0
        %5278 = vmatpush.msra.mxu0 0.0
        %5279 = vmatpush.msra.mxu0 0.0
        %5280 = vmatpush.msra.mxu0 0.0
        %5281 = vmatpush.msra.mxu0 0.0
        %5282 = vmatpush.msra.mxu0 0.0
        %5283 = vmatpush.msra.mxu0 0.0
        %5284 = vmatpush.msra.mxu0 0.0
        %5285 = vmatpush.msra.mxu0 %v5262
        %5286 = vmatpush.msra.mxu0 %v5260
        %5287 = vmatpush.msra.mxu0 %v5258
        %5288 = vmatpush.msra.mxu0 %v5256
        %5289 = vmatmul.f32.gmra.mxu0 %v5268
        %v5290 = vpop.f32.mrf.mxu0
        %v5291 = vadd.f32 0.0, %v5290
        %5292 = vmatmul.f32.gmra.mxu0 %v5271
        %v5293 = vpop.f32.mrf.mxu0
        %v5294 = vadd.f32 0.0, %v5293
        %5295 = vdwg.mxu0
        %v5296 = vadd.f32 %v5250, %v5291
        %v5297 = vadd.f32 %v5251, %v5294
        %s5298 = scalar_lea.vmem %s33, 112
        %v5299 = vld [vmem:[%s5298] sm:$0xff]
        %v5300 = vld [vmem:[%s5298 + $0x8] sm:$0xff]
        %5301 = vrot.lane.b32.xlu0 %v4985, 107
        %v5302 = vpop.permute.xlu0 %5301
        %5303 = vrot.lane.b32.xlu0 %v4986, 107
        %v5304 = vpop.permute.xlu0 %5303
        %5305 = vrot.lane.b32.xlu0 %v4987, 107
        %v5306 = vpop.permute.xlu0 %5305
        %5307 = vrot.lane.b32.xlu0 %v4988, 107
        %v5308 = vpop.permute.xlu0 %5307
        %v5314 = vsel %vm4169, %v5299, 0
        %v5317 = vsel %vm4169, %v5300, 0
        %5319 = vmatpush.msra.mxu0 0.0
        %5320 = vmatpush.msra.mxu0 0.0
        %5321 = vmatpush.msra.mxu0 0.0
        %5322 = vmatpush.msra.mxu0 0.0
        %5323 = vmatpush.msra.mxu0 0.0
        %5324 = vmatpush.msra.mxu0 0.0
        %5325 = vmatpush.msra.mxu0 0.0
        %5326 = vmatpush.msra.mxu0 0.0
        %5327 = vmatpush.msra.mxu0 0.0
        %5328 = vmatpush.msra.mxu0 0.0
        %5329 = vmatpush.msra.mxu0 0.0
        %5330 = vmatpush.msra.mxu0 0.0
        %5331 = vmatpush.msra.mxu0 %v5308
        %5332 = vmatpush.msra.mxu0 %v5306
        %5333 = vmatpush.msra.mxu0 %v5304
        %5334 = vmatpush.msra.mxu0 %v5302
        %5335 = vmatmul.f32.gmra.mxu0 %v5314
        %v5336 = vpop.f32.mrf.mxu0
        %v5337 = vadd.f32 0.0, %v5336
        %5338 = vmatmul.f32.gmra.mxu0 %v5317
        %v5339 = vpop.f32.mrf.mxu0
        %v5340 = vadd.f32 0.0, %v5339
        %5341 = vdwg.mxu0
        %v5342 = vadd.f32 %v5296, %v5337
        %v5343 = vadd.f32 %v5297, %v5340
        %s5344 = scalar_lea.vmem %s33, 128
        %v5345 = vld [vmem:[%s5344] sm:$0xff]
        %v5346 = vld [vmem:[%s5344 + $0x8] sm:$0xff]
        %5347 = vrot.lane.b32.xlu0 %v4985, 106
        %v5348 = vpop.permute.xlu0 %5347
        %5349 = vrot.lane.b32.xlu0 %v4986, 106
        %v5350 = vpop.permute.xlu0 %5349
        %5351 = vrot.lane.b32.xlu0 %v4987, 106
        %v5352 = vpop.permute.xlu0 %5351
        %5353 = vrot.lane.b32.xlu0 %v4988, 106
        %v5354 = vpop.permute.xlu0 %5353
        %v5360 = vsel %vm4169, %v5345, 0
        %v5363 = vsel %vm4169, %v5346, 0
        %5365 = vmatpush.msra.mxu0 0.0
        %5366 = vmatpush.msra.mxu0 0.0
        %5367 = vmatpush.msra.mxu0 0.0
        %5368 = vmatpush.msra.mxu0 0.0
        %5369 = vmatpush.msra.mxu0 0.0
        %5370 = vmatpush.msra.mxu0 0.0
        %5371 = vmatpush.msra.mxu0 0.0
        %5372 = vmatpush.msra.mxu0 0.0
        %5373 = vmatpush.msra.mxu0 0.0
        %5374 = vmatpush.msra.mxu0 0.0
        %5375 = vmatpush.msra.mxu0 0.0
        %5376 = vmatpush.msra.mxu0 0.0
        %5377 = vmatpush.msra.mxu0 %v5354
        %5378 = vmatpush.msra.mxu0 %v5352
        %5379 = vmatpush.msra.mxu0 %v5350
        %5380 = vmatpush.msra.mxu0 %v5348
        %5381 = vmatmul.f32.gmra.mxu0 %v5360
        %v5382 = vpop.f32.mrf.mxu0
        %v5383 = vadd.f32 0.0, %v5382
        %5384 = vmatmul.f32.gmra.mxu0 %v5363
        %v5385 = vpop.f32.mrf.mxu0
        %v5386 = vadd.f32 0.0, %v5385
        %5387 = vdwg.mxu0
        %v5388 = vadd.f32 %v5342, %v5383
        %v5389 = vadd.f32 %v5343, %v5386
        %v5390 = vld [vmem:[%s35] sm:$0xff]
        %v5391 = vld [vmem:[%s35 + $0x8] sm:$0xff]
        %5393 = vset.pattern.permute.xlu0 0
        %5394 = vperm.xlu0 %5393, %v5390
        %v5395 = vpop.permute.xlu0 %5394
        %5398 = vset.pattern.permute.xlu0 0
        %5399 = vperm.xlu0 %5398, %v5391
        %v5400 = vpop.permute.xlu0 %5399
        %v5402 = vadd.f32 %v5388, %v5395
        %v5403 = vadd.f32 %v5389, %v5400
        %v5404 = vmax.f32 %v5402, 0.0
        %v5405 = vmax.f32 %v5403, 0.0
        %v5406 = vld [vmem:[%s65] sm:$0x1]
        %v5408 = vperm.slane %v5406, 0
        %v5410 = vmul.f32 %v5404, %v5408
        %v5411 = vmul.f32 %v5405, %v5408
        %5414 = vrot.lane.b32.xlu0 %v5410, 11
        %v5415 = vpop.permute.xlu0 %5414
        %5416 = vrot.lane.b32.xlu0 %v5411, 11
        %v5417 = vpop.permute.xlu0 %5416
        %5420 = vst.msk [vmem:[#allocation3] sm:$0xff] %vm2757, %v5415
        %5421 = vst.msk [vmem:[#allocation3 + $0x8] sm:$0xff] %vm2757, %v5417
        %v5422 = vld [vmem:[#allocation3] sm:$0xff]
        %v5423 = vld [vmem:[#allocation3 + $0x8] sm:$0xff]
        %v5424 = vld [vmem:[%s37] sm:$0xff]
        %v5425 = vld [vmem:[%s37 + $0x8] sm:$0xff]
        %s5426 = scalar_lea.vmem %s37, 16
        %v5427 = vld [vmem:[%s5426] sm:$0xff]
        %v5428 = vld [vmem:[%s5426 + $0x8] sm:$0xff]
        %5431 = vrot.lane.b32.xlu0 %v5422, 127
        %v5432 = vpop.permute.xlu0 %5431
        %5433 = vrot.lane.b32.xlu0 %v5423, 127
        %v5434 = vpop.permute.xlu0 %5433
        %v5438 = vsel %vm3133, %v5427, 0
        %v5441 = vsel %vm3133, %v5428, 0
        %5443 = vmatpush.msra.mxu0 0.0
        %5444 = vmatpush.msra.mxu0 0.0
        %5445 = vmatpush.msra.mxu0 0.0
        %5446 = vmatpush.msra.mxu0 0.0
        %5447 = vmatpush.msra.mxu0 0.0
        %5448 = vmatpush.msra.mxu0 0.0
        %5449 = vmatpush.msra.mxu0 0.0
        %5450 = vmatpush.msra.mxu0 0.0
        %5451 = vmatpush.msra.mxu0 0.0
        %5452 = vmatpush.msra.mxu0 0.0
        %5453 = vmatpush.msra.mxu0 0.0
        %5454 = vmatpush.msra.mxu0 0.0
        %5455 = vmatpush.msra.mxu0 0.0
        %5456 = vmatpush.msra.mxu0 0.0
        %5457 = vmatpush.msra.mxu0 %v5434
        %5458 = vmatpush.msra.mxu0 %v5432
        %5459 = vmatmul.f32.gmra.mxu0 %v5438
        %v5460 = vpop.f32.mrf.mxu0
        %v5461 = vadd.f32 0.0, %v5460
        %5462 = vmatmul.f32.gmra.mxu0 %v5441
        %v5463 = vpop.f32.mrf.mxu0
        %v5464 = vadd.f32 0.0, %v5463
        %5465 = vdwg.mxu0
        %v5467 = vsel %vm3133, %v5424, 0
        %v5470 = vsel %vm3133, %v5425, 0
        %5472 = vmatpush.msra.mxu0 0.0
        %5473 = vmatpush.msra.mxu0 0.0
        %5474 = vmatpush.msra.mxu0 0.0
        %5475 = vmatpush.msra.mxu0 0.0
        %5476 = vmatpush.msra.mxu0 0.0
        %5477 = vmatpush.msra.mxu0 0.0
        %5478 = vmatpush.msra.mxu0 0.0
        %5479 = vmatpush.msra.mxu0 0.0
        %5480 = vmatpush.msra.mxu0 0.0
        %5481 = vmatpush.msra.mxu0 0.0
        %5482 = vmatpush.msra.mxu0 0.0
        %5483 = vmatpush.msra.mxu0 0.0
        %5484 = vmatpush.msra.mxu0 0.0
        %5485 = vmatpush.msra.mxu0 0.0
        %5486 = vmatpush.msra.mxu0 %v5423
        %5487 = vmatpush.msra.mxu0 %v5422
        %5488 = vmatmul.f32.gmra.mxu0 %v5467
        %v5489 = vpop.f32.mrf.mxu0
        %v5490 = vadd.f32 %v5461, %v5489
        %5491 = vmatmul.f32.gmra.mxu0 %v5470
        %v5492 = vpop.f32.mrf.mxu0
        %v5493 = vadd.f32 %v5464, %v5492
        %5494 = vdwg.mxu0
        %s5495 = scalar_lea.vmem %s37, 32
        %v5496 = vld [vmem:[%s5495] sm:$0xff]
        %v5497 = vld [vmem:[%s5495 + $0x8] sm:$0xff]
        %5498 = vrot.lane.b32.xlu0 %v5422, 126
        %v5499 = vpop.permute.xlu0 %5498
        %5500 = vrot.lane.b32.xlu0 %v5423, 126
        %v5501 = vpop.permute.xlu0 %5500
        %v5505 = vsel %vm3133, %v5496, 0
        %v5508 = vsel %vm3133, %v5497, 0
        %5510 = vmatpush.msra.mxu0 0.0
        %5511 = vmatpush.msra.mxu0 0.0
        %5512 = vmatpush.msra.mxu0 0.0
        %5513 = vmatpush.msra.mxu0 0.0
        %5514 = vmatpush.msra.mxu0 0.0
        %5515 = vmatpush.msra.mxu0 0.0
        %5516 = vmatpush.msra.mxu0 0.0
        %5517 = vmatpush.msra.mxu0 0.0
        %5518 = vmatpush.msra.mxu0 0.0
        %5519 = vmatpush.msra.mxu0 0.0
        %5520 = vmatpush.msra.mxu0 0.0
        %5521 = vmatpush.msra.mxu0 0.0
        %5522 = vmatpush.msra.mxu0 0.0
        %5523 = vmatpush.msra.mxu0 0.0
        %5524 = vmatpush.msra.mxu0 %v5501
        %5525 = vmatpush.msra.mxu0 %v5499
        %5526 = vmatmul.f32.gmra.mxu0 %v5505
        %v5527 = vpop.f32.mrf.mxu0
        %v5528 = vadd.f32 0.0, %v5527
        %5529 = vmatmul.f32.gmra.mxu0 %v5508
        %v5530 = vpop.f32.mrf.mxu0
        %v5531 = vadd.f32 0.0, %v5530
        %5532 = vdwg.mxu0
        %v5533 = vadd.f32 %v5490, %v5528
        %v5534 = vadd.f32 %v5493, %v5531
        %s5535 = scalar_lea.vmem %s37, 48
        %v5536 = vld [vmem:[%s5535] sm:$0xff]
        %v5537 = vld [vmem:[%s5535 + $0x8] sm:$0xff]
        %5538 = vrot.lane.b32.xlu0 %v5422, 118
        %v5539 = vpop.permute.xlu0 %5538
        %5540 = vrot.lane.b32.xlu0 %v5423, 118
        %v5541 = vpop.permute.xlu0 %5540
        %v5545 = vsel %vm3133, %v5536, 0
        %v5548 = vsel %vm3133, %v5537, 0
        %5550 = vmatpush.msra.mxu0 0.0
        %5551 = vmatpush.msra.mxu0 0.0
        %5552 = vmatpush.msra.mxu0 0.0
        %5553 = vmatpush.msra.mxu0 0.0
        %5554 = vmatpush.msra.mxu0 0.0
        %5555 = vmatpush.msra.mxu0 0.0
        %5556 = vmatpush.msra.mxu0 0.0
        %5557 = vmatpush.msra.mxu0 0.0
        %5558 = vmatpush.msra.mxu0 0.0
        %5559 = vmatpush.msra.mxu0 0.0
        %5560 = vmatpush.msra.mxu0 0.0
        %5561 = vmatpush.msra.mxu0 0.0
        %5562 = vmatpush.msra.mxu0 0.0
        %5563 = vmatpush.msra.mxu0 0.0
        %5564 = vmatpush.msra.mxu0 %v5541
        %5565 = vmatpush.msra.mxu0 %v5539
        %5566 = vmatmul.f32.gmra.mxu0 %v5545
        %v5567 = vpop.f32.mrf.mxu0
        %v5568 = vadd.f32 0.0, %v5567
        %5569 = vmatmul.f32.gmra.mxu0 %v5548
        %v5570 = vpop.f32.mrf.mxu0
        %v5571 = vadd.f32 0.0, %v5570
        %5572 = vdwg.mxu0
        %v5573 = vadd.f32 %v5533, %v5568
        %v5574 = vadd.f32 %v5534, %v5571
        %s5575 = scalar_lea.vmem %s37, 64
        %v5576 = vld [vmem:[%s5575] sm:$0xff]
        %v5577 = vld [vmem:[%s5575 + $0x8] sm:$0xff]
        %5578 = vrot.lane.b32.xlu0 %v5422, 117
        %v5579 = vpop.permute.xlu0 %5578
        %5580 = vrot.lane.b32.xlu0 %v5423, 117
        %v5581 = vpop.permute.xlu0 %5580
        %v5585 = vsel %vm3133, %v5576, 0
        %v5588 = vsel %vm3133, %v5577, 0
        %5590 = vmatpush.msra.mxu0 0.0
        %5591 = vmatpush.msra.mxu0 0.0
        %5592 = vmatpush.msra.mxu0 0.0
        %5593 = vmatpush.msra.mxu0 0.0
        %5594 = vmatpush.msra.mxu0 0.0
        %5595 = vmatpush.msra.mxu0 0.0
        %5596 = vmatpush.msra.mxu0 0.0
        %5597 = vmatpush.msra.mxu0 0.0
        %5598 = vmatpush.msra.mxu0 0.0
        %5599 = vmatpush.msra.mxu0 0.0
        %5600 = vmatpush.msra.mxu0 0.0
        %5601 = vmatpush.msra.mxu0 0.0
        %5602 = vmatpush.msra.mxu0 0.0
        %5603 = vmatpush.msra.mxu0 0.0
        %5604 = vmatpush.msra.mxu0 %v5581
        %5605 = vmatpush.msra.mxu0 %v5579
        %5606 = vmatmul.f32.gmra.mxu0 %v5585
        %v5607 = vpop.f32.mrf.mxu0
        %v5608 = vadd.f32 0.0, %v5607
        %5609 = vmatmul.f32.gmra.mxu0 %v5588
        %v5610 = vpop.f32.mrf.mxu0
        %v5611 = vadd.f32 0.0, %v5610
        %5612 = vdwg.mxu0
        %v5613 = vadd.f32 %v5573, %v5608
        %v5614 = vadd.f32 %v5574, %v5611
        %s5615 = scalar_lea.vmem %s37, 80
        %v5616 = vld [vmem:[%s5615] sm:$0xff]
        %v5617 = vld [vmem:[%s5615 + $0x8] sm:$0xff]
        %5618 = vrot.lane.b32.xlu0 %v5422, 116
        %v5619 = vpop.permute.xlu0 %5618
        %5620 = vrot.lane.b32.xlu0 %v5423, 116
        %v5621 = vpop.permute.xlu0 %5620
        %v5625 = vsel %vm3133, %v5616, 0
        %v5628 = vsel %vm3133, %v5617, 0
        %5630 = vmatpush.msra.mxu0 0.0
        %5631 = vmatpush.msra.mxu0 0.0
        %5632 = vmatpush.msra.mxu0 0.0
        %5633 = vmatpush.msra.mxu0 0.0
        %5634 = vmatpush.msra.mxu0 0.0
        %5635 = vmatpush.msra.mxu0 0.0
        %5636 = vmatpush.msra.mxu0 0.0
        %5637 = vmatpush.msra.mxu0 0.0
        %5638 = vmatpush.msra.mxu0 0.0
        %5639 = vmatpush.msra.mxu0 0.0
        %5640 = vmatpush.msra.mxu0 0.0
        %5641 = vmatpush.msra.mxu0 0.0
        %5642 = vmatpush.msra.mxu0 0.0
        %5643 = vmatpush.msra.mxu0 0.0
        %5644 = vmatpush.msra.mxu0 %v5621
        %5645 = vmatpush.msra.mxu0 %v5619
        %5646 = vmatmul.f32.gmra.mxu0 %v5625
        %v5647 = vpop.f32.mrf.mxu0
        %v5648 = vadd.f32 0.0, %v5647
        %5649 = vmatmul.f32.gmra.mxu0 %v5628
        %v5650 = vpop.f32.mrf.mxu0
        %v5651 = vadd.f32 0.0, %v5650
        %5652 = vdwg.mxu0
        %v5653 = vadd.f32 %v5613, %v5648
        %v5654 = vadd.f32 %v5614, %v5651
        %s5655 = scalar_lea.vmem %s37, 96
        %v5656 = vld [vmem:[%s5655] sm:$0xff]
        %v5657 = vld [vmem:[%s5655 + $0x8] sm:$0xff]
        %5658 = vrot.lane.b32.xlu0 %v5422, 108
        %v5659 = vpop.permute.xlu0 %5658
        %5660 = vrot.lane.b32.xlu0 %v5423, 108
        %v5661 = vpop.permute.xlu0 %5660
        %v5665 = vsel %vm3133, %v5656, 0
        %v5668 = vsel %vm3133, %v5657, 0
        %5670 = vmatpush.msra.mxu0 0.0
        %5671 = vmatpush.msra.mxu0 0.0
        %5672 = vmatpush.msra.mxu0 0.0
        %5673 = vmatpush.msra.mxu0 0.0
        %5674 = vmatpush.msra.mxu0 0.0
        %5675 = vmatpush.msra.mxu0 0.0
        %5676 = vmatpush.msra.mxu0 0.0
        %5677 = vmatpush.msra.mxu0 0.0
        %5678 = vmatpush.msra.mxu0 0.0
        %5679 = vmatpush.msra.mxu0 0.0
        %5680 = vmatpush.msra.mxu0 0.0
        %5681 = vmatpush.msra.mxu0 0.0
        %5682 = vmatpush.msra.mxu0 0.0
        %5683 = vmatpush.msra.mxu0 0.0
        %5684 = vmatpush.msra.mxu0 %v5661
        %5685 = vmatpush.msra.mxu0 %v5659
        %5686 = vmatmul.f32.gmra.mxu0 %v5665
        %v5687 = vpop.f32.mrf.mxu0
        %v5688 = vadd.f32 0.0, %v5687
        %5689 = vmatmul.f32.gmra.mxu0 %v5668
        %v5690 = vpop.f32.mrf.mxu0
        %v5691 = vadd.f32 0.0, %v5690
        %5692 = vdwg.mxu0
        %v5693 = vadd.f32 %v5653, %v5688
        %v5694 = vadd.f32 %v5654, %v5691
        %s5695 = scalar_lea.vmem %s37, 112
        %v5696 = vld [vmem:[%s5695] sm:$0xff]
        %v5697 = vld [vmem:[%s5695 + $0x8] sm:$0xff]
        %5698 = vrot.lane.b32.xlu0 %v5422, 107
        %v5699 = vpop.permute.xlu0 %5698
        %5700 = vrot.lane.b32.xlu0 %v5423, 107
        %v5701 = vpop.permute.xlu0 %5700
        %v5705 = vsel %vm3133, %v5696, 0
        %v5708 = vsel %vm3133, %v5697, 0
        %5710 = vmatpush.msra.mxu0 0.0
        %5711 = vmatpush.msra.mxu0 0.0
        %5712 = vmatpush.msra.mxu0 0.0
        %5713 = vmatpush.msra.mxu0 0.0
        %5714 = vmatpush.msra.mxu0 0.0
        %5715 = vmatpush.msra.mxu0 0.0
        %5716 = vmatpush.msra.mxu0 0.0
        %5717 = vmatpush.msra.mxu0 0.0
        %5718 = vmatpush.msra.mxu0 0.0
        %5719 = vmatpush.msra.mxu0 0.0
        %5720 = vmatpush.msra.mxu0 0.0
        %5721 = vmatpush.msra.mxu0 0.0
        %5722 = vmatpush.msra.mxu0 0.0
        %5723 = vmatpush.msra.mxu0 0.0
        %5724 = vmatpush.msra.mxu0 %v5701
        %5725 = vmatpush.msra.mxu0 %v5699
        %5726 = vmatmul.f32.gmra.mxu0 %v5705
        %v5727 = vpop.f32.mrf.mxu0
        %v5728 = vadd.f32 0.0, %v5727
        %5729 = vmatmul.f32.gmra.mxu0 %v5708
        %v5730 = vpop.f32.mrf.mxu0
        %v5731 = vadd.f32 0.0, %v5730
        %5732 = vdwg.mxu0
        %v5733 = vadd.f32 %v5693, %v5728
        %v5734 = vadd.f32 %v5694, %v5731
        %s5735 = scalar_lea.vmem %s37, 128
        %v5736 = vld [vmem:[%s5735] sm:$0xff]
        %v5737 = vld [vmem:[%s5735 + $0x8] sm:$0xff]
        %5738 = vrot.lane.b32.xlu0 %v5422, 106
        %v5739 = vpop.permute.xlu0 %5738
        %5740 = vrot.lane.b32.xlu0 %v5423, 106
        %v5741 = vpop.permute.xlu0 %5740
        %v5745 = vsel %vm3133, %v5736, 0
        %v5748 = vsel %vm3133, %v5737, 0
        %5750 = vmatpush.msra.mxu0 0.0
        %5751 = vmatpush.msra.mxu0 0.0
        %5752 = vmatpush.msra.mxu0 0.0
        %5753 = vmatpush.msra.mxu0 0.0
        %5754 = vmatpush.msra.mxu0 0.0
        %5755 = vmatpush.msra.mxu0 0.0
        %5756 = vmatpush.msra.mxu0 0.0
        %5757 = vmatpush.msra.mxu0 0.0
        %5758 = vmatpush.msra.mxu0 0.0
        %5759 = vmatpush.msra.mxu0 0.0
        %5760 = vmatpush.msra.mxu0 0.0
        %5761 = vmatpush.msra.mxu0 0.0
        %5762 = vmatpush.msra.mxu0 0.0
        %5763 = vmatpush.msra.mxu0 0.0
        %5764 = vmatpush.msra.mxu0 %v5741
        %5765 = vmatpush.msra.mxu0 %v5739
        %5766 = vmatmul.f32.gmra.mxu0 %v5745
        %v5767 = vpop.f32.mrf.mxu0
        %v5768 = vadd.f32 0.0, %v5767
        %5769 = vmatmul.f32.gmra.mxu0 %v5748
        %v5770 = vpop.f32.mrf.mxu0
        %v5771 = vadd.f32 0.0, %v5770
        %5772 = vdwg.mxu0
        %v5773 = vadd.f32 %v5733, %v5768
        %v5774 = vadd.f32 %v5734, %v5771
        %v5775 = vld [vmem:[%s39] sm:$0xff]
        %v5776 = vld [vmem:[%s39 + $0x8] sm:$0xff]
        %5778 = vset.pattern.permute.xlu0 0
        %5779 = vperm.xlu0 %5778, %v5775
        %v5780 = vpop.permute.xlu0 %5779
        %5783 = vset.pattern.permute.xlu0 0
        %5784 = vperm.xlu0 %5783, %v5776
        %v5785 = vpop.permute.xlu0 %5784
        %v5787 = vadd.f32 %v5773, %v5780
        %v5788 = vadd.f32 %v5774, %v5785
        %v5789 = vmax.f32 %v5787, 0.0
        %v5790 = vmax.f32 %v5788, 0.0
        %v5791 = vld [vmem:[%s65] sm:$0x1]
        %v5793 = vperm.slane %v5791, 0
        %v5795 = vmul.f32 %v5789, %v5793
        %v5796 = vmul.f32 %v5790, %v5793
        %v5797 = vld [vmem:[%s41] sm:$0xff]
        %v5798 = vld [vmem:[%s41 + $0x8] sm:$0xff]
        %v5799 = vld [vmem:[%s41 + $0x10] sm:$0xff]
        %v5800 = vld [vmem:[%s41 + $0x18] sm:$0xff]
        %v5802 = vsel %vm3133, %v5797, 0
        %v5805 = vsel %vm3133, %v5798, 0
        %v5808 = vsel %vm3133, %v5799, 0
        %v5811 = vsel %vm3133, %v5800, 0
        %5813 = vmatpush.msra.mxu0 0.0
        %5814 = vmatpush.msra.mxu0 0.0
        %5815 = vmatpush.msra.mxu0 0.0
        %5816 = vmatpush.msra.mxu0 0.0
        %5817 = vmatpush.msra.mxu0 0.0
        %5818 = vmatpush.msra.mxu0 0.0
        %5819 = vmatpush.msra.mxu0 0.0
        %5820 = vmatpush.msra.mxu0 0.0
        %5821 = vmatpush.msra.mxu0 0.0
        %5822 = vmatpush.msra.mxu0 0.0
        %5823 = vmatpush.msra.mxu0 0.0
        %5824 = vmatpush.msra.mxu0 0.0
        %5825 = vmatpush.msra.mxu0 0.0
        %5826 = vmatpush.msra.mxu0 0.0
        %5827 = vmatpush.msra.mxu0 %v5796
        %5828 = vmatpush.msra.mxu0 %v5795
        %5829 = vmatmul.f32.gmra.mxu0 %v5802
        %v5830 = vpop.f32.mrf.mxu0
        %v5831 = vadd.f32 0.0, %v5830
        %5832 = vmatmul.f32.gmra.mxu0 %v5805
        %v5833 = vpop.f32.mrf.mxu0
        %v5834 = vadd.f32 0.0, %v5833
        %5835 = vmatmul.f32.gmra.mxu0 %v5808
        %v5836 = vpop.f32.mrf.mxu0
        %v5837 = vadd.f32 0.0, %v5836
        %5838 = vmatmul.f32.gmra.mxu0 %v5811
        %v5839 = vpop.f32.mrf.mxu0
        %v5840 = vadd.f32 0.0, %v5839
        %5841 = vdwg.mxu0
        %v5842 = vld [vmem:[#allocation6] sm:$0xff]
        %v5843 = vld [vmem:[#allocation6 + $0x8] sm:$0xff]
        %v5844 = vld [vmem:[#allocation6 + $0x10] sm:$0xff]
        %v5845 = vld [vmem:[#allocation6 + $0x18] sm:$0xff]
        %v5846 = vld [vmem:[#allocation6 + $0x20] sm:$0xff]
        %v5847 = vld [vmem:[#allocation6 + $0x28] sm:$0xff]
        %v5848 = vld [vmem:[#allocation6 + $0x30] sm:$0xff]
        %v5849 = vld [vmem:[#allocation6 + $0x38] sm:$0xff]
        %v5850 = vld [vmem:[#allocation6 + $0x40] sm:$0xff]
        %v5851 = vld [vmem:[#allocation6 + $0x48] sm:$0xff]
        %v5852 = vld [vmem:[#allocation6 + $0x50] sm:$0xff]
        %v5853 = vld [vmem:[#allocation6 + $0x58] sm:$0xff]
        %v5854 = vld [vmem:[#allocation6 + $0x60] sm:$0xff]
        %v5855 = vld [vmem:[#allocation6 + $0x68] sm:$0xff]
        %v5856 = vld [vmem:[#allocation6 + $0x70] sm:$0xff]
        %v5857 = vld [vmem:[#allocation6 + $0x78] sm:$0xff]
        %v5858 = vld [vmem:[#allocation6 + $0x80] sm:$0xff]
        %v5859 = vld [vmem:[#allocation6 + $0x88] sm:$0xff]
        %v5860 = vld [vmem:[#allocation6 + $0x90] sm:$0xff]
        %v5861 = vld [vmem:[#allocation6 + $0x98] sm:$0xff]
        %v5862 = vld [vmem:[#allocation6 + $0xa0] sm:$0xff]
        %v5863 = vld [vmem:[#allocation6 + $0xa8] sm:$0xff]
        %v5864 = vld [vmem:[#allocation6 + $0xb0] sm:$0xff]
        %v5865 = vld [vmem:[#allocation6 + $0xb8] sm:$0xff]
        %v5866 = vld [vmem:[#allocation6 + $0xc0] sm:$0xff]
        %v5867 = vld [vmem:[#allocation6 + $0xc8] sm:$0xff]
        %v5868 = vld [vmem:[#allocation6 + $0xd0] sm:$0xff]
        %v5869 = vld [vmem:[#allocation6 + $0xd8] sm:$0xff]
        %v5870 = vld [vmem:[#allocation6 + $0xe0] sm:$0xff]
        %v5871 = vld [vmem:[#allocation6 + $0xe8] sm:$0xff]
        %v5872 = vld [vmem:[#allocation6 + $0xf0] sm:$0xff]
        %v5873 = vld [vmem:[#allocation6 + $0xf8] sm:$0xff]
        %v5874 = vld [vmem:[#allocation6 + $0x100] sm:$0xff]
        %v5875 = vld [vmem:[#allocation6 + $0x108] sm:$0xff]
        %v5876 = vld [vmem:[#allocation6 + $0x110] sm:$0xff]
        %v5877 = vld [vmem:[#allocation6 + $0x118] sm:$0xff]
        %v5878 = vld [vmem:[#allocation6 + $0x120] sm:$0xf]
        %v5879 = vld [vmem:[#allocation6 + $0x128] sm:$0xf]
        %v5880 = vld [vmem:[#allocation6 + $0x130] sm:$0xf]
        %s5881 = scalar_lea.vmem [#allocation6], 312
        %v5882 = vld [vmem:[%s5881] sm:$0xff]
        %v5883 = vld [vmem:[%s5881 + $0x8] sm:$0xff]
        %v5884 = vld [vmem:[%s5881 + $0x10] sm:$0xff]
        %v5885 = vld [vmem:[%s5881 + $0x18] sm:$0xff]
        %v5886 = vld [vmem:[%s5881 + $0x20] sm:$0xff]
        %v5887 = vld [vmem:[%s5881 + $0x28] sm:$0xff]
        %v5888 = vld [vmem:[%s5881 + $0x30] sm:$0xff]
        %v5889 = vld [vmem:[%s5881 + $0x38] sm:$0xff]
        %v5890 = vld [vmem:[%s5881 + $0x40] sm:$0xff]
        %v5891 = vld [vmem:[%s5881 + $0x48] sm:$0xff]
        %v5892 = vld [vmem:[%s5881 + $0x50] sm:$0xff]
        %v5893 = vld [vmem:[%s5881 + $0x58] sm:$0xff]
        %v5894 = vld [vmem:[%s5881 + $0x60] sm:$0xff]
        %v5895 = vld [vmem:[%s5881 + $0x68] sm:$0xff]
        %v5896 = vld [vmem:[%s5881 + $0x70] sm:$0xff]
        %v5897 = vld [vmem:[%s5881 + $0x78] sm:$0xff]
        %v5898 = vld [vmem:[%s5881 + $0x80] sm:$0xff]
        %v5899 = vld [vmem:[%s5881 + $0x88] sm:$0xff]
        %v5900 = vld [vmem:[%s5881 + $0x90] sm:$0xff]
        %v5901 = vld [vmem:[%s5881 + $0x98] sm:$0xff]
        %v5902 = vld [vmem:[%s5881 + $0xa0] sm:$0xff]
        %v5903 = vld [vmem:[%s5881 + $0xa8] sm:$0xff]
        %v5904 = vld [vmem:[%s5881 + $0xb0] sm:$0xff]
        %v5905 = vld [vmem:[%s5881 + $0xb8] sm:$0xff]
        %v5906 = vld [vmem:[%s5881 + $0xc0] sm:$0xff]
        %v5907 = vld [vmem:[%s5881 + $0xc8] sm:$0xff]
        %v5908 = vld [vmem:[%s5881 + $0xd0] sm:$0xff]
        %v5909 = vld [vmem:[%s5881 + $0xd8] sm:$0xff]
        %v5910 = vld [vmem:[%s5881 + $0xe0] sm:$0xff]
        %v5911 = vld [vmem:[%s5881 + $0xe8] sm:$0xff]
        %v5912 = vld [vmem:[%s5881 + $0xf0] sm:$0xff]
        %v5913 = vld [vmem:[%s5881 + $0xf8] sm:$0xff]
        %v5914 = vld [vmem:[%s5881 + $0x100] sm:$0xff]
        %v5915 = vld [vmem:[%s5881 + $0x108] sm:$0xff]
        %v5916 = vld [vmem:[%s5881 + $0x110] sm:$0xff]
        %v5917 = vld [vmem:[%s5881 + $0x118] sm:$0xff]
        %v5918 = vld [vmem:[%s5881 + $0x120] sm:$0xf]
        %v5919 = vld [vmem:[%s5881 + $0x128] sm:$0xf]
        %v5920 = vld [vmem:[%s5881 + $0x130] sm:$0xf]
        %v5922 = vsel %vm3545, %v5834, 0
        %v5925 = vsel %vm2689, %v5918, 0
        %v5928 = vsel %vm2689, %v5919, 0
        %v5931 = vsel %vm2689, %v5920, 0
        %5933 = vmatpush.msra.mxu0 0.0
        %5934 = vmatpush.msra.mxu0 0.0
        %5935 = vmatpush.msra.mxu0 0.0
        %5936 = vmatpush.msra.mxu0 %v5925
        %5937 = vmatpush.msra.mxu0 %v5915
        %5938 = vmatpush.msra.mxu0 %v5912
        %5939 = vmatpush.msra.mxu0 %v5909
        %5940 = vmatpush.msra.mxu0 %v5906
        %5941 = vmatpush.msra.mxu0 %v5903
        %5942 = vmatpush.msra.mxu0 %v5900
        %5943 = vmatpush.msra.mxu0 %v5897
        %5944 = vmatpush.msra.mxu0 %v5894
        %5945 = vmatpush.msra.mxu0 %v5891
        %5946 = vmatpush.msra.mxu0 %v5888
        %5947 = vmatpush.msra.mxu0 %v5885
        %5948 = vmatpush.msra.mxu0 %v5882
        %5949 = vmatmul.f32.gmra.mxu0 %v5922
        %v5950 = vpop.f32.mrf.mxu0
        %v5951 = vadd.f32 0.0, %v5950
        %5952 = vdwg.mxu0
        %5953 = vmatpush.msra.mxu0 0.0
        %5954 = vmatpush.msra.mxu0 0.0
        %5955 = vmatpush.msra.mxu0 0.0
        %5956 = vmatpush.msra.mxu0 %v5928
        %5957 = vmatpush.msra.mxu0 %v5916
        %5958 = vmatpush.msra.mxu0 %v5913
        %5959 = vmatpush.msra.mxu0 %v5910
        %5960 = vmatpush.msra.mxu0 %v5907
        %5961 = vmatpush.msra.mxu0 %v5904
        %5962 = vmatpush.msra.mxu0 %v5901
        %5963 = vmatpush.msra.mxu0 %v5898
        %5964 = vmatpush.msra.mxu0 %v5895
        %5965 = vmatpush.msra.mxu0 %v5892
        %5966 = vmatpush.msra.mxu0 %v5889
        %5967 = vmatpush.msra.mxu0 %v5886
        %5968 = vmatpush.msra.mxu0 %v5883
        %5969 = vmatmul.f32.gmra.mxu0 %v5922
        %v5970 = vpop.f32.mrf.mxu0
        %v5971 = vadd.f32 0.0, %v5970
        %5972 = vdwg.mxu0
        %5973 = vmatpush.msra.mxu0 0.0
        %5974 = vmatpush.msra.mxu0 0.0
        %5975 = vmatpush.msra.mxu0 0.0
        %5976 = vmatpush.msra.mxu0 %v5931
        %5977 = vmatpush.msra.mxu0 %v5917
        %5978 = vmatpush.msra.mxu0 %v5914
        %5979 = vmatpush.msra.mxu0 %v5911
        %5980 = vmatpush.msra.mxu0 %v5908
        %5981 = vmatpush.msra.mxu0 %v5905
        %5982 = vmatpush.msra.mxu0 %v5902
        %5983 = vmatpush.msra.mxu0 %v5899
        %5984 = vmatpush.msra.mxu0 %v5896
        %5985 = vmatpush.msra.mxu0 %v5893
        %5986 = vmatpush.msra.mxu0 %v5890
        %5987 = vmatpush.msra.mxu0 %v5887
        %5988 = vmatpush.msra.mxu0 %v5884
        %5989 = vmatmul.f32.gmra.mxu0 %v5922
        %v5990 = vpop.f32.mrf.mxu0
        %v5991 = vadd.f32 0.0, %v5990
        %5992 = vdwg.mxu0
        %v5994 = vsel %vm3545, %v5831, 0
        %v5997 = vsel %vm2689, %v5878, 0
        %v6000 = vsel %vm2689, %v5879, 0
        %v6003 = vsel %vm2689, %v5880, 0
        %6005 = vmatpush.msra.mxu0 0.0
        %6006 = vmatpush.msra.mxu0 0.0
        %6007 = vmatpush.msra.mxu0 0.0
        %6008 = vmatpush.msra.mxu0 %v5997
        %6009 = vmatpush.msra.mxu0 %v5875
        %6010 = vmatpush.msra.mxu0 %v5872
        %6011 = vmatpush.msra.mxu0 %v5869
        %6012 = vmatpush.msra.mxu0 %v5866
        %6013 = vmatpush.msra.mxu0 %v5863
        %6014 = vmatpush.msra.mxu0 %v5860
        %6015 = vmatpush.msra.mxu0 %v5857
        %6016 = vmatpush.msra.mxu0 %v5854
        %6017 = vmatpush.msra.mxu0 %v5851
        %6018 = vmatpush.msra.mxu0 %v5848
        %6019 = vmatpush.msra.mxu0 %v5845
        %6020 = vmatpush.msra.mxu0 %v5842
        %6021 = vmatmul.f32.gmra.mxu0 %v5994
        %v6022 = vpop.f32.mrf.mxu0
        %v6023 = vadd.f32 %v5951, %v6022
        %6024 = vdwg.mxu0
        %6025 = vmatpush.msra.mxu0 0.0
        %6026 = vmatpush.msra.mxu0 0.0
        %6027 = vmatpush.msra.mxu0 0.0
        %6028 = vmatpush.msra.mxu0 %v6000
        %6029 = vmatpush.msra.mxu0 %v5876
        %6030 = vmatpush.msra.mxu0 %v5873
        %6031 = vmatpush.msra.mxu0 %v5870
        %6032 = vmatpush.msra.mxu0 %v5867
        %6033 = vmatpush.msra.mxu0 %v5864
        %6034 = vmatpush.msra.mxu0 %v5861
        %6035 = vmatpush.msra.mxu0 %v5858
        %6036 = vmatpush.msra.mxu0 %v5855
        %6037 = vmatpush.msra.mxu0 %v5852
        %6038 = vmatpush.msra.mxu0 %v5849
        %6039 = vmatpush.msra.mxu0 %v5846
        %6040 = vmatpush.msra.mxu0 %v5843
        %6041 = vmatmul.f32.gmra.mxu0 %v5994
        %v6042 = vpop.f32.mrf.mxu0
        %v6043 = vadd.f32 %v5971, %v6042
        %6044 = vdwg.mxu0
        %6045 = vmatpush.msra.mxu0 0.0
        %6046 = vmatpush.msra.mxu0 0.0
        %6047 = vmatpush.msra.mxu0 0.0
        %6048 = vmatpush.msra.mxu0 %v6003
        %6049 = vmatpush.msra.mxu0 %v5877
        %6050 = vmatpush.msra.mxu0 %v5874
        %6051 = vmatpush.msra.mxu0 %v5871
        %6052 = vmatpush.msra.mxu0 %v5868
        %6053 = vmatpush.msra.mxu0 %v5865
        %6054 = vmatpush.msra.mxu0 %v5862
        %6055 = vmatpush.msra.mxu0 %v5859
        %6056 = vmatpush.msra.mxu0 %v5856
        %6057 = vmatpush.msra.mxu0 %v5853
        %6058 = vmatpush.msra.mxu0 %v5850
        %6059 = vmatpush.msra.mxu0 %v5847
        %6060 = vmatpush.msra.mxu0 %v5844
        %6061 = vmatmul.f32.gmra.mxu0 %v5994
        %v6062 = vpop.f32.mrf.mxu0
        %v6063 = vadd.f32 %v5991, %v6062
        %6064 = vdwg.mxu0
        %s6065 = scalar_lea.vmem [#allocation6], 624
        %v6066 = vld [vmem:[%s6065] sm:$0xff]
        %v6067 = vld [vmem:[%s6065 + $0x8] sm:$0xff]
        %v6068 = vld [vmem:[%s6065 + $0x10] sm:$0xff]
        %v6069 = vld [vmem:[%s6065 + $0x18] sm:$0xff]
        %v6070 = vld [vmem:[%s6065 + $0x20] sm:$0xff]
        %v6071 = vld [vmem:[%s6065 + $0x28] sm:$0xff]
        %v6072 = vld [vmem:[%s6065 + $0x30] sm:$0xff]
        %v6073 = vld [vmem:[%s6065 + $0x38] sm:$0xff]
        %v6074 = vld [vmem:[%s6065 + $0x40] sm:$0xff]
        %v6075 = vld [vmem:[%s6065 + $0x48] sm:$0xff]
        %v6076 = vld [vmem:[%s6065 + $0x50] sm:$0xff]
        %v6077 = vld [vmem:[%s6065 + $0x58] sm:$0xff]
        %v6078 = vld [vmem:[%s6065 + $0x60] sm:$0xff]
        %v6079 = vld [vmem:[%s6065 + $0x68] sm:$0xff]
        %v6080 = vld [vmem:[%s6065 + $0x70] sm:$0xff]
        %v6081 = vld [vmem:[%s6065 + $0x78] sm:$0xff]
        %v6082 = vld [vmem:[%s6065 + $0x80] sm:$0xff]
        %v6083 = vld [vmem:[%s6065 + $0x88] sm:$0xff]
        %v6084 = vld [vmem:[%s6065 + $0x90] sm:$0xff]
        %v6085 = vld [vmem:[%s6065 + $0x98] sm:$0xff]
        %v6086 = vld [vmem:[%s6065 + $0xa0] sm:$0xff]
        %v6087 = vld [vmem:[%s6065 + $0xa8] sm:$0xff]
        %v6088 = vld [vmem:[%s6065 + $0xb0] sm:$0xff]
        %v6089 = vld [vmem:[%s6065 + $0xb8] sm:$0xff]
        %v6090 = vld [vmem:[%s6065 + $0xc0] sm:$0xff]
        %v6091 = vld [vmem:[%s6065 + $0xc8] sm:$0xff]
        %v6092 = vld [vmem:[%s6065 + $0xd0] sm:$0xff]
        %v6093 = vld [vmem:[%s6065 + $0xd8] sm:$0xff]
        %v6094 = vld [vmem:[%s6065 + $0xe0] sm:$0xff]
        %v6095 = vld [vmem:[%s6065 + $0xe8] sm:$0xff]
        %v6096 = vld [vmem:[%s6065 + $0xf0] sm:$0xff]
        %v6097 = vld [vmem:[%s6065 + $0xf8] sm:$0xff]
        %v6098 = vld [vmem:[%s6065 + $0x100] sm:$0xff]
        %v6099 = vld [vmem:[%s6065 + $0x108] sm:$0xff]
        %v6100 = vld [vmem:[%s6065 + $0x110] sm:$0xff]
        %v6101 = vld [vmem:[%s6065 + $0x118] sm:$0xff]
        %v6102 = vld [vmem:[%s6065 + $0x120] sm:$0xf]
        %v6103 = vld [vmem:[%s6065 + $0x128] sm:$0xf]
        %v6104 = vld [vmem:[%s6065 + $0x130] sm:$0xf]
        %v6106 = vsel %vm3545, %v5837, 0
        %v6109 = vsel %vm2689, %v6102, 0
        %v6112 = vsel %vm2689, %v6103, 0
        %v6115 = vsel %vm2689, %v6104, 0
        %6117 = vmatpush.msra.mxu0 0.0
        %6118 = vmatpush.msra.mxu0 0.0
        %6119 = vmatpush.msra.mxu0 0.0
        %6120 = vmatpush.msra.mxu0 %v6109
        %6121 = vmatpush.msra.mxu0 %v6099
        %6122 = vmatpush.msra.mxu0 %v6096
        %6123 = vmatpush.msra.mxu0 %v6093
        %6124 = vmatpush.msra.mxu0 %v6090
        %6125 = vmatpush.msra.mxu0 %v6087
        %6126 = vmatpush.msra.mxu0 %v6084
        %6127 = vmatpush.msra.mxu0 %v6081
        %6128 = vmatpush.msra.mxu0 %v6078
        %6129 = vmatpush.msra.mxu0 %v6075
        %6130 = vmatpush.msra.mxu0 %v6072
        %6131 = vmatpush.msra.mxu0 %v6069
        %6132 = vmatpush.msra.mxu0 %v6066
        %6133 = vmatmul.f32.gmra.mxu0 %v6106
        %v6134 = vpop.f32.mrf.mxu0
        %v6135 = vadd.f32 0.0, %v6134
        %6136 = vdwg.mxu0
        %6137 = vmatpush.msra.mxu0 0.0
        %6138 = vmatpush.msra.mxu0 0.0
        %6139 = vmatpush.msra.mxu0 0.0
        %6140 = vmatpush.msra.mxu0 %v6112
        %6141 = vmatpush.msra.mxu0 %v6100
        %6142 = vmatpush.msra.mxu0 %v6097
        %6143 = vmatpush.msra.mxu0 %v6094
        %6144 = vmatpush.msra.mxu0 %v6091
        %6145 = vmatpush.msra.mxu0 %v6088
        %6146 = vmatpush.msra.mxu0 %v6085
        %6147 = vmatpush.msra.mxu0 %v6082
        %6148 = vmatpush.msra.mxu0 %v6079
        %6149 = vmatpush.msra.mxu0 %v6076
        %6150 = vmatpush.msra.mxu0 %v6073
        %6151 = vmatpush.msra.mxu0 %v6070
        %6152 = vmatpush.msra.mxu0 %v6067
        %6153 = vmatmul.f32.gmra.mxu0 %v6106
        %v6154 = vpop.f32.mrf.mxu0
        %v6155 = vadd.f32 0.0, %v6154
        %6156 = vdwg.mxu0
        %6157 = vmatpush.msra.mxu0 0.0
        %6158 = vmatpush.msra.mxu0 0.0
        %6159 = vmatpush.msra.mxu0 0.0
        %6160 = vmatpush.msra.mxu0 %v6115
        %6161 = vmatpush.msra.mxu0 %v6101
        %6162 = vmatpush.msra.mxu0 %v6098
        %6163 = vmatpush.msra.mxu0 %v6095
        %6164 = vmatpush.msra.mxu0 %v6092
        %6165 = vmatpush.msra.mxu0 %v6089
        %6166 = vmatpush.msra.mxu0 %v6086
        %6167 = vmatpush.msra.mxu0 %v6083
        %6168 = vmatpush.msra.mxu0 %v6080
        %6169 = vmatpush.msra.mxu0 %v6077
        %6170 = vmatpush.msra.mxu0 %v6074
        %6171 = vmatpush.msra.mxu0 %v6071
        %6172 = vmatpush.msra.mxu0 %v6068
        %6173 = vmatmul.f32.gmra.mxu0 %v6106
        %v6174 = vpop.f32.mrf.mxu0
        %v6175 = vadd.f32 0.0, %v6174
        %6176 = vdwg.mxu0
        %v6177 = vadd.f32 %v6023, %v6135
        %v6178 = vadd.f32 %v6043, %v6155
        %v6179 = vadd.f32 %v6063, %v6175
        %s6180 = scalar_lea.vmem [#allocation6], 936
        %v6181 = vld [vmem:[%s6180] sm:$0xff]
        %v6182 = vld [vmem:[%s6180 + $0x8] sm:$0xff]
        %v6183 = vld [vmem:[%s6180 + $0x10] sm:$0xff]
        %v6184 = vld [vmem:[%s6180 + $0x18] sm:$0xff]
        %v6185 = vld [vmem:[%s6180 + $0x20] sm:$0xff]
        %v6186 = vld [vmem:[%s6180 + $0x28] sm:$0xff]
        %v6187 = vld [vmem:[%s6180 + $0x30] sm:$0xff]
        %v6188 = vld [vmem:[%s6180 + $0x38] sm:$0xff]
        %v6189 = vld [vmem:[%s6180 + $0x40] sm:$0xff]
        %v6190 = vld [vmem:[%s6180 + $0x48] sm:$0xff]
        %v6191 = vld [vmem:[%s6180 + $0x50] sm:$0xff]
        %v6192 = vld [vmem:[%s6180 + $0x58] sm:$0xff]
        %v6193 = vld [vmem:[%s6180 + $0x60] sm:$0xff]
        %v6194 = vld [vmem:[%s6180 + $0x68] sm:$0xff]
        %v6195 = vld [vmem:[%s6180 + $0x70] sm:$0xff]
        %v6196 = vld [vmem:[%s6180 + $0x78] sm:$0xff]
        %v6197 = vld [vmem:[%s6180 + $0x80] sm:$0xff]
        %v6198 = vld [vmem:[%s6180 + $0x88] sm:$0xff]
        %v6199 = vld [vmem:[%s6180 + $0x90] sm:$0xff]
        %v6200 = vld [vmem:[%s6180 + $0x98] sm:$0xff]
        %v6201 = vld [vmem:[%s6180 + $0xa0] sm:$0xff]
        %v6202 = vld [vmem:[%s6180 + $0xa8] sm:$0xff]
        %v6203 = vld [vmem:[%s6180 + $0xb0] sm:$0xff]
        %v6204 = vld [vmem:[%s6180 + $0xb8] sm:$0xff]
        %v6205 = vld [vmem:[%s6180 + $0xc0] sm:$0xff]
        %v6206 = vld [vmem:[%s6180 + $0xc8] sm:$0xff]
        %v6207 = vld [vmem:[%s6180 + $0xd0] sm:$0xff]
        %v6208 = vld [vmem:[%s6180 + $0xd8] sm:$0xff]
        %v6209 = vld [vmem:[%s6180 + $0xe0] sm:$0xff]
        %v6210 = vld [vmem:[%s6180 + $0xe8] sm:$0xff]
        %v6211 = vld [vmem:[%s6180 + $0xf0] sm:$0xff]
        %v6212 = vld [vmem:[%s6180 + $0xf8] sm:$0xff]
        %v6213 = vld [vmem:[%s6180 + $0x100] sm:$0xff]
        %v6214 = vld [vmem:[%s6180 + $0x108] sm:$0xff]
        %v6215 = vld [vmem:[%s6180 + $0x110] sm:$0xff]
        %v6216 = vld [vmem:[%s6180 + $0x118] sm:$0xff]
        %v6217 = vld [vmem:[%s6180 + $0x120] sm:$0xf]
        %v6218 = vld [vmem:[%s6180 + $0x128] sm:$0xf]
        %v6219 = vld [vmem:[%s6180 + $0x130] sm:$0xf]
        %v6221 = vsel %vm3545, %v5840, 0
        %v6224 = vsel %vm2689, %v6217, 0
        %v6227 = vsel %vm2689, %v6218, 0
        %v6230 = vsel %vm2689, %v6219, 0
        %6232 = vmatpush.msra.mxu0 0.0
        %6233 = vmatpush.msra.mxu0 0.0
        %6234 = vmatpush.msra.mxu0 0.0
        %6235 = vmatpush.msra.mxu0 %v6224
        %6236 = vmatpush.msra.mxu0 %v6214
        %6237 = vmatpush.msra.mxu0 %v6211
        %6238 = vmatpush.msra.mxu0 %v6208
        %6239 = vmatpush.msra.mxu0 %v6205
        %6240 = vmatpush.msra.mxu0 %v6202
        %6241 = vmatpush.msra.mxu0 %v6199
        %6242 = vmatpush.msra.mxu0 %v6196
        %6243 = vmatpush.msra.mxu0 %v6193
        %6244 = vmatpush.msra.mxu0 %v6190
        %6245 = vmatpush.msra.mxu0 %v6187
        %6246 = vmatpush.msra.mxu0 %v6184
        %6247 = vmatpush.msra.mxu0 %v6181
        %6248 = vmatmul.f32.gmra.mxu0 %v6221
        %v6249 = vpop.f32.mrf.mxu0
        %v6250 = vadd.f32 0.0, %v6249
        %6251 = vdwg.mxu0
        %6252 = vmatpush.msra.mxu0 0.0
        %6253 = vmatpush.msra.mxu0 0.0
        %6254 = vmatpush.msra.mxu0 0.0
        %6255 = vmatpush.msra.mxu0 %v6227
        %6256 = vmatpush.msra.mxu0 %v6215
        %6257 = vmatpush.msra.mxu0 %v6212
        %6258 = vmatpush.msra.mxu0 %v6209
        %6259 = vmatpush.msra.mxu0 %v6206
        %6260 = vmatpush.msra.mxu0 %v6203
        %6261 = vmatpush.msra.mxu0 %v6200
        %6262 = vmatpush.msra.mxu0 %v6197
        %6263 = vmatpush.msra.mxu0 %v6194
        %6264 = vmatpush.msra.mxu0 %v6191
        %6265 = vmatpush.msra.mxu0 %v6188
        %6266 = vmatpush.msra.mxu0 %v6185
        %6267 = vmatpush.msra.mxu0 %v6182
        %6268 = vmatmul.f32.gmra.mxu0 %v6221
        %v6269 = vpop.f32.mrf.mxu0
        %v6270 = vadd.f32 0.0, %v6269
        %6271 = vdwg.mxu0
        %6272 = vmatpush.msra.mxu0 0.0
        %6273 = vmatpush.msra.mxu0 0.0
        %6274 = vmatpush.msra.mxu0 0.0
        %6275 = vmatpush.msra.mxu0 %v6230
        %6276 = vmatpush.msra.mxu0 %v6216
        %6277 = vmatpush.msra.mxu0 %v6213
        %6278 = vmatpush.msra.mxu0 %v6210
        %6279 = vmatpush.msra.mxu0 %v6207
        %6280 = vmatpush.msra.mxu0 %v6204
        %6281 = vmatpush.msra.mxu0 %v6201
        %6282 = vmatpush.msra.mxu0 %v6198
        %6283 = vmatpush.msra.mxu0 %v6195
        %6284 = vmatpush.msra.mxu0 %v6192
        %6285 = vmatpush.msra.mxu0 %v6189
        %6286 = vmatpush.msra.mxu0 %v6186
        %6287 = vmatpush.msra.mxu0 %v6183
        %6288 = vmatmul.f32.gmra.mxu0 %v6221
        %v6289 = vpop.f32.mrf.mxu0
        %v6290 = vadd.f32 0.0, %v6289
        %6291 = vdwg.mxu0
        %v6292 = vadd.f32 %v6177, %v6250
        %v6293 = vadd.f32 %v6178, %v6270
        %v6294 = vadd.f32 %v6179, %v6290
        %v6295 = vld [vmem:[%s43] sm:$0xff]
        %6297 = vset.pattern.permute.xlu0 0
        %6298 = vperm.xlu0 %6297, %v6295
        %v6299 = vpop.permute.xlu0 %6298
        %v6301 = vadd.f32 %v6292, %v6299
        %v6302 = vadd.f32 %v6293, %v6299
        %v6303 = vadd.f32 %v6294, %v6299
        %v6304 = vld [vmem:[%s63] sm:$0x7]
        %v6306 = vperm.slane %v6304, 0
        %v6307 = vperm.slane %v6304, 1
        %v6308 = vperm.slane %v6304, 2
        %v6312 = vmul.f32 %v6301, %v6306
        %v6313 = vmul.f32 %v6302, %v6307
        %v6314 = vmul.f32 %v6303, %v6308
        %6318 = vrot.lane.b32.xlu0 %v6312, 19
        %v6319 = vpop.permute.xlu0 %6318
        %6320 = vrot.lane.b32.xlu0 %v6313, 19
        %v6321 = vpop.permute.xlu0 %6320
        %6322 = vrot.lane.b32.xlu0 %v6314, 19
        %v6323 = vpop.permute.xlu0 %6322
        %v6324 = vsel %vm1060, %v6319, %v6321
        %v6325 = vsel %vm1060, %v6321, %v6323
        %6329 = vst.msk [vmem:[#allocation2] sm:$0xff] %vm1103, %v6319
        %6330 = vst [vmem:[#allocation2 + $0x8] sm:$0xff] %v6324
        %6331 = vst.msk [vmem:[#allocation2 + $0x10] sm:$0xff] %vm1106, %v6325
        %v6332 = vld [vmem:[#allocation2] sm:$0xff]
        %v6333 = vld [vmem:[#allocation2 + $0x8] sm:$0xff]
        %v6334 = vld [vmem:[#allocation2 + $0x10] sm:$0xff]
        %v6335 = vld [vmem:[#allocation2 + $0x18] sm:$0xff]
        %v6336 = vld [vmem:[#allocation2 + $0x20] sm:$0xff]
        %v6337 = vld [vmem:[#allocation2 + $0x28] sm:$0xff]
        %v6338 = vld [vmem:[%s47] sm:$0xff]
        %s6339 = scalar_lea.vmem %s47, 8
        %v6340 = vld [vmem:[%s6339] sm:$0xff]
        %6347 = vrot.lane.b32.xlu0 %v6332, 127
        %v6348 = vpop.permute.xlu0 %6347
        %6349 = vrot.lane.b32.xlu0 %v6333, 127
        %v6350 = vpop.permute.xlu0 %6349
        %6351 = vrot.lane.b32.xlu0 %v6334, 127
        %v6352 = vpop.permute.xlu0 %6351
        %6353 = vrot.lane.b32.xlu0 %v6335, 127
        %v6354 = vpop.permute.xlu0 %6353
        %6355 = vrot.lane.b32.xlu0 %v6336, 127
        %v6356 = vpop.permute.xlu0 %6355
        %6357 = vrot.lane.b32.xlu0 %v6337, 127
        %v6358 = vpop.permute.xlu0 %6357
        %v6359 = vsel %vm1123, %v6348, %v6350
        %v6360 = vsel %vm1123, %v6350, %v6352
        %v6361 = vsel %vm1123, %v6354, %v6356
        %v6362 = vsel %vm1123, %v6356, %v6358
        %v6370 = vsel %vm3133, %v6340, 0
        %6372 = vmatpush.msra.mxu0 0.0
        %6373 = vmatpush.msra.mxu0 0.0
        %6374 = vmatpush.msra.mxu0 0.0
        %6375 = vmatpush.msra.mxu0 0.0
        %6376 = vmatpush.msra.mxu0 0.0
        %6377 = vmatpush.msra.mxu0 0.0
        %6378 = vmatpush.msra.mxu0 0.0
        %6379 = vmatpush.msra.mxu0 0.0
        %6380 = vmatpush.msra.mxu0 0.0
        %6381 = vmatpush.msra.mxu0 0.0
        %6382 = vmatpush.msra.mxu0 0.0
        %6383 = vmatpush.msra.mxu0 0.0
        %6384 = vmatpush.msra.mxu0 0.0
        %6385 = vmatpush.msra.mxu0 0.0
        %6386 = vmatpush.msra.mxu0 %v6361
        %6387 = vmatpush.msra.mxu0 %v6359
        %6388 = vmatmul.f32.gmra.mxu0 %v6370
        %v6389 = vpop.f32.mrf.mxu0
        %v6390 = vadd.f32 0.0, %v6389
        %6391 = vdwg.mxu0
        %6392 = vmatpush.msra.mxu0 0.0
        %6393 = vmatpush.msra.mxu0 0.0
        %6394 = vmatpush.msra.mxu0 0.0
        %6395 = vmatpush.msra.mxu0 0.0
        %6396 = vmatpush.msra.mxu0 0.0
        %6397 = vmatpush.msra.mxu0 0.0
        %6398 = vmatpush.msra.mxu0 0.0
        %6399 = vmatpush.msra.mxu0 0.0
        %6400 = vmatpush.msra.mxu0 0.0
        %6401 = vmatpush.msra.mxu0 0.0
        %6402 = vmatpush.msra.mxu0 0.0
        %6403 = vmatpush.msra.mxu0 0.0
        %6404 = vmatpush.msra.mxu0 0.0
        %6405 = vmatpush.msra.mxu0 0.0
        %6406 = vmatpush.msra.mxu0 %v6362
        %6407 = vmatpush.msra.mxu0 %v6360
        %6408 = vmatmul.f32.gmra.mxu0 %v6370
        %v6409 = vpop.f32.mrf.mxu0
        %v6410 = vadd.f32 0.0, %v6409
        %6411 = vdwg.mxu0
        %6412 = vmatpush.msra.mxu0 0.0
        %6413 = vmatpush.msra.mxu0 0.0
        %6414 = vmatpush.msra.mxu0 0.0
        %6415 = vmatpush.msra.mxu0 0.0
        %6416 = vmatpush.msra.mxu0 0.0
        %6417 = vmatpush.msra.mxu0 0.0
        %6418 = vmatpush.msra.mxu0 0.0
        %6419 = vmatpush.msra.mxu0 0.0
        %6420 = vmatpush.msra.mxu0 0.0
        %6421 = vmatpush.msra.mxu0 0.0
        %6422 = vmatpush.msra.mxu0 0.0
        %6423 = vmatpush.msra.mxu0 0.0
        %6424 = vmatpush.msra.mxu0 0.0
        %6425 = vmatpush.msra.mxu0 0.0
        %6426 = vmatpush.msra.mxu0 %v6358
        %6427 = vmatpush.msra.mxu0 %v6352
        %6428 = vmatmul.f32.gmra.mxu0 %v6370
        %v6429 = vpop.f32.mrf.mxu0
        %v6430 = vadd.f32 0.0, %v6429
        %6431 = vdwg.mxu0
        %v6433 = vsel %vm3133, %v6338, 0
        %6435 = vmatpush.msra.mxu0 0.0
        %6436 = vmatpush.msra.mxu0 0.0
        %6437 = vmatpush.msra.mxu0 0.0
        %6438 = vmatpush.msra.mxu0 0.0
        %6439 = vmatpush.msra.mxu0 0.0
        %6440 = vmatpush.msra.mxu0 0.0
        %6441 = vmatpush.msra.mxu0 0.0
        %6442 = vmatpush.msra.mxu0 0.0
        %6443 = vmatpush.msra.mxu0 0.0
        %6444 = vmatpush.msra.mxu0 0.0
        %6445 = vmatpush.msra.mxu0 0.0
        %6446 = vmatpush.msra.mxu0 0.0
        %6447 = vmatpush.msra.mxu0 0.0
        %6448 = vmatpush.msra.mxu0 0.0
        %6449 = vmatpush.msra.mxu0 %v6335
        %6450 = vmatpush.msra.mxu0 %v6332
        %6451 = vmatmul.f32.gmra.mxu0 %v6433
        %v6452 = vpop.f32.mrf.mxu0
        %v6453 = vadd.f32 %v6390, %v6452
        %6454 = vdwg.mxu0
        %6455 = vmatpush.msra.mxu0 0.0
        %6456 = vmatpush.msra.mxu0 0.0
        %6457 = vmatpush.msra.mxu0 0.0
        %6458 = vmatpush.msra.mxu0 0.0
        %6459 = vmatpush.msra.mxu0 0.0
        %6460 = vmatpush.msra.mxu0 0.0
        %6461 = vmatpush.msra.mxu0 0.0
        %6462 = vmatpush.msra.mxu0 0.0
        %6463 = vmatpush.msra.mxu0 0.0
        %6464 = vmatpush.msra.mxu0 0.0
        %6465 = vmatpush.msra.mxu0 0.0
        %6466 = vmatpush.msra.mxu0 0.0
        %6467 = vmatpush.msra.mxu0 0.0
        %6468 = vmatpush.msra.mxu0 0.0
        %6469 = vmatpush.msra.mxu0 %v6336
        %6470 = vmatpush.msra.mxu0 %v6333
        %6471 = vmatmul.f32.gmra.mxu0 %v6433
        %v6472 = vpop.f32.mrf.mxu0
        %v6473 = vadd.f32 %v6410, %v6472
        %6474 = vdwg.mxu0
        %6475 = vmatpush.msra.mxu0 0.0
        %6476 = vmatpush.msra.mxu0 0.0
        %6477 = vmatpush.msra.mxu0 0.0
        %6478 = vmatpush.msra.mxu0 0.0
        %6479 = vmatpush.msra.mxu0 0.0
        %6480 = vmatpush.msra.mxu0 0.0
        %6481 = vmatpush.msra.mxu0 0.0
        %6482 = vmatpush.msra.mxu0 0.0
        %6483 = vmatpush.msra.mxu0 0.0
        %6484 = vmatpush.msra.mxu0 0.0
        %6485 = vmatpush.msra.mxu0 0.0
        %6486 = vmatpush.msra.mxu0 0.0
        %6487 = vmatpush.msra.mxu0 0.0
        %6488 = vmatpush.msra.mxu0 0.0
        %6489 = vmatpush.msra.mxu0 %v6337
        %6490 = vmatpush.msra.mxu0 %v6334
        %6491 = vmatmul.f32.gmra.mxu0 %v6433
        %v6492 = vpop.f32.mrf.mxu0
        %v6493 = vadd.f32 %v6430, %v6492
        %6494 = vdwg.mxu0
        %s6495 = scalar_lea.vmem %s47, 16
        %v6496 = vld [vmem:[%s6495] sm:$0xff]
        %6497 = vrot.lane.b32.xlu0 %v6332, 126
        %v6498 = vpop.permute.xlu0 %6497
        %6499 = vrot.lane.b32.xlu0 %v6333, 126
        %v6500 = vpop.permute.xlu0 %6499
        %6501 = vrot.lane.b32.xlu0 %v6334, 126
        %v6502 = vpop.permute.xlu0 %6501
        %6503 = vrot.lane.b32.xlu0 %v6335, 126
        %v6504 = vpop.permute.xlu0 %6503
        %6505 = vrot.lane.b32.xlu0 %v6336, 126
        %v6506 = vpop.permute.xlu0 %6505
        %6507 = vrot.lane.b32.xlu0 %v6337, 126
        %v6508 = vpop.permute.xlu0 %6507
        %v6509 = vsel %vm1264, %v6498, %v6500
        %v6510 = vsel %vm1264, %v6500, %v6502
        %v6511 = vsel %vm1264, %v6504, %v6506
        %v6512 = vsel %vm1264, %v6506, %v6508
        %v6520 = vsel %vm3133, %v6496, 0
        %6522 = vmatpush.msra.mxu0 0.0
        %6523 = vmatpush.msra.mxu0 0.0
        %6524 = vmatpush.msra.mxu0 0.0
        %6525 = vmatpush.msra.mxu0 0.0
        %6526 = vmatpush.msra.mxu0 0.0
        %6527 = vmatpush.msra.mxu0 0.0
        %6528 = vmatpush.msra.mxu0 0.0
        %6529 = vmatpush.msra.mxu0 0.0
        %6530 = vmatpush.msra.mxu0 0.0
        %6531 = vmatpush.msra.mxu0 0.0
        %6532 = vmatpush.msra.mxu0 0.0
        %6533 = vmatpush.msra.mxu0 0.0
        %6534 = vmatpush.msra.mxu0 0.0
        %6535 = vmatpush.msra.mxu0 0.0
        %6536 = vmatpush.msra.mxu0 %v6511
        %6537 = vmatpush.msra.mxu0 %v6509
        %6538 = vmatmul.f32.gmra.mxu0 %v6520
        %v6539 = vpop.f32.mrf.mxu0
        %v6540 = vadd.f32 0.0, %v6539
        %6541 = vdwg.mxu0
        %6542 = vmatpush.msra.mxu0 0.0
        %6543 = vmatpush.msra.mxu0 0.0
        %6544 = vmatpush.msra.mxu0 0.0
        %6545 = vmatpush.msra.mxu0 0.0
        %6546 = vmatpush.msra.mxu0 0.0
        %6547 = vmatpush.msra.mxu0 0.0
        %6548 = vmatpush.msra.mxu0 0.0
        %6549 = vmatpush.msra.mxu0 0.0
        %6550 = vmatpush.msra.mxu0 0.0
        %6551 = vmatpush.msra.mxu0 0.0
        %6552 = vmatpush.msra.mxu0 0.0
        %6553 = vmatpush.msra.mxu0 0.0
        %6554 = vmatpush.msra.mxu0 0.0
        %6555 = vmatpush.msra.mxu0 0.0
        %6556 = vmatpush.msra.mxu0 %v6512
        %6557 = vmatpush.msra.mxu0 %v6510
        %6558 = vmatmul.f32.gmra.mxu0 %v6520
        %v6559 = vpop.f32.mrf.mxu0
        %v6560 = vadd.f32 0.0, %v6559
        %6561 = vdwg.mxu0
        %6562 = vmatpush.msra.mxu0 0.0
        %6563 = vmatpush.msra.mxu0 0.0
        %6564 = vmatpush.msra.mxu0 0.0
        %6565 = vmatpush.msra.mxu0 0.0
        %6566 = vmatpush.msra.mxu0 0.0
        %6567 = vmatpush.msra.mxu0 0.0
        %6568 = vmatpush.msra.mxu0 0.0
        %6569 = vmatpush.msra.mxu0 0.0
        %6570 = vmatpush.msra.mxu0 0.0
        %6571 = vmatpush.msra.mxu0 0.0
        %6572 = vmatpush.msra.mxu0 0.0
        %6573 = vmatpush.msra.mxu0 0.0
        %6574 = vmatpush.msra.mxu0 0.0
        %6575 = vmatpush.msra.mxu0 0.0
        %6576 = vmatpush.msra.mxu0 %v6508
        %6577 = vmatpush.msra.mxu0 %v6502
        %6578 = vmatmul.f32.gmra.mxu0 %v6520
        %v6579 = vpop.f32.mrf.mxu0
        %v6580 = vadd.f32 0.0, %v6579
        %6581 = vdwg.mxu0
        %v6582 = vadd.f32 %v6453, %v6540
        %v6583 = vadd.f32 %v6473, %v6560
        %v6584 = vadd.f32 %v6493, %v6580
        %s6585 = scalar_lea.vmem %s47, 24
        %v6586 = vld [vmem:[%s6585] sm:$0xff]
        %6587 = vrot.lane.b32.xlu0 %v6332, 110
        %v6588 = vpop.permute.xlu0 %6587
        %6589 = vrot.lane.b32.xlu0 %v6333, 110
        %v6590 = vpop.permute.xlu0 %6589
        %6591 = vrot.lane.b32.xlu0 %v6334, 110
        %v6592 = vpop.permute.xlu0 %6591
        %6593 = vrot.lane.b32.xlu0 %v6335, 110
        %v6594 = vpop.permute.xlu0 %6593
        %6595 = vrot.lane.b32.xlu0 %v6336, 110
        %v6596 = vpop.permute.xlu0 %6595
        %6597 = vrot.lane.b32.xlu0 %v6337, 110
        %v6598 = vpop.permute.xlu0 %6597
        %v6599 = vsel %vm1344, %v6588, %v6590
        %v6600 = vsel %vm1344, %v6590, %v6592
        %v6601 = vsel %vm1344, %v6594, %v6596
        %v6602 = vsel %vm1344, %v6596, %v6598
        %v6610 = vsel %vm3133, %v6586, 0
        %6612 = vmatpush.msra.mxu0 0.0
        %6613 = vmatpush.msra.mxu0 0.0
        %6614 = vmatpush.msra.mxu0 0.0
        %6615 = vmatpush.msra.mxu0 0.0
        %6616 = vmatpush.msra.mxu0 0.0
        %6617 = vmatpush.msra.mxu0 0.0
        %6618 = vmatpush.msra.mxu0 0.0
        %6619 = vmatpush.msra.mxu0 0.0
        %6620 = vmatpush.msra.mxu0 0.0
        %6621 = vmatpush.msra.mxu0 0.0
        %6622 = vmatpush.msra.mxu0 0.0
        %6623 = vmatpush.msra.mxu0 0.0
        %6624 = vmatpush.msra.mxu0 0.0
        %6625 = vmatpush.msra.mxu0 0.0
        %6626 = vmatpush.msra.mxu0 %v6601
        %6627 = vmatpush.msra.mxu0 %v6599
        %6628 = vmatmul.f32.gmra.mxu0 %v6610
        %v6629 = vpop.f32.mrf.mxu0
        %v6630 = vadd.f32 0.0, %v6629
        %6631 = vdwg.mxu0
        %6632 = vmatpush.msra.mxu0 0.0
        %6633 = vmatpush.msra.mxu0 0.0
        %6634 = vmatpush.msra.mxu0 0.0
        %6635 = vmatpush.msra.mxu0 0.0
        %6636 = vmatpush.msra.mxu0 0.0
        %6637 = vmatpush.msra.mxu0 0.0
        %6638 = vmatpush.msra.mxu0 0.0
        %6639 = vmatpush.msra.mxu0 0.0
        %6640 = vmatpush.msra.mxu0 0.0
        %6641 = vmatpush.msra.mxu0 0.0
        %6642 = vmatpush.msra.mxu0 0.0
        %6643 = vmatpush.msra.mxu0 0.0
        %6644 = vmatpush.msra.mxu0 0.0
        %6645 = vmatpush.msra.mxu0 0.0
        %6646 = vmatpush.msra.mxu0 %v6602
        %6647 = vmatpush.msra.mxu0 %v6600
        %6648 = vmatmul.f32.gmra.mxu0 %v6610
        %v6649 = vpop.f32.mrf.mxu0
        %v6650 = vadd.f32 0.0, %v6649
        %6651 = vdwg.mxu0
        %6652 = vmatpush.msra.mxu0 0.0
        %6653 = vmatpush.msra.mxu0 0.0
        %6654 = vmatpush.msra.mxu0 0.0
        %6655 = vmatpush.msra.mxu0 0.0
        %6656 = vmatpush.msra.mxu0 0.0
        %6657 = vmatpush.msra.mxu0 0.0
        %6658 = vmatpush.msra.mxu0 0.0
        %6659 = vmatpush.msra.mxu0 0.0
        %6660 = vmatpush.msra.mxu0 0.0
        %6661 = vmatpush.msra.mxu0 0.0
        %6662 = vmatpush.msra.mxu0 0.0
        %6663 = vmatpush.msra.mxu0 0.0
        %6664 = vmatpush.msra.mxu0 0.0
        %6665 = vmatpush.msra.mxu0 0.0
        %6666 = vmatpush.msra.mxu0 %v6598
        %6667 = vmatpush.msra.mxu0 %v6592
        %6668 = vmatmul.f32.gmra.mxu0 %v6610
        %v6669 = vpop.f32.mrf.mxu0
        %v6670 = vadd.f32 0.0, %v6669
        %6671 = vdwg.mxu0
        %v6672 = vadd.f32 %v6582, %v6630
        %v6673 = vadd.f32 %v6583, %v6650
        %v6674 = vadd.f32 %v6584, %v6670
        %s6675 = scalar_lea.vmem %s47, 32
        %v6676 = vld [vmem:[%s6675] sm:$0xff]
        %6677 = vrot.lane.b32.xlu0 %v6332, 109
        %v6678 = vpop.permute.xlu0 %6677
        %6679 = vrot.lane.b32.xlu0 %v6333, 109
        %v6680 = vpop.permute.xlu0 %6679
        %6681 = vrot.lane.b32.xlu0 %v6334, 109
        %v6682 = vpop.permute.xlu0 %6681
        %6683 = vrot.lane.b32.xlu0 %v6335, 109
        %v6684 = vpop.permute.xlu0 %6683
        %6685 = vrot.lane.b32.xlu0 %v6336, 109
        %v6686 = vpop.permute.xlu0 %6685
        %6687 = vrot.lane.b32.xlu0 %v6337, 109
        %v6688 = vpop.permute.xlu0 %6687
        %v6689 = vsel %vm1424, %v6678, %v6680
        %v6690 = vsel %vm1424, %v6680, %v6682
        %v6691 = vsel %vm1424, %v6684, %v6686
        %v6692 = vsel %vm1424, %v6686, %v6688
        %v6700 = vsel %vm3133, %v6676, 0
        %6702 = vmatpush.msra.mxu0 0.0
        %6703 = vmatpush.msra.mxu0 0.0
        %6704 = vmatpush.msra.mxu0 0.0
        %6705 = vmatpush.msra.mxu0 0.0
        %6706 = vmatpush.msra.mxu0 0.0
        %6707 = vmatpush.msra.mxu0 0.0
        %6708 = vmatpush.msra.mxu0 0.0
        %6709 = vmatpush.msra.mxu0 0.0
        %6710 = vmatpush.msra.mxu0 0.0
        %6711 = vmatpush.msra.mxu0 0.0
        %6712 = vmatpush.msra.mxu0 0.0
        %6713 = vmatpush.msra.mxu0 0.0
        %6714 = vmatpush.msra.mxu0 0.0
        %6715 = vmatpush.msra.mxu0 0.0
        %6716 = vmatpush.msra.mxu0 %v6691
        %6717 = vmatpush.msra.mxu0 %v6689
        %6718 = vmatmul.f32.gmra.mxu0 %v6700
        %v6719 = vpop.f32.mrf.mxu0
        %v6720 = vadd.f32 0.0, %v6719
        %6721 = vdwg.mxu0
        %6722 = vmatpush.msra.mxu0 0.0
        %6723 = vmatpush.msra.mxu0 0.0
        %6724 = vmatpush.msra.mxu0 0.0
        %6725 = vmatpush.msra.mxu0 0.0
        %6726 = vmatpush.msra.mxu0 0.0
        %6727 = vmatpush.msra.mxu0 0.0
        %6728 = vmatpush.msra.mxu0 0.0
        %6729 = vmatpush.msra.mxu0 0.0
        %6730 = vmatpush.msra.mxu0 0.0
        %6731 = vmatpush.msra.mxu0 0.0
        %6732 = vmatpush.msra.mxu0 0.0
        %6733 = vmatpush.msra.mxu0 0.0
        %6734 = vmatpush.msra.mxu0 0.0
        %6735 = vmatpush.msra.mxu0 0.0
        %6736 = vmatpush.msra.mxu0 %v6692
        %6737 = vmatpush.msra.mxu0 %v6690
        %6738 = vmatmul.f32.gmra.mxu0 %v6700
        %v6739 = vpop.f32.mrf.mxu0
        %v6740 = vadd.f32 0.0, %v6739
        %6741 = vdwg.mxu0
        %6742 = vmatpush.msra.mxu0 0.0
        %6743 = vmatpush.msra.mxu0 0.0
        %6744 = vmatpush.msra.mxu0 0.0
        %6745 = vmatpush.msra.mxu0 0.0
        %6746 = vmatpush.msra.mxu0 0.0
        %6747 = vmatpush.msra.mxu0 0.0
        %6748 = vmatpush.msra.mxu0 0.0
        %6749 = vmatpush.msra.mxu0 0.0
        %6750 = vmatpush.msra.mxu0 0.0
        %6751 = vmatpush.msra.mxu0 0.0
        %6752 = vmatpush.msra.mxu0 0.0
        %6753 = vmatpush.msra.mxu0 0.0
        %6754 = vmatpush.msra.mxu0 0.0
        %6755 = vmatpush.msra.mxu0 0.0
        %6756 = vmatpush.msra.mxu0 %v6688
        %6757 = vmatpush.msra.mxu0 %v6682
        %6758 = vmatmul.f32.gmra.mxu0 %v6700
        %v6759 = vpop.f32.mrf.mxu0
        %v6760 = vadd.f32 0.0, %v6759
        %6761 = vdwg.mxu0
        %v6762 = vadd.f32 %v6672, %v6720
        %v6763 = vadd.f32 %v6673, %v6740
        %v6764 = vadd.f32 %v6674, %v6760
        %s6765 = scalar_lea.vmem %s47, 40
        %v6766 = vld [vmem:[%s6765] sm:$0xff]
        %6767 = vrot.lane.b32.xlu0 %v6332, 108
        %v6768 = vpop.permute.xlu0 %6767
        %6769 = vrot.lane.b32.xlu0 %v6333, 108
        %v6770 = vpop.permute.xlu0 %6769
        %6771 = vrot.lane.b32.xlu0 %v6334, 108
        %v6772 = vpop.permute.xlu0 %6771
        %6773 = vrot.lane.b32.xlu0 %v6335, 108
        %v6774 = vpop.permute.xlu0 %6773
        %6775 = vrot.lane.b32.xlu0 %v6336, 108
        %v6776 = vpop.permute.xlu0 %6775
        %6777 = vrot.lane.b32.xlu0 %v6337, 108
        %v6778 = vpop.permute.xlu0 %6777
        %v6779 = vsel %vm1504, %v6768, %v6770
        %v6780 = vsel %vm1504, %v6770, %v6772
        %v6781 = vsel %vm1504, %v6774, %v6776
        %v6782 = vsel %vm1504, %v6776, %v6778
        %v6790 = vsel %vm3133, %v6766, 0
        %6792 = vmatpush.msra.mxu0 0.0
        %6793 = vmatpush.msra.mxu0 0.0
        %6794 = vmatpush.msra.mxu0 0.0
        %6795 = vmatpush.msra.mxu0 0.0
        %6796 = vmatpush.msra.mxu0 0.0
        %6797 = vmatpush.msra.mxu0 0.0
        %6798 = vmatpush.msra.mxu0 0.0
        %6799 = vmatpush.msra.mxu0 0.0
        %6800 = vmatpush.msra.mxu0 0.0
        %6801 = vmatpush.msra.mxu0 0.0
        %6802 = vmatpush.msra.mxu0 0.0
        %6803 = vmatpush.msra.mxu0 0.0
        %6804 = vmatpush.msra.mxu0 0.0
        %6805 = vmatpush.msra.mxu0 0.0
        %6806 = vmatpush.msra.mxu0 %v6781
        %6807 = vmatpush.msra.mxu0 %v6779
        %6808 = vmatmul.f32.gmra.mxu0 %v6790
        %v6809 = vpop.f32.mrf.mxu0
        %v6810 = vadd.f32 0.0, %v6809
        %6811 = vdwg.mxu0
        %6812 = vmatpush.msra.mxu0 0.0
        %6813 = vmatpush.msra.mxu0 0.0
        %6814 = vmatpush.msra.mxu0 0.0
        %6815 = vmatpush.msra.mxu0 0.0
        %6816 = vmatpush.msra.mxu0 0.0
        %6817 = vmatpush.msra.mxu0 0.0
        %6818 = vmatpush.msra.mxu0 0.0
        %6819 = vmatpush.msra.mxu0 0.0
        %6820 = vmatpush.msra.mxu0 0.0
        %6821 = vmatpush.msra.mxu0 0.0
        %6822 = vmatpush.msra.mxu0 0.0
        %6823 = vmatpush.msra.mxu0 0.0
        %6824 = vmatpush.msra.mxu0 0.0
        %6825 = vmatpush.msra.mxu0 0.0
        %6826 = vmatpush.msra.mxu0 %v6782
        %6827 = vmatpush.msra.mxu0 %v6780
        %6828 = vmatmul.f32.gmra.mxu0 %v6790
        %v6829 = vpop.f32.mrf.mxu0
        %v6830 = vadd.f32 0.0, %v6829
        %6831 = vdwg.mxu0
        %6832 = vmatpush.msra.mxu0 0.0
        %6833 = vmatpush.msra.mxu0 0.0
        %6834 = vmatpush.msra.mxu0 0.0
        %6835 = vmatpush.msra.mxu0 0.0
        %6836 = vmatpush.msra.mxu0 0.0
        %6837 = vmatpush.msra.mxu0 0.0
        %6838 = vmatpush.msra.mxu0 0.0
        %6839 = vmatpush.msra.mxu0 0.0
        %6840 = vmatpush.msra.mxu0 0.0
        %6841 = vmatpush.msra.mxu0 0.0
        %6842 = vmatpush.msra.mxu0 0.0
        %6843 = vmatpush.msra.mxu0 0.0
        %6844 = vmatpush.msra.mxu0 0.0
        %6845 = vmatpush.msra.mxu0 0.0
        %6846 = vmatpush.msra.mxu0 %v6778
        %6847 = vmatpush.msra.mxu0 %v6772
        %6848 = vmatmul.f32.gmra.mxu0 %v6790
        %v6849 = vpop.f32.mrf.mxu0
        %v6850 = vadd.f32 0.0, %v6849
        %6851 = vdwg.mxu0
        %v6852 = vadd.f32 %v6762, %v6810
        %v6853 = vadd.f32 %v6763, %v6830
        %v6854 = vadd.f32 %v6764, %v6850
        %s6855 = scalar_lea.vmem %s47, 48
        %v6856 = vld [vmem:[%s6855] sm:$0xff]
        %6857 = vrot.lane.b32.xlu0 %v6332, 92
        %v6858 = vpop.permute.xlu0 %6857
        %6859 = vrot.lane.b32.xlu0 %v6333, 92
        %v6860 = vpop.permute.xlu0 %6859
        %6861 = vrot.lane.b32.xlu0 %v6334, 92
        %v6862 = vpop.permute.xlu0 %6861
        %6863 = vrot.lane.b32.xlu0 %v6335, 92
        %v6864 = vpop.permute.xlu0 %6863
        %6865 = vrot.lane.b32.xlu0 %v6336, 92
        %v6866 = vpop.permute.xlu0 %6865
        %6867 = vrot.lane.b32.xlu0 %v6337, 92
        %v6868 = vpop.permute.xlu0 %6867
        %v6869 = vsel %vm1584, %v6858, %v6860
        %v6870 = vsel %vm1584, %v6860, %v6862
        %v6871 = vsel %vm1584, %v6864, %v6866
        %v6872 = vsel %vm1584, %v6866, %v6868
        %v6880 = vsel %vm3133, %v6856, 0
        %6882 = vmatpush.msra.mxu0 0.0
        %6883 = vmatpush.msra.mxu0 0.0
        %6884 = vmatpush.msra.mxu0 0.0
        %6885 = vmatpush.msra.mxu0 0.0
        %6886 = vmatpush.msra.mxu0 0.0
        %6887 = vmatpush.msra.mxu0 0.0
        %6888 = vmatpush.msra.mxu0 0.0
        %6889 = vmatpush.msra.mxu0 0.0
        %6890 = vmatpush.msra.mxu0 0.0
        %6891 = vmatpush.msra.mxu0 0.0
        %6892 = vmatpush.msra.mxu0 0.0
        %6893 = vmatpush.msra.mxu0 0.0
        %6894 = vmatpush.msra.mxu0 0.0
        %6895 = vmatpush.msra.mxu0 0.0
        %6896 = vmatpush.msra.mxu0 %v6871
        %6897 = vmatpush.msra.mxu0 %v6869
        %6898 = vmatmul.f32.gmra.mxu0 %v6880
        %v6899 = vpop.f32.mrf.mxu0
        %v6900 = vadd.f32 0.0, %v6899
        %6901 = vdwg.mxu0
        %6902 = vmatpush.msra.mxu0 0.0
        %6903 = vmatpush.msra.mxu0 0.0
        %6904 = vmatpush.msra.mxu0 0.0
        %6905 = vmatpush.msra.mxu0 0.0
        %6906 = vmatpush.msra.mxu0 0.0
        %6907 = vmatpush.msra.mxu0 0.0
        %6908 = vmatpush.msra.mxu0 0.0
        %6909 = vmatpush.msra.mxu0 0.0
        %6910 = vmatpush.msra.mxu0 0.0
        %6911 = vmatpush.msra.mxu0 0.0
        %6912 = vmatpush.msra.mxu0 0.0
        %6913 = vmatpush.msra.mxu0 0.0
        %6914 = vmatpush.msra.mxu0 0.0
        %6915 = vmatpush.msra.mxu0 0.0
        %6916 = vmatpush.msra.mxu0 %v6872
        %6917 = vmatpush.msra.mxu0 %v6870
        %6918 = vmatmul.f32.gmra.mxu0 %v6880
        %v6919 = vpop.f32.mrf.mxu0
        %v6920 = vadd.f32 0.0, %v6919
        %6921 = vdwg.mxu0
        %6922 = vmatpush.msra.mxu0 0.0
        %6923 = vmatpush.msra.mxu0 0.0
        %6924 = vmatpush.msra.mxu0 0.0
        %6925 = vmatpush.msra.mxu0 0.0
        %6926 = vmatpush.msra.mxu0 0.0
        %6927 = vmatpush.msra.mxu0 0.0
        %6928 = vmatpush.msra.mxu0 0.0
        %6929 = vmatpush.msra.mxu0 0.0
        %6930 = vmatpush.msra.mxu0 0.0
        %6931 = vmatpush.msra.mxu0 0.0
        %6932 = vmatpush.msra.mxu0 0.0
        %6933 = vmatpush.msra.mxu0 0.0
        %6934 = vmatpush.msra.mxu0 0.0
        %6935 = vmatpush.msra.mxu0 0.0
        %6936 = vmatpush.msra.mxu0 %v6868
        %6937 = vmatpush.msra.mxu0 %v6862
        %6938 = vmatmul.f32.gmra.mxu0 %v6880
        %v6939 = vpop.f32.mrf.mxu0
        %v6940 = vadd.f32 0.0, %v6939
        %6941 = vdwg.mxu0
        %v6942 = vadd.f32 %v6852, %v6900
        %v6943 = vadd.f32 %v6853, %v6920
        %v6944 = vadd.f32 %v6854, %v6940
        %s6945 = scalar_lea.vmem %s47, 56
        %v6946 = vld [vmem:[%s6945] sm:$0xff]
        %6947 = vrot.lane.b32.xlu0 %v6332, 91
        %v6948 = vpop.permute.xlu0 %6947
        %6949 = vrot.lane.b32.xlu0 %v6333, 91
        %v6950 = vpop.permute.xlu0 %6949
        %6951 = vrot.lane.b32.xlu0 %v6334, 91
        %v6952 = vpop.permute.xlu0 %6951
        %6953 = vrot.lane.b32.xlu0 %v6335, 91
        %v6954 = vpop.permute.xlu0 %6953
        %6955 = vrot.lane.b32.xlu0 %v6336, 91
        %v6956 = vpop.permute.xlu0 %6955
        %6957 = vrot.lane.b32.xlu0 %v6337, 91
        %v6958 = vpop.permute.xlu0 %6957
        %v6959 = vsel %vm1664, %v6948, %v6950
        %v6960 = vsel %vm1664, %v6950, %v6952
        %v6961 = vsel %vm1664, %v6954, %v6956
        %v6962 = vsel %vm1664, %v6956, %v6958
        %v6970 = vsel %vm3133, %v6946, 0
        %6972 = vmatpush.msra.mxu0 0.0
        %6973 = vmatpush.msra.mxu0 0.0
        %6974 = vmatpush.msra.mxu0 0.0
        %6975 = vmatpush.msra.mxu0 0.0
        %6976 = vmatpush.msra.mxu0 0.0
        %6977 = vmatpush.msra.mxu0 0.0
        %6978 = vmatpush.msra.mxu0 0.0
        %6979 = vmatpush.msra.mxu0 0.0
        %6980 = vmatpush.msra.mxu0 0.0
        %6981 = vmatpush.msra.mxu0 0.0
        %6982 = vmatpush.msra.mxu0 0.0
        %6983 = vmatpush.msra.mxu0 0.0
        %6984 = vmatpush.msra.mxu0 0.0
        %6985 = vmatpush.msra.mxu0 0.0
        %6986 = vmatpush.msra.mxu0 %v6961
        %6987 = vmatpush.msra.mxu0 %v6959
        %6988 = vmatmul.f32.gmra.mxu0 %v6970
        %v6989 = vpop.f32.mrf.mxu0
        %v6990 = vadd.f32 0.0, %v6989
        %6991 = vdwg.mxu0
        %6992 = vmatpush.msra.mxu0 0.0
        %6993 = vmatpush.msra.mxu0 0.0
        %6994 = vmatpush.msra.mxu0 0.0
        %6995 = vmatpush.msra.mxu0 0.0
        %6996 = vmatpush.msra.mxu0 0.0
        %6997 = vmatpush.msra.mxu0 0.0
        %6998 = vmatpush.msra.mxu0 0.0
        %6999 = vmatpush.msra.mxu0 0.0
        %7000 = vmatpush.msra.mxu0 0.0
        %7001 = vmatpush.msra.mxu0 0.0
        %7002 = vmatpush.msra.mxu0 0.0
        %7003 = vmatpush.msra.mxu0 0.0
        %7004 = vmatpush.msra.mxu0 0.0
        %7005 = vmatpush.msra.mxu0 0.0
        %7006 = vmatpush.msra.mxu0 %v6962
        %7007 = vmatpush.msra.mxu0 %v6960
        %7008 = vmatmul.f32.gmra.mxu0 %v6970
        %v7009 = vpop.f32.mrf.mxu0
        %v7010 = vadd.f32 0.0, %v7009
        %7011 = vdwg.mxu0
        %7012 = vmatpush.msra.mxu0 0.0
        %7013 = vmatpush.msra.mxu0 0.0
        %7014 = vmatpush.msra.mxu0 0.0
        %7015 = vmatpush.msra.mxu0 0.0
        %7016 = vmatpush.msra.mxu0 0.0
        %7017 = vmatpush.msra.mxu0 0.0
        %7018 = vmatpush.msra.mxu0 0.0
        %7019 = vmatpush.msra.mxu0 0.0
        %7020 = vmatpush.msra.mxu0 0.0
        %7021 = vmatpush.msra.mxu0 0.0
        %7022 = vmatpush.msra.mxu0 0.0
        %7023 = vmatpush.msra.mxu0 0.0
        %7024 = vmatpush.msra.mxu0 0.0
        %7025 = vmatpush.msra.mxu0 0.0
        %7026 = vmatpush.msra.mxu0 %v6958
        %7027 = vmatpush.msra.mxu0 %v6952
        %7028 = vmatmul.f32.gmra.mxu0 %v6970
        %v7029 = vpop.f32.mrf.mxu0
        %v7030 = vadd.f32 0.0, %v7029
        %7031 = vdwg.mxu0
        %v7032 = vadd.f32 %v6942, %v6990
        %v7033 = vadd.f32 %v6943, %v7010
        %v7034 = vadd.f32 %v6944, %v7030
        %s7035 = scalar_lea.vmem %s47, 64
        %v7036 = vld [vmem:[%s7035] sm:$0xff]
        %7037 = vrot.lane.b32.xlu0 %v6332, 90
        %v7038 = vpop.permute.xlu0 %7037
        %7039 = vrot.lane.b32.xlu0 %v6333, 90
        %v7040 = vpop.permute.xlu0 %7039
        %7041 = vrot.lane.b32.xlu0 %v6334, 90
        %v7042 = vpop.permute.xlu0 %7041
        %7043 = vrot.lane.b32.xlu0 %v6335, 90
        %v7044 = vpop.permute.xlu0 %7043
        %7045 = vrot.lane.b32.xlu0 %v6336, 90
        %v7046 = vpop.permute.xlu0 %7045
        %7047 = vrot.lane.b32.xlu0 %v6337, 90
        %v7048 = vpop.permute.xlu0 %7047
        %v7049 = vsel %vm1744, %v7038, %v7040
        %v7050 = vsel %vm1744, %v7040, %v7042
        %v7051 = vsel %vm1744, %v7044, %v7046
        %v7052 = vsel %vm1744, %v7046, %v7048
        %v7060 = vsel %vm3133, %v7036, 0
        %7062 = vmatpush.msra.mxu0 0.0
        %7063 = vmatpush.msra.mxu0 0.0
        %7064 = vmatpush.msra.mxu0 0.0
        %7065 = vmatpush.msra.mxu0 0.0
        %7066 = vmatpush.msra.mxu0 0.0
        %7067 = vmatpush.msra.mxu0 0.0
        %7068 = vmatpush.msra.mxu0 0.0
        %7069 = vmatpush.msra.mxu0 0.0
        %7070 = vmatpush.msra.mxu0 0.0
        %7071 = vmatpush.msra.mxu0 0.0
        %7072 = vmatpush.msra.mxu0 0.0
        %7073 = vmatpush.msra.mxu0 0.0
        %7074 = vmatpush.msra.mxu0 0.0
        %7075 = vmatpush.msra.mxu0 0.0
        %7076 = vmatpush.msra.mxu0 %v7051
        %7077 = vmatpush.msra.mxu0 %v7049
        %7078 = vmatmul.f32.gmra.mxu0 %v7060
        %v7079 = vpop.f32.mrf.mxu0
        %v7080 = vadd.f32 0.0, %v7079
        %7081 = vdwg.mxu0
        %7082 = vmatpush.msra.mxu0 0.0
        %7083 = vmatpush.msra.mxu0 0.0
        %7084 = vmatpush.msra.mxu0 0.0
        %7085 = vmatpush.msra.mxu0 0.0
        %7086 = vmatpush.msra.mxu0 0.0
        %7087 = vmatpush.msra.mxu0 0.0
        %7088 = vmatpush.msra.mxu0 0.0
        %7089 = vmatpush.msra.mxu0 0.0
        %7090 = vmatpush.msra.mxu0 0.0
        %7091 = vmatpush.msra.mxu0 0.0
        %7092 = vmatpush.msra.mxu0 0.0
        %7093 = vmatpush.msra.mxu0 0.0
        %7094 = vmatpush.msra.mxu0 0.0
        %7095 = vmatpush.msra.mxu0 0.0
        %7096 = vmatpush.msra.mxu0 %v7052
        %7097 = vmatpush.msra.mxu0 %v7050
        %7098 = vmatmul.f32.gmra.mxu0 %v7060
        %v7099 = vpop.f32.mrf.mxu0
        %v7100 = vadd.f32 0.0, %v7099
        %7101 = vdwg.mxu0
        %7102 = vmatpush.msra.mxu0 0.0
        %7103 = vmatpush.msra.mxu0 0.0
        %7104 = vmatpush.msra.mxu0 0.0
        %7105 = vmatpush.msra.mxu0 0.0
        %7106 = vmatpush.msra.mxu0 0.0
        %7107 = vmatpush.msra.mxu0 0.0
        %7108 = vmatpush.msra.mxu0 0.0
        %7109 = vmatpush.msra.mxu0 0.0
        %7110 = vmatpush.msra.mxu0 0.0
        %7111 = vmatpush.msra.mxu0 0.0
        %7112 = vmatpush.msra.mxu0 0.0
        %7113 = vmatpush.msra.mxu0 0.0
        %7114 = vmatpush.msra.mxu0 0.0
        %7115 = vmatpush.msra.mxu0 0.0
        %7116 = vmatpush.msra.mxu0 %v7048
        %7117 = vmatpush.msra.mxu0 %v7042
        %7118 = vmatmul.f32.gmra.mxu0 %v7060
        %v7119 = vpop.f32.mrf.mxu0
        %v7120 = vadd.f32 0.0, %v7119
        %7121 = vdwg.mxu0
        %v7122 = vadd.f32 %v7032, %v7080
        %v7123 = vadd.f32 %v7033, %v7100
        %v7124 = vadd.f32 %v7034, %v7120
        %v7125 = vld [vmem:[%s49] sm:$0xff]
        %7127 = vset.pattern.permute.xlu0 0
        %7128 = vperm.xlu0 %7127, %v7125
        %v7129 = vpop.permute.xlu0 %7128
        %v7131 = vadd.f32 %v7122, %v7129
        %v7132 = vadd.f32 %v7123, %v7129
        %v7133 = vadd.f32 %v7124, %v7129
        %v7134 = vmax.f32 %v7131, 0.0
        %v7135 = vmax.f32 %v7132, 0.0
        %v7136 = vmax.f32 %v7133, 0.0
        %v7137 = vld [vmem:[%s63] sm:$0x7]
        %v7139 = vperm.slane %v7137, 0
        %v7140 = vperm.slane %v7137, 1
        %v7141 = vperm.slane %v7137, 2
        %v7145 = vmul.f32 %v7134, %v7139
        %v7146 = vmul.f32 %v7135, %v7140
        %v7147 = vmul.f32 %v7136, %v7141
        %7151 = vrot.lane.b32.xlu0 %v7145, 19
        %v7152 = vpop.permute.xlu0 %7151
        %7153 = vrot.lane.b32.xlu0 %v7146, 19
        %v7154 = vpop.permute.xlu0 %7153
        %7155 = vrot.lane.b32.xlu0 %v7147, 19
        %v7156 = vpop.permute.xlu0 %7155
        %v7157 = vsel %vm1060, %v7152, %v7154
        %v7158 = vsel %vm1060, %v7154, %v7156
        %7162 = vst.msk [vmem:[#allocation2] sm:$0xff] %vm1103, %v7152
        %7163 = vst [vmem:[#allocation2 + $0x8] sm:$0xff] %v7157
        %7164 = vst.msk [vmem:[#allocation2 + $0x10] sm:$0xff] %vm1106, %v7158
        %v7165 = vld [vmem:[#allocation2] sm:$0xff]
        %v7166 = vld [vmem:[#allocation2 + $0x8] sm:$0xff]
        %v7167 = vld [vmem:[#allocation2 + $0x10] sm:$0xff]
        %v7168 = vld [vmem:[%s51] sm:$0xff]
        %s7169 = scalar_lea.vmem %s51, 8
        %v7170 = vld [vmem:[%s7169] sm:$0xff]
        %7174 = vrot.lane.b32.xlu0 %v7165, 127
        %v7175 = vpop.permute.xlu0 %7174
        %7176 = vrot.lane.b32.xlu0 %v7166, 127
        %v7177 = vpop.permute.xlu0 %7176
        %7178 = vrot.lane.b32.xlu0 %v7167, 127
        %v7179 = vpop.permute.xlu0 %7178
        %v7180 = vsel %vm1123, %v7175, %v7177
        %v7181 = vsel %vm1123, %v7177, %v7179
        %v7186 = vsel %vm1129, %v7170, 0
        %7188 = vmatpush.msra.mxu0 0.0
        %7189 = vmatpush.msra.mxu0 0.0
        %7190 = vmatpush.msra.mxu0 0.0
        %7191 = vmatpush.msra.mxu0 0.0
        %7192 = vmatpush.msra.mxu0 0.0
        %7193 = vmatpush.msra.mxu0 0.0
        %7194 = vmatpush.msra.mxu0 0.0
        %7195 = vmatpush.msra.mxu0 0.0
        %7196 = vmatpush.msra.mxu0 0.0
        %7197 = vmatpush.msra.mxu0 0.0
        %7198 = vmatpush.msra.mxu0 0.0
        %7199 = vmatpush.msra.mxu0 0.0
        %7200 = vmatpush.msra.mxu0 0.0
        %7201 = vmatpush.msra.mxu0 0.0
        %7202 = vmatpush.msra.mxu0 0.0
        %7203 = vmatpush.msra.mxu0 %v7180
        %7204 = vmatmul.f32.gmra.mxu0 %v7186
        %v7205 = vpop.f32.mrf.mxu0
        %v7206 = vadd.f32 0.0, %v7205
        %7207 = vdwg.mxu0
        %7208 = vmatpush.msra.mxu0 0.0
        %7209 = vmatpush.msra.mxu0 0.0
        %7210 = vmatpush.msra.mxu0 0.0
        %7211 = vmatpush.msra.mxu0 0.0
        %7212 = vmatpush.msra.mxu0 0.0
        %7213 = vmatpush.msra.mxu0 0.0
        %7214 = vmatpush.msra.mxu0 0.0
        %7215 = vmatpush.msra.mxu0 0.0
        %7216 = vmatpush.msra.mxu0 0.0
        %7217 = vmatpush.msra.mxu0 0.0
        %7218 = vmatpush.msra.mxu0 0.0
        %7219 = vmatpush.msra.mxu0 0.0
        %7220 = vmatpush.msra.mxu0 0.0
        %7221 = vmatpush.msra.mxu0 0.0
        %7222 = vmatpush.msra.mxu0 0.0
        %7223 = vmatpush.msra.mxu0 %v7181
        %7224 = vmatmul.f32.gmra.mxu0 %v7186
        %v7225 = vpop.f32.mrf.mxu0
        %v7226 = vadd.f32 0.0, %v7225
        %7227 = vdwg.mxu0
        %7228 = vmatpush.msra.mxu0 0.0
        %7229 = vmatpush.msra.mxu0 0.0
        %7230 = vmatpush.msra.mxu0 0.0
        %7231 = vmatpush.msra.mxu0 0.0
        %7232 = vmatpush.msra.mxu0 0.0
        %7233 = vmatpush.msra.mxu0 0.0
        %7234 = vmatpush.msra.mxu0 0.0
        %7235 = vmatpush.msra.mxu0 0.0
        %7236 = vmatpush.msra.mxu0 0.0
        %7237 = vmatpush.msra.mxu0 0.0
        %7238 = vmatpush.msra.mxu0 0.0
        %7239 = vmatpush.msra.mxu0 0.0
        %7240 = vmatpush.msra.mxu0 0.0
        %7241 = vmatpush.msra.mxu0 0.0
        %7242 = vmatpush.msra.mxu0 0.0
        %7243 = vmatpush.msra.mxu0 %v7179
        %7244 = vmatmul.f32.gmra.mxu0 %v7186
        %v7245 = vpop.f32.mrf.mxu0
        %v7246 = vadd.f32 0.0, %v7245
        %7247 = vdwg.mxu0
        %v7249 = vsel %vm1129, %v7168, 0
        %7251 = vmatpush.msra.mxu0 0.0
        %7252 = vmatpush.msra.mxu0 0.0
        %7253 = vmatpush.msra.mxu0 0.0
        %7254 = vmatpush.msra.mxu0 0.0
        %7255 = vmatpush.msra.mxu0 0.0
        %7256 = vmatpush.msra.mxu0 0.0
        %7257 = vmatpush.msra.mxu0 0.0
        %7258 = vmatpush.msra.mxu0 0.0
        %7259 = vmatpush.msra.mxu0 0.0
        %7260 = vmatpush.msra.mxu0 0.0
        %7261 = vmatpush.msra.mxu0 0.0
        %7262 = vmatpush.msra.mxu0 0.0
        %7263 = vmatpush.msra.mxu0 0.0
        %7264 = vmatpush.msra.mxu0 0.0
        %7265 = vmatpush.msra.mxu0 0.0
        %7266 = vmatpush.msra.mxu0 %v7165
        %7267 = vmatmul.f32.gmra.mxu0 %v7249
        %v7268 = vpop.f32.mrf.mxu0
        %v7269 = vadd.f32 %v7206, %v7268
        %7270 = vdwg.mxu0
        %7271 = vmatpush.msra.mxu0 0.0
        %7272 = vmatpush.msra.mxu0 0.0
        %7273 = vmatpush.msra.mxu0 0.0
        %7274 = vmatpush.msra.mxu0 0.0
        %7275 = vmatpush.msra.mxu0 0.0
        %7276 = vmatpush.msra.mxu0 0.0
        %7277 = vmatpush.msra.mxu0 0.0
        %7278 = vmatpush.msra.mxu0 0.0
        %7279 = vmatpush.msra.mxu0 0.0
        %7280 = vmatpush.msra.mxu0 0.0
        %7281 = vmatpush.msra.mxu0 0.0
        %7282 = vmatpush.msra.mxu0 0.0
        %7283 = vmatpush.msra.mxu0 0.0
        %7284 = vmatpush.msra.mxu0 0.0
        %7285 = vmatpush.msra.mxu0 0.0
        %7286 = vmatpush.msra.mxu0 %v7166
        %7287 = vmatmul.f32.gmra.mxu0 %v7249
        %v7288 = vpop.f32.mrf.mxu0
        %v7289 = vadd.f32 %v7226, %v7288
        %7290 = vdwg.mxu0
        %7291 = vmatpush.msra.mxu0 0.0
        %7292 = vmatpush.msra.mxu0 0.0
        %7293 = vmatpush.msra.mxu0 0.0
        %7294 = vmatpush.msra.mxu0 0.0
        %7295 = vmatpush.msra.mxu0 0.0
        %7296 = vmatpush.msra.mxu0 0.0
        %7297 = vmatpush.msra.mxu0 0.0
        %7298 = vmatpush.msra.mxu0 0.0
        %7299 = vmatpush.msra.mxu0 0.0
        %7300 = vmatpush.msra.mxu0 0.0
        %7301 = vmatpush.msra.mxu0 0.0
        %7302 = vmatpush.msra.mxu0 0.0
        %7303 = vmatpush.msra.mxu0 0.0
        %7304 = vmatpush.msra.mxu0 0.0
        %7305 = vmatpush.msra.mxu0 0.0
        %7306 = vmatpush.msra.mxu0 %v7167
        %7307 = vmatmul.f32.gmra.mxu0 %v7249
        %v7308 = vpop.f32.mrf.mxu0
        %v7309 = vadd.f32 %v7246, %v7308
        %7310 = vdwg.mxu0
        %s7311 = scalar_lea.vmem %s51, 16
        %v7312 = vld [vmem:[%s7311] sm:$0xff]
        %7313 = vrot.lane.b32.xlu0 %v7165, 126
        %v7314 = vpop.permute.xlu0 %7313
        %7315 = vrot.lane.b32.xlu0 %v7166, 126
        %v7316 = vpop.permute.xlu0 %7315
        %7317 = vrot.lane.b32.xlu0 %v7167, 126
        %v7318 = vpop.permute.xlu0 %7317
        %v7319 = vsel %vm1264, %v7314, %v7316
        %v7320 = vsel %vm1264, %v7316, %v7318
        %v7325 = vsel %vm1129, %v7312, 0
        %7327 = vmatpush.msra.mxu0 0.0
        %7328 = vmatpush.msra.mxu0 0.0
        %7329 = vmatpush.msra.mxu0 0.0
        %7330 = vmatpush.msra.mxu0 0.0
        %7331 = vmatpush.msra.mxu0 0.0
        %7332 = vmatpush.msra.mxu0 0.0
        %7333 = vmatpush.msra.mxu0 0.0
        %7334 = vmatpush.msra.mxu0 0.0
        %7335 = vmatpush.msra.mxu0 0.0
        %7336 = vmatpush.msra.mxu0 0.0
        %7337 = vmatpush.msra.mxu0 0.0
        %7338 = vmatpush.msra.mxu0 0.0
        %7339 = vmatpush.msra.mxu0 0.0
        %7340 = vmatpush.msra.mxu0 0.0
        %7341 = vmatpush.msra.mxu0 0.0
        %7342 = vmatpush.msra.mxu0 %v7319
        %7343 = vmatmul.f32.gmra.mxu0 %v7325
        %v7344 = vpop.f32.mrf.mxu0
        %v7345 = vadd.f32 0.0, %v7344
        %7346 = vdwg.mxu0
        %7347 = vmatpush.msra.mxu0 0.0
        %7348 = vmatpush.msra.mxu0 0.0
        %7349 = vmatpush.msra.mxu0 0.0
        %7350 = vmatpush.msra.mxu0 0.0
        %7351 = vmatpush.msra.mxu0 0.0
        %7352 = vmatpush.msra.mxu0 0.0
        %7353 = vmatpush.msra.mxu0 0.0
        %7354 = vmatpush.msra.mxu0 0.0
        %7355 = vmatpush.msra.mxu0 0.0
        %7356 = vmatpush.msra.mxu0 0.0
        %7357 = vmatpush.msra.mxu0 0.0
        %7358 = vmatpush.msra.mxu0 0.0
        %7359 = vmatpush.msra.mxu0 0.0
        %7360 = vmatpush.msra.mxu0 0.0
        %7361 = vmatpush.msra.mxu0 0.0
        %7362 = vmatpush.msra.mxu0 %v7320
        %7363 = vmatmul.f32.gmra.mxu0 %v7325
        %v7364 = vpop.f32.mrf.mxu0
        %v7365 = vadd.f32 0.0, %v7364
        %7366 = vdwg.mxu0
        %7367 = vmatpush.msra.mxu0 0.0
        %7368 = vmatpush.msra.mxu0 0.0
        %7369 = vmatpush.msra.mxu0 0.0
        %7370 = vmatpush.msra.mxu0 0.0
        %7371 = vmatpush.msra.mxu0 0.0
        %7372 = vmatpush.msra.mxu0 0.0
        %7373 = vmatpush.msra.mxu0 0.0
        %7374 = vmatpush.msra.mxu0 0.0
        %7375 = vmatpush.msra.mxu0 0.0
        %7376 = vmatpush.msra.mxu0 0.0
        %7377 = vmatpush.msra.mxu0 0.0
        %7378 = vmatpush.msra.mxu0 0.0
        %7379 = vmatpush.msra.mxu0 0.0
        %7380 = vmatpush.msra.mxu0 0.0
        %7381 = vmatpush.msra.mxu0 0.0
        %7382 = vmatpush.msra.mxu0 %v7318
        %7383 = vmatmul.f32.gmra.mxu0 %v7325
        %v7384 = vpop.f32.mrf.mxu0
        %v7385 = vadd.f32 0.0, %v7384
        %7386 = vdwg.mxu0
        %v7387 = vadd.f32 %v7269, %v7345
        %v7388 = vadd.f32 %v7289, %v7365
        %v7389 = vadd.f32 %v7309, %v7385
        %s7390 = scalar_lea.vmem %s51, 24
        %v7391 = vld [vmem:[%s7390] sm:$0xff]
        %7392 = vrot.lane.b32.xlu0 %v7165, 110
        %v7393 = vpop.permute.xlu0 %7392
        %7394 = vrot.lane.b32.xlu0 %v7166, 110
        %v7395 = vpop.permute.xlu0 %7394
        %7396 = vrot.lane.b32.xlu0 %v7167, 110
        %v7397 = vpop.permute.xlu0 %7396
        %v7398 = vsel %vm1344, %v7393, %v7395
        %v7399 = vsel %vm1344, %v7395, %v7397
        %v7404 = vsel %vm1129, %v7391, 0
        %7406 = vmatpush.msra.mxu0 0.0
        %7407 = vmatpush.msra.mxu0 0.0
        %7408 = vmatpush.msra.mxu0 0.0
        %7409 = vmatpush.msra.mxu0 0.0
        %7410 = vmatpush.msra.mxu0 0.0
        %7411 = vmatpush.msra.mxu0 0.0
        %7412 = vmatpush.msra.mxu0 0.0
        %7413 = vmatpush.msra.mxu0 0.0
        %7414 = vmatpush.msra.mxu0 0.0
        %7415 = vmatpush.msra.mxu0 0.0
        %7416 = vmatpush.msra.mxu0 0.0
        %7417 = vmatpush.msra.mxu0 0.0
        %7418 = vmatpush.msra.mxu0 0.0
        %7419 = vmatpush.msra.mxu0 0.0
        %7420 = vmatpush.msra.mxu0 0.0
        %7421 = vmatpush.msra.mxu0 %v7398
        %7422 = vmatmul.f32.gmra.mxu0 %v7404
        %v7423 = vpop.f32.mrf.mxu0
        %v7424 = vadd.f32 0.0, %v7423
        %7425 = vdwg.mxu0
        %7426 = vmatpush.msra.mxu0 0.0
        %7427 = vmatpush.msra.mxu0 0.0
        %7428 = vmatpush.msra.mxu0 0.0
        %7429 = vmatpush.msra.mxu0 0.0
        %7430 = vmatpush.msra.mxu0 0.0
        %7431 = vmatpush.msra.mxu0 0.0
        %7432 = vmatpush.msra.mxu0 0.0
        %7433 = vmatpush.msra.mxu0 0.0
        %7434 = vmatpush.msra.mxu0 0.0
        %7435 = vmatpush.msra.mxu0 0.0
        %7436 = vmatpush.msra.mxu0 0.0
        %7437 = vmatpush.msra.mxu0 0.0
        %7438 = vmatpush.msra.mxu0 0.0
        %7439 = vmatpush.msra.mxu0 0.0
        %7440 = vmatpush.msra.mxu0 0.0
        %7441 = vmatpush.msra.mxu0 %v7399
        %7442 = vmatmul.f32.gmra.mxu0 %v7404
        %v7443 = vpop.f32.mrf.mxu0
        %v7444 = vadd.f32 0.0, %v7443
        %7445 = vdwg.mxu0
        %7446 = vmatpush.msra.mxu0 0.0
        %7447 = vmatpush.msra.mxu0 0.0
        %7448 = vmatpush.msra.mxu0 0.0
        %7449 = vmatpush.msra.mxu0 0.0
        %7450 = vmatpush.msra.mxu0 0.0
        %7451 = vmatpush.msra.mxu0 0.0
        %7452 = vmatpush.msra.mxu0 0.0
        %7453 = vmatpush.msra.mxu0 0.0
        %7454 = vmatpush.msra.mxu0 0.0
        %7455 = vmatpush.msra.mxu0 0.0
        %7456 = vmatpush.msra.mxu0 0.0
        %7457 = vmatpush.msra.mxu0 0.0
        %7458 = vmatpush.msra.mxu0 0.0
        %7459 = vmatpush.msra.mxu0 0.0
        %7460 = vmatpush.msra.mxu0 0.0
        %7461 = vmatpush.msra.mxu0 %v7397
        %7462 = vmatmul.f32.gmra.mxu0 %v7404
        %v7463 = vpop.f32.mrf.mxu0
        %v7464 = vadd.f32 0.0, %v7463
        %7465 = vdwg.mxu0
        %v7466 = vadd.f32 %v7387, %v7424
        %v7467 = vadd.f32 %v7388, %v7444
        %v7468 = vadd.f32 %v7389, %v7464
        %s7469 = scalar_lea.vmem %s51, 32
        %v7470 = vld [vmem:[%s7469] sm:$0xff]
        %7471 = vrot.lane.b32.xlu0 %v7165, 109
        %v7472 = vpop.permute.xlu0 %7471
        %7473 = vrot.lane.b32.xlu0 %v7166, 109
        %v7474 = vpop.permute.xlu0 %7473
        %7475 = vrot.lane.b32.xlu0 %v7167, 109
        %v7476 = vpop.permute.xlu0 %7475
        %v7477 = vsel %vm1424, %v7472, %v7474
        %v7478 = vsel %vm1424, %v7474, %v7476
        %v7483 = vsel %vm1129, %v7470, 0
        %7485 = vmatpush.msra.mxu0 0.0
        %7486 = vmatpush.msra.mxu0 0.0
        %7487 = vmatpush.msra.mxu0 0.0
        %7488 = vmatpush.msra.mxu0 0.0
        %7489 = vmatpush.msra.mxu0 0.0
        %7490 = vmatpush.msra.mxu0 0.0
        %7491 = vmatpush.msra.mxu0 0.0
        %7492 = vmatpush.msra.mxu0 0.0
        %7493 = vmatpush.msra.mxu0 0.0
        %7494 = vmatpush.msra.mxu0 0.0
        %7495 = vmatpush.msra.mxu0 0.0
        %7496 = vmatpush.msra.mxu0 0.0
        %7497 = vmatpush.msra.mxu0 0.0
        %7498 = vmatpush.msra.mxu0 0.0
        %7499 = vmatpush.msra.mxu0 0.0
        %7500 = vmatpush.msra.mxu0 %v7477
        %7501 = vmatmul.f32.gmra.mxu0 %v7483
        %v7502 = vpop.f32.mrf.mxu0
        %v7503 = vadd.f32 0.0, %v7502
        %7504 = vdwg.mxu0
        %7505 = vmatpush.msra.mxu0 0.0
        %7506 = vmatpush.msra.mxu0 0.0
        %7507 = vmatpush.msra.mxu0 0.0
        %7508 = vmatpush.msra.mxu0 0.0
        %7509 = vmatpush.msra.mxu0 0.0
        %7510 = vmatpush.msra.mxu0 0.0
        %7511 = vmatpush.msra.mxu0 0.0
        %7512 = vmatpush.msra.mxu0 0.0
        %7513 = vmatpush.msra.mxu0 0.0
        %7514 = vmatpush.msra.mxu0 0.0
        %7515 = vmatpush.msra.mxu0 0.0
        %7516 = vmatpush.msra.mxu0 0.0
        %7517 = vmatpush.msra.mxu0 0.0
        %7518 = vmatpush.msra.mxu0 0.0
        %7519 = vmatpush.msra.mxu0 0.0
        %7520 = vmatpush.msra.mxu0 %v7478
        %7521 = vmatmul.f32.gmra.mxu0 %v7483
        %v7522 = vpop.f32.mrf.mxu0
        %v7523 = vadd.f32 0.0, %v7522
        %7524 = vdwg.mxu0
        %7525 = vmatpush.msra.mxu0 0.0
        %7526 = vmatpush.msra.mxu0 0.0
        %7527 = vmatpush.msra.mxu0 0.0
        %7528 = vmatpush.msra.mxu0 0.0
        %7529 = vmatpush.msra.mxu0 0.0
        %7530 = vmatpush.msra.mxu0 0.0
        %7531 = vmatpush.msra.mxu0 0.0
        %7532 = vmatpush.msra.mxu0 0.0
        %7533 = vmatpush.msra.mxu0 0.0
        %7534 = vmatpush.msra.mxu0 0.0
        %7535 = vmatpush.msra.mxu0 0.0
        %7536 = vmatpush.msra.mxu0 0.0
        %7537 = vmatpush.msra.mxu0 0.0
        %7538 = vmatpush.msra.mxu0 0.0
        %7539 = vmatpush.msra.mxu0 0.0
        %7540 = vmatpush.msra.mxu0 %v7476
        %7541 = vmatmul.f32.gmra.mxu0 %v7483
        %v7542 = vpop.f32.mrf.mxu0
        %v7543 = vadd.f32 0.0, %v7542
        %7544 = vdwg.mxu0
        %v7545 = vadd.f32 %v7466, %v7503
        %v7546 = vadd.f32 %v7467, %v7523
        %v7547 = vadd.f32 %v7468, %v7543
        %s7548 = scalar_lea.vmem %s51, 40
        %v7549 = vld [vmem:[%s7548] sm:$0xff]
        %7550 = vrot.lane.b32.xlu0 %v7165, 108
        %v7551 = vpop.permute.xlu0 %7550
        %7552 = vrot.lane.b32.xlu0 %v7166, 108
        %v7553 = vpop.permute.xlu0 %7552
        %7554 = vrot.lane.b32.xlu0 %v7167, 108
        %v7555 = vpop.permute.xlu0 %7554
        %v7556 = vsel %vm1504, %v7551, %v7553
        %v7557 = vsel %vm1504, %v7553, %v7555
        %v7562 = vsel %vm1129, %v7549, 0
        %7564 = vmatpush.msra.mxu0 0.0
        %7565 = vmatpush.msra.mxu0 0.0
        %7566 = vmatpush.msra.mxu0 0.0
        %7567 = vmatpush.msra.mxu0 0.0
        %7568 = vmatpush.msra.mxu0 0.0
        %7569 = vmatpush.msra.mxu0 0.0
        %7570 = vmatpush.msra.mxu0 0.0
        %7571 = vmatpush.msra.mxu0 0.0
        %7572 = vmatpush.msra.mxu0 0.0
        %7573 = vmatpush.msra.mxu0 0.0
        %7574 = vmatpush.msra.mxu0 0.0
        %7575 = vmatpush.msra.mxu0 0.0
        %7576 = vmatpush.msra.mxu0 0.0
        %7577 = vmatpush.msra.mxu0 0.0
        %7578 = vmatpush.msra.mxu0 0.0
        %7579 = vmatpush.msra.mxu0 %v7556
        %7580 = vmatmul.f32.gmra.mxu0 %v7562
        %v7581 = vpop.f32.mrf.mxu0
        %v7582 = vadd.f32 0.0, %v7581
        %7583 = vdwg.mxu0
        %7584 = vmatpush.msra.mxu0 0.0
        %7585 = vmatpush.msra.mxu0 0.0
        %7586 = vmatpush.msra.mxu0 0.0
        %7587 = vmatpush.msra.mxu0 0.0
        %7588 = vmatpush.msra.mxu0 0.0
        %7589 = vmatpush.msra.mxu0 0.0
        %7590 = vmatpush.msra.mxu0 0.0
        %7591 = vmatpush.msra.mxu0 0.0
        %7592 = vmatpush.msra.mxu0 0.0
        %7593 = vmatpush.msra.mxu0 0.0
        %7594 = vmatpush.msra.mxu0 0.0
        %7595 = vmatpush.msra.mxu0 0.0
        %7596 = vmatpush.msra.mxu0 0.0
        %7597 = vmatpush.msra.mxu0 0.0
        %7598 = vmatpush.msra.mxu0 0.0
        %7599 = vmatpush.msra.mxu0 %v7557
        %7600 = vmatmul.f32.gmra.mxu0 %v7562
        %v7601 = vpop.f32.mrf.mxu0
        %v7602 = vadd.f32 0.0, %v7601
        %7603 = vdwg.mxu0
        %7604 = vmatpush.msra.mxu0 0.0
        %7605 = vmatpush.msra.mxu0 0.0
        %7606 = vmatpush.msra.mxu0 0.0
        %7607 = vmatpush.msra.mxu0 0.0
        %7608 = vmatpush.msra.mxu0 0.0
        %7609 = vmatpush.msra.mxu0 0.0
        %7610 = vmatpush.msra.mxu0 0.0
        %7611 = vmatpush.msra.mxu0 0.0
        %7612 = vmatpush.msra.mxu0 0.0
        %7613 = vmatpush.msra.mxu0 0.0
        %7614 = vmatpush.msra.mxu0 0.0
        %7615 = vmatpush.msra.mxu0 0.0
        %7616 = vmatpush.msra.mxu0 0.0
        %7617 = vmatpush.msra.mxu0 0.0
        %7618 = vmatpush.msra.mxu0 0.0
        %7619 = vmatpush.msra.mxu0 %v7555
        %7620 = vmatmul.f32.gmra.mxu0 %v7562
        %v7621 = vpop.f32.mrf.mxu0
        %v7622 = vadd.f32 0.0, %v7621
        %7623 = vdwg.mxu0
        %v7624 = vadd.f32 %v7545, %v7582
        %v7625 = vadd.f32 %v7546, %v7602
        %v7626 = vadd.f32 %v7547, %v7622
        %s7627 = scalar_lea.vmem %s51, 48
        %v7628 = vld [vmem:[%s7627] sm:$0xff]
        %7629 = vrot.lane.b32.xlu0 %v7165, 92
        %v7630 = vpop.permute.xlu0 %7629
        %7631 = vrot.lane.b32.xlu0 %v7166, 92
        %v7632 = vpop.permute.xlu0 %7631
        %7633 = vrot.lane.b32.xlu0 %v7167, 92
        %v7634 = vpop.permute.xlu0 %7633
        %v7635 = vsel %vm1584, %v7630, %v7632
        %v7636 = vsel %vm1584, %v7632, %v7634
        %v7641 = vsel %vm1129, %v7628, 0
        %7643 = vmatpush.msra.mxu0 0.0
        %7644 = vmatpush.msra.mxu0 0.0
        %7645 = vmatpush.msra.mxu0 0.0
        %7646 = vmatpush.msra.mxu0 0.0
        %7647 = vmatpush.msra.mxu0 0.0
        %7648 = vmatpush.msra.mxu0 0.0
        %7649 = vmatpush.msra.mxu0 0.0
        %7650 = vmatpush.msra.mxu0 0.0
        %7651 = vmatpush.msra.mxu0 0.0
        %7652 = vmatpush.msra.mxu0 0.0
        %7653 = vmatpush.msra.mxu0 0.0
        %7654 = vmatpush.msra.mxu0 0.0
        %7655 = vmatpush.msra.mxu0 0.0
        %7656 = vmatpush.msra.mxu0 0.0
        %7657 = vmatpush.msra.mxu0 0.0
        %7658 = vmatpush.msra.mxu0 %v7635
        %7659 = vmatmul.f32.gmra.mxu0 %v7641
        %v7660 = vpop.f32.mrf.mxu0
        %v7661 = vadd.f32 0.0, %v7660
        %7662 = vdwg.mxu0
        %7663 = vmatpush.msra.mxu0 0.0
        %7664 = vmatpush.msra.mxu0 0.0
        %7665 = vmatpush.msra.mxu0 0.0
        %7666 = vmatpush.msra.mxu0 0.0
        %7667 = vmatpush.msra.mxu0 0.0
        %7668 = vmatpush.msra.mxu0 0.0
        %7669 = vmatpush.msra.mxu0 0.0
        %7670 = vmatpush.msra.mxu0 0.0
        %7671 = vmatpush.msra.mxu0 0.0
        %7672 = vmatpush.msra.mxu0 0.0
        %7673 = vmatpush.msra.mxu0 0.0
        %7674 = vmatpush.msra.mxu0 0.0
        %7675 = vmatpush.msra.mxu0 0.0
        %7676 = vmatpush.msra.mxu0 0.0
        %7677 = vmatpush.msra.mxu0 0.0
        %7678 = vmatpush.msra.mxu0 %v7636
        %7679 = vmatmul.f32.gmra.mxu0 %v7641
        %v7680 = vpop.f32.mrf.mxu0
        %v7681 = vadd.f32 0.0, %v7680
        %7682 = vdwg.mxu0
        %7683 = vmatpush.msra.mxu0 0.0
        %7684 = vmatpush.msra.mxu0 0.0
        %7685 = vmatpush.msra.mxu0 0.0
        %7686 = vmatpush.msra.mxu0 0.0
        %7687 = vmatpush.msra.mxu0 0.0
        %7688 = vmatpush.msra.mxu0 0.0
        %7689 = vmatpush.msra.mxu0 0.0
        %7690 = vmatpush.msra.mxu0 0.0
        %7691 = vmatpush.msra.mxu0 0.0
        %7692 = vmatpush.msra.mxu0 0.0
        %7693 = vmatpush.msra.mxu0 0.0
        %7694 = vmatpush.msra.mxu0 0.0
        %7695 = vmatpush.msra.mxu0 0.0
        %7696 = vmatpush.msra.mxu0 0.0
        %7697 = vmatpush.msra.mxu0 0.0
        %7698 = vmatpush.msra.mxu0 %v7634
        %7699 = vmatmul.f32.gmra.mxu0 %v7641
        %v7700 = vpop.f32.mrf.mxu0
        %v7701 = vadd.f32 0.0, %v7700
        %7702 = vdwg.mxu0
        %v7703 = vadd.f32 %v7624, %v7661
        %v7704 = vadd.f32 %v7625, %v7681
        %v7705 = vadd.f32 %v7626, %v7701
        %s7706 = scalar_lea.vmem %s51, 56
        %v7707 = vld [vmem:[%s7706] sm:$0xff]
        %7708 = vrot.lane.b32.xlu0 %v7165, 91
        %v7709 = vpop.permute.xlu0 %7708
        %7710 = vrot.lane.b32.xlu0 %v7166, 91
        %v7711 = vpop.permute.xlu0 %7710
        %7712 = vrot.lane.b32.xlu0 %v7167, 91
        %v7713 = vpop.permute.xlu0 %7712
        %v7714 = vsel %vm1664, %v7709, %v7711
        %v7715 = vsel %vm1664, %v7711, %v7713
        %v7720 = vsel %vm1129, %v7707, 0
        %7722 = vmatpush.msra.mxu0 0.0
        %7723 = vmatpush.msra.mxu0 0.0
        %7724 = vmatpush.msra.mxu0 0.0
        %7725 = vmatpush.msra.mxu0 0.0
        %7726 = vmatpush.msra.mxu0 0.0
        %7727 = vmatpush.msra.mxu0 0.0
        %7728 = vmatpush.msra.mxu0 0.0
        %7729 = vmatpush.msra.mxu0 0.0
        %7730 = vmatpush.msra.mxu0 0.0
        %7731 = vmatpush.msra.mxu0 0.0
        %7732 = vmatpush.msra.mxu0 0.0
        %7733 = vmatpush.msra.mxu0 0.0
        %7734 = vmatpush.msra.mxu0 0.0
        %7735 = vmatpush.msra.mxu0 0.0
        %7736 = vmatpush.msra.mxu0 0.0
        %7737 = vmatpush.msra.mxu0 %v7714
        %7738 = vmatmul.f32.gmra.mxu0 %v7720
        %v7739 = vpop.f32.mrf.mxu0
        %v7740 = vadd.f32 0.0, %v7739
        %7741 = vdwg.mxu0
        %7742 = vmatpush.msra.mxu0 0.0
        %7743 = vmatpush.msra.mxu0 0.0
        %7744 = vmatpush.msra.mxu0 0.0
        %7745 = vmatpush.msra.mxu0 0.0
        %7746 = vmatpush.msra.mxu0 0.0
        %7747 = vmatpush.msra.mxu0 0.0
        %7748 = vmatpush.msra.mxu0 0.0
        %7749 = vmatpush.msra.mxu0 0.0
        %7750 = vmatpush.msra.mxu0 0.0
        %7751 = vmatpush.msra.mxu0 0.0
        %7752 = vmatpush.msra.mxu0 0.0
        %7753 = vmatpush.msra.mxu0 0.0
        %7754 = vmatpush.msra.mxu0 0.0
        %7755 = vmatpush.msra.mxu0 0.0
        %7756 = vmatpush.msra.mxu0 0.0
        %7757 = vmatpush.msra.mxu0 %v7715
        %7758 = vmatmul.f32.gmra.mxu0 %v7720
        %v7759 = vpop.f32.mrf.mxu0
        %v7760 = vadd.f32 0.0, %v7759
        %7761 = vdwg.mxu0
        %7762 = vmatpush.msra.mxu0 0.0
        %7763 = vmatpush.msra.mxu0 0.0
        %7764 = vmatpush.msra.mxu0 0.0
        %7765 = vmatpush.msra.mxu0 0.0
        %7766 = vmatpush.msra.mxu0 0.0
        %7767 = vmatpush.msra.mxu0 0.0
        %7768 = vmatpush.msra.mxu0 0.0
        %7769 = vmatpush.msra.mxu0 0.0
        %7770 = vmatpush.msra.mxu0 0.0
        %7771 = vmatpush.msra.mxu0 0.0
        %7772 = vmatpush.msra.mxu0 0.0
        %7773 = vmatpush.msra.mxu0 0.0
        %7774 = vmatpush.msra.mxu0 0.0
        %7775 = vmatpush.msra.mxu0 0.0
        %7776 = vmatpush.msra.mxu0 0.0
        %7777 = vmatpush.msra.mxu0 %v7713
        %7778 = vmatmul.f32.gmra.mxu0 %v7720
        %v7779 = vpop.f32.mrf.mxu0
        %v7780 = vadd.f32 0.0, %v7779
        %7781 = vdwg.mxu0
        %v7782 = vadd.f32 %v7703, %v7740
        %v7783 = vadd.f32 %v7704, %v7760
        %v7784 = vadd.f32 %v7705, %v7780
        %s7785 = scalar_lea.vmem %s51, 64
        %v7786 = vld [vmem:[%s7785] sm:$0xff]
        %7787 = vrot.lane.b32.xlu0 %v7165, 90
        %v7788 = vpop.permute.xlu0 %7787
        %7789 = vrot.lane.b32.xlu0 %v7166, 90
        %v7790 = vpop.permute.xlu0 %7789
        %7791 = vrot.lane.b32.xlu0 %v7167, 90
        %v7792 = vpop.permute.xlu0 %7791
        %v7793 = vsel %vm1744, %v7788, %v7790
        %v7794 = vsel %vm1744, %v7790, %v7792
        %v7799 = vsel %vm1129, %v7786, 0
        %7801 = vmatpush.msra.mxu0 0.0
        %7802 = vmatpush.msra.mxu0 0.0
        %7803 = vmatpush.msra.mxu0 0.0
        %7804 = vmatpush.msra.mxu0 0.0
        %7805 = vmatpush.msra.mxu0 0.0
        %7806 = vmatpush.msra.mxu0 0.0
        %7807 = vmatpush.msra.mxu0 0.0
        %7808 = vmatpush.msra.mxu0 0.0
        %7809 = vmatpush.msra.mxu0 0.0
        %7810 = vmatpush.msra.mxu0 0.0
        %7811 = vmatpush.msra.mxu0 0.0
        %7812 = vmatpush.msra.mxu0 0.0
        %7813 = vmatpush.msra.mxu0 0.0
        %7814 = vmatpush.msra.mxu0 0.0
        %7815 = vmatpush.msra.mxu0 0.0
        %7816 = vmatpush.msra.mxu0 %v7793
        %7817 = vmatmul.f32.gmra.mxu0 %v7799
        %v7818 = vpop.f32.mrf.mxu0
        %v7819 = vadd.f32 0.0, %v7818
        %7820 = vdwg.mxu0
        %7821 = vmatpush.msra.mxu0 0.0
        %7822 = vmatpush.msra.mxu0 0.0
        %7823 = vmatpush.msra.mxu0 0.0
        %7824 = vmatpush.msra.mxu0 0.0
        %7825 = vmatpush.msra.mxu0 0.0
        %7826 = vmatpush.msra.mxu0 0.0
        %7827 = vmatpush.msra.mxu0 0.0
        %7828 = vmatpush.msra.mxu0 0.0
        %7829 = vmatpush.msra.mxu0 0.0
        %7830 = vmatpush.msra.mxu0 0.0
        %7831 = vmatpush.msra.mxu0 0.0
        %7832 = vmatpush.msra.mxu0 0.0
        %7833 = vmatpush.msra.mxu0 0.0
        %7834 = vmatpush.msra.mxu0 0.0
        %7835 = vmatpush.msra.mxu0 0.0
        %7836 = vmatpush.msra.mxu0 %v7794
        %7837 = vmatmul.f32.gmra.mxu0 %v7799
        %v7838 = vpop.f32.mrf.mxu0
        %v7839 = vadd.f32 0.0, %v7838
        %7840 = vdwg.mxu0
        %7841 = vmatpush.msra.mxu0 0.0
        %7842 = vmatpush.msra.mxu0 0.0
        %7843 = vmatpush.msra.mxu0 0.0
        %7844 = vmatpush.msra.mxu0 0.0
        %7845 = vmatpush.msra.mxu0 0.0
        %7846 = vmatpush.msra.mxu0 0.0
        %7847 = vmatpush.msra.mxu0 0.0
        %7848 = vmatpush.msra.mxu0 0.0
        %7849 = vmatpush.msra.mxu0 0.0
        %7850 = vmatpush.msra.mxu0 0.0
        %7851 = vmatpush.msra.mxu0 0.0
        %7852 = vmatpush.msra.mxu0 0.0
        %7853 = vmatpush.msra.mxu0 0.0
        %7854 = vmatpush.msra.mxu0 0.0
        %7855 = vmatpush.msra.mxu0 0.0
        %7856 = vmatpush.msra.mxu0 %v7792
        %7857 = vmatmul.f32.gmra.mxu0 %v7799
        %v7858 = vpop.f32.mrf.mxu0
        %v7859 = vadd.f32 0.0, %v7858
        %7860 = vdwg.mxu0
        %v7861 = vadd.f32 %v7782, %v7819
        %v7862 = vadd.f32 %v7783, %v7839
        %v7863 = vadd.f32 %v7784, %v7859
        %v7864 = vld [vmem:[%s53] sm:$0xff]
        %7866 = vset.pattern.permute.xlu0 0
        %7867 = vperm.xlu0 %7866, %v7864
        %v7868 = vpop.permute.xlu0 %7867
        %v7870 = vadd.f32 %v7861, %v7868
        %v7871 = vadd.f32 %v7862, %v7868
        %v7872 = vadd.f32 %v7863, %v7868
        %v7873 = vmax.f32 %v7870, 0.0
        %v7874 = vmax.f32 %v7871, 0.0
        %v7875 = vmax.f32 %v7872, 0.0
        %v7876 = vld [vmem:[%s63] sm:$0x7]
        %v7878 = vperm.slane %v7876, 0
        %v7879 = vperm.slane %v7876, 1
        %v7880 = vperm.slane %v7876, 2
        %v7884 = vmul.f32 %v7873, %v7878
        %v7885 = vmul.f32 %v7874, %v7879
        %v7886 = vmul.f32 %v7875, %v7880
        %v7887 = vld [vmem:[%s55] sm:$0x1]
        %v7888 = vld [vmem:[#allocation5] sm:$0x1]
        %7890 = vset.pattern.permute.xlu0 0
        %7891 = vperm.xlu0 %7890, %v7888
        %v7892 = vpop.permute.xlu0 %7891
        %v7894 = vperm.slane %v7892, 0
        %v7896 = vsel %vm1129, %v7887, 0
        %7898 = vmatpush.msra.mxu0 0.0
        %7899 = vmatpush.msra.mxu0 0.0
        %7900 = vmatpush.msra.mxu0 0.0
        %7901 = vmatpush.msra.mxu0 0.0
        %7902 = vmatpush.msra.mxu0 0.0
        %7903 = vmatpush.msra.mxu0 0.0
        %7904 = vmatpush.msra.mxu0 0.0
        %7905 = vmatpush.msra.mxu0 0.0
        %7906 = vmatpush.msra.mxu0 0.0
        %7907 = vmatpush.msra.mxu0 0.0
        %7908 = vmatpush.msra.mxu0 0.0
        %7909 = vmatpush.msra.mxu0 0.0
        %7910 = vmatpush.msra.mxu0 0.0
        %7911 = vmatpush.msra.mxu0 0.0
        %7912 = vmatpush.msra.mxu0 0.0
        %7913 = vmatpush.msra.mxu0 %v7884
        %7914 = vmatmul.f32.gmra.mxu0 %v7896
        %v7915 = vpop.f32.mrf.mxu0
        %v7916 = vadd.f32 %v7894, %v7915
        %7917 = vdwg.mxu0
        %7918 = vmatpush.msra.mxu0 0.0
        %7919 = vmatpush.msra.mxu0 0.0
        %7920 = vmatpush.msra.mxu0 0.0
        %7921 = vmatpush.msra.mxu0 0.0
        %7922 = vmatpush.msra.mxu0 0.0
        %7923 = vmatpush.msra.mxu0 0.0
        %7924 = vmatpush.msra.mxu0 0.0
        %7925 = vmatpush.msra.mxu0 0.0
        %7926 = vmatpush.msra.mxu0 0.0
        %7927 = vmatpush.msra.mxu0 0.0
        %7928 = vmatpush.msra.mxu0 0.0
        %7929 = vmatpush.msra.mxu0 0.0
        %7930 = vmatpush.msra.mxu0 0.0
        %7931 = vmatpush.msra.mxu0 0.0
        %7932 = vmatpush.msra.mxu0 0.0
        %7933 = vmatpush.msra.mxu0 %v7885
        %7934 = vmatmul.f32.gmra.mxu0 %v7896
        %v7935 = vpop.f32.mrf.mxu0
        %v7936 = vadd.f32 %v7894, %v7935
        %7937 = vdwg.mxu0
        %7938 = vmatpush.msra.mxu0 0.0
        %7939 = vmatpush.msra.mxu0 0.0
        %7940 = vmatpush.msra.mxu0 0.0
        %7941 = vmatpush.msra.mxu0 0.0
        %7942 = vmatpush.msra.mxu0 0.0
        %7943 = vmatpush.msra.mxu0 0.0
        %7944 = vmatpush.msra.mxu0 0.0
        %7945 = vmatpush.msra.mxu0 0.0
        %7946 = vmatpush.msra.mxu0 0.0
        %7947 = vmatpush.msra.mxu0 0.0
        %7948 = vmatpush.msra.mxu0 0.0
        %7949 = vmatpush.msra.mxu0 0.0
        %7950 = vmatpush.msra.mxu0 0.0
        %7951 = vmatpush.msra.mxu0 0.0
        %7952 = vmatpush.msra.mxu0 0.0
        %7953 = vmatpush.msra.mxu0 %v7886
        %7954 = vmatmul.f32.gmra.mxu0 %v7896
        %v7955 = vpop.f32.mrf.mxu0
        %v7956 = vadd.f32 %v7894, %v7955
        %7957 = vdwg.mxu0
        %v7961 = vrot.slane %v7936, 7
        %v7962 = vrot.slane %v7956, 6
        %vm7963 = vcmask 1040384
        %v7964 = vsel %vm7963, %v7916, %v7961
        %vm7965 = vcmask 1041408
        %v7966 = vsel %vm7965, %v7964, %v7962
        %v7968 = vlaneseq
        %vm7969 = vcmp.ge.s32.totalorder %v7968, 0
        %vm7970 = vcmp.lt.s32.totalorder %v7968, 324
        %vm7971 = vmand %vm7969, %vm7970
        %7972 = vst.msk [vmem:[%s1059] sm:$0x7] %vm7971, %v7966
        %p7973 = scmp.lt.s32.totalorder %s83, 1
        %s7974 = scalar_select %p7973, %s83, 1
        %s7975 = smul.addr %s7974, 3
        %s7976 = scalar_lea.vmem %s69, %s7975
        // Predicated region
        $region161: #{unet1_forward.1} parent=155 // pred_check
          %p7977 = pneg %p820
        $region162: #{unet1_forward.1} parent=155 // pred_check_branch
          %7979 = sbr.rel (%p7977) target = $region164
        $region163: #{unet1_forward.1} parent=155 // pred_region
          _
        $region164: #{unet1_forward.1} parent=155 // pred_fallthru
          _
      $region156: #{unet1_forward.1} parent=5 // pred_fallthru
        _
      %p7980 = scmp.le.s32.totalorder 2, %s78
      // Predicated region
      $region165: #{unet1_forward.1} parent=5 // pred_check
        %p7981 = pneg %p7980
      $region166: #{unet1_forward.1} parent=5 // pred_check_branch
        %7983 = sbr.rel (%p7981) target = $region168
      $region167: #{unet1_forward.1} parent=5 // pred_region
        %s7984 = ssub.s32 %s78, 2
        // Predicated region
        $region169: #{unet1_forward.1} parent=167 // pred_check
          %p7985 = pneg %p826
        $region170: #{unet1_forward.1} parent=167 // pred_check_branch
          %7987 = sbr.rel (%p7985) target = $region172
        $region171: #{unet1_forward.1} parent=167 // pred_region
          %p7988 = scmp.lt.s32.totalorder %s84, 1
          %s7989 = scalar_select %p7988, %s84, 1
          %s7990 = smul.addr %s7989, 3
          %s7991 = scalar_lea.vmem %s69, %s7990
        $region172: #{unet1_forward.1} parent=167 // pred_fallthru
          _
      $region168: #{unet1_forward.1} parent=5 // pred_fallthru
        _
    $region6: #{unet1_forward.1} parent=1 // loop_footer
      %s82 = sadd.s32 1, %s78
    $region7: #{unet1_forward.1} parent=1 // loop_footer_branch
      %77 = sbr.rel target = $region3
    $region8: #{unet1_forward.1} parent=1 // loop_exit
      _
    %7992 = vsyncpa [#allocation7], 1
    %s7993 = scalar_lea.sflag [#allocation7], 1
    %7994 = vsyncpa %s7993, 1

</llo_original>
